<compile_context>
chip_gen: v6e
topology: v6e:2x2x1
jax: 0.10.0
libtpu: 0.0.40
codegen_flags: <defaults>
</compile_context>

<pallas_src>
import itertools
import math

import jax
import jax.numpy as jnp
from jax.experimental import pallas as pl
from jax.experimental.pallas import tpu as pltpu


# ----------------------------------------------------------------------------
# Hardware-aware sizing helpers
# ----------------------------------------------------------------------------

def _round_up(x, k):
    return -(-x // k) * k


def _tile_bytes(shape, itemsize):
    """VMEM footprint of an array, with (8, 128) tiling padding on the last two dims."""
    s = list(shape)
    s[-1] = _round_up(s[-1], 128)
    if len(s) >= 2:
        s[-2] = _round_up(s[-2], 8)
    return math.prod(s) * itemsize


def _vmem_budget_bytes():
    """Generation-aware usable-VMEM budget (leave headroom for Mosaic scratch)."""
    cap = 64 << 20                               # conservative default (v7x-sized)
    try:
        info = pltpu.get_tpu_info()
        cap = int(getattr(info, "vmem_capacity_bytes", cap))
    except Exception:
        pass
    return max(16 << 20, int(cap * 3 // 4))      # ~48 MiB on v7x, ~96 MiB on v5e/v6e


def _multi_tensorcore():
    """Best-effort detection of parts where 'parallel' grid axes shard across cores."""
    try:
        kind = jax.devices()[0].device_kind.lower()
    except Exception:
        return True
    return any(tag in kind for tag in ("v7", "7x", "v4", "v5p"))


def _vmem_per_step(nb, in_tail, flat, ktot, cin, tcout, ntaps, per_tap,
                   out_itemsize, cdt_size, has_bias):
    """Estimated VMEM bytes resident for one grid step at batch-block size nb."""
    m = nb * flat
    total = 3 * _tile_bytes((nb,) + in_tail, cdt_size)       # 2 pipeline bufs + working copy
    total += 2 * _tile_bytes((ktot, tcout), cdt_size)        # weight slab (double-buffered)
    if has_bias:
        total += 2 * _tile_bytes((1, tcout), 4)
    total += 2 * _tile_bytes((m, tcout), out_itemsize)       # output tile (double-buffered)
    total += _tile_bytes((m, tcout), 4)                      # f32 accumulator
    if per_tap:
        total += 2 * _tile_bytes((m, cin), cdt_size)         # in-flight tap slices
    else:
        total += ntaps * _tile_bytes((m, cin), cdt_size)     # per-tap columns (live at concat)
        total += _tile_bytes((m, ntaps * cin), cdt_size)     # concatenated (m, K) im2col slab
    return total


def _choose_block_batch(n_batch, flat, cout_blocks, multi_tc, vmem_fn, budget):
    """Pick how many flattened-batch elements go into each grid step.

    Preference order: fit the per-step VMEM budget; keep >= 2 total grid steps on
    multi-TensorCore parts; minimize batch-padding waste; then take the largest nb
    (amortizes per-step overhead and weight reuse).  m = nb*flat is kept a multiple
    of 8 unless a single block covers the whole batch (full-dim blocks are legal).
    """
    base = 8 // math.gcd(flat, 8)
    cands = sorted(set(list(range(base, n_batch, base)) + [n_batch]))

    def keyfn(nb):
        n_blocks = -(-n_batch // nb)
        padded = n_blocks * nb
        fits = 0 if vmem_fn(nb) <= budget else 1
        ok2 = 0 if (not multi_tc or n_blocks * cout_blocks >= 2) else 1
        return (fits, ok2, padded, -nb if fits == 0 else nb)

    return min(cands, key=keyfn)


# ----------------------------------------------------------------------------
# Kernel
# ----------------------------------------------------------------------------

def _make_conv_kernel(n, nb, sp_pad, cin, spatial_out, ksize, stride, dilation,
                      tcout, per_tap, has_bias):
    """Conv kernel for one (batch block, Cout tile) grid step."""
    flat = math.prod(spatial_out)
    m = nb * flat
    taps = list(itertools.product(*[range(k) for k in ksize]))

    def tap_slice(x, kidx):
        # Static strided window for one kernel tap -> (m, Cin) column block.
        sl = (slice(None),) + tuple(
            slice(
                kidx[d] * dilation[d],
                kidx[d] * dilation[d] + (spatial_out[d] - 1) * stride[d] + 1,
                stride[d],
            )
            for d in range(n)
        ) + (slice(None),)
        return x[sl].reshape(m, cin)

    def kernel(x_ref, w_ref, *refs):
        if has_bias:
            b_ref, o_ref = refs
        else:
            (o_ref,) = refs

        x = x_ref[...]                            # (nb, *sp_pad, Cin), bf16

        if per_tap:
            # Large Cin: per-tap MXU accumulation into f32 — no (m, K) im2col slab,
            # no lane-axis concatenation (review item #1).
            acc = jnp.zeros((m, tcout), jnp.float32)
            for t, kidx in enumerate(taps):
                acc = acc + jax.lax.dot_general(
                    tap_slice(x, kidx),
                    w_ref[t * cin:(t + 1) * cin, :],
                    dimension_numbers=(((1,), (0,)), ((), ())),
                    preferred_element_type=jnp.float32)
        else:
            # Small Cin: single matmul with contraction K = prod(ksize)*Cin.
            cols = [tap_slice(x, kidx) for kidx in taps]
            xim = cols[0] if len(cols) == 1 else jnp.concatenate(cols, axis=-1)
            acc = jax.lax.dot_general(
                xim, w_ref[...],
                dimension_numbers=(((1,), (0,)), ((), ())),
                preferred_element_type=jnp.float32)

        if has_bias:
            acc = acc + b_ref[...]                # (1, tcout) f32 broadcast over rows
        o_ref[...] = acc.astype(o_ref.dtype)      # (m, tcout)

    return kernel


# ----------------------------------------------------------------------------
# Module wrapper
# ----------------------------------------------------------------------------

class ConvNd:
    """JAX/Pallas equivalent of the PyTorch ConvNd wrapper (groups=1, zero padding)."""

    def __init__(self, n, in_channels, out_channels, kernel_size, stride=1,
                 padding=0, dilation=1, groups=1, bias=True, padding_mode="zeros",
                 key=None, dtype=jnp.float32, compute_dtype=jnp.bfloat16):
        assert n in (1, 2, 3)
        if groups != 1:
            # TODO(synk): grouped convolution not implemented in the Pallas kernel.
            raise NotImplementedError("groups != 1 not supported")
        if isinstance(padding, str):
            # TODO(synk): string padding ('same'/'valid') not implemented; use ints.
            raise NotImplementedError("string padding not supported")
        if padding_mode != "zeros":
            # TODO(synk): only 'zeros' padding_mode implemented.
            raise NotImplementedError("padding_mode != 'zeros' not supported")

        def _tup(v):
            return (v,) * n if isinstance(v, int) else tuple(v)

        self.n = n
        self.cin = in_channels
        self.cout = out_channels
        self.ksize = _tup(kernel_size)
        self.stride = _tup(stride)
        self.padding = _tup(padding)              # symmetric zero padding
        self.dilation = _tup(dilation)
        self.compute_dtype = compute_dtype        # MXU operand dtype (f32 accumulation)
        self.has_bias = bool(bias)

        key = jax.random.PRNGKey(0) if key is None else key
        kw, kb = jax.random.split(key)
        fan_in = in_channels * math.prod(self.ksize)
        bound = 1.0 / math.sqrt(fan_in)
        # PyTorch-layout weight (Cout, Cin, *kernel), deterministic uniform init.
        self.weight = jax.random.uniform(
            kw, (out_channels, in_channels, *self.ksize), dtype, -bound, bound)
        self.bias = (jax.random.uniform(kb, (out_channels,), dtype, -bound, bound)
                     if bias else None)

    def __call__(self, x):
        n = self.n
        lead = x.shape[:-(n + 1)]                          # (B, $...)
        cin = x.shape[-(n + 1)]
        spatial = x.shape[-n:]
        x_flat = x.reshape((-1, cin) + spatial)            # (N, Cin, *spatial)
        N = x_flat.shape[0]

        spatial_out = tuple(
            (spatial[d] + 2 * self.padding[d]
             - self.dilation[d] * (self.ksize[d] - 1) - 1) // self.stride[d] + 1
            for d in range(n))
        flat = math.prod(spatial_out)
        ntaps = math.prod(self.ksize)
        ktot = cin * ntaps
        sp_pad = tuple(spatial[d] + 2 * self.padding[d] for d in range(n))
        per_tap = cin >= 128                               # review item #1

        cdt = self.compute_dtype
        cdt_size = jnp.dtype(cdt).itemsize
        out_itemsize = jnp.dtype(x.dtype).itemsize

        # --- Cout tiling to the MXU lane width (review item on Cout grid axis) ---
        cout = self.cout
        if cout <= 256:
            tcout, cout_pad = cout, cout
        else:
            tcout = 256
            cout_pad = _round_up(cout, 256)
        cout_blocks = cout_pad // tcout

        # --- batch-block sizing against a generation-aware VMEM model ---
        in_tail = sp_pad + (cin,)
        budget = _vmem_budget_bytes()
        multi_tc = _multi_tensorcore()
        vmem_fn = lambda nb: _vmem_per_step(
            nb, in_tail, flat, ktot, cin, tcout, ntaps, per_tap,
            out_itemsize, cdt_size, self.has_bias)
        nb = _choose_block_batch(N, flat, cout_blocks, multi_tc, vmem_fn, budget)
        n_pad = _round_up(N, nb)
        batch_blocks = n_pad // nb
        m = nb * flat

        # --- wrapper-side layout plumbing ---
        # NC* -> channels-last, cast MXU operand to bf16, zero-pad spatial dims,
        # pad batch up to a multiple of nb.
        x_cl = jnp.moveaxis(x_flat, 1, -1).astype(cdt)
        x_cl = jnp.pad(x_cl, [(0, n_pad - N)]
                       + [(p, p) for p in self.padding] + [(0, 0)])

        # Weight (Cout, Cin, *k) -> (Cout, *k, Cin) -> (Cout, K) -> (K, Cout_pad).
        wmat = (jnp.moveaxis(self.weight, 1, -1)
                .reshape(cout, ktot).T.astype(cdt))
        if cout_pad != cout:
            wmat = jnp.pad(wmat, ((0, 0), (0, cout_pad - cout)))
        if self.has_bias:
            bmat = self.bias.astype(jnp.float32).reshape(1, cout)
            if cout_pad != cout:
                bmat = jnp.pad(bmat, ((0, 0), (0, cout_pad - cout)))

        kernel = _make_conv_kernel(n, nb, sp_pad, cin, spatial_out, self.ksize,
                                   self.stride, self.dilation, tcout, per_tap,
                                   self.has_bias)

        in_rank = 1 + n + 1
        in_specs = [
            pl.BlockSpec((nb,) + in_tail,
                         lambda b, j: (b,) + (0,) * (in_rank - 1)),
            pl.BlockSpec((ktot, tcout), lambda b, j: (0, j)),
        ]
        args = [x_cl, wmat]
        if self.has_bias:
            in_specs.append(pl.BlockSpec((1, tcout), lambda b, j: (0, j)))
            args.append(bmat)

        cost = pl.CostEstimate(
            flops=2 * n_pad * flat * ktot * cout_pad,
            transcendentals=0,
            bytes_accessed=(x_cl.size * cdt_size
                            + wmat.size * cdt_size
                            + (bmat.size * 4 if self.has_bias else 0)
                            + n_pad * flat * cout_pad * out_itemsize))

        out2d = pl.pallas_call(
            kernel,
            out_shape=jax.ShapeDtypeStruct((n_pad * flat, cout_pad), x.dtype),
            grid=(batch_blocks, cout_blocks),
            in_specs=in_specs,
            out_specs=pl.BlockSpec((m, tcout), lambda b, j: (b, j)),
            compiler_params=pltpu.CompilerParams(
                dimension_semantics=("parallel", "parallel"),
                vmem_limit_bytes=int(budget)),
            cost_estimate=cost,
        )(*args)

        # Channels-last (N*flat, Cout) -> channels-first (N, Cout, *spatial_out).
        out = out2d[:N * flat, :cout].reshape((N,) + spatial_out + (cout,))
        out = jnp.moveaxis(out, -1, 1)
        return out.reshape(lead + (cout,) + spatial_out)


# ----------------------------------------------------------------------------
# Reference + tests
# ----------------------------------------------------------------------------

def _ref_conv(x_flat, weight, bias, stride, padding, dilation, compute_dtype):
    """Pure-JAX reference (channels-first) with the same bf16-operand / f32-acc math."""
    n = weight.ndim - 2
    spatial_chars = "DHW"[-n:]
    spec = "NC" + spatial_chars
    out = jax.lax.conv_general_dilated(
        x_flat.astype(compute_dtype), weight.astype(compute_dtype),
        window_strides=stride, padding=[(p, p) for p in padding],
        rhs_dilation=dilation,
        dimension_numbers=(spec, "OI" + spatial_chars, spec),
        preferred_element_type=jnp.float32)
    if bias is not None:
        out = out + bias.astype(jnp.float32).reshape((1, -1) + (1,) * n)
    return out.astype(x_flat.dtype)


if __name__ == "__main__":
    key = jax.random.PRNGKey(0)
    kx2, kx1, kp2, kp1 = jax.random.split(key, 4)

    # --- 2D case: x has an extra batching dim: (B, $, C, H, W) ---
    x2 = jax.random.normal(kx2, (2, 3, 4, 16, 16), jnp.float32)
    conv2 = ConvNd(2, in_channels=4, out_channels=8, kernel_size=3,
                   stride=1, padding=1, key=kp2)
    y2 = jax.block_until_ready(conv2(x2))
    ref2 = _ref_conv(x2.reshape(-1, 4, 16, 16), conv2.weight, conv2.bias,
                     conv2.stride, conv2.padding, conv2.dilation,
                     conv2.compute_dtype).reshape(2, 3, 8, 16, 16)
    assert y2.shape == (2, 3, 8, 16, 16), y2.shape
    assert jnp.allclose(y2, ref2, atol=1e-3, rtol=1e-3), float(
        jnp.max(jnp.abs(y2 - ref2)))

    # --- 1D case: (B, $, C, L) ---
    x1 = jax.random.normal(kx1, (2, 5, 4, 32), jnp.float32)
    conv1 = ConvNd(1, in_channels=4, out_channels=6, kernel_size=5,
                   stride=1, padding=2, key=kp1)
    y1 = jax.block_until_ready(conv1(x1))
    ref1 = _ref_conv(x1.reshape(-1, 4, 32), conv1.weight, conv1.bias,
                     conv1.stride, conv1.padding, conv1.dilation,
                     conv1.compute_dtype).reshape(2, 5, 6, 32)
    assert y1.shape == (2, 5, 6, 32), y1.shape
    assert jnp.allclose(y1, ref1, atol=1e-3, rtol=1e-3), float(
        jnp.max(jnp.abs(y1 - ref1)))

    print("KERNEL_OK")
</pallas_src>

<mosaic_0001>
module attributes {stable_mosaic.version = 11 : i64} {
  func.func @kernel(%arg0: i32, %arg1: i32, %arg2: memref<6x18x18x4xbf16, #tpu.memory_space<vmem>>, %arg3: memref<36x8xbf16, #tpu.memory_space<vmem>>, %arg4: memref<1x8xf32, #tpu.memory_space<vmem>>, %arg5: memref<1536x8xf32, #tpu.memory_space<vmem>>) attributes {dimension_semantics = [#tpu.dimension_semantics<parallel>, #tpu.dimension_semantics<parallel>], iteration_bounds = array<i64: 1, 1>, scalar_prefetch = 0 : i64, scratch_operands = 0 : i64, tpu.core_type = #tpu.core_type<tc>, window_params = [{transform_indices = @transform_0, window_bounds = array<i64: 6, 18, 18, 4>}, {transform_indices = @transform_1, window_bounds = array<i64: 36, 8>}, {transform_indices = @transform_2, window_bounds = array<i64: 1, 8>}, {transform_indices = @transform_3, window_bounds = array<i64: 1536, 8>}]} {
    %c0 = arith.constant 0 : index
    %c0_0 = arith.constant 0 : index
    %c0_1 = arith.constant 0 : index
    %c0_2 = arith.constant 0 : index
    %0 = vector.load %arg2[%c0, %c0_0, %c0_1, %c0_2] : memref<6x18x18x4xbf16, #tpu.memory_space<vmem>>, vector<6x18x18x4xbf16>
    %1 = vector.extract_strided_slice %0 {offsets = [0, 0, 0, 0], sizes = [6, 16, 16, 4], strides = [1, 1, 1, 1]} : vector<6x18x18x4xbf16> to vector<6x16x16x4xbf16>
    %2 = vector.shape_cast %1 : vector<6x16x16x4xbf16> to vector<1536x4xbf16>
    %3 = vector.extract_strided_slice %0 {offsets = [0, 0, 1, 0], sizes = [6, 16, 16, 4], strides = [1, 1, 1, 1]} : vector<6x18x18x4xbf16> to vector<6x16x16x4xbf16>
    %4 = vector.shape_cast %3 : vector<6x16x16x4xbf16> to vector<1536x4xbf16>
    %5 = vector.extract_strided_slice %0 {offsets = [0, 0, 2, 0], sizes = [6, 16, 16, 4], strides = [1, 1, 1, 1]} : vector<6x18x18x4xbf16> to vector<6x16x16x4xbf16>
    %6 = vector.shape_cast %5 : vector<6x16x16x4xbf16> to vector<1536x4xbf16>
    %7 = vector.extract_strided_slice %0 {offsets = [0, 1, 0, 0], sizes = [6, 16, 16, 4], strides = [1, 1, 1, 1]} : vector<6x18x18x4xbf16> to vector<6x16x16x4xbf16>
    %8 = vector.shape_cast %7 : vector<6x16x16x4xbf16> to vector<1536x4xbf16>
    %9 = vector.extract_strided_slice %0 {offsets = [0, 1, 1, 0], sizes = [6, 16, 16, 4], strides = [1, 1, 1, 1]} : vector<6x18x18x4xbf16> to vector<6x16x16x4xbf16>
    %10 = vector.shape_cast %9 : vector<6x16x16x4xbf16> to vector<1536x4xbf16>
    %11 = vector.extract_strided_slice %0 {offsets = [0, 1, 2, 0], sizes = [6, 16, 16, 4], strides = [1, 1, 1, 1]} : vector<6x18x18x4xbf16> to vector<6x16x16x4xbf16>
    %12 = vector.shape_cast %11 : vector<6x16x16x4xbf16> to vector<1536x4xbf16>
    %13 = vector.extract_strided_slice %0 {offsets = [0, 2, 0, 0], sizes = [6, 16, 16, 4], strides = [1, 1, 1, 1]} : vector<6x18x18x4xbf16> to vector<6x16x16x4xbf16>
    %14 = vector.shape_cast %13 : vector<6x16x16x4xbf16> to vector<1536x4xbf16>
    %15 = vector.extract_strided_slice %0 {offsets = [0, 2, 1, 0], sizes = [6, 16, 16, 4], strides = [1, 1, 1, 1]} : vector<6x18x18x4xbf16> to vector<6x16x16x4xbf16>
    %16 = vector.shape_cast %15 : vector<6x16x16x4xbf16> to vector<1536x4xbf16>
    %17 = vector.extract_strided_slice %0 {offsets = [0, 2, 2, 0], sizes = [6, 16, 16, 4], strides = [1, 1, 1, 1]} : vector<6x18x18x4xbf16> to vector<6x16x16x4xbf16>
    %18 = vector.shape_cast %17 : vector<6x16x16x4xbf16> to vector<1536x4xbf16>
    %19 = tpu.concatenate %2, %4, %6, %8, %10, %12, %14, %16, %18 in 1 : vector<1536x4xbf16>, vector<1536x4xbf16>, vector<1536x4xbf16>, vector<1536x4xbf16>, vector<1536x4xbf16>, vector<1536x4xbf16>, vector<1536x4xbf16>, vector<1536x4xbf16>, vector<1536x4xbf16> -> vector<1536x36xbf16>
    %c0_3 = arith.constant 0 : index
    %c0_4 = arith.constant 0 : index
    %20 = vector.load %arg3[%c0_3, %c0_4] : memref<36x8xbf16, #tpu.memory_space<vmem>>, vector<36x8xbf16>
    %cst = arith.constant dense<0.000000e+00> : vector<1536x8xf32>
    %21 = tpu.matmul %19, %20, %cst {dimension_numbers = #tpu.dot_dimension_numbers<[1], [0], [0], [1], [0, 0, 1, 1], [], []>} : vector<1536x36xbf16>, vector<36x8xbf16>, vector<1536x8xf32> -> vector<1536x8xf32>
    %c0_5 = arith.constant 0 : index
    %c0_6 = arith.constant 0 : index
    %22 = vector.load %arg4[%c0_5, %c0_6] : memref<1x8xf32, #tpu.memory_space<vmem>>, vector<1x8xf32>
    %23 = vector.broadcast %22 : vector<1x8xf32> to vector<1536x8xf32>
    %24 = arith.addf %21, %23 : vector<1536x8xf32>
    %c0_7 = arith.constant 0 : index
    %c0_8 = arith.constant 0 : index
    %25 = vector.load %arg5[%c0_7, %c0_8] : memref<1536x8xf32, #tpu.memory_space<vmem>>, vector<1536x8xf32>
    tpu.vector_store %arg5[%c0_7, %c0_8], %24 {strides = array<i32>} : memref<1536x8xf32, #tpu.memory_space<vmem>>, vector<1536x8xf32>,
    return
  }
  func.func @transform_0(%arg0: i32, %arg1: i32) -> (i32, i32, i32, i32) {
    %c0_i32 = arith.constant 0 : i32
    %c0_i32_0 = arith.constant 0 : i32
    %c0_i32_1 = arith.constant 0 : i32
    %c0_i32_2 = arith.constant 0 : i32
    return %arg0, %c0_i32, %c0_i32_0, %c0_i32_1 : i32, i32, i32, i32
  }
  func.func @transform_1(%arg0: i32, %arg1: i32) -> (i32, i32) {
    %c0_i32 = arith.constant 0 : i32
    %c0_i32_0 = arith.constant 0 : i32
    return %c0_i32, %arg1 : i32, i32
  }
  func.func @transform_2(%arg0: i32, %arg1: i32) -> (i32, i32) {
    %c0_i32 = arith.constant 0 : i32
    %c0_i32_0 = arith.constant 0 : i32
    return %c0_i32, %arg1 : i32, i32
  }
  func.func @transform_3(%arg0: i32, %arg1: i32) -> (i32, i32) {
    %c0_i32 = arith.constant 0 : i32
    return %arg0, %arg1 : i32, i32
  }
}

</mosaic_0001>

<llo_original>
// kernel: tpu_custom_call.1
$region0: #{tpu_custom_call.1}
  #allocation0 [shape = 'u32[]', space=smem, size = 0x4, offset = 0x4, fixed_abs, tag = 'smem constant byte address 0x4 - core index']
  #allocation1 [shape = 'u32[144,128]{1,0:T(1,128)}', space=vmem, size = 0x12000, scoped, tag = 'internal scratch']
  %s0 = inlined_call_operand.vmem [shape: bf16[6,18,18,4], index: 0, kind: input, shape index: {}]
  %s1 = inlined_call_operand.vmem [shape: bf16[36,8], index: 1, kind: input, shape index: {}]
  %s2 = inlined_call_operand.vmem [shape: f32[1,8], index: 2, kind: input, shape index: {}]
  %s3 = inlined_call_operand.vmem [shape: f32[1536,8], index: 3, kind: output, shape index: {}]
  %s4 = sld [smem:[#allocation0]]
  $region22: #{tpu_custom_call.1} parent=0
    _
  %s6 = ssub.s32 1, %s4
  %s7 = scalar_select 0, %s6, %s4
  // Predicated region
  $region2: #{tpu_custom_call.1} parent=0 // pred_check
    _
  $region3: #{tpu_custom_call.1} parent=0 // pred_check_branch
    %9 = sbr.rel (0) target = $region5
  $region4: #{tpu_custom_call.1} parent=0 // pred_region
    _
  $region5: #{tpu_custom_call.1} parent=0 // pred_fallthru
    _
  // Predicated region
  $region6: #{tpu_custom_call.1} parent=0 // pred_check
    _
  $region7: #{tpu_custom_call.1} parent=0 // pred_check_branch
    %11 = sbr.rel (0) target = $region9
  $region8: #{tpu_custom_call.1} parent=0 // pred_region
    _
  $region9: #{tpu_custom_call.1} parent=0 // pred_fallthru
    _
  // Predicated region
  $region10: #{tpu_custom_call.1} parent=0 // pred_check
    _
  $region11: #{tpu_custom_call.1} parent=0 // pred_check_branch
    %13 = sbr.rel (0) target = $region13
  $region12: #{tpu_custom_call.1} parent=0 // pred_region
    _
  $region13: #{tpu_custom_call.1} parent=0 // pred_fallthru
    _
  %v15 = vld [vmem:[%s0] sm:$0xf]
  %v16 = vld [vmem:[%s0 + $0x4] sm:$0xf]
  %v17 = vld [vmem:[%s0 + $0x8] sm:$0x1]
  %v18 = vld [vmem:[%s0 + $0xc] sm:$0xf]
  %v19 = vld [vmem:[%s0 + $0x10] sm:$0xf]
  %v20 = vld [vmem:[%s0 + $0x14] sm:$0x1]
  %v21 = vld [vmem:[%s0 + $0x18] sm:$0xf]
  %v22 = vld [vmem:[%s0 + $0x1c] sm:$0xf]
  %v23 = vld [vmem:[%s0 + $0x20] sm:$0x1]
  %v24 = vld [vmem:[%s0 + $0x24] sm:$0xf]
  %v25 = vld [vmem:[%s0 + $0x28] sm:$0xf]
  %v26 = vld [vmem:[%s0 + $0x2c] sm:$0x1]
  %v27 = vld [vmem:[%s0 + $0x30] sm:$0xf]
  %v28 = vld [vmem:[%s0 + $0x34] sm:$0xf]
  %v29 = vld [vmem:[%s0 + $0x38] sm:$0x1]
  %v30 = vld [vmem:[%s0 + $0x3c] sm:$0xf]
  %v31 = vld [vmem:[%s0 + $0x40] sm:$0xf]
  %v32 = vld [vmem:[%s0 + $0x44] sm:$0x1]
  %v33 = vld [vmem:[%s0 + $0x48] sm:$0xf]
  %v34 = vld [vmem:[%s0 + $0x4c] sm:$0xf]
  %v35 = vld [vmem:[%s0 + $0x50] sm:$0x1]
  %v36 = vld [vmem:[%s0 + $0x54] sm:$0xf]
  %v37 = vld [vmem:[%s0 + $0x58] sm:$0xf]
  %v38 = vld [vmem:[%s0 + $0x5c] sm:$0x1]
  %v39 = vld [vmem:[%s0 + $0x60] sm:$0xf]
  %v40 = vld [vmem:[%s0 + $0x64] sm:$0xf]
  %v41 = vld [vmem:[%s0 + $0x68] sm:$0x1]
  %v42 = vld [vmem:[%s0 + $0x6c] sm:$0xf]
  %v43 = vld [vmem:[%s0 + $0x70] sm:$0xf]
  %v44 = vld [vmem:[%s0 + $0x74] sm:$0x1]
  %v45 = vld [vmem:[%s0 + $0x78] sm:$0xf]
  %v46 = vld [vmem:[%s0 + $0x7c] sm:$0xf]
  %v47 = vld [vmem:[%s0 + $0x80] sm:$0x1]
  %v48 = vld [vmem:[%s0 + $0x84] sm:$0xf]
  %v49 = vld [vmem:[%s0 + $0x88] sm:$0xf]
  %v50 = vld [vmem:[%s0 + $0x8c] sm:$0x1]
  %v51 = vld [vmem:[%s0 + $0x90] sm:$0xf]
  %v52 = vld [vmem:[%s0 + $0x94] sm:$0xf]
  %v53 = vld [vmem:[%s0 + $0x98] sm:$0x1]
  %v54 = vld [vmem:[%s0 + $0x9c] sm:$0xf]
  %v55 = vld [vmem:[%s0 + $0xa0] sm:$0xf]
  %v56 = vld [vmem:[%s0 + $0xa4] sm:$0x1]
  %v57 = vld [vmem:[%s0 + $0xa8] sm:$0xf]
  %v58 = vld [vmem:[%s0 + $0xac] sm:$0xf]
  %v59 = vld [vmem:[%s0 + $0xb0] sm:$0x1]
  %v60 = vld [vmem:[%s0 + $0xb4] sm:$0xf]
  %v61 = vld [vmem:[%s0 + $0xb8] sm:$0xf]
  %v62 = vld [vmem:[%s0 + $0xbc] sm:$0x1]
  %v63 = vld [vmem:[%s0 + $0xc0] sm:$0xf]
  %v64 = vld [vmem:[%s0 + $0xc4] sm:$0xf]
  %v65 = vld [vmem:[%s0 + $0xc8] sm:$0x1]
  %v66 = vld [vmem:[%s0 + $0xcc] sm:$0xf]
  %v67 = vld [vmem:[%s0 + $0xd0] sm:$0xf]
  %v68 = vld [vmem:[%s0 + $0xd4] sm:$0x1]
  %v69 = vld [vmem:[%s0 + $0xd8] sm:$0xf]
  %v70 = vld [vmem:[%s0 + $0xdc] sm:$0xf]
  %v71 = vld [vmem:[%s0 + $0xe0] sm:$0x1]
  %v72 = vld [vmem:[%s0 + $0xe4] sm:$0xf]
  %v73 = vld [vmem:[%s0 + $0xe8] sm:$0xf]
  %v74 = vld [vmem:[%s0 + $0xec] sm:$0x1]
  %v75 = vld [vmem:[%s0 + $0xf0] sm:$0xf]
  %v76 = vld [vmem:[%s0 + $0xf4] sm:$0xf]
  %v77 = vld [vmem:[%s0 + $0xf8] sm:$0x1]
  %v78 = vld [vmem:[%s0 + $0xfc] sm:$0xf]
  %v79 = vld [vmem:[%s0 + $0x100] sm:$0xf]
  %v80 = vld [vmem:[%s0 + $0x104] sm:$0x1]
  %v81 = vld [vmem:[%s0 + $0x108] sm:$0xf]
  %v82 = vld [vmem:[%s0 + $0x10c] sm:$0xf]
  %v83 = vld [vmem:[%s0 + $0x110] sm:$0x1]
  %v84 = vld [vmem:[%s0 + $0x114] sm:$0xf]
  %v85 = vld [vmem:[%s0 + $0x118] sm:$0xf]
  %v86 = vld [vmem:[%s0 + $0x11c] sm:$0x1]
  %v87 = vld [vmem:[%s0 + $0x120] sm:$0xf]
  %v88 = vld [vmem:[%s0 + $0x124] sm:$0xf]
  %v89 = vld [vmem:[%s0 + $0x128] sm:$0x1]
  %v90 = vld [vmem:[%s0 + $0x12c] sm:$0xf]
  %v91 = vld [vmem:[%s0 + $0x130] sm:$0xf]
  %v92 = vld [vmem:[%s0 + $0x134] sm:$0x1]
  %v93 = vld [vmem:[%s0 + $0x138] sm:$0xf]
  %v94 = vld [vmem:[%s0 + $0x13c] sm:$0xf]
  %v95 = vld [vmem:[%s0 + $0x140] sm:$0x1]
  %v96 = vld [vmem:[%s0 + $0x144] sm:$0xf]
  %v97 = vld [vmem:[%s0 + $0x148] sm:$0xf]
  %v98 = vld [vmem:[%s0 + $0x14c] sm:$0x1]
  %v99 = vld [vmem:[%s0 + $0x150] sm:$0xf]
  %v100 = vld [vmem:[%s0 + $0x154] sm:$0xf]
  %v101 = vld [vmem:[%s0 + $0x158] sm:$0x1]
  %v102 = vld [vmem:[%s0 + $0x15c] sm:$0xf]
  %v103 = vld [vmem:[%s0 + $0x160] sm:$0xf]
  %v104 = vld [vmem:[%s0 + $0x164] sm:$0x1]
  %v105 = vld [vmem:[%s0 + $0x168] sm:$0xf]
  %v106 = vld [vmem:[%s0 + $0x16c] sm:$0xf]
  %v107 = vld [vmem:[%s0 + $0x170] sm:$0x1]
  %v108 = vld [vmem:[%s0 + $0x174] sm:$0xf]
  %v109 = vld [vmem:[%s0 + $0x178] sm:$0xf]
  %v110 = vld [vmem:[%s0 + $0x17c] sm:$0x1]
  %v111 = vld [vmem:[%s0 + $0x180] sm:$0xf]
  %v112 = vld [vmem:[%s0 + $0x184] sm:$0xf]
  %v113 = vld [vmem:[%s0 + $0x188] sm:$0x1]
  %v114 = vld [vmem:[%s0 + $0x18c] sm:$0xf]
  %v115 = vld [vmem:[%s0 + $0x190] sm:$0xf]
  %v116 = vld [vmem:[%s0 + $0x194] sm:$0x1]
  %v117 = vld [vmem:[%s0 + $0x198] sm:$0xf]
  %v118 = vld [vmem:[%s0 + $0x19c] sm:$0xf]
  %v119 = vld [vmem:[%s0 + $0x1a0] sm:$0x1]
  %v120 = vld [vmem:[%s0 + $0x1a4] sm:$0xf]
  %v121 = vld [vmem:[%s0 + $0x1a8] sm:$0xf]
  %v122 = vld [vmem:[%s0 + $0x1ac] sm:$0x1]
  %v123 = vld [vmem:[%s0 + $0x1b0] sm:$0xf]
  %v124 = vld [vmem:[%s0 + $0x1b4] sm:$0xf]
  %v125 = vld [vmem:[%s0 + $0x1b8] sm:$0x1]
  %v126 = vld [vmem:[%s0 + $0x1bc] sm:$0xf]
  %v127 = vld [vmem:[%s0 + $0x1c0] sm:$0xf]
  %v128 = vld [vmem:[%s0 + $0x1c4] sm:$0x1]
  %v129 = vld [vmem:[%s0 + $0x1c8] sm:$0xf]
  %v130 = vld [vmem:[%s0 + $0x1cc] sm:$0xf]
  %v131 = vld [vmem:[%s0 + $0x1d0] sm:$0x1]
  %v132 = vld [vmem:[%s0 + $0x1d4] sm:$0xf]
  %v133 = vld [vmem:[%s0 + $0x1d8] sm:$0xf]
  %v134 = vld [vmem:[%s0 + $0x1dc] sm:$0x1]
  %v135 = vld [vmem:[%s0 + $0x1e0] sm:$0xf]
  %v136 = vld [vmem:[%s0 + $0x1e4] sm:$0xf]
  %v137 = vld [vmem:[%s0 + $0x1e8] sm:$0x1]
  %v138 = vld [vmem:[%s0 + $0x1ec] sm:$0xf]
  %v139 = vld [vmem:[%s0 + $0x1f0] sm:$0xf]
  %v140 = vld [vmem:[%s0 + $0x1f4] sm:$0x1]
  %v141 = vld [vmem:[%s0 + $0x1f8] sm:$0xf]
  %v142 = vld [vmem:[%s0 + $0x1fc] sm:$0xf]
  %v143 = vld [vmem:[%s0 + $0x200] sm:$0x1]
  %v144 = vld [vmem:[%s0 + $0x204] sm:$0xf]
  %v145 = vld [vmem:[%s0 + $0x208] sm:$0xf]
  %v146 = vld [vmem:[%s0 + $0x20c] sm:$0x1]
  %v147 = vld [vmem:[%s0 + $0x210] sm:$0xf]
  %v148 = vld [vmem:[%s0 + $0x214] sm:$0xf]
  %v149 = vld [vmem:[%s0 + $0x218] sm:$0x1]
  %v150 = vld [vmem:[%s0 + $0x21c] sm:$0xf]
  %v151 = vld [vmem:[%s0 + $0x220] sm:$0xf]
  %v152 = vld [vmem:[%s0 + $0x224] sm:$0x1]
  %v153 = vld [vmem:[%s0 + $0x228] sm:$0xf]
  %v154 = vld [vmem:[%s0 + $0x22c] sm:$0xf]
  %v155 = vld [vmem:[%s0 + $0x230] sm:$0x1]
  %v156 = vld [vmem:[%s0 + $0x234] sm:$0xf]
  %v157 = vld [vmem:[%s0 + $0x238] sm:$0xf]
  %v158 = vld [vmem:[%s0 + $0x23c] sm:$0x1]
  %v159 = vld [vmem:[%s0 + $0x240] sm:$0xf]
  %v160 = vld [vmem:[%s0 + $0x244] sm:$0xf]
  %v161 = vld [vmem:[%s0 + $0x248] sm:$0x1]
  %v162 = vld [vmem:[%s0 + $0x24c] sm:$0xf]
  %v163 = vld [vmem:[%s0 + $0x250] sm:$0xf]
  %v164 = vld [vmem:[%s0 + $0x254] sm:$0x1]
  %v165 = vld [vmem:[%s0 + $0x258] sm:$0xf]
  %v166 = vld [vmem:[%s0 + $0x25c] sm:$0xf]
  %v167 = vld [vmem:[%s0 + $0x260] sm:$0x1]
  %v168 = vld [vmem:[%s0 + $0x264] sm:$0xf]
  %v169 = vld [vmem:[%s0 + $0x268] sm:$0xf]
  %v170 = vld [vmem:[%s0 + $0x26c] sm:$0x1]
  %v171 = vld [vmem:[%s0 + $0x270] sm:$0xf]
  %v172 = vld [vmem:[%s0 + $0x274] sm:$0xf]
  %v173 = vld [vmem:[%s0 + $0x278] sm:$0x1]
  %v174 = vld [vmem:[%s0 + $0x27c] sm:$0xf]
  %v175 = vld [vmem:[%s0 + $0x280] sm:$0xf]
  %v176 = vld [vmem:[%s0 + $0x284] sm:$0x1]
  %v177 = vld [vmem:[%s0 + $0x288] sm:$0xf]
  %v178 = vld [vmem:[%s0 + $0x28c] sm:$0xf]
  %v179 = vld [vmem:[%s0 + $0x290] sm:$0x1]
  %v180 = vld [vmem:[%s0 + $0x294] sm:$0xf]
  %v181 = vld [vmem:[%s0 + $0x298] sm:$0xf]
  %v182 = vld [vmem:[%s0 + $0x29c] sm:$0x1]
  %v183 = vld [vmem:[%s0 + $0x2a0] sm:$0xf]
  %v184 = vld [vmem:[%s0 + $0x2a4] sm:$0xf]
  %v185 = vld [vmem:[%s0 + $0x2a8] sm:$0x1]
  %v186 = vld [vmem:[%s0 + $0x2ac] sm:$0xf]
  %v187 = vld [vmem:[%s0 + $0x2b0] sm:$0xf]
  %v188 = vld [vmem:[%s0 + $0x2b4] sm:$0x1]
  %v189 = vld [vmem:[%s0 + $0x2b8] sm:$0xf]
  %v190 = vld [vmem:[%s0 + $0x2bc] sm:$0xf]
  %v191 = vld [vmem:[%s0 + $0x2c0] sm:$0x1]
  %v192 = vld [vmem:[%s0 + $0x2c4] sm:$0xf]
  %v193 = vld [vmem:[%s0 + $0x2c8] sm:$0xf]
  %v194 = vld [vmem:[%s0 + $0x2cc] sm:$0x1]
  %v195 = vld [vmem:[%s0 + $0x2d0] sm:$0xf]
  %v196 = vld [vmem:[%s0 + $0x2d4] sm:$0xf]
  %v197 = vld [vmem:[%s0 + $0x2d8] sm:$0x1]
  %v198 = vld [vmem:[%s0 + $0x2dc] sm:$0xf]
  %v199 = vld [vmem:[%s0 + $0x2e0] sm:$0xf]
  %v200 = vld [vmem:[%s0 + $0x2e4] sm:$0x1]
  %v201 = vld [vmem:[%s0 + $0x2e8] sm:$0xf]
  %v202 = vld [vmem:[%s0 + $0x2ec] sm:$0xf]
  %v203 = vld [vmem:[%s0 + $0x2f0] sm:$0x1]
  %v204 = vld [vmem:[%s0 + $0x2f4] sm:$0xf]
  %v205 = vld [vmem:[%s0 + $0x2f8] sm:$0xf]
  %v206 = vld [vmem:[%s0 + $0x2fc] sm:$0x1]
  %v207 = vld [vmem:[%s0 + $0x300] sm:$0xf]
  %v208 = vld [vmem:[%s0 + $0x304] sm:$0xf]
  %v209 = vld [vmem:[%s0 + $0x308] sm:$0x1]
  %v210 = vld [vmem:[%s0 + $0x30c] sm:$0xf]
  %v211 = vld [vmem:[%s0 + $0x310] sm:$0xf]
  %v212 = vld [vmem:[%s0 + $0x314] sm:$0x1]
  %v213 = vld [vmem:[%s0 + $0x318] sm:$0xf]
  %v214 = vld [vmem:[%s0 + $0x31c] sm:$0xf]
  %v215 = vld [vmem:[%s0 + $0x320] sm:$0x1]
  %v216 = vld [vmem:[%s0 + $0x324] sm:$0xf]
  %v217 = vld [vmem:[%s0 + $0x328] sm:$0xf]
  %v218 = vld [vmem:[%s0 + $0x32c] sm:$0x1]
  %v219 = vld [vmem:[%s0 + $0x330] sm:$0xf]
  %v220 = vld [vmem:[%s0 + $0x334] sm:$0xf]
  %v221 = vld [vmem:[%s0 + $0x338] sm:$0x1]
  %v222 = vld [vmem:[%s0 + $0x33c] sm:$0xf]
  %v223 = vld [vmem:[%s0 + $0x340] sm:$0xf]
  %v224 = vld [vmem:[%s0 + $0x344] sm:$0x1]
  %v225 = vld [vmem:[%s0 + $0x348] sm:$0xf]
  %v226 = vld [vmem:[%s0 + $0x34c] sm:$0xf]
  %v227 = vld [vmem:[%s0 + $0x350] sm:$0x1]
  %v228 = vld [vmem:[%s0 + $0x354] sm:$0xf]
  %v229 = vld [vmem:[%s0 + $0x358] sm:$0xf]
  %v230 = vld [vmem:[%s0 + $0x35c] sm:$0x1]
  %v231 = vld [vmem:[%s0 + $0x360] sm:$0xf]
  %v232 = vld [vmem:[%s0 + $0x364] sm:$0xf]
  %v233 = vld [vmem:[%s0 + $0x368] sm:$0x1]
  %v234 = vld [vmem:[%s0 + $0x36c] sm:$0xf]
  %v235 = vld [vmem:[%s0 + $0x370] sm:$0xf]
  %v236 = vld [vmem:[%s0 + $0x374] sm:$0x1]
  %v237 = vld [vmem:[%s0 + $0x378] sm:$0xf]
  %v238 = vld [vmem:[%s0 + $0x37c] sm:$0xf]
  %v239 = vld [vmem:[%s0 + $0x380] sm:$0x1]
  %v240 = vld [vmem:[%s0 + $0x384] sm:$0xf]
  %v241 = vld [vmem:[%s0 + $0x388] sm:$0xf]
  %v242 = vld [vmem:[%s0 + $0x38c] sm:$0x1]
  %v243 = vld [vmem:[%s0 + $0x390] sm:$0xf]
  %v244 = vld [vmem:[%s0 + $0x394] sm:$0xf]
  %v245 = vld [vmem:[%s0 + $0x398] sm:$0x1]
  %v246 = vld [vmem:[%s0 + $0x39c] sm:$0xf]
  %v247 = vld [vmem:[%s0 + $0x3a0] sm:$0xf]
  %v248 = vld [vmem:[%s0 + $0x3a4] sm:$0x1]
  %v249 = vld [vmem:[%s0 + $0x3a8] sm:$0xf]
  %v250 = vld [vmem:[%s0 + $0x3ac] sm:$0xf]
  %v251 = vld [vmem:[%s0 + $0x3b0] sm:$0x1]
  %v252 = vld [vmem:[%s0 + $0x3b4] sm:$0xf]
  %v253 = vld [vmem:[%s0 + $0x3b8] sm:$0xf]
  %v254 = vld [vmem:[%s0 + $0x3bc] sm:$0x1]
  %v255 = vld [vmem:[%s0 + $0x3c0] sm:$0xf]
  %v256 = vld [vmem:[%s0 + $0x3c4] sm:$0xf]
  %v257 = vld [vmem:[%s0 + $0x3c8] sm:$0x1]
  %v258 = vld [vmem:[%s0 + $0x3cc] sm:$0xf]
  %v259 = vld [vmem:[%s0 + $0x3d0] sm:$0xf]
  %v260 = vld [vmem:[%s0 + $0x3d4] sm:$0x1]
  %v261 = vld [vmem:[%s0 + $0x3d8] sm:$0xf]
  %v262 = vld [vmem:[%s0 + $0x3dc] sm:$0xf]
  %v263 = vld [vmem:[%s0 + $0x3e0] sm:$0x1]
  %v264 = vld [vmem:[%s0 + $0x3e4] sm:$0xf]
  %v265 = vld [vmem:[%s0 + $0x3e8] sm:$0xf]
  %v266 = vld [vmem:[%s0 + $0x3ec] sm:$0x1]
  %v267 = vld [vmem:[%s0 + $0x3f0] sm:$0xf]
  %v268 = vld [vmem:[%s0 + $0x3f4] sm:$0xf]
  %v269 = vld [vmem:[%s0 + $0x3f8] sm:$0x1]
  %v270 = vld [vmem:[%s0 + $0x3fc] sm:$0xf]
  %v271 = vld [vmem:[%s0 + $0x400] sm:$0xf]
  %v272 = vld [vmem:[%s0 + $0x404] sm:$0x1]
  %v273 = vld [vmem:[%s0 + $0x408] sm:$0xf]
  %v274 = vld [vmem:[%s0 + $0x40c] sm:$0xf]
  %v275 = vld [vmem:[%s0 + $0x410] sm:$0x1]
  %v276 = vld [vmem:[%s0 + $0x414] sm:$0xf]
  %v277 = vld [vmem:[%s0 + $0x418] sm:$0xf]
  %v278 = vld [vmem:[%s0 + $0x41c] sm:$0x1]
  %v279 = vld [vmem:[%s0 + $0x420] sm:$0xf]
  %v280 = vld [vmem:[%s0 + $0x424] sm:$0xf]
  %v281 = vld [vmem:[%s0 + $0x428] sm:$0x1]
  %v282 = vld [vmem:[%s0 + $0x42c] sm:$0xf]
  %v283 = vld [vmem:[%s0 + $0x430] sm:$0xf]
  %v284 = vld [vmem:[%s0 + $0x434] sm:$0x1]
  %v285 = vld [vmem:[%s0 + $0x438] sm:$0xf]
  %v286 = vld [vmem:[%s0 + $0x43c] sm:$0xf]
  %v287 = vld [vmem:[%s0 + $0x440] sm:$0x1]
  %v288 = vld [vmem:[%s0 + $0x444] sm:$0xf]
  %v289 = vld [vmem:[%s0 + $0x448] sm:$0xf]
  %v290 = vld [vmem:[%s0 + $0x44c] sm:$0x1]
  %v291 = vld [vmem:[%s0 + $0x450] sm:$0xf]
  %v292 = vld [vmem:[%s0 + $0x454] sm:$0xf]
  %v293 = vld [vmem:[%s0 + $0x458] sm:$0x1]
  %v294 = vld [vmem:[%s0 + $0x45c] sm:$0xf]
  %v295 = vld [vmem:[%s0 + $0x460] sm:$0xf]
  %v296 = vld [vmem:[%s0 + $0x464] sm:$0x1]
  %v297 = vld [vmem:[%s0 + $0x468] sm:$0xf]
  %v298 = vld [vmem:[%s0 + $0x46c] sm:$0xf]
  %v299 = vld [vmem:[%s0 + $0x470] sm:$0x1]
  %v300 = vld [vmem:[%s0 + $0x474] sm:$0xf]
  %v301 = vld [vmem:[%s0 + $0x478] sm:$0xf]
  %v302 = vld [vmem:[%s0 + $0x47c] sm:$0x1]
  %v303 = vld [vmem:[%s0 + $0x480] sm:$0xf]
  %v304 = vld [vmem:[%s0 + $0x484] sm:$0xf]
  %v305 = vld [vmem:[%s0 + $0x488] sm:$0x1]
  %v306 = vld [vmem:[%s0 + $0x48c] sm:$0xf]
  %v307 = vld [vmem:[%s0 + $0x490] sm:$0xf]
  %v308 = vld [vmem:[%s0 + $0x494] sm:$0x1]
  %v309 = vld [vmem:[%s0 + $0x498] sm:$0xf]
  %v310 = vld [vmem:[%s0 + $0x49c] sm:$0xf]
  %v311 = vld [vmem:[%s0 + $0x4a0] sm:$0x1]
  %v312 = vld [vmem:[%s0 + $0x4a4] sm:$0xf]
  %v313 = vld [vmem:[%s0 + $0x4a8] sm:$0xf]
  %v314 = vld [vmem:[%s0 + $0x4ac] sm:$0x1]
  %v315 = vld [vmem:[%s0 + $0x4b0] sm:$0xf]
  %v316 = vld [vmem:[%s0 + $0x4b4] sm:$0xf]
  %v317 = vld [vmem:[%s0 + $0x4b8] sm:$0x1]
  %v318 = vld [vmem:[%s0 + $0x4bc] sm:$0xf]
  %v319 = vld [vmem:[%s0 + $0x4c0] sm:$0xf]
  %v320 = vld [vmem:[%s0 + $0x4c4] sm:$0x1]
  %v321 = vld [vmem:[%s0 + $0x4c8] sm:$0xf]
  %v322 = vld [vmem:[%s0 + $0x4cc] sm:$0xf]
  %v323 = vld [vmem:[%s0 + $0x4d0] sm:$0x1]
  %v324 = vld [vmem:[%s0 + $0x4d4] sm:$0xf]
  %v325 = vld [vmem:[%s0 + $0x4d8] sm:$0xf]
  %v326 = vld [vmem:[%s0 + $0x4dc] sm:$0x1]
  %v327 = vld [vmem:[%s0 + $0x4e0] sm:$0xf]
  %v328 = vld [vmem:[%s0 + $0x4e4] sm:$0xf]
  %v329 = vld [vmem:[%s0 + $0x4e8] sm:$0x1]
  %v330 = vld [vmem:[%s0 + $0x4ec] sm:$0xf]
  %v331 = vld [vmem:[%s0 + $0x4f0] sm:$0xf]
  %v332 = vld [vmem:[%s0 + $0x4f4] sm:$0x1]
  %v333 = vld [vmem:[%s0 + $0x4f8] sm:$0xf]
  %v334 = vld [vmem:[%s0 + $0x4fc] sm:$0xf]
  %v335 = vld [vmem:[%s0 + $0x500] sm:$0x1]
  %v336 = vld [vmem:[%s0 + $0x504] sm:$0xf]
  %v337 = vld [vmem:[%s0 + $0x508] sm:$0xf]
  %v338 = vld [vmem:[%s0 + $0x50c] sm:$0x1]
  %vm339 = vsmask.f32 3328
  %vm340 = vsmask.f32 7440
  %vm341 = vmor %vm339, %vm340
  %v343 = vshrl.u32 %v15, 16
  %v345 = vrot.slane %v343, 4
  %v346 = vshll.u32 %v15, 16
  %v348 = vrot.slane %v346, 5
  %v349 = vor.u32 %v345, %v348
  %v350 = vrot.slane %v349, 4
  %v352 = vshll.u32 %v16, 16
  %v354 = vrot.slane %v352, 5
  %v355 = vsel %vm341, %v350, %v354
  %v356 = vshrl.u32 %v16, 16
  %v358 = vrot.slane %v356, 4
  %v359 = vor.u32 %v358, %v354
  %v360 = vrot.slane %v359, 4
  %v362 = vshll.u32 %v17, 16
  %v364 = vrot.slane %v362, 5
  %v365 = vsel %vm341, %v360, %v364
  %v367 = vshrl.u32 %v18, 16
  %v369 = vrot.slane %v367, 4
  %v370 = vshll.u32 %v18, 16
  %v372 = vrot.slane %v370, 5
  %v373 = vor.u32 %v369, %v372
  %v374 = vrot.slane %v373, 4
  %v376 = vshll.u32 %v19, 16
  %v378 = vrot.slane %v376, 5
  %v379 = vsel %vm341, %v374, %v378
  %v380 = vshrl.u32 %v19, 16
  %v382 = vrot.slane %v380, 4
  %v383 = vor.u32 %v382, %v378
  %v384 = vrot.slane %v383, 4
  %v386 = vshll.u32 %v20, 16
  %v388 = vrot.slane %v386, 5
  %v389 = vsel %vm341, %v384, %v388
  %v391 = vshrl.u32 %v21, 16
  %v393 = vrot.slane %v391, 4
  %v394 = vshll.u32 %v21, 16
  %v396 = vrot.slane %v394, 5
  %v397 = vor.u32 %v393, %v396
  %v398 = vrot.slane %v397, 4
  %v400 = vshll.u32 %v22, 16
  %v402 = vrot.slane %v400, 5
  %v403 = vsel %vm341, %v398, %v402
  %v404 = vshrl.u32 %v22, 16
  %v406 = vrot.slane %v404, 4
  %v407 = vor.u32 %v406, %v402
  %v408 = vrot.slane %v407, 4
  %v410 = vshll.u32 %v23, 16
  %v412 = vrot.slane %v410, 5
  %v413 = vsel %vm341, %v408, %v412
  %v415 = vshrl.u32 %v24, 16
  %v417 = vrot.slane %v415, 4
  %v418 = vshll.u32 %v24, 16
  %v420 = vrot.slane %v418, 5
  %v421 = vor.u32 %v417, %v420
  %v422 = vrot.slane %v421, 4
  %v424 = vshll.u32 %v25, 16
  %v426 = vrot.slane %v424, 5
  %v427 = vsel %vm341, %v422, %v426
  %v428 = vshrl.u32 %v25, 16
  %v430 = vrot.slane %v428, 4
  %v431 = vor.u32 %v430, %v426
  %v432 = vrot.slane %v431, 4
  %v434 = vshll.u32 %v26, 16
  %v436 = vrot.slane %v434, 5
  %v437 = vsel %vm341, %v432, %v436
  %v439 = vshrl.u32 %v27, 16
  %v441 = vrot.slane %v439, 4
  %v442 = vshll.u32 %v27, 16
  %v444 = vrot.slane %v442, 5
  %v445 = vor.u32 %v441, %v444
  %v446 = vrot.slane %v445, 4
  %v448 = vshll.u32 %v28, 16
  %v450 = vrot.slane %v448, 5
  %v451 = vsel %vm341, %v446, %v450
  %v452 = vshrl.u32 %v28, 16
  %v454 = vrot.slane %v452, 4
  %v455 = vor.u32 %v454, %v450
  %v456 = vrot.slane %v455, 4
  %v458 = vshll.u32 %v29, 16
  %v460 = vrot.slane %v458, 5
  %v461 = vsel %vm341, %v456, %v460
  %v463 = vshrl.u32 %v30, 16
  %v465 = vrot.slane %v463, 4
  %v466 = vshll.u32 %v30, 16
  %v468 = vrot.slane %v466, 5
  %v469 = vor.u32 %v465, %v468
  %v470 = vrot.slane %v469, 4
  %v472 = vshll.u32 %v31, 16
  %v474 = vrot.slane %v472, 5
  %v475 = vsel %vm341, %v470, %v474
  %v476 = vshrl.u32 %v31, 16
  %v478 = vrot.slane %v476, 4
  %v479 = vor.u32 %v478, %v474
  %v480 = vrot.slane %v479, 4
  %v482 = vshll.u32 %v32, 16
  %v484 = vrot.slane %v482, 5
  %v485 = vsel %vm341, %v480, %v484
  %v487 = vshrl.u32 %v33, 16
  %v489 = vrot.slane %v487, 4
  %v490 = vshll.u32 %v33, 16
  %v492 = vrot.slane %v490, 5
  %v493 = vor.u32 %v489, %v492
  %v494 = vrot.slane %v493, 4
  %v496 = vshll.u32 %v34, 16
  %v498 = vrot.slane %v496, 5
  %v499 = vsel %vm341, %v494, %v498
  %v500 = vshrl.u32 %v34, 16
  %v502 = vrot.slane %v500, 4
  %v503 = vor.u32 %v502, %v498
  %v504 = vrot.slane %v503, 4
  %v506 = vshll.u32 %v35, 16
  %v508 = vrot.slane %v506, 5
  %v509 = vsel %vm341, %v504, %v508
  %v511 = vshrl.u32 %v36, 16
  %v513 = vrot.slane %v511, 4
  %v514 = vshll.u32 %v36, 16
  %v516 = vrot.slane %v514, 5
  %v517 = vor.u32 %v513, %v516
  %v518 = vrot.slane %v517, 4
  %v520 = vshll.u32 %v37, 16
  %v522 = vrot.slane %v520, 5
  %v523 = vsel %vm341, %v518, %v522
  %v524 = vshrl.u32 %v37, 16
  %v526 = vrot.slane %v524, 4
  %v527 = vor.u32 %v526, %v522
  %v528 = vrot.slane %v527, 4
  %v530 = vshll.u32 %v38, 16
  %v532 = vrot.slane %v530, 5
  %v533 = vsel %vm341, %v528, %v532
  %v535 = vshrl.u32 %v39, 16
  %v537 = vrot.slane %v535, 4
  %v538 = vshll.u32 %v39, 16
  %v540 = vrot.slane %v538, 5
  %v541 = vor.u32 %v537, %v540
  %v542 = vrot.slane %v541, 4
  %v544 = vshll.u32 %v40, 16
  %v546 = vrot.slane %v544, 5
  %v547 = vsel %vm341, %v542, %v546
  %v548 = vshrl.u32 %v40, 16
  %v550 = vrot.slane %v548, 4
  %v551 = vor.u32 %v550, %v546
  %v552 = vrot.slane %v551, 4
  %v554 = vshll.u32 %v41, 16
  %v556 = vrot.slane %v554, 5
  %v557 = vsel %vm341, %v552, %v556
  %v559 = vshrl.u32 %v42, 16
  %v561 = vrot.slane %v559, 4
  %v562 = vshll.u32 %v42, 16
  %v564 = vrot.slane %v562, 5
  %v565 = vor.u32 %v561, %v564
  %v566 = vrot.slane %v565, 4
  %v568 = vshll.u32 %v43, 16
  %v570 = vrot.slane %v568, 5
  %v571 = vsel %vm341, %v566, %v570
  %v572 = vshrl.u32 %v43, 16
  %v574 = vrot.slane %v572, 4
  %v575 = vor.u32 %v574, %v570
  %v576 = vrot.slane %v575, 4
  %v578 = vshll.u32 %v44, 16
  %v580 = vrot.slane %v578, 5
  %v581 = vsel %vm341, %v576, %v580
  %v583 = vshrl.u32 %v45, 16
  %v585 = vrot.slane %v583, 4
  %v586 = vshll.u32 %v45, 16
  %v588 = vrot.slane %v586, 5
  %v589 = vor.u32 %v585, %v588
  %v590 = vrot.slane %v589, 4
  %v592 = vshll.u32 %v46, 16
  %v594 = vrot.slane %v592, 5
  %v595 = vsel %vm341, %v590, %v594
  %v596 = vshrl.u32 %v46, 16
  %v598 = vrot.slane %v596, 4
  %v599 = vor.u32 %v598, %v594
  %v600 = vrot.slane %v599, 4
  %v602 = vshll.u32 %v47, 16
  %v604 = vrot.slane %v602, 5
  %v605 = vsel %vm341, %v600, %v604
  %v607 = vshrl.u32 %v48, 16
  %v609 = vrot.slane %v607, 4
  %v610 = vshll.u32 %v48, 16
  %v612 = vrot.slane %v610, 5
  %v613 = vor.u32 %v609, %v612
  %v614 = vrot.slane %v613, 4
  %v616 = vshll.u32 %v49, 16
  %v618 = vrot.slane %v616, 5
  %v619 = vsel %vm341, %v614, %v618
  %v620 = vshrl.u32 %v49, 16
  %v622 = vrot.slane %v620, 4
  %v623 = vor.u32 %v622, %v618
  %v624 = vrot.slane %v623, 4
  %v626 = vshll.u32 %v50, 16
  %v628 = vrot.slane %v626, 5
  %v629 = vsel %vm341, %v624, %v628
  %v631 = vshrl.u32 %v51, 16
  %v633 = vrot.slane %v631, 4
  %v634 = vshll.u32 %v51, 16
  %v636 = vrot.slane %v634, 5
  %v637 = vor.u32 %v633, %v636
  %v638 = vrot.slane %v637, 4
  %v640 = vshll.u32 %v52, 16
  %v642 = vrot.slane %v640, 5
  %v643 = vsel %vm341, %v638, %v642
  %v644 = vshrl.u32 %v52, 16
  %v646 = vrot.slane %v644, 4
  %v647 = vor.u32 %v646, %v642
  %v648 = vrot.slane %v647, 4
  %v650 = vshll.u32 %v53, 16
  %v652 = vrot.slane %v650, 5
  %v653 = vsel %vm341, %v648, %v652
  %v655 = vshrl.u32 %v54, 16
  %v657 = vrot.slane %v655, 4
  %v658 = vshll.u32 %v54, 16
  %v660 = vrot.slane %v658, 5
  %v661 = vor.u32 %v657, %v660
  %v662 = vrot.slane %v661, 4
  %v664 = vshll.u32 %v55, 16
  %v666 = vrot.slane %v664, 5
  %v667 = vsel %vm341, %v662, %v666
  %v668 = vshrl.u32 %v55, 16
  %v670 = vrot.slane %v668, 4
  %v671 = vor.u32 %v670, %v666
  %v672 = vrot.slane %v671, 4
  %v674 = vshll.u32 %v56, 16
  %v676 = vrot.slane %v674, 5
  %v677 = vsel %vm341, %v672, %v676
  %v679 = vshrl.u32 %v57, 16
  %v681 = vrot.slane %v679, 4
  %v682 = vshll.u32 %v57, 16
  %v684 = vrot.slane %v682, 5
  %v685 = vor.u32 %v681, %v684
  %v686 = vrot.slane %v685, 4
  %v688 = vshll.u32 %v58, 16
  %v690 = vrot.slane %v688, 5
  %v691 = vsel %vm341, %v686, %v690
  %v692 = vshrl.u32 %v58, 16
  %v694 = vrot.slane %v692, 4
  %v695 = vor.u32 %v694, %v690
  %v696 = vrot.slane %v695, 4
  %v698 = vshll.u32 %v59, 16
  %v700 = vrot.slane %v698, 5
  %v701 = vsel %vm341, %v696, %v700
  %v703 = vshrl.u32 %v60, 16
  %v705 = vrot.slane %v703, 4
  %v706 = vshll.u32 %v60, 16
  %v708 = vrot.slane %v706, 5
  %v709 = vor.u32 %v705, %v708
  %v710 = vrot.slane %v709, 4
  %v712 = vshll.u32 %v61, 16
  %v714 = vrot.slane %v712, 5
  %v715 = vsel %vm341, %v710, %v714
  %v716 = vshrl.u32 %v61, 16
  %v718 = vrot.slane %v716, 4
  %v719 = vor.u32 %v718, %v714
  %v720 = vrot.slane %v719, 4
  %v722 = vshll.u32 %v62, 16
  %v724 = vrot.slane %v722, 5
  %v725 = vsel %vm341, %v720, %v724
  %v727 = vshrl.u32 %v69, 16
  %v729 = vrot.slane %v727, 4
  %v730 = vshll.u32 %v69, 16
  %v732 = vrot.slane %v730, 5
  %v733 = vor.u32 %v729, %v732
  %v734 = vrot.slane %v733, 4
  %v736 = vshll.u32 %v70, 16
  %v738 = vrot.slane %v736, 5
  %v739 = vsel %vm341, %v734, %v738
  %v740 = vshrl.u32 %v70, 16
  %v742 = vrot.slane %v740, 4
  %v743 = vor.u32 %v742, %v738
  %v744 = vrot.slane %v743, 4
  %v746 = vshll.u32 %v71, 16
  %v748 = vrot.slane %v746, 5
  %v749 = vsel %vm341, %v744, %v748
  %v751 = vshrl.u32 %v72, 16
  %v753 = vrot.slane %v751, 4
  %v754 = vshll.u32 %v72, 16
  %v756 = vrot.slane %v754, 5
  %v757 = vor.u32 %v753, %v756
  %v758 = vrot.slane %v757, 4
  %v760 = vshll.u32 %v73, 16
  %v762 = vrot.slane %v760, 5
  %v763 = vsel %vm341, %v758, %v762
  %v764 = vshrl.u32 %v73, 16
  %v766 = vrot.slane %v764, 4
  %v767 = vor.u32 %v766, %v762
  %v768 = vrot.slane %v767, 4
  %v770 = vshll.u32 %v74, 16
  %v772 = vrot.slane %v770, 5
  %v773 = vsel %vm341, %v768, %v772
  %v775 = vshrl.u32 %v75, 16
  %v777 = vrot.slane %v775, 4
  %v778 = vshll.u32 %v75, 16
  %v780 = vrot.slane %v778, 5
  %v781 = vor.u32 %v777, %v780
  %v782 = vrot.slane %v781, 4
  %v784 = vshll.u32 %v76, 16
  %v786 = vrot.slane %v784, 5
  %v787 = vsel %vm341, %v782, %v786
  %v788 = vshrl.u32 %v76, 16
  %v790 = vrot.slane %v788, 4
  %v791 = vor.u32 %v790, %v786
  %v792 = vrot.slane %v791, 4
  %v794 = vshll.u32 %v77, 16
  %v796 = vrot.slane %v794, 5
  %v797 = vsel %vm341, %v792, %v796
  %v799 = vshrl.u32 %v78, 16
  %v801 = vrot.slane %v799, 4
  %v802 = vshll.u32 %v78, 16
  %v804 = vrot.slane %v802, 5
  %v805 = vor.u32 %v801, %v804
  %v806 = vrot.slane %v805, 4
  %v808 = vshll.u32 %v79, 16
  %v810 = vrot.slane %v808, 5
  %v811 = vsel %vm341, %v806, %v810
  %v812 = vshrl.u32 %v79, 16
  %v814 = vrot.slane %v812, 4
  %v815 = vor.u32 %v814, %v810
  %v816 = vrot.slane %v815, 4
  %v818 = vshll.u32 %v80, 16
  %v820 = vrot.slane %v818, 5
  %v821 = vsel %vm341, %v816, %v820
  %v823 = vshrl.u32 %v81, 16
  %v825 = vrot.slane %v823, 4
  %v826 = vshll.u32 %v81, 16
  %v828 = vrot.slane %v826, 5
  %v829 = vor.u32 %v825, %v828
  %v830 = vrot.slane %v829, 4
  %v832 = vshll.u32 %v82, 16
  %v834 = vrot.slane %v832, 5
  %v835 = vsel %vm341, %v830, %v834
  %v836 = vshrl.u32 %v82, 16
  %v838 = vrot.slane %v836, 4
  %v839 = vor.u32 %v838, %v834
  %v840 = vrot.slane %v839, 4
  %v842 = vshll.u32 %v83, 16
  %v844 = vrot.slane %v842, 5
  %v845 = vsel %vm341, %v840, %v844
  %v847 = vshrl.u32 %v84, 16
  %v849 = vrot.slane %v847, 4
  %v850 = vshll.u32 %v84, 16
  %v852 = vrot.slane %v850, 5
  %v853 = vor.u32 %v849, %v852
  %v854 = vrot.slane %v853, 4
  %v856 = vshll.u32 %v85, 16
  %v858 = vrot.slane %v856, 5
  %v859 = vsel %vm341, %v854, %v858
  %v860 = vshrl.u32 %v85, 16
  %v862 = vrot.slane %v860, 4
  %v863 = vor.u32 %v862, %v858
  %v864 = vrot.slane %v863, 4
  %v866 = vshll.u32 %v86, 16
  %v868 = vrot.slane %v866, 5
  %v869 = vsel %vm341, %v864, %v868
  %v871 = vshrl.u32 %v87, 16
  %v873 = vrot.slane %v871, 4
  %v874 = vshll.u32 %v87, 16
  %v876 = vrot.slane %v874, 5
  %v877 = vor.u32 %v873, %v876
  %v878 = vrot.slane %v877, 4
  %v880 = vshll.u32 %v88, 16
  %v882 = vrot.slane %v880, 5
  %v883 = vsel %vm341, %v878, %v882
  %v884 = vshrl.u32 %v88, 16
  %v886 = vrot.slane %v884, 4
  %v887 = vor.u32 %v886, %v882
  %v888 = vrot.slane %v887, 4
  %v890 = vshll.u32 %v89, 16
  %v892 = vrot.slane %v890, 5
  %v893 = vsel %vm341, %v888, %v892
  %v895 = vshrl.u32 %v90, 16
  %v897 = vrot.slane %v895, 4
  %v898 = vshll.u32 %v90, 16
  %v900 = vrot.slane %v898, 5
  %v901 = vor.u32 %v897, %v900
  %v902 = vrot.slane %v901, 4
  %v904 = vshll.u32 %v91, 16
  %v906 = vrot.slane %v904, 5
  %v907 = vsel %vm341, %v902, %v906
  %v908 = vshrl.u32 %v91, 16
  %v910 = vrot.slane %v908, 4
  %v911 = vor.u32 %v910, %v906
  %v912 = vrot.slane %v911, 4
  %v914 = vshll.u32 %v92, 16
  %v916 = vrot.slane %v914, 5
  %v917 = vsel %vm341, %v912, %v916
  %v919 = vshrl.u32 %v93, 16
  %v921 = vrot.slane %v919, 4
  %v922 = vshll.u32 %v93, 16
  %v924 = vrot.slane %v922, 5
  %v925 = vor.u32 %v921, %v924
  %v926 = vrot.slane %v925, 4
  %v928 = vshll.u32 %v94, 16
  %v930 = vrot.slane %v928, 5
  %v931 = vsel %vm341, %v926, %v930
  %v932 = vshrl.u32 %v94, 16
  %v934 = vrot.slane %v932, 4
  %v935 = vor.u32 %v934, %v930
  %v936 = vrot.slane %v935, 4
  %v938 = vshll.u32 %v95, 16
  %v940 = vrot.slane %v938, 5
  %v941 = vsel %vm341, %v936, %v940
  %v943 = vshrl.u32 %v96, 16
  %v945 = vrot.slane %v943, 4
  %v946 = vshll.u32 %v96, 16
  %v948 = vrot.slane %v946, 5
  %v949 = vor.u32 %v945, %v948
  %v950 = vrot.slane %v949, 4
  %v952 = vshll.u32 %v97, 16
  %v954 = vrot.slane %v952, 5
  %v955 = vsel %vm341, %v950, %v954
  %v956 = vshrl.u32 %v97, 16
  %v958 = vrot.slane %v956, 4
  %v959 = vor.u32 %v958, %v954
  %v960 = vrot.slane %v959, 4
  %v962 = vshll.u32 %v98, 16
  %v964 = vrot.slane %v962, 5
  %v965 = vsel %vm341, %v960, %v964
  %v967 = vshrl.u32 %v99, 16
  %v969 = vrot.slane %v967, 4
  %v970 = vshll.u32 %v99, 16
  %v972 = vrot.slane %v970, 5
  %v973 = vor.u32 %v969, %v972
  %v974 = vrot.slane %v973, 4
  %v976 = vshll.u32 %v100, 16
  %v978 = vrot.slane %v976, 5
  %v979 = vsel %vm341, %v974, %v978
  %v980 = vshrl.u32 %v100, 16
  %v982 = vrot.slane %v980, 4
  %v983 = vor.u32 %v982, %v978
  %v984 = vrot.slane %v983, 4
  %v986 = vshll.u32 %v101, 16
  %v988 = vrot.slane %v986, 5
  %v989 = vsel %vm341, %v984, %v988
  %v991 = vshrl.u32 %v102, 16
  %v993 = vrot.slane %v991, 4
  %v994 = vshll.u32 %v102, 16
  %v996 = vrot.slane %v994, 5
  %v997 = vor.u32 %v993, %v996
  %v998 = vrot.slane %v997, 4
  %v1000 = vshll.u32 %v103, 16
  %v1002 = vrot.slane %v1000, 5
  %v1003 = vsel %vm341, %v998, %v1002
  %v1004 = vshrl.u32 %v103, 16
  %v1006 = vrot.slane %v1004, 4
  %v1007 = vor.u32 %v1006, %v1002
  %v1008 = vrot.slane %v1007, 4
  %v1010 = vshll.u32 %v104, 16
  %v1012 = vrot.slane %v1010, 5
  %v1013 = vsel %vm341, %v1008, %v1012
  %v1015 = vshrl.u32 %v105, 16
  %v1017 = vrot.slane %v1015, 4
  %v1018 = vshll.u32 %v105, 16
  %v1020 = vrot.slane %v1018, 5
  %v1021 = vor.u32 %v1017, %v1020
  %v1022 = vrot.slane %v1021, 4
  %v1024 = vshll.u32 %v106, 16
  %v1026 = vrot.slane %v1024, 5
  %v1027 = vsel %vm341, %v1022, %v1026
  %v1028 = vshrl.u32 %v106, 16
  %v1030 = vrot.slane %v1028, 4
  %v1031 = vor.u32 %v1030, %v1026
  %v1032 = vrot.slane %v1031, 4
  %v1034 = vshll.u32 %v107, 16
  %v1036 = vrot.slane %v1034, 5
  %v1037 = vsel %vm341, %v1032, %v1036
  %v1039 = vshrl.u32 %v108, 16
  %v1041 = vrot.slane %v1039, 4
  %v1042 = vshll.u32 %v108, 16
  %v1044 = vrot.slane %v1042, 5
  %v1045 = vor.u32 %v1041, %v1044
  %v1046 = vrot.slane %v1045, 4
  %v1048 = vshll.u32 %v109, 16
  %v1050 = vrot.slane %v1048, 5
  %v1051 = vsel %vm341, %v1046, %v1050
  %v1052 = vshrl.u32 %v109, 16
  %v1054 = vrot.slane %v1052, 4
  %v1055 = vor.u32 %v1054, %v1050
  %v1056 = vrot.slane %v1055, 4
  %v1058 = vshll.u32 %v110, 16
  %v1060 = vrot.slane %v1058, 5
  %v1061 = vsel %vm341, %v1056, %v1060
  %v1063 = vshrl.u32 %v111, 16
  %v1065 = vrot.slane %v1063, 4
  %v1066 = vshll.u32 %v111, 16
  %v1068 = vrot.slane %v1066, 5
  %v1069 = vor.u32 %v1065, %v1068
  %v1070 = vrot.slane %v1069, 4
  %v1072 = vshll.u32 %v112, 16
  %v1074 = vrot.slane %v1072, 5
  %v1075 = vsel %vm341, %v1070, %v1074
  %v1076 = vshrl.u32 %v112, 16
  %v1078 = vrot.slane %v1076, 4
  %v1079 = vor.u32 %v1078, %v1074
  %v1080 = vrot.slane %v1079, 4
  %v1082 = vshll.u32 %v113, 16
  %v1084 = vrot.slane %v1082, 5
  %v1085 = vsel %vm341, %v1080, %v1084
  %v1087 = vshrl.u32 %v114, 16
  %v1089 = vrot.slane %v1087, 4
  %v1090 = vshll.u32 %v114, 16
  %v1092 = vrot.slane %v1090, 5
  %v1093 = vor.u32 %v1089, %v1092
  %v1094 = vrot.slane %v1093, 4
  %v1096 = vshll.u32 %v115, 16
  %v1098 = vrot.slane %v1096, 5
  %v1099 = vsel %vm341, %v1094, %v1098
  %v1100 = vshrl.u32 %v115, 16
  %v1102 = vrot.slane %v1100, 4
  %v1103 = vor.u32 %v1102, %v1098
  %v1104 = vrot.slane %v1103, 4
  %v1106 = vshll.u32 %v116, 16
  %v1108 = vrot.slane %v1106, 5
  %v1109 = vsel %vm341, %v1104, %v1108
  %v1111 = vshrl.u32 %v123, 16
  %v1113 = vrot.slane %v1111, 4
  %v1114 = vshll.u32 %v123, 16
  %v1116 = vrot.slane %v1114, 5
  %v1117 = vor.u32 %v1113, %v1116
  %v1118 = vrot.slane %v1117, 4
  %v1120 = vshll.u32 %v124, 16
  %v1122 = vrot.slane %v1120, 5
  %v1123 = vsel %vm341, %v1118, %v1122
  %v1124 = vshrl.u32 %v124, 16
  %v1126 = vrot.slane %v1124, 4
  %v1127 = vor.u32 %v1126, %v1122
  %v1128 = vrot.slane %v1127, 4
  %v1130 = vshll.u32 %v125, 16
  %v1132 = vrot.slane %v1130, 5
  %v1133 = vsel %vm341, %v1128, %v1132
  %v1135 = vshrl.u32 %v126, 16
  %v1137 = vrot.slane %v1135, 4
  %v1138 = vshll.u32 %v126, 16
  %v1140 = vrot.slane %v1138, 5
  %v1141 = vor.u32 %v1137, %v1140
  %v1142 = vrot.slane %v1141, 4
  %v1144 = vshll.u32 %v127, 16
  %v1146 = vrot.slane %v1144, 5
  %v1147 = vsel %vm341, %v1142, %v1146
  %v1148 = vshrl.u32 %v127, 16
  %v1150 = vrot.slane %v1148, 4
  %v1151 = vor.u32 %v1150, %v1146
  %v1152 = vrot.slane %v1151, 4
  %v1154 = vshll.u32 %v128, 16
  %v1156 = vrot.slane %v1154, 5
  %v1157 = vsel %vm341, %v1152, %v1156
  %v1159 = vshrl.u32 %v129, 16
  %v1161 = vrot.slane %v1159, 4
  %v1162 = vshll.u32 %v129, 16
  %v1164 = vrot.slane %v1162, 5
  %v1165 = vor.u32 %v1161, %v1164
  %v1166 = vrot.slane %v1165, 4
  %v1168 = vshll.u32 %v130, 16
  %v1170 = vrot.slane %v1168, 5
  %v1171 = vsel %vm341, %v1166, %v1170
  %v1172 = vshrl.u32 %v130, 16
  %v1174 = vrot.slane %v1172, 4
  %v1175 = vor.u32 %v1174, %v1170
  %v1176 = vrot.slane %v1175, 4
  %v1178 = vshll.u32 %v131, 16
  %v1180 = vrot.slane %v1178, 5
  %v1181 = vsel %vm341, %v1176, %v1180
  %v1183 = vshrl.u32 %v132, 16
  %v1185 = vrot.slane %v1183, 4
  %v1186 = vshll.u32 %v132, 16
  %v1188 = vrot.slane %v1186, 5
  %v1189 = vor.u32 %v1185, %v1188
  %v1190 = vrot.slane %v1189, 4
  %v1192 = vshll.u32 %v133, 16
  %v1194 = vrot.slane %v1192, 5
  %v1195 = vsel %vm341, %v1190, %v1194
  %v1196 = vshrl.u32 %v133, 16
  %v1198 = vrot.slane %v1196, 4
  %v1199 = vor.u32 %v1198, %v1194
  %v1200 = vrot.slane %v1199, 4
  %v1202 = vshll.u32 %v134, 16
  %v1204 = vrot.slane %v1202, 5
  %v1205 = vsel %vm341, %v1200, %v1204
  %v1207 = vshrl.u32 %v135, 16
  %v1209 = vrot.slane %v1207, 4
  %v1210 = vshll.u32 %v135, 16
  %v1212 = vrot.slane %v1210, 5
  %v1213 = vor.u32 %v1209, %v1212
  %v1214 = vrot.slane %v1213, 4
  %v1216 = vshll.u32 %v136, 16
  %v1218 = vrot.slane %v1216, 5
  %v1219 = vsel %vm341, %v1214, %v1218
  %v1220 = vshrl.u32 %v136, 16
  %v1222 = vrot.slane %v1220, 4
  %v1223 = vor.u32 %v1222, %v1218
  %v1224 = vrot.slane %v1223, 4
  %v1226 = vshll.u32 %v137, 16
  %v1228 = vrot.slane %v1226, 5
  %v1229 = vsel %vm341, %v1224, %v1228
  %v1231 = vshrl.u32 %v138, 16
  %v1233 = vrot.slane %v1231, 4
  %v1234 = vshll.u32 %v138, 16
  %v1236 = vrot.slane %v1234, 5
  %v1237 = vor.u32 %v1233, %v1236
  %v1238 = vrot.slane %v1237, 4
  %v1240 = vshll.u32 %v139, 16
  %v1242 = vrot.slane %v1240, 5
  %v1243 = vsel %vm341, %v1238, %v1242
  %v1244 = vshrl.u32 %v139, 16
  %v1246 = vrot.slane %v1244, 4
  %v1247 = vor.u32 %v1246, %v1242
  %v1248 = vrot.slane %v1247, 4
  %v1250 = vshll.u32 %v140, 16
  %v1252 = vrot.slane %v1250, 5
  %v1253 = vsel %vm341, %v1248, %v1252
  %v1255 = vshrl.u32 %v141, 16
  %v1257 = vrot.slane %v1255, 4
  %v1258 = vshll.u32 %v141, 16
  %v1260 = vrot.slane %v1258, 5
  %v1261 = vor.u32 %v1257, %v1260
  %v1262 = vrot.slane %v1261, 4
  %v1264 = vshll.u32 %v142, 16
  %v1266 = vrot.slane %v1264, 5
  %v1267 = vsel %vm341, %v1262, %v1266
  %v1268 = vshrl.u32 %v142, 16
  %v1270 = vrot.slane %v1268, 4
  %v1271 = vor.u32 %v1270, %v1266
  %v1272 = vrot.slane %v1271, 4
  %v1274 = vshll.u32 %v143, 16
  %v1276 = vrot.slane %v1274, 5
  %v1277 = vsel %vm341, %v1272, %v1276
  %v1279 = vshrl.u32 %v144, 16
  %v1281 = vrot.slane %v1279, 4
  %v1282 = vshll.u32 %v144, 16
  %v1284 = vrot.slane %v1282, 5
  %v1285 = vor.u32 %v1281, %v1284
  %v1286 = vrot.slane %v1285, 4
  %v1288 = vshll.u32 %v145, 16
  %v1290 = vrot.slane %v1288, 5
  %v1291 = vsel %vm341, %v1286, %v1290
  %v1292 = vshrl.u32 %v145, 16
  %v1294 = vrot.slane %v1292, 4
  %v1295 = vor.u32 %v1294, %v1290
  %v1296 = vrot.slane %v1295, 4
  %v1298 = vshll.u32 %v146, 16
  %v1300 = vrot.slane %v1298, 5
  %v1301 = vsel %vm341, %v1296, %v1300
  %v1303 = vshrl.u32 %v147, 16
  %v1305 = vrot.slane %v1303, 4
  %v1306 = vshll.u32 %v147, 16
  %v1308 = vrot.slane %v1306, 5
  %v1309 = vor.u32 %v1305, %v1308
  %v1310 = vrot.slane %v1309, 4
  %v1312 = vshll.u32 %v148, 16
  %v1314 = vrot.slane %v1312, 5
  %v1315 = vsel %vm341, %v1310, %v1314
  %v1316 = vshrl.u32 %v148, 16
  %v1318 = vrot.slane %v1316, 4
  %v1319 = vor.u32 %v1318, %v1314
  %v1320 = vrot.slane %v1319, 4
  %v1322 = vshll.u32 %v149, 16
  %v1324 = vrot.slane %v1322, 5
  %v1325 = vsel %vm341, %v1320, %v1324
  %v1327 = vshrl.u32 %v150, 16
  %v1329 = vrot.slane %v1327, 4
  %v1330 = vshll.u32 %v150, 16
  %v1332 = vrot.slane %v1330, 5
  %v1333 = vor.u32 %v1329, %v1332
  %v1334 = vrot.slane %v1333, 4
  %v1336 = vshll.u32 %v151, 16
  %v1338 = vrot.slane %v1336, 5
  %v1339 = vsel %vm341, %v1334, %v1338
  %v1340 = vshrl.u32 %v151, 16
  %v1342 = vrot.slane %v1340, 4
  %v1343 = vor.u32 %v1342, %v1338
  %v1344 = vrot.slane %v1343, 4
  %v1346 = vshll.u32 %v152, 16
  %v1348 = vrot.slane %v1346, 5
  %v1349 = vsel %vm341, %v1344, %v1348
  %v1351 = vshrl.u32 %v153, 16
  %v1353 = vrot.slane %v1351, 4
  %v1354 = vshll.u32 %v153, 16
  %v1356 = vrot.slane %v1354, 5
  %v1357 = vor.u32 %v1353, %v1356
  %v1358 = vrot.slane %v1357, 4
  %v1360 = vshll.u32 %v154, 16
  %v1362 = vrot.slane %v1360, 5
  %v1363 = vsel %vm341, %v1358, %v1362
  %v1364 = vshrl.u32 %v154, 16
  %v1366 = vrot.slane %v1364, 4
  %v1367 = vor.u32 %v1366, %v1362
  %v1368 = vrot.slane %v1367, 4
  %v1370 = vshll.u32 %v155, 16
  %v1372 = vrot.slane %v1370, 5
  %v1373 = vsel %vm341, %v1368, %v1372
  %v1375 = vshrl.u32 %v156, 16
  %v1377 = vrot.slane %v1375, 4
  %v1378 = vshll.u32 %v156, 16
  %v1380 = vrot.slane %v1378, 5
  %v1381 = vor.u32 %v1377, %v1380
  %v1382 = vrot.slane %v1381, 4
  %v1384 = vshll.u32 %v157, 16
  %v1386 = vrot.slane %v1384, 5
  %v1387 = vsel %vm341, %v1382, %v1386
  %v1388 = vshrl.u32 %v157, 16
  %v1390 = vrot.slane %v1388, 4
  %v1391 = vor.u32 %v1390, %v1386
  %v1392 = vrot.slane %v1391, 4
  %v1394 = vshll.u32 %v158, 16
  %v1396 = vrot.slane %v1394, 5
  %v1397 = vsel %vm341, %v1392, %v1396
  %v1399 = vshrl.u32 %v159, 16
  %v1401 = vrot.slane %v1399, 4
  %v1402 = vshll.u32 %v159, 16
  %v1404 = vrot.slane %v1402, 5
  %v1405 = vor.u32 %v1401, %v1404
  %v1406 = vrot.slane %v1405, 4
  %v1408 = vshll.u32 %v160, 16
  %v1410 = vrot.slane %v1408, 5
  %v1411 = vsel %vm341, %v1406, %v1410
  %v1412 = vshrl.u32 %v160, 16
  %v1414 = vrot.slane %v1412, 4
  %v1415 = vor.u32 %v1414, %v1410
  %v1416 = vrot.slane %v1415, 4
  %v1418 = vshll.u32 %v161, 16
  %v1420 = vrot.slane %v1418, 5
  %v1421 = vsel %vm341, %v1416, %v1420
  %v1423 = vshrl.u32 %v162, 16
  %v1425 = vrot.slane %v1423, 4
  %v1426 = vshll.u32 %v162, 16
  %v1428 = vrot.slane %v1426, 5
  %v1429 = vor.u32 %v1425, %v1428
  %v1430 = vrot.slane %v1429, 4
  %v1432 = vshll.u32 %v163, 16
  %v1434 = vrot.slane %v1432, 5
  %v1435 = vsel %vm341, %v1430, %v1434
  %v1436 = vshrl.u32 %v163, 16
  %v1438 = vrot.slane %v1436, 4
  %v1439 = vor.u32 %v1438, %v1434
  %v1440 = vrot.slane %v1439, 4
  %v1442 = vshll.u32 %v164, 16
  %v1444 = vrot.slane %v1442, 5
  %v1445 = vsel %vm341, %v1440, %v1444
  %v1447 = vshrl.u32 %v165, 16
  %v1449 = vrot.slane %v1447, 4
  %v1450 = vshll.u32 %v165, 16
  %v1452 = vrot.slane %v1450, 5
  %v1453 = vor.u32 %v1449, %v1452
  %v1454 = vrot.slane %v1453, 4
  %v1456 = vshll.u32 %v166, 16
  %v1458 = vrot.slane %v1456, 5
  %v1459 = vsel %vm341, %v1454, %v1458
  %v1460 = vshrl.u32 %v166, 16
  %v1462 = vrot.slane %v1460, 4
  %v1463 = vor.u32 %v1462, %v1458
  %v1464 = vrot.slane %v1463, 4
  %v1466 = vshll.u32 %v167, 16
  %v1468 = vrot.slane %v1466, 5
  %v1469 = vsel %vm341, %v1464, %v1468
  %v1471 = vshrl.u32 %v168, 16
  %v1473 = vrot.slane %v1471, 4
  %v1474 = vshll.u32 %v168, 16
  %v1476 = vrot.slane %v1474, 5
  %v1477 = vor.u32 %v1473, %v1476
  %v1478 = vrot.slane %v1477, 4
  %v1480 = vshll.u32 %v169, 16
  %v1482 = vrot.slane %v1480, 5
  %v1483 = vsel %vm341, %v1478, %v1482
  %v1484 = vshrl.u32 %v169, 16
  %v1486 = vrot.slane %v1484, 4
  %v1487 = vor.u32 %v1486, %v1482
  %v1488 = vrot.slane %v1487, 4
  %v1490 = vshll.u32 %v170, 16
  %v1492 = vrot.slane %v1490, 5
  %v1493 = vsel %vm341, %v1488, %v1492
  %v1495 = vshrl.u32 %v177, 16
  %v1497 = vrot.slane %v1495, 4
  %v1498 = vshll.u32 %v177, 16
  %v1500 = vrot.slane %v1498, 5
  %v1501 = vor.u32 %v1497, %v1500
  %v1502 = vrot.slane %v1501, 4
  %v1504 = vshll.u32 %v178, 16
  %v1506 = vrot.slane %v1504, 5
  %v1507 = vsel %vm341, %v1502, %v1506
  %v1508 = vshrl.u32 %v178, 16
  %v1510 = vrot.slane %v1508, 4
  %v1511 = vor.u32 %v1510, %v1506
  %v1512 = vrot.slane %v1511, 4
  %v1514 = vshll.u32 %v179, 16
  %v1516 = vrot.slane %v1514, 5
  %v1517 = vsel %vm341, %v1512, %v1516
  %v1519 = vshrl.u32 %v180, 16
  %v1521 = vrot.slane %v1519, 4
  %v1522 = vshll.u32 %v180, 16
  %v1524 = vrot.slane %v1522, 5
  %v1525 = vor.u32 %v1521, %v1524
  %v1526 = vrot.slane %v1525, 4
  %v1528 = vshll.u32 %v181, 16
  %v1530 = vrot.slane %v1528, 5
  %v1531 = vsel %vm341, %v1526, %v1530
  %v1532 = vshrl.u32 %v181, 16
  %v1534 = vrot.slane %v1532, 4
  %v1535 = vor.u32 %v1534, %v1530
  %v1536 = vrot.slane %v1535, 4
  %v1538 = vshll.u32 %v182, 16
  %v1540 = vrot.slane %v1538, 5
  %v1541 = vsel %vm341, %v1536, %v1540
  %v1543 = vshrl.u32 %v183, 16
  %v1545 = vrot.slane %v1543, 4
  %v1546 = vshll.u32 %v183, 16
  %v1548 = vrot.slane %v1546, 5
  %v1549 = vor.u32 %v1545, %v1548
  %v1550 = vrot.slane %v1549, 4
  %v1552 = vshll.u32 %v184, 16
  %v1554 = vrot.slane %v1552, 5
  %v1555 = vsel %vm341, %v1550, %v1554
  %v1556 = vshrl.u32 %v184, 16
  %v1558 = vrot.slane %v1556, 4
  %v1559 = vor.u32 %v1558, %v1554
  %v1560 = vrot.slane %v1559, 4
  %v1562 = vshll.u32 %v185, 16
  %v1564 = vrot.slane %v1562, 5
  %v1565 = vsel %vm341, %v1560, %v1564
  %v1567 = vshrl.u32 %v186, 16
  %v1569 = vrot.slane %v1567, 4
  %v1570 = vshll.u32 %v186, 16
  %v1572 = vrot.slane %v1570, 5
  %v1573 = vor.u32 %v1569, %v1572
  %v1574 = vrot.slane %v1573, 4
  %v1576 = vshll.u32 %v187, 16
  %v1578 = vrot.slane %v1576, 5
  %v1579 = vsel %vm341, %v1574, %v1578
  %v1580 = vshrl.u32 %v187, 16
  %v1582 = vrot.slane %v1580, 4
  %v1583 = vor.u32 %v1582, %v1578
  %v1584 = vrot.slane %v1583, 4
  %v1586 = vshll.u32 %v188, 16
  %v1588 = vrot.slane %v1586, 5
  %v1589 = vsel %vm341, %v1584, %v1588
  %v1591 = vshrl.u32 %v189, 16
  %v1593 = vrot.slane %v1591, 4
  %v1594 = vshll.u32 %v189, 16
  %v1596 = vrot.slane %v1594, 5
  %v1597 = vor.u32 %v1593, %v1596
  %v1598 = vrot.slane %v1597, 4
  %v1600 = vshll.u32 %v190, 16
  %v1602 = vrot.slane %v1600, 5
  %v1603 = vsel %vm341, %v1598, %v1602
  %v1604 = vshrl.u32 %v190, 16
  %v1606 = vrot.slane %v1604, 4
  %v1607 = vor.u32 %v1606, %v1602
  %v1608 = vrot.slane %v1607, 4
  %v1610 = vshll.u32 %v191, 16
  %v1612 = vrot.slane %v1610, 5
  %v1613 = vsel %vm341, %v1608, %v1612
  %v1615 = vshrl.u32 %v192, 16
  %v1617 = vrot.slane %v1615, 4
  %v1618 = vshll.u32 %v192, 16
  %v1620 = vrot.slane %v1618, 5
  %v1621 = vor.u32 %v1617, %v1620
  %v1622 = vrot.slane %v1621, 4
  %v1624 = vshll.u32 %v193, 16
  %v1626 = vrot.slane %v1624, 5
  %v1627 = vsel %vm341, %v1622, %v1626
  %v1628 = vshrl.u32 %v193, 16
  %v1630 = vrot.slane %v1628, 4
  %v1631 = vor.u32 %v1630, %v1626
  %v1632 = vrot.slane %v1631, 4
  %v1634 = vshll.u32 %v194, 16
  %v1636 = vrot.slane %v1634, 5
  %v1637 = vsel %vm341, %v1632, %v1636
  %v1639 = vshrl.u32 %v195, 16
  %v1641 = vrot.slane %v1639, 4
  %v1642 = vshll.u32 %v195, 16
  %v1644 = vrot.slane %v1642, 5
  %v1645 = vor.u32 %v1641, %v1644
  %v1646 = vrot.slane %v1645, 4
  %v1648 = vshll.u32 %v196, 16
  %v1650 = vrot.slane %v1648, 5
  %v1651 = vsel %vm341, %v1646, %v1650
  %v1652 = vshrl.u32 %v196, 16
  %v1654 = vrot.slane %v1652, 4
  %v1655 = vor.u32 %v1654, %v1650
  %v1656 = vrot.slane %v1655, 4
  %v1658 = vshll.u32 %v197, 16
  %v1660 = vrot.slane %v1658, 5
  %v1661 = vsel %vm341, %v1656, %v1660
  %v1663 = vshrl.u32 %v198, 16
  %v1665 = vrot.slane %v1663, 4
  %v1666 = vshll.u32 %v198, 16
  %v1668 = vrot.slane %v1666, 5
  %v1669 = vor.u32 %v1665, %v1668
  %v1670 = vrot.slane %v1669, 4
  %v1672 = vshll.u32 %v199, 16
  %v1674 = vrot.slane %v1672, 5
  %v1675 = vsel %vm341, %v1670, %v1674
  %v1676 = vshrl.u32 %v199, 16
  %v1678 = vrot.slane %v1676, 4
  %v1679 = vor.u32 %v1678, %v1674
  %v1680 = vrot.slane %v1679, 4
  %v1682 = vshll.u32 %v200, 16
  %v1684 = vrot.slane %v1682, 5
  %v1685 = vsel %vm341, %v1680, %v1684
  %v1687 = vshrl.u32 %v201, 16
  %v1689 = vrot.slane %v1687, 4
  %v1690 = vshll.u32 %v201, 16
  %v1692 = vrot.slane %v1690, 5
  %v1693 = vor.u32 %v1689, %v1692
  %v1694 = vrot.slane %v1693, 4
  %v1696 = vshll.u32 %v202, 16
  %v1698 = vrot.slane %v1696, 5
  %v1699 = vsel %vm341, %v1694, %v1698
  %v1700 = vshrl.u32 %v202, 16
  %v1702 = vrot.slane %v1700, 4
  %v1703 = vor.u32 %v1702, %v1698
  %v1704 = vrot.slane %v1703, 4
  %v1706 = vshll.u32 %v203, 16
  %v1708 = vrot.slane %v1706, 5
  %v1709 = vsel %vm341, %v1704, %v1708
  %v1711 = vshrl.u32 %v204, 16
  %v1713 = vrot.slane %v1711, 4
  %v1714 = vshll.u32 %v204, 16
  %v1716 = vrot.slane %v1714, 5
  %v1717 = vor.u32 %v1713, %v1716
  %v1718 = vrot.slane %v1717, 4
  %v1720 = vshll.u32 %v205, 16
  %v1722 = vrot.slane %v1720, 5
  %v1723 = vsel %vm341, %v1718, %v1722
  %v1724 = vshrl.u32 %v205, 16
  %v1726 = vrot.slane %v1724, 4
  %v1727 = vor.u32 %v1726, %v1722
  %v1728 = vrot.slane %v1727, 4
  %v1730 = vshll.u32 %v206, 16
  %v1732 = vrot.slane %v1730, 5
  %v1733 = vsel %vm341, %v1728, %v1732
  %v1735 = vshrl.u32 %v207, 16
  %v1737 = vrot.slane %v1735, 4
  %v1738 = vshll.u32 %v207, 16
  %v1740 = vrot.slane %v1738, 5
  %v1741 = vor.u32 %v1737, %v1740
  %v1742 = vrot.slane %v1741, 4
  %v1744 = vshll.u32 %v208, 16
  %v1746 = vrot.slane %v1744, 5
  %v1747 = vsel %vm341, %v1742, %v1746
  %v1748 = vshrl.u32 %v208, 16
  %v1750 = vrot.slane %v1748, 4
  %v1751 = vor.u32 %v1750, %v1746
  %v1752 = vrot.slane %v1751, 4
  %v1754 = vshll.u32 %v209, 16
  %v1756 = vrot.slane %v1754, 5
  %v1757 = vsel %vm341, %v1752, %v1756
  %v1759 = vshrl.u32 %v210, 16
  %v1761 = vrot.slane %v1759, 4
  %v1762 = vshll.u32 %v210, 16
  %v1764 = vrot.slane %v1762, 5
  %v1765 = vor.u32 %v1761, %v1764
  %v1766 = vrot.slane %v1765, 4
  %v1768 = vshll.u32 %v211, 16
  %v1770 = vrot.slane %v1768, 5
  %v1771 = vsel %vm341, %v1766, %v1770
  %v1772 = vshrl.u32 %v211, 16
  %v1774 = vrot.slane %v1772, 4
  %v1775 = vor.u32 %v1774, %v1770
  %v1776 = vrot.slane %v1775, 4
  %v1778 = vshll.u32 %v212, 16
  %v1780 = vrot.slane %v1778, 5
  %v1781 = vsel %vm341, %v1776, %v1780
  %v1783 = vshrl.u32 %v213, 16
  %v1785 = vrot.slane %v1783, 4
  %v1786 = vshll.u32 %v213, 16
  %v1788 = vrot.slane %v1786, 5
  %v1789 = vor.u32 %v1785, %v1788
  %v1790 = vrot.slane %v1789, 4
  %v1792 = vshll.u32 %v214, 16
  %v1794 = vrot.slane %v1792, 5
  %v1795 = vsel %vm341, %v1790, %v1794
  %v1796 = vshrl.u32 %v214, 16
  %v1798 = vrot.slane %v1796, 4
  %v1799 = vor.u32 %v1798, %v1794
  %v1800 = vrot.slane %v1799, 4
  %v1802 = vshll.u32 %v215, 16
  %v1804 = vrot.slane %v1802, 5
  %v1805 = vsel %vm341, %v1800, %v1804
  %v1807 = vshrl.u32 %v216, 16
  %v1809 = vrot.slane %v1807, 4
  %v1810 = vshll.u32 %v216, 16
  %v1812 = vrot.slane %v1810, 5
  %v1813 = vor.u32 %v1809, %v1812
  %v1814 = vrot.slane %v1813, 4
  %v1816 = vshll.u32 %v217, 16
  %v1818 = vrot.slane %v1816, 5
  %v1819 = vsel %vm341, %v1814, %v1818
  %v1820 = vshrl.u32 %v217, 16
  %v1822 = vrot.slane %v1820, 4
  %v1823 = vor.u32 %v1822, %v1818
  %v1824 = vrot.slane %v1823, 4
  %v1826 = vshll.u32 %v218, 16
  %v1828 = vrot.slane %v1826, 5
  %v1829 = vsel %vm341, %v1824, %v1828
  %v1831 = vshrl.u32 %v219, 16
  %v1833 = vrot.slane %v1831, 4
  %v1834 = vshll.u32 %v219, 16
  %v1836 = vrot.slane %v1834, 5
  %v1837 = vor.u32 %v1833, %v1836
  %v1838 = vrot.slane %v1837, 4
  %v1840 = vshll.u32 %v220, 16
  %v1842 = vrot.slane %v1840, 5
  %v1843 = vsel %vm341, %v1838, %v1842
  %v1844 = vshrl.u32 %v220, 16
  %v1846 = vrot.slane %v1844, 4
  %v1847 = vor.u32 %v1846, %v1842
  %v1848 = vrot.slane %v1847, 4
  %v1850 = vshll.u32 %v221, 16
  %v1852 = vrot.slane %v1850, 5
  %v1853 = vsel %vm341, %v1848, %v1852
  %v1855 = vshrl.u32 %v222, 16
  %v1857 = vrot.slane %v1855, 4
  %v1858 = vshll.u32 %v222, 16
  %v1860 = vrot.slane %v1858, 5
  %v1861 = vor.u32 %v1857, %v1860
  %v1862 = vrot.slane %v1861, 4
  %v1864 = vshll.u32 %v223, 16
  %v1866 = vrot.slane %v1864, 5
  %v1867 = vsel %vm341, %v1862, %v1866
  %v1868 = vshrl.u32 %v223, 16
  %v1870 = vrot.slane %v1868, 4
  %v1871 = vor.u32 %v1870, %v1866
  %v1872 = vrot.slane %v1871, 4
  %v1874 = vshll.u32 %v224, 16
  %v1876 = vrot.slane %v1874, 5
  %v1877 = vsel %vm341, %v1872, %v1876
  %v1879 = vshrl.u32 %v231, 16
  %v1881 = vrot.slane %v1879, 4
  %v1882 = vshll.u32 %v231, 16
  %v1884 = vrot.slane %v1882, 5
  %v1885 = vor.u32 %v1881, %v1884
  %v1886 = vrot.slane %v1885, 4
  %v1888 = vshll.u32 %v232, 16
  %v1890 = vrot.slane %v1888, 5
  %v1891 = vsel %vm341, %v1886, %v1890
  %v1892 = vshrl.u32 %v232, 16
  %v1894 = vrot.slane %v1892, 4
  %v1895 = vor.u32 %v1894, %v1890
  %v1896 = vrot.slane %v1895, 4
  %v1898 = vshll.u32 %v233, 16
  %v1900 = vrot.slane %v1898, 5
  %v1901 = vsel %vm341, %v1896, %v1900
  %v1903 = vshrl.u32 %v234, 16
  %v1905 = vrot.slane %v1903, 4
  %v1906 = vshll.u32 %v234, 16
  %v1908 = vrot.slane %v1906, 5
  %v1909 = vor.u32 %v1905, %v1908
  %v1910 = vrot.slane %v1909, 4
  %v1912 = vshll.u32 %v235, 16
  %v1914 = vrot.slane %v1912, 5
  %v1915 = vsel %vm341, %v1910, %v1914
  %v1916 = vshrl.u32 %v235, 16
  %v1918 = vrot.slane %v1916, 4
  %v1919 = vor.u32 %v1918, %v1914
  %v1920 = vrot.slane %v1919, 4
  %v1922 = vshll.u32 %v236, 16
  %v1924 = vrot.slane %v1922, 5
  %v1925 = vsel %vm341, %v1920, %v1924
  %v1927 = vshrl.u32 %v237, 16
  %v1929 = vrot.slane %v1927, 4
  %v1930 = vshll.u32 %v237, 16
  %v1932 = vrot.slane %v1930, 5
  %v1933 = vor.u32 %v1929, %v1932
  %v1934 = vrot.slane %v1933, 4
  %v1936 = vshll.u32 %v238, 16
  %v1938 = vrot.slane %v1936, 5
  %v1939 = vsel %vm341, %v1934, %v1938
  %v1940 = vshrl.u32 %v238, 16
  %v1942 = vrot.slane %v1940, 4
  %v1943 = vor.u32 %v1942, %v1938
  %v1944 = vrot.slane %v1943, 4
  %v1946 = vshll.u32 %v239, 16
  %v1948 = vrot.slane %v1946, 5
  %v1949 = vsel %vm341, %v1944, %v1948
  %v1951 = vshrl.u32 %v240, 16
  %v1953 = vrot.slane %v1951, 4
  %v1954 = vshll.u32 %v240, 16
  %v1956 = vrot.slane %v1954, 5
  %v1957 = vor.u32 %v1953, %v1956
  %v1958 = vrot.slane %v1957, 4
  %v1960 = vshll.u32 %v241, 16
  %v1962 = vrot.slane %v1960, 5
  %v1963 = vsel %vm341, %v1958, %v1962
  %v1964 = vshrl.u32 %v241, 16
  %v1966 = vrot.slane %v1964, 4
  %v1967 = vor.u32 %v1966, %v1962
  %v1968 = vrot.slane %v1967, 4
  %v1970 = vshll.u32 %v242, 16
  %v1972 = vrot.slane %v1970, 5
  %v1973 = vsel %vm341, %v1968, %v1972
  %v1975 = vshrl.u32 %v243, 16
  %v1977 = vrot.slane %v1975, 4
  %v1978 = vshll.u32 %v243, 16
  %v1980 = vrot.slane %v1978, 5
  %v1981 = vor.u32 %v1977, %v1980
  %v1982 = vrot.slane %v1981, 4
  %v1984 = vshll.u32 %v244, 16
  %v1986 = vrot.slane %v1984, 5
  %v1987 = vsel %vm341, %v1982, %v1986
  %v1988 = vshrl.u32 %v244, 16
  %v1990 = vrot.slane %v1988, 4
  %v1991 = vor.u32 %v1990, %v1986
  %v1992 = vrot.slane %v1991, 4
  %v1994 = vshll.u32 %v245, 16
  %v1996 = vrot.slane %v1994, 5
  %v1997 = vsel %vm341, %v1992, %v1996
  %v1999 = vshrl.u32 %v246, 16
  %v2001 = vrot.slane %v1999, 4
  %v2002 = vshll.u32 %v246, 16
  %v2004 = vrot.slane %v2002, 5
  %v2005 = vor.u32 %v2001, %v2004
  %v2006 = vrot.slane %v2005, 4
  %v2008 = vshll.u32 %v247, 16
  %v2010 = vrot.slane %v2008, 5
  %v2011 = vsel %vm341, %v2006, %v2010
  %v2012 = vshrl.u32 %v247, 16
  %v2014 = vrot.slane %v2012, 4
  %v2015 = vor.u32 %v2014, %v2010
  %v2016 = vrot.slane %v2015, 4
  %v2018 = vshll.u32 %v248, 16
  %v2020 = vrot.slane %v2018, 5
  %v2021 = vsel %vm341, %v2016, %v2020
  %v2023 = vshrl.u32 %v249, 16
  %v2025 = vrot.slane %v2023, 4
  %v2026 = vshll.u32 %v249, 16
  %v2028 = vrot.slane %v2026, 5
  %v2029 = vor.u32 %v2025, %v2028
  %v2030 = vrot.slane %v2029, 4
  %v2032 = vshll.u32 %v250, 16
  %v2034 = vrot.slane %v2032, 5
  %v2035 = vsel %vm341, %v2030, %v2034
  %v2036 = vshrl.u32 %v250, 16
  %v2038 = vrot.slane %v2036, 4
  %v2039 = vor.u32 %v2038, %v2034
  %v2040 = vrot.slane %v2039, 4
  %v2042 = vshll.u32 %v251, 16
  %v2044 = vrot.slane %v2042, 5
  %v2045 = vsel %vm341, %v2040, %v2044
  %v2047 = vshrl.u32 %v252, 16
  %v2049 = vrot.slane %v2047, 4
  %v2050 = vshll.u32 %v252, 16
  %v2052 = vrot.slane %v2050, 5
  %v2053 = vor.u32 %v2049, %v2052
  %v2054 = vrot.slane %v2053, 4
  %v2056 = vshll.u32 %v253, 16
  %v2058 = vrot.slane %v2056, 5
  %v2059 = vsel %vm341, %v2054, %v2058
  %v2060 = vshrl.u32 %v253, 16
  %v2062 = vrot.slane %v2060, 4
  %v2063 = vor.u32 %v2062, %v2058
  %v2064 = vrot.slane %v2063, 4
  %v2066 = vshll.u32 %v254, 16
  %v2068 = vrot.slane %v2066, 5
  %v2069 = vsel %vm341, %v2064, %v2068
  %v2071 = vshrl.u32 %v255, 16
  %v2073 = vrot.slane %v2071, 4
  %v2074 = vshll.u32 %v255, 16
  %v2076 = vrot.slane %v2074, 5
  %v2077 = vor.u32 %v2073, %v2076
  %v2078 = vrot.slane %v2077, 4
  %v2080 = vshll.u32 %v256, 16
  %v2082 = vrot.slane %v2080, 5
  %v2083 = vsel %vm341, %v2078, %v2082
  %v2084 = vshrl.u32 %v256, 16
  %v2086 = vrot.slane %v2084, 4
  %v2087 = vor.u32 %v2086, %v2082
  %v2088 = vrot.slane %v2087, 4
  %v2090 = vshll.u32 %v257, 16
  %v2092 = vrot.slane %v2090, 5
  %v2093 = vsel %vm341, %v2088, %v2092
  %v2095 = vshrl.u32 %v258, 16
  %v2097 = vrot.slane %v2095, 4
  %v2098 = vshll.u32 %v258, 16
  %v2100 = vrot.slane %v2098, 5
  %v2101 = vor.u32 %v2097, %v2100
  %v2102 = vrot.slane %v2101, 4
  %v2104 = vshll.u32 %v259, 16
  %v2106 = vrot.slane %v2104, 5
  %v2107 = vsel %vm341, %v2102, %v2106
  %v2108 = vshrl.u32 %v259, 16
  %v2110 = vrot.slane %v2108, 4
  %v2111 = vor.u32 %v2110, %v2106
  %v2112 = vrot.slane %v2111, 4
  %v2114 = vshll.u32 %v260, 16
  %v2116 = vrot.slane %v2114, 5
  %v2117 = vsel %vm341, %v2112, %v2116
  %v2119 = vshrl.u32 %v261, 16
  %v2121 = vrot.slane %v2119, 4
  %v2122 = vshll.u32 %v261, 16
  %v2124 = vrot.slane %v2122, 5
  %v2125 = vor.u32 %v2121, %v2124
  %v2126 = vrot.slane %v2125, 4
  %v2128 = vshll.u32 %v262, 16
  %v2130 = vrot.slane %v2128, 5
  %v2131 = vsel %vm341, %v2126, %v2130
  %v2132 = vshrl.u32 %v262, 16
  %v2134 = vrot.slane %v2132, 4
  %v2135 = vor.u32 %v2134, %v2130
  %v2136 = vrot.slane %v2135, 4
  %v2138 = vshll.u32 %v263, 16
  %v2140 = vrot.slane %v2138, 5
  %v2141 = vsel %vm341, %v2136, %v2140
  %v2143 = vshrl.u32 %v264, 16
  %v2145 = vrot.slane %v2143, 4
  %v2146 = vshll.u32 %v264, 16
  %v2148 = vrot.slane %v2146, 5
  %v2149 = vor.u32 %v2145, %v2148
  %v2150 = vrot.slane %v2149, 4
  %v2152 = vshll.u32 %v265, 16
  %v2154 = vrot.slane %v2152, 5
  %v2155 = vsel %vm341, %v2150, %v2154
  %v2156 = vshrl.u32 %v265, 16
  %v2158 = vrot.slane %v2156, 4
  %v2159 = vor.u32 %v2158, %v2154
  %v2160 = vrot.slane %v2159, 4
  %v2162 = vshll.u32 %v266, 16
  %v2164 = vrot.slane %v2162, 5
  %v2165 = vsel %vm341, %v2160, %v2164
  %v2167 = vshrl.u32 %v267, 16
  %v2169 = vrot.slane %v2167, 4
  %v2170 = vshll.u32 %v267, 16
  %v2172 = vrot.slane %v2170, 5
  %v2173 = vor.u32 %v2169, %v2172
  %v2174 = vrot.slane %v2173, 4
  %v2176 = vshll.u32 %v268, 16
  %v2178 = vrot.slane %v2176, 5
  %v2179 = vsel %vm341, %v2174, %v2178
  %v2180 = vshrl.u32 %v268, 16
  %v2182 = vrot.slane %v2180, 4
  %v2183 = vor.u32 %v2182, %v2178
  %v2184 = vrot.slane %v2183, 4
  %v2186 = vshll.u32 %v269, 16
  %v2188 = vrot.slane %v2186, 5
  %v2189 = vsel %vm341, %v2184, %v2188
  %v2191 = vshrl.u32 %v270, 16
  %v2193 = vrot.slane %v2191, 4
  %v2194 = vshll.u32 %v270, 16
  %v2196 = vrot.slane %v2194, 5
  %v2197 = vor.u32 %v2193, %v2196
  %v2198 = vrot.slane %v2197, 4
  %v2200 = vshll.u32 %v271, 16
  %v2202 = vrot.slane %v2200, 5
  %v2203 = vsel %vm341, %v2198, %v2202
  %v2204 = vshrl.u32 %v271, 16
  %v2206 = vrot.slane %v2204, 4
  %v2207 = vor.u32 %v2206, %v2202
  %v2208 = vrot.slane %v2207, 4
  %v2210 = vshll.u32 %v272, 16
  %v2212 = vrot.slane %v2210, 5
  %v2213 = vsel %vm341, %v2208, %v2212
  %v2215 = vshrl.u32 %v273, 16
  %v2217 = vrot.slane %v2215, 4
  %v2218 = vshll.u32 %v273, 16
  %v2220 = vrot.slane %v2218, 5
  %v2221 = vor.u32 %v2217, %v2220
  %v2222 = vrot.slane %v2221, 4
  %v2224 = vshll.u32 %v274, 16
  %v2226 = vrot.slane %v2224, 5
  %v2227 = vsel %vm341, %v2222, %v2226
  %v2228 = vshrl.u32 %v274, 16
  %v2230 = vrot.slane %v2228, 4
  %v2231 = vor.u32 %v2230, %v2226
  %v2232 = vrot.slane %v2231, 4
  %v2234 = vshll.u32 %v275, 16
  %v2236 = vrot.slane %v2234, 5
  %v2237 = vsel %vm341, %v2232, %v2236
  %v2239 = vshrl.u32 %v276, 16
  %v2241 = vrot.slane %v2239, 4
  %v2242 = vshll.u32 %v276, 16
  %v2244 = vrot.slane %v2242, 5
  %v2245 = vor.u32 %v2241, %v2244
  %v2246 = vrot.slane %v2245, 4
  %v2248 = vshll.u32 %v277, 16
  %v2250 = vrot.slane %v2248, 5
  %v2251 = vsel %vm341, %v2246, %v2250
  %v2252 = vshrl.u32 %v277, 16
  %v2254 = vrot.slane %v2252, 4
  %v2255 = vor.u32 %v2254, %v2250
  %v2256 = vrot.slane %v2255, 4
  %v2258 = vshll.u32 %v278, 16
  %v2260 = vrot.slane %v2258, 5
  %v2261 = vsel %vm341, %v2256, %v2260
  %v2263 = vshrl.u32 %v285, 16
  %v2265 = vrot.slane %v2263, 4
  %v2266 = vshll.u32 %v285, 16
  %v2268 = vrot.slane %v2266, 5
  %v2269 = vor.u32 %v2265, %v2268
  %v2270 = vrot.slane %v2269, 4
  %v2272 = vshll.u32 %v286, 16
  %v2274 = vrot.slane %v2272, 5
  %v2275 = vsel %vm341, %v2270, %v2274
  %v2276 = vshrl.u32 %v286, 16
  %v2278 = vrot.slane %v2276, 4
  %v2279 = vor.u32 %v2278, %v2274
  %v2280 = vrot.slane %v2279, 4
  %v2282 = vshll.u32 %v287, 16
  %v2284 = vrot.slane %v2282, 5
  %v2285 = vsel %vm341, %v2280, %v2284
  %v2287 = vshrl.u32 %v288, 16
  %v2289 = vrot.slane %v2287, 4
  %v2290 = vshll.u32 %v288, 16
  %v2292 = vrot.slane %v2290, 5
  %v2293 = vor.u32 %v2289, %v2292
  %v2294 = vrot.slane %v2293, 4
  %v2296 = vshll.u32 %v289, 16
  %v2298 = vrot.slane %v2296, 5
  %v2299 = vsel %vm341, %v2294, %v2298
  %v2300 = vshrl.u32 %v289, 16
  %v2302 = vrot.slane %v2300, 4
  %v2303 = vor.u32 %v2302, %v2298
  %v2304 = vrot.slane %v2303, 4
  %v2306 = vshll.u32 %v290, 16
  %v2308 = vrot.slane %v2306, 5
  %v2309 = vsel %vm341, %v2304, %v2308
  %v2311 = vshrl.u32 %v291, 16
  %v2313 = vrot.slane %v2311, 4
  %v2314 = vshll.u32 %v291, 16
  %v2316 = vrot.slane %v2314, 5
  %v2317 = vor.u32 %v2313, %v2316
  %v2318 = vrot.slane %v2317, 4
  %v2320 = vshll.u32 %v292, 16
  %v2322 = vrot.slane %v2320, 5
  %v2323 = vsel %vm341, %v2318, %v2322
  %v2324 = vshrl.u32 %v292, 16
  %v2326 = vrot.slane %v2324, 4
  %v2327 = vor.u32 %v2326, %v2322
  %v2328 = vrot.slane %v2327, 4
  %v2330 = vshll.u32 %v293, 16
  %v2332 = vrot.slane %v2330, 5
  %v2333 = vsel %vm341, %v2328, %v2332
  %v2335 = vshrl.u32 %v294, 16
  %v2337 = vrot.slane %v2335, 4
  %v2338 = vshll.u32 %v294, 16
  %v2340 = vrot.slane %v2338, 5
  %v2341 = vor.u32 %v2337, %v2340
  %v2342 = vrot.slane %v2341, 4
  %v2344 = vshll.u32 %v295, 16
  %v2346 = vrot.slane %v2344, 5
  %v2347 = vsel %vm341, %v2342, %v2346
  %v2348 = vshrl.u32 %v295, 16
  %v2350 = vrot.slane %v2348, 4
  %v2351 = vor.u32 %v2350, %v2346
  %v2352 = vrot.slane %v2351, 4
  %v2354 = vshll.u32 %v296, 16
  %v2356 = vrot.slane %v2354, 5
  %v2357 = vsel %vm341, %v2352, %v2356
  %v2359 = vshrl.u32 %v297, 16
  %v2361 = vrot.slane %v2359, 4
  %v2362 = vshll.u32 %v297, 16
  %v2364 = vrot.slane %v2362, 5
  %v2365 = vor.u32 %v2361, %v2364
  %v2366 = vrot.slane %v2365, 4
  %v2368 = vshll.u32 %v298, 16
  %v2370 = vrot.slane %v2368, 5
  %v2371 = vsel %vm341, %v2366, %v2370
  %v2372 = vshrl.u32 %v298, 16
  %v2374 = vrot.slane %v2372, 4
  %v2375 = vor.u32 %v2374, %v2370
  %v2376 = vrot.slane %v2375, 4
  %v2378 = vshll.u32 %v299, 16
  %v2380 = vrot.slane %v2378, 5
  %v2381 = vsel %vm341, %v2376, %v2380
  %v2383 = vshrl.u32 %v300, 16
  %v2385 = vrot.slane %v2383, 4
  %v2386 = vshll.u32 %v300, 16
  %v2388 = vrot.slane %v2386, 5
  %v2389 = vor.u32 %v2385, %v2388
  %v2390 = vrot.slane %v2389, 4
  %v2392 = vshll.u32 %v301, 16
  %v2394 = vrot.slane %v2392, 5
  %v2395 = vsel %vm341, %v2390, %v2394
  %v2396 = vshrl.u32 %v301, 16
  %v2398 = vrot.slane %v2396, 4
  %v2399 = vor.u32 %v2398, %v2394
  %v2400 = vrot.slane %v2399, 4
  %v2402 = vshll.u32 %v302, 16
  %v2404 = vrot.slane %v2402, 5
  %v2405 = vsel %vm341, %v2400, %v2404
  %v2407 = vshrl.u32 %v303, 16
  %v2409 = vrot.slane %v2407, 4
  %v2410 = vshll.u32 %v303, 16
  %v2412 = vrot.slane %v2410, 5
  %v2413 = vor.u32 %v2409, %v2412
  %v2414 = vrot.slane %v2413, 4
  %v2416 = vshll.u32 %v304, 16
  %v2418 = vrot.slane %v2416, 5
  %v2419 = vsel %vm341, %v2414, %v2418
  %v2420 = vshrl.u32 %v304, 16
  %v2422 = vrot.slane %v2420, 4
  %v2423 = vor.u32 %v2422, %v2418
  %v2424 = vrot.slane %v2423, 4
  %v2426 = vshll.u32 %v305, 16
  %v2428 = vrot.slane %v2426, 5
  %v2429 = vsel %vm341, %v2424, %v2428
  %v2431 = vshrl.u32 %v306, 16
  %v2433 = vrot.slane %v2431, 4
  %v2434 = vshll.u32 %v306, 16
  %v2436 = vrot.slane %v2434, 5
  %v2437 = vor.u32 %v2433, %v2436
  %v2438 = vrot.slane %v2437, 4
  %v2440 = vshll.u32 %v307, 16
  %v2442 = vrot.slane %v2440, 5
  %v2443 = vsel %vm341, %v2438, %v2442
  %v2444 = vshrl.u32 %v307, 16
  %v2446 = vrot.slane %v2444, 4
  %v2447 = vor.u32 %v2446, %v2442
  %v2448 = vrot.slane %v2447, 4
  %v2450 = vshll.u32 %v308, 16
  %v2452 = vrot.slane %v2450, 5
  %v2453 = vsel %vm341, %v2448, %v2452
  %v2455 = vshrl.u32 %v309, 16
  %v2457 = vrot.slane %v2455, 4
  %v2458 = vshll.u32 %v309, 16
  %v2460 = vrot.slane %v2458, 5
  %v2461 = vor.u32 %v2457, %v2460
  %v2462 = vrot.slane %v2461, 4
  %v2464 = vshll.u32 %v310, 16
  %v2466 = vrot.slane %v2464, 5
  %v2467 = vsel %vm341, %v2462, %v2466
  %v2468 = vshrl.u32 %v310, 16
  %v2470 = vrot.slane %v2468, 4
  %v2471 = vor.u32 %v2470, %v2466
  %v2472 = vrot.slane %v2471, 4
  %v2474 = vshll.u32 %v311, 16
  %v2476 = vrot.slane %v2474, 5
  %v2477 = vsel %vm341, %v2472, %v2476
  %v2479 = vshrl.u32 %v312, 16
  %v2481 = vrot.slane %v2479, 4
  %v2482 = vshll.u32 %v312, 16
  %v2484 = vrot.slane %v2482, 5
  %v2485 = vor.u32 %v2481, %v2484
  %v2486 = vrot.slane %v2485, 4
  %v2488 = vshll.u32 %v313, 16
  %v2490 = vrot.slane %v2488, 5
  %v2491 = vsel %vm341, %v2486, %v2490
  %v2492 = vshrl.u32 %v313, 16
  %v2494 = vrot.slane %v2492, 4
  %v2495 = vor.u32 %v2494, %v2490
  %v2496 = vrot.slane %v2495, 4
  %v2498 = vshll.u32 %v314, 16
  %v2500 = vrot.slane %v2498, 5
  %v2501 = vsel %vm341, %v2496, %v2500
  %v2503 = vshrl.u32 %v315, 16
  %v2505 = vrot.slane %v2503, 4
  %v2506 = vshll.u32 %v315, 16
  %v2508 = vrot.slane %v2506, 5
  %v2509 = vor.u32 %v2505, %v2508
  %v2510 = vrot.slane %v2509, 4
  %v2512 = vshll.u32 %v316, 16
  %v2514 = vrot.slane %v2512, 5
  %v2515 = vsel %vm341, %v2510, %v2514
  %v2516 = vshrl.u32 %v316, 16
  %v2518 = vrot.slane %v2516, 4
  %v2519 = vor.u32 %v2518, %v2514
  %v2520 = vrot.slane %v2519, 4
  %v2522 = vshll.u32 %v317, 16
  %v2524 = vrot.slane %v2522, 5
  %v2525 = vsel %vm341, %v2520, %v2524
  %v2527 = vshrl.u32 %v318, 16
  %v2529 = vrot.slane %v2527, 4
  %v2530 = vshll.u32 %v318, 16
  %v2532 = vrot.slane %v2530, 5
  %v2533 = vor.u32 %v2529, %v2532
  %v2534 = vrot.slane %v2533, 4
  %v2536 = vshll.u32 %v319, 16
  %v2538 = vrot.slane %v2536, 5
  %v2539 = vsel %vm341, %v2534, %v2538
  %v2540 = vshrl.u32 %v319, 16
  %v2542 = vrot.slane %v2540, 4
  %v2543 = vor.u32 %v2542, %v2538
  %v2544 = vrot.slane %v2543, 4
  %v2546 = vshll.u32 %v320, 16
  %v2548 = vrot.slane %v2546, 5
  %v2549 = vsel %vm341, %v2544, %v2548
  %v2551 = vshrl.u32 %v321, 16
  %v2553 = vrot.slane %v2551, 4
  %v2554 = vshll.u32 %v321, 16
  %v2556 = vrot.slane %v2554, 5
  %v2557 = vor.u32 %v2553, %v2556
  %v2558 = vrot.slane %v2557, 4
  %v2560 = vshll.u32 %v322, 16
  %v2562 = vrot.slane %v2560, 5
  %v2563 = vsel %vm341, %v2558, %v2562
  %v2564 = vshrl.u32 %v322, 16
  %v2566 = vrot.slane %v2564, 4
  %v2567 = vor.u32 %v2566, %v2562
  %v2568 = vrot.slane %v2567, 4
  %v2570 = vshll.u32 %v323, 16
  %v2572 = vrot.slane %v2570, 5
  %v2573 = vsel %vm341, %v2568, %v2572
  %v2575 = vshrl.u32 %v324, 16
  %v2577 = vrot.slane %v2575, 4
  %v2578 = vshll.u32 %v324, 16
  %v2580 = vrot.slane %v2578, 5
  %v2581 = vor.u32 %v2577, %v2580
  %v2582 = vrot.slane %v2581, 4
  %v2584 = vshll.u32 %v325, 16
  %v2586 = vrot.slane %v2584, 5
  %v2587 = vsel %vm341, %v2582, %v2586
  %v2588 = vshrl.u32 %v325, 16
  %v2590 = vrot.slane %v2588, 4
  %v2591 = vor.u32 %v2590, %v2586
  %v2592 = vrot.slane %v2591, 4
  %v2594 = vshll.u32 %v326, 16
  %v2596 = vrot.slane %v2594, 5
  %v2597 = vsel %vm341, %v2592, %v2596
  %v2599 = vshrl.u32 %v327, 16
  %v2601 = vrot.slane %v2599, 4
  %v2602 = vshll.u32 %v327, 16
  %v2604 = vrot.slane %v2602, 5
  %v2605 = vor.u32 %v2601, %v2604
  %v2606 = vrot.slane %v2605, 4
  %v2608 = vshll.u32 %v328, 16
  %v2610 = vrot.slane %v2608, 5
  %v2611 = vsel %vm341, %v2606, %v2610
  %v2612 = vshrl.u32 %v328, 16
  %v2614 = vrot.slane %v2612, 4
  %v2615 = vor.u32 %v2614, %v2610
  %v2616 = vrot.slane %v2615, 4
  %v2618 = vshll.u32 %v329, 16
  %v2620 = vrot.slane %v2618, 5
  %v2621 = vsel %vm341, %v2616, %v2620
  %v2623 = vshrl.u32 %v330, 16
  %v2625 = vrot.slane %v2623, 4
  %v2626 = vshll.u32 %v330, 16
  %v2628 = vrot.slane %v2626, 5
  %v2629 = vor.u32 %v2625, %v2628
  %v2630 = vrot.slane %v2629, 4
  %v2632 = vshll.u32 %v331, 16
  %v2634 = vrot.slane %v2632, 5
  %v2635 = vsel %vm341, %v2630, %v2634
  %v2636 = vshrl.u32 %v331, 16
  %v2638 = vrot.slane %v2636, 4
  %v2639 = vor.u32 %v2638, %v2634
  %v2640 = vrot.slane %v2639, 4
  %v2642 = vshll.u32 %v332, 16
  %v2644 = vrot.slane %v2642, 5
  %v2645 = vsel %vm341, %v2640, %v2644
  %vm2934 = vcmask 1042432
  %vm2935 = vcmask 1046532
  %vm2936 = vmor %vm2934, %vm2935
  %v2937 = vrot.slane %v15, 5
  %v2938 = vrot.slane %v2937, 4
  %v2939 = vrot.slane %v16, 5
  %v2940 = vsel %vm2936, %v2938, %v2939
  %v2941 = vrot.slane %v2939, 4
  %v2942 = vrot.slane %v17, 5
  %v2943 = vsel %vm2936, %v2941, %v2942
  %v2944 = vrot.slane %v18, 5
  %v2945 = vrot.slane %v2944, 4
  %v2946 = vrot.slane %v19, 5
  %v2947 = vsel %vm2936, %v2945, %v2946
  %v2948 = vrot.slane %v2946, 4
  %v2949 = vrot.slane %v20, 5
  %v2950 = vsel %vm2936, %v2948, %v2949
  %v2951 = vrot.slane %v21, 5
  %v2952 = vrot.slane %v2951, 4
  %v2953 = vrot.slane %v22, 5
  %v2954 = vsel %vm2936, %v2952, %v2953
  %v2955 = vrot.slane %v2953, 4
  %v2956 = vrot.slane %v23, 5
  %v2957 = vsel %vm2936, %v2955, %v2956
  %v2958 = vrot.slane %v24, 5
  %v2959 = vrot.slane %v2958, 4
  %v2960 = vrot.slane %v25, 5
  %v2961 = vsel %vm2936, %v2959, %v2960
  %v2962 = vrot.slane %v2960, 4
  %v2963 = vrot.slane %v26, 5
  %v2964 = vsel %vm2936, %v2962, %v2963
  %v2965 = vrot.slane %v27, 5
  %v2966 = vrot.slane %v2965, 4
  %v2967 = vrot.slane %v28, 5
  %v2968 = vsel %vm2936, %v2966, %v2967
  %v2969 = vrot.slane %v2967, 4
  %v2970 = vrot.slane %v29, 5
  %v2971 = vsel %vm2936, %v2969, %v2970
  %v2972 = vrot.slane %v30, 5
  %v2973 = vrot.slane %v2972, 4
  %v2974 = vrot.slane %v31, 5
  %v2975 = vsel %vm2936, %v2973, %v2974
  %v2976 = vrot.slane %v2974, 4
  %v2977 = vrot.slane %v32, 5
  %v2978 = vsel %vm2936, %v2976, %v2977
  %v2979 = vrot.slane %v33, 5
  %v2980 = vrot.slane %v2979, 4
  %v2981 = vrot.slane %v34, 5
  %v2982 = vsel %vm2936, %v2980, %v2981
  %v2983 = vrot.slane %v2981, 4
  %v2984 = vrot.slane %v35, 5
  %v2985 = vsel %vm2936, %v2983, %v2984
  %v2986 = vrot.slane %v36, 5
  %v2987 = vrot.slane %v2986, 4
  %v2988 = vrot.slane %v37, 5
  %v2989 = vsel %vm2936, %v2987, %v2988
  %v2990 = vrot.slane %v2988, 4
  %v2991 = vrot.slane %v38, 5
  %v2992 = vsel %vm2936, %v2990, %v2991
  %v2993 = vrot.slane %v39, 5
  %v2994 = vrot.slane %v2993, 4
  %v2995 = vrot.slane %v40, 5
  %v2996 = vsel %vm2936, %v2994, %v2995
  %v2997 = vrot.slane %v2995, 4
  %v2998 = vrot.slane %v41, 5
  %v2999 = vsel %vm2936, %v2997, %v2998
  %v3000 = vrot.slane %v42, 5
  %v3001 = vrot.slane %v3000, 4
  %v3002 = vrot.slane %v43, 5
  %v3003 = vsel %vm2936, %v3001, %v3002
  %v3004 = vrot.slane %v3002, 4
  %v3005 = vrot.slane %v44, 5
  %v3006 = vsel %vm2936, %v3004, %v3005
  %v3007 = vrot.slane %v45, 5
  %v3008 = vrot.slane %v3007, 4
  %v3009 = vrot.slane %v46, 5
  %v3010 = vsel %vm2936, %v3008, %v3009
  %v3011 = vrot.slane %v3009, 4
  %v3012 = vrot.slane %v47, 5
  %v3013 = vsel %vm2936, %v3011, %v3012
  %v3014 = vrot.slane %v48, 5
  %v3015 = vrot.slane %v3014, 4
  %v3016 = vrot.slane %v49, 5
  %v3017 = vsel %vm2936, %v3015, %v3016
  %v3018 = vrot.slane %v3016, 4
  %v3019 = vrot.slane %v50, 5
  %v3020 = vsel %vm2936, %v3018, %v3019
  %v3021 = vrot.slane %v51, 5
  %v3022 = vrot.slane %v3021, 4
  %v3023 = vrot.slane %v52, 5
  %v3024 = vsel %vm2936, %v3022, %v3023
  %v3025 = vrot.slane %v3023, 4
  %v3026 = vrot.slane %v53, 5
  %v3027 = vsel %vm2936, %v3025, %v3026
  %v3028 = vrot.slane %v54, 5
  %v3029 = vrot.slane %v3028, 4
  %v3030 = vrot.slane %v55, 5
  %v3031 = vsel %vm2936, %v3029, %v3030
  %v3032 = vrot.slane %v3030, 4
  %v3033 = vrot.slane %v56, 5
  %v3034 = vsel %vm2936, %v3032, %v3033
  %v3035 = vrot.slane %v57, 5
  %v3036 = vrot.slane %v3035, 4
  %v3037 = vrot.slane %v58, 5
  %v3038 = vsel %vm2936, %v3036, %v3037
  %v3039 = vrot.slane %v3037, 4
  %v3040 = vrot.slane %v59, 5
  %v3041 = vsel %vm2936, %v3039, %v3040
  %v3042 = vrot.slane %v60, 5
  %v3043 = vrot.slane %v3042, 4
  %v3044 = vrot.slane %v61, 5
  %v3045 = vsel %vm2936, %v3043, %v3044
  %v3046 = vrot.slane %v3044, 4
  %v3047 = vrot.slane %v62, 5
  %v3048 = vsel %vm2936, %v3046, %v3047
  %v3049 = vrot.slane %v69, 5
  %v3050 = vrot.slane %v3049, 4
  %v3051 = vrot.slane %v70, 5
  %v3052 = vsel %vm2936, %v3050, %v3051
  %v3053 = vrot.slane %v3051, 4
  %v3054 = vrot.slane %v71, 5
  %v3055 = vsel %vm2936, %v3053, %v3054
  %v3056 = vrot.slane %v72, 5
  %v3057 = vrot.slane %v3056, 4
  %v3058 = vrot.slane %v73, 5
  %v3059 = vsel %vm2936, %v3057, %v3058
  %v3060 = vrot.slane %v3058, 4
  %v3061 = vrot.slane %v74, 5
  %v3062 = vsel %vm2936, %v3060, %v3061
  %v3063 = vrot.slane %v75, 5
  %v3064 = vrot.slane %v3063, 4
  %v3065 = vrot.slane %v76, 5
  %v3066 = vsel %vm2936, %v3064, %v3065
  %v3067 = vrot.slane %v3065, 4
  %v3068 = vrot.slane %v77, 5
  %v3069 = vsel %vm2936, %v3067, %v3068
  %v3070 = vrot.slane %v78, 5
  %v3071 = vrot.slane %v3070, 4
  %v3072 = vrot.slane %v79, 5
  %v3073 = vsel %vm2936, %v3071, %v3072
  %v3074 = vrot.slane %v3072, 4
  %v3075 = vrot.slane %v80, 5
  %v3076 = vsel %vm2936, %v3074, %v3075
  %v3077 = vrot.slane %v81, 5
  %v3078 = vrot.slane %v3077, 4
  %v3079 = vrot.slane %v82, 5
  %v3080 = vsel %vm2936, %v3078, %v3079
  %v3081 = vrot.slane %v3079, 4
  %v3082 = vrot.slane %v83, 5
  %v3083 = vsel %vm2936, %v3081, %v3082
  %v3084 = vrot.slane %v84, 5
  %v3085 = vrot.slane %v3084, 4
  %v3086 = vrot.slane %v85, 5
  %v3087 = vsel %vm2936, %v3085, %v3086
  %v3088 = vrot.slane %v3086, 4
  %v3089 = vrot.slane %v86, 5
  %v3090 = vsel %vm2936, %v3088, %v3089
  %v3091 = vrot.slane %v87, 5
  %v3092 = vrot.slane %v3091, 4
  %v3093 = vrot.slane %v88, 5
  %v3094 = vsel %vm2936, %v3092, %v3093
  %v3095 = vrot.slane %v3093, 4
  %v3096 = vrot.slane %v89, 5
  %v3097 = vsel %vm2936, %v3095, %v3096
  %v3098 = vrot.slane %v90, 5
  %v3099 = vrot.slane %v3098, 4
  %v3100 = vrot.slane %v91, 5
  %v3101 = vsel %vm2936, %v3099, %v3100
  %v3102 = vrot.slane %v3100, 4
  %v3103 = vrot.slane %v92, 5
  %v3104 = vsel %vm2936, %v3102, %v3103
  %v3105 = vrot.slane %v93, 5
  %v3106 = vrot.slane %v3105, 4
  %v3107 = vrot.slane %v94, 5
  %v3108 = vsel %vm2936, %v3106, %v3107
  %v3109 = vrot.slane %v3107, 4
  %v3110 = vrot.slane %v95, 5
  %v3111 = vsel %vm2936, %v3109, %v3110
  %v3112 = vrot.slane %v96, 5
  %v3113 = vrot.slane %v3112, 4
  %v3114 = vrot.slane %v97, 5
  %v3115 = vsel %vm2936, %v3113, %v3114
  %v3116 = vrot.slane %v3114, 4
  %v3117 = vrot.slane %v98, 5
  %v3118 = vsel %vm2936, %v3116, %v3117
  %v3119 = vrot.slane %v99, 5
  %v3120 = vrot.slane %v3119, 4
  %v3121 = vrot.slane %v100, 5
  %v3122 = vsel %vm2936, %v3120, %v3121
  %v3123 = vrot.slane %v3121, 4
  %v3124 = vrot.slane %v101, 5
  %v3125 = vsel %vm2936, %v3123, %v3124
  %v3126 = vrot.slane %v102, 5
  %v3127 = vrot.slane %v3126, 4
  %v3128 = vrot.slane %v103, 5
  %v3129 = vsel %vm2936, %v3127, %v3128
  %v3130 = vrot.slane %v3128, 4
  %v3131 = vrot.slane %v104, 5
  %v3132 = vsel %vm2936, %v3130, %v3131
  %v3133 = vrot.slane %v105, 5
  %v3134 = vrot.slane %v3133, 4
  %v3135 = vrot.slane %v106, 5
  %v3136 = vsel %vm2936, %v3134, %v3135
  %v3137 = vrot.slane %v3135, 4
  %v3138 = vrot.slane %v107, 5
  %v3139 = vsel %vm2936, %v3137, %v3138
  %v3140 = vrot.slane %v108, 5
  %v3141 = vrot.slane %v3140, 4
  %v3142 = vrot.slane %v109, 5
  %v3143 = vsel %vm2936, %v3141, %v3142
  %v3144 = vrot.slane %v3142, 4
  %v3145 = vrot.slane %v110, 5
  %v3146 = vsel %vm2936, %v3144, %v3145
  %v3147 = vrot.slane %v111, 5
  %v3148 = vrot.slane %v3147, 4
  %v3149 = vrot.slane %v112, 5
  %v3150 = vsel %vm2936, %v3148, %v3149
  %v3151 = vrot.slane %v3149, 4
  %v3152 = vrot.slane %v113, 5
  %v3153 = vsel %vm2936, %v3151, %v3152
  %v3154 = vrot.slane %v114, 5
  %v3155 = vrot.slane %v3154, 4
  %v3156 = vrot.slane %v115, 5
  %v3157 = vsel %vm2936, %v3155, %v3156
  %v3158 = vrot.slane %v3156, 4
  %v3159 = vrot.slane %v116, 5
  %v3160 = vsel %vm2936, %v3158, %v3159
  %v3161 = vrot.slane %v123, 5
  %v3162 = vrot.slane %v3161, 4
  %v3163 = vrot.slane %v124, 5
  %v3164 = vsel %vm2936, %v3162, %v3163
  %v3165 = vrot.slane %v3163, 4
  %v3166 = vrot.slane %v125, 5
  %v3167 = vsel %vm2936, %v3165, %v3166
  %v3168 = vrot.slane %v126, 5
  %v3169 = vrot.slane %v3168, 4
  %v3170 = vrot.slane %v127, 5
  %v3171 = vsel %vm2936, %v3169, %v3170
  %v3172 = vrot.slane %v3170, 4
  %v3173 = vrot.slane %v128, 5
  %v3174 = vsel %vm2936, %v3172, %v3173
  %v3175 = vrot.slane %v129, 5
  %v3176 = vrot.slane %v3175, 4
  %v3177 = vrot.slane %v130, 5
  %v3178 = vsel %vm2936, %v3176, %v3177
  %v3179 = vrot.slane %v3177, 4
  %v3180 = vrot.slane %v131, 5
  %v3181 = vsel %vm2936, %v3179, %v3180
  %v3182 = vrot.slane %v132, 5
  %v3183 = vrot.slane %v3182, 4
  %v3184 = vrot.slane %v133, 5
  %v3185 = vsel %vm2936, %v3183, %v3184
  %v3186 = vrot.slane %v3184, 4
  %v3187 = vrot.slane %v134, 5
  %v3188 = vsel %vm2936, %v3186, %v3187
  %v3189 = vrot.slane %v135, 5
  %v3190 = vrot.slane %v3189, 4
  %v3191 = vrot.slane %v136, 5
  %v3192 = vsel %vm2936, %v3190, %v3191
  %v3193 = vrot.slane %v3191, 4
  %v3194 = vrot.slane %v137, 5
  %v3195 = vsel %vm2936, %v3193, %v3194
  %v3196 = vrot.slane %v138, 5
  %v3197 = vrot.slane %v3196, 4
  %v3198 = vrot.slane %v139, 5
  %v3199 = vsel %vm2936, %v3197, %v3198
  %v3200 = vrot.slane %v3198, 4
  %v3201 = vrot.slane %v140, 5
  %v3202 = vsel %vm2936, %v3200, %v3201
  %v3203 = vrot.slane %v141, 5
  %v3204 = vrot.slane %v3203, 4
  %v3205 = vrot.slane %v142, 5
  %v3206 = vsel %vm2936, %v3204, %v3205
  %v3207 = vrot.slane %v3205, 4
  %v3208 = vrot.slane %v143, 5
  %v3209 = vsel %vm2936, %v3207, %v3208
  %v3210 = vrot.slane %v144, 5
  %v3211 = vrot.slane %v3210, 4
  %v3212 = vrot.slane %v145, 5
  %v3213 = vsel %vm2936, %v3211, %v3212
  %v3214 = vrot.slane %v3212, 4
  %v3215 = vrot.slane %v146, 5
  %v3216 = vsel %vm2936, %v3214, %v3215
  %v3217 = vrot.slane %v147, 5
  %v3218 = vrot.slane %v3217, 4
  %v3219 = vrot.slane %v148, 5
  %v3220 = vsel %vm2936, %v3218, %v3219
  %v3221 = vrot.slane %v3219, 4
  %v3222 = vrot.slane %v149, 5
  %v3223 = vsel %vm2936, %v3221, %v3222
  %v3224 = vrot.slane %v150, 5
  %v3225 = vrot.slane %v3224, 4
  %v3226 = vrot.slane %v151, 5
  %v3227 = vsel %vm2936, %v3225, %v3226
  %v3228 = vrot.slane %v3226, 4
  %v3229 = vrot.slane %v152, 5
  %v3230 = vsel %vm2936, %v3228, %v3229
  %v3231 = vrot.slane %v153, 5
  %v3232 = vrot.slane %v3231, 4
  %v3233 = vrot.slane %v154, 5
  %v3234 = vsel %vm2936, %v3232, %v3233
  %v3235 = vrot.slane %v3233, 4
  %v3236 = vrot.slane %v155, 5
  %v3237 = vsel %vm2936, %v3235, %v3236
  %v3238 = vrot.slane %v156, 5
  %v3239 = vrot.slane %v3238, 4
  %v3240 = vrot.slane %v157, 5
  %v3241 = vsel %vm2936, %v3239, %v3240
  %v3242 = vrot.slane %v3240, 4
  %v3243 = vrot.slane %v158, 5
  %v3244 = vsel %vm2936, %v3242, %v3243
  %v3245 = vrot.slane %v159, 5
  %v3246 = vrot.slane %v3245, 4
  %v3247 = vrot.slane %v160, 5
  %v3248 = vsel %vm2936, %v3246, %v3247
  %v3249 = vrot.slane %v3247, 4
  %v3250 = vrot.slane %v161, 5
  %v3251 = vsel %vm2936, %v3249, %v3250
  %v3252 = vrot.slane %v162, 5
  %v3253 = vrot.slane %v3252, 4
  %v3254 = vrot.slane %v163, 5
  %v3255 = vsel %vm2936, %v3253, %v3254
  %v3256 = vrot.slane %v3254, 4
  %v3257 = vrot.slane %v164, 5
  %v3258 = vsel %vm2936, %v3256, %v3257
  %v3259 = vrot.slane %v165, 5
  %v3260 = vrot.slane %v3259, 4
  %v3261 = vrot.slane %v166, 5
  %v3262 = vsel %vm2936, %v3260, %v3261
  %v3263 = vrot.slane %v3261, 4
  %v3264 = vrot.slane %v167, 5
  %v3265 = vsel %vm2936, %v3263, %v3264
  %v3266 = vrot.slane %v168, 5
  %v3267 = vrot.slane %v3266, 4
  %v3268 = vrot.slane %v169, 5
  %v3269 = vsel %vm2936, %v3267, %v3268
  %v3270 = vrot.slane %v3268, 4
  %v3271 = vrot.slane %v170, 5
  %v3272 = vsel %vm2936, %v3270, %v3271
  %v3273 = vrot.slane %v177, 5
  %v3274 = vrot.slane %v3273, 4
  %v3275 = vrot.slane %v178, 5
  %v3276 = vsel %vm2936, %v3274, %v3275
  %v3277 = vrot.slane %v3275, 4
  %v3278 = vrot.slane %v179, 5
  %v3279 = vsel %vm2936, %v3277, %v3278
  %v3280 = vrot.slane %v180, 5
  %v3281 = vrot.slane %v3280, 4
  %v3282 = vrot.slane %v181, 5
  %v3283 = vsel %vm2936, %v3281, %v3282
  %v3284 = vrot.slane %v3282, 4
  %v3285 = vrot.slane %v182, 5
  %v3286 = vsel %vm2936, %v3284, %v3285
  %v3287 = vrot.slane %v183, 5
  %v3288 = vrot.slane %v3287, 4
  %v3289 = vrot.slane %v184, 5
  %v3290 = vsel %vm2936, %v3288, %v3289
  %v3291 = vrot.slane %v3289, 4
  %v3292 = vrot.slane %v185, 5
  %v3293 = vsel %vm2936, %v3291, %v3292
  %v3294 = vrot.slane %v186, 5
  %v3295 = vrot.slane %v3294, 4
  %v3296 = vrot.slane %v187, 5
  %v3297 = vsel %vm2936, %v3295, %v3296
  %v3298 = vrot.slane %v3296, 4
  %v3299 = vrot.slane %v188, 5
  %v3300 = vsel %vm2936, %v3298, %v3299
  %v3301 = vrot.slane %v189, 5
  %v3302 = vrot.slane %v3301, 4
  %v3303 = vrot.slane %v190, 5
  %v3304 = vsel %vm2936, %v3302, %v3303
  %v3305 = vrot.slane %v3303, 4
  %v3306 = vrot.slane %v191, 5
  %v3307 = vsel %vm2936, %v3305, %v3306
  %v3308 = vrot.slane %v192, 5
  %v3309 = vrot.slane %v3308, 4
  %v3310 = vrot.slane %v193, 5
  %v3311 = vsel %vm2936, %v3309, %v3310
  %v3312 = vrot.slane %v3310, 4
  %v3313 = vrot.slane %v194, 5
  %v3314 = vsel %vm2936, %v3312, %v3313
  %v3315 = vrot.slane %v195, 5
  %v3316 = vrot.slane %v3315, 4
  %v3317 = vrot.slane %v196, 5
  %v3318 = vsel %vm2936, %v3316, %v3317
  %v3319 = vrot.slane %v3317, 4
  %v3320 = vrot.slane %v197, 5
  %v3321 = vsel %vm2936, %v3319, %v3320
  %v3322 = vrot.slane %v198, 5
  %v3323 = vrot.slane %v3322, 4
  %v3324 = vrot.slane %v199, 5
  %v3325 = vsel %vm2936, %v3323, %v3324
  %v3326 = vrot.slane %v3324, 4
  %v3327 = vrot.slane %v200, 5
  %v3328 = vsel %vm2936, %v3326, %v3327
  %v3329 = vrot.slane %v201, 5
  %v3330 = vrot.slane %v3329, 4
  %v3331 = vrot.slane %v202, 5
  %v3332 = vsel %vm2936, %v3330, %v3331
  %v3333 = vrot.slane %v3331, 4
  %v3334 = vrot.slane %v203, 5
  %v3335 = vsel %vm2936, %v3333, %v3334
  %v3336 = vrot.slane %v204, 5
  %v3337 = vrot.slane %v3336, 4
  %v3338 = vrot.slane %v205, 5
  %v3339 = vsel %vm2936, %v3337, %v3338
  %v3340 = vrot.slane %v3338, 4
  %v3341 = vrot.slane %v206, 5
  %v3342 = vsel %vm2936, %v3340, %v3341
  %v3343 = vrot.slane %v207, 5
  %v3344 = vrot.slane %v3343, 4
  %v3345 = vrot.slane %v208, 5
  %v3346 = vsel %vm2936, %v3344, %v3345
  %v3347 = vrot.slane %v3345, 4
  %v3348 = vrot.slane %v209, 5
  %v3349 = vsel %vm2936, %v3347, %v3348
  %v3350 = vrot.slane %v210, 5
  %v3351 = vrot.slane %v3350, 4
  %v3352 = vrot.slane %v211, 5
  %v3353 = vsel %vm2936, %v3351, %v3352
  %v3354 = vrot.slane %v3352, 4
  %v3355 = vrot.slane %v212, 5
  %v3356 = vsel %vm2936, %v3354, %v3355
  %v3357 = vrot.slane %v213, 5
  %v3358 = vrot.slane %v3357, 4
  %v3359 = vrot.slane %v214, 5
  %v3360 = vsel %vm2936, %v3358, %v3359
  %v3361 = vrot.slane %v3359, 4
  %v3362 = vrot.slane %v215, 5
  %v3363 = vsel %vm2936, %v3361, %v3362
  %v3364 = vrot.slane %v216, 5
  %v3365 = vrot.slane %v3364, 4
  %v3366 = vrot.slane %v217, 5
  %v3367 = vsel %vm2936, %v3365, %v3366
  %v3368 = vrot.slane %v3366, 4
  %v3369 = vrot.slane %v218, 5
  %v3370 = vsel %vm2936, %v3368, %v3369
  %v3371 = vrot.slane %v219, 5
  %v3372 = vrot.slane %v3371, 4
  %v3373 = vrot.slane %v220, 5
  %v3374 = vsel %vm2936, %v3372, %v3373
  %v3375 = vrot.slane %v3373, 4
  %v3376 = vrot.slane %v221, 5
  %v3377 = vsel %vm2936, %v3375, %v3376
  %v3378 = vrot.slane %v222, 5
  %v3379 = vrot.slane %v3378, 4
  %v3380 = vrot.slane %v223, 5
  %v3381 = vsel %vm2936, %v3379, %v3380
  %v3382 = vrot.slane %v3380, 4
  %v3383 = vrot.slane %v224, 5
  %v3384 = vsel %vm2936, %v3382, %v3383
  %v3385 = vrot.slane %v231, 5
  %v3386 = vrot.slane %v3385, 4
  %v3387 = vrot.slane %v232, 5
  %v3388 = vsel %vm2936, %v3386, %v3387
  %v3389 = vrot.slane %v3387, 4
  %v3390 = vrot.slane %v233, 5
  %v3391 = vsel %vm2936, %v3389, %v3390
  %v3392 = vrot.slane %v234, 5
  %v3393 = vrot.slane %v3392, 4
  %v3394 = vrot.slane %v235, 5
  %v3395 = vsel %vm2936, %v3393, %v3394
  %v3396 = vrot.slane %v3394, 4
  %v3397 = vrot.slane %v236, 5
  %v3398 = vsel %vm2936, %v3396, %v3397
  %v3399 = vrot.slane %v237, 5
  %v3400 = vrot.slane %v3399, 4
  %v3401 = vrot.slane %v238, 5
  %v3402 = vsel %vm2936, %v3400, %v3401
  %v3403 = vrot.slane %v3401, 4
  %v3404 = vrot.slane %v239, 5
  %v3405 = vsel %vm2936, %v3403, %v3404
  %v3406 = vrot.slane %v240, 5
  %v3407 = vrot.slane %v3406, 4
  %v3408 = vrot.slane %v241, 5
  %v3409 = vsel %vm2936, %v3407, %v3408
  %v3410 = vrot.slane %v3408, 4
  %v3411 = vrot.slane %v242, 5
  %v3412 = vsel %vm2936, %v3410, %v3411
  %v3413 = vrot.slane %v243, 5
  %v3414 = vrot.slane %v3413, 4
  %v3415 = vrot.slane %v244, 5
  %v3416 = vsel %vm2936, %v3414, %v3415
  %v3417 = vrot.slane %v3415, 4
  %v3418 = vrot.slane %v245, 5
  %v3419 = vsel %vm2936, %v3417, %v3418
  %v3420 = vrot.slane %v246, 5
  %v3421 = vrot.slane %v3420, 4
  %v3422 = vrot.slane %v247, 5
  %v3423 = vsel %vm2936, %v3421, %v3422
  %v3424 = vrot.slane %v3422, 4
  %v3425 = vrot.slane %v248, 5
  %v3426 = vsel %vm2936, %v3424, %v3425
  %v3427 = vrot.slane %v249, 5
  %v3428 = vrot.slane %v3427, 4
  %v3429 = vrot.slane %v250, 5
  %v3430 = vsel %vm2936, %v3428, %v3429
  %v3431 = vrot.slane %v3429, 4
  %v3432 = vrot.slane %v251, 5
  %v3433 = vsel %vm2936, %v3431, %v3432
  %v3434 = vrot.slane %v252, 5
  %v3435 = vrot.slane %v3434, 4
  %v3436 = vrot.slane %v253, 5
  %v3437 = vsel %vm2936, %v3435, %v3436
  %v3438 = vrot.slane %v3436, 4
  %v3439 = vrot.slane %v254, 5
  %v3440 = vsel %vm2936, %v3438, %v3439
  %v3441 = vrot.slane %v255, 5
  %v3442 = vrot.slane %v3441, 4
  %v3443 = vrot.slane %v256, 5
  %v3444 = vsel %vm2936, %v3442, %v3443
  %v3445 = vrot.slane %v3443, 4
  %v3446 = vrot.slane %v257, 5
  %v3447 = vsel %vm2936, %v3445, %v3446
  %v3448 = vrot.slane %v258, 5
  %v3449 = vrot.slane %v3448, 4
  %v3450 = vrot.slane %v259, 5
  %v3451 = vsel %vm2936, %v3449, %v3450
  %v3452 = vrot.slane %v3450, 4
  %v3453 = vrot.slane %v260, 5
  %v3454 = vsel %vm2936, %v3452, %v3453
  %v3455 = vrot.slane %v261, 5
  %v3456 = vrot.slane %v3455, 4
  %v3457 = vrot.slane %v262, 5
  %v3458 = vsel %vm2936, %v3456, %v3457
  %v3459 = vrot.slane %v3457, 4
  %v3460 = vrot.slane %v263, 5
  %v3461 = vsel %vm2936, %v3459, %v3460
  %v3462 = vrot.slane %v264, 5
  %v3463 = vrot.slane %v3462, 4
  %v3464 = vrot.slane %v265, 5
  %v3465 = vsel %vm2936, %v3463, %v3464
  %v3466 = vrot.slane %v3464, 4
  %v3467 = vrot.slane %v266, 5
  %v3468 = vsel %vm2936, %v3466, %v3467
  %v3469 = vrot.slane %v267, 5
  %v3470 = vrot.slane %v3469, 4
  %v3471 = vrot.slane %v268, 5
  %v3472 = vsel %vm2936, %v3470, %v3471
  %v3473 = vrot.slane %v3471, 4
  %v3474 = vrot.slane %v269, 5
  %v3475 = vsel %vm2936, %v3473, %v3474
  %v3476 = vrot.slane %v270, 5
  %v3477 = vrot.slane %v3476, 4
  %v3478 = vrot.slane %v271, 5
  %v3479 = vsel %vm2936, %v3477, %v3478
  %v3480 = vrot.slane %v3478, 4
  %v3481 = vrot.slane %v272, 5
  %v3482 = vsel %vm2936, %v3480, %v3481
  %v3483 = vrot.slane %v273, 5
  %v3484 = vrot.slane %v3483, 4
  %v3485 = vrot.slane %v274, 5
  %v3486 = vsel %vm2936, %v3484, %v3485
  %v3487 = vrot.slane %v3485, 4
  %v3488 = vrot.slane %v275, 5
  %v3489 = vsel %vm2936, %v3487, %v3488
  %v3490 = vrot.slane %v276, 5
  %v3491 = vrot.slane %v3490, 4
  %v3492 = vrot.slane %v277, 5
  %v3493 = vsel %vm2936, %v3491, %v3492
  %v3494 = vrot.slane %v3492, 4
  %v3495 = vrot.slane %v278, 5
  %v3496 = vsel %vm2936, %v3494, %v3495
  %v3497 = vrot.slane %v285, 5
  %v3498 = vrot.slane %v3497, 4
  %v3499 = vrot.slane %v286, 5
  %v3500 = vsel %vm2936, %v3498, %v3499
  %v3501 = vrot.slane %v3499, 4
  %v3502 = vrot.slane %v287, 5
  %v3503 = vsel %vm2936, %v3501, %v3502
  %v3504 = vrot.slane %v288, 5
  %v3505 = vrot.slane %v3504, 4
  %v3506 = vrot.slane %v289, 5
  %v3507 = vsel %vm2936, %v3505, %v3506
  %v3508 = vrot.slane %v3506, 4
  %v3509 = vrot.slane %v290, 5
  %v3510 = vsel %vm2936, %v3508, %v3509
  %v3511 = vrot.slane %v291, 5
  %v3512 = vrot.slane %v3511, 4
  %v3513 = vrot.slane %v292, 5
  %v3514 = vsel %vm2936, %v3512, %v3513
  %v3515 = vrot.slane %v3513, 4
  %v3516 = vrot.slane %v293, 5
  %v3517 = vsel %vm2936, %v3515, %v3516
  %v3518 = vrot.slane %v294, 5
  %v3519 = vrot.slane %v3518, 4
  %v3520 = vrot.slane %v295, 5
  %v3521 = vsel %vm2936, %v3519, %v3520
  %v3522 = vrot.slane %v3520, 4
  %v3523 = vrot.slane %v296, 5
  %v3524 = vsel %vm2936, %v3522, %v3523
  %v3525 = vrot.slane %v297, 5
  %v3526 = vrot.slane %v3525, 4
  %v3527 = vrot.slane %v298, 5
  %v3528 = vsel %vm2936, %v3526, %v3527
  %v3529 = vrot.slane %v3527, 4
  %v3530 = vrot.slane %v299, 5
  %v3531 = vsel %vm2936, %v3529, %v3530
  %v3532 = vrot.slane %v300, 5
  %v3533 = vrot.slane %v3532, 4
  %v3534 = vrot.slane %v301, 5
  %v3535 = vsel %vm2936, %v3533, %v3534
  %v3536 = vrot.slane %v3534, 4
  %v3537 = vrot.slane %v302, 5
  %v3538 = vsel %vm2936, %v3536, %v3537
  %v3539 = vrot.slane %v303, 5
  %v3540 = vrot.slane %v3539, 4
  %v3541 = vrot.slane %v304, 5
  %v3542 = vsel %vm2936, %v3540, %v3541
  %v3543 = vrot.slane %v3541, 4
  %v3544 = vrot.slane %v305, 5
  %v3545 = vsel %vm2936, %v3543, %v3544
  %v3546 = vrot.slane %v306, 5
  %v3547 = vrot.slane %v3546, 4
  %v3548 = vrot.slane %v307, 5
  %v3549 = vsel %vm2936, %v3547, %v3548
  %v3550 = vrot.slane %v3548, 4
  %v3551 = vrot.slane %v308, 5
  %v3552 = vsel %vm2936, %v3550, %v3551
  %v3553 = vrot.slane %v309, 5
  %v3554 = vrot.slane %v3553, 4
  %v3555 = vrot.slane %v310, 5
  %v3556 = vsel %vm2936, %v3554, %v3555
  %v3557 = vrot.slane %v3555, 4
  %v3558 = vrot.slane %v311, 5
  %v3559 = vsel %vm2936, %v3557, %v3558
  %v3560 = vrot.slane %v312, 5
  %v3561 = vrot.slane %v3560, 4
  %v3562 = vrot.slane %v313, 5
  %v3563 = vsel %vm2936, %v3561, %v3562
  %v3564 = vrot.slane %v3562, 4
  %v3565 = vrot.slane %v314, 5
  %v3566 = vsel %vm2936, %v3564, %v3565
  %v3567 = vrot.slane %v315, 5
  %v3568 = vrot.slane %v3567, 4
  %v3569 = vrot.slane %v316, 5
  %v3570 = vsel %vm2936, %v3568, %v3569
  %v3571 = vrot.slane %v3569, 4
  %v3572 = vrot.slane %v317, 5
  %v3573 = vsel %vm2936, %v3571, %v3572
  %v3574 = vrot.slane %v318, 5
  %v3575 = vrot.slane %v3574, 4
  %v3576 = vrot.slane %v319, 5
  %v3577 = vsel %vm2936, %v3575, %v3576
  %v3578 = vrot.slane %v3576, 4
  %v3579 = vrot.slane %v320, 5
  %v3580 = vsel %vm2936, %v3578, %v3579
  %v3581 = vrot.slane %v321, 5
  %v3582 = vrot.slane %v3581, 4
  %v3583 = vrot.slane %v322, 5
  %v3584 = vsel %vm2936, %v3582, %v3583
  %v3585 = vrot.slane %v3583, 4
  %v3586 = vrot.slane %v323, 5
  %v3587 = vsel %vm2936, %v3585, %v3586
  %v3588 = vrot.slane %v324, 5
  %v3589 = vrot.slane %v3588, 4
  %v3590 = vrot.slane %v325, 5
  %v3591 = vsel %vm2936, %v3589, %v3590
  %v3592 = vrot.slane %v3590, 4
  %v3593 = vrot.slane %v326, 5
  %v3594 = vsel %vm2936, %v3592, %v3593
  %v3595 = vrot.slane %v327, 5
  %v3596 = vrot.slane %v3595, 4
  %v3597 = vrot.slane %v328, 5
  %v3598 = vsel %vm2936, %v3596, %v3597
  %v3599 = vrot.slane %v3597, 4
  %v3600 = vrot.slane %v329, 5
  %v3601 = vsel %vm2936, %v3599, %v3600
  %v3602 = vrot.slane %v330, 5
  %v3603 = vrot.slane %v3602, 4
  %v3604 = vrot.slane %v331, 5
  %v3605 = vsel %vm2936, %v3603, %v3604
  %v3606 = vrot.slane %v3604, 4
  %v3607 = vrot.slane %v332, 5
  %v3608 = vsel %vm2936, %v3606, %v3607
  %v3610 = vshrl.u32 %v63, 16
  %v3612 = vrot.slane %v3610, 4
  %v3613 = vshll.u32 %v63, 16
  %v3615 = vrot.slane %v3613, 5
  %v3616 = vor.u32 %v3612, %v3615
  %v3617 = vrot.slane %v3616, 4
  %v3619 = vshll.u32 %v64, 16
  %v3621 = vrot.slane %v3619, 5
  %v3622 = vsel %vm341, %v3617, %v3621
  %v3623 = vshrl.u32 %v64, 16
  %v3625 = vrot.slane %v3623, 4
  %v3626 = vor.u32 %v3625, %v3621
  %v3627 = vrot.slane %v3626, 4
  %v3629 = vshll.u32 %v65, 16
  %v3631 = vrot.slane %v3629, 5
  %v3632 = vsel %vm341, %v3627, %v3631
  %v3634 = vshrl.u32 %v117, 16
  %v3636 = vrot.slane %v3634, 4
  %v3637 = vshll.u32 %v117, 16
  %v3639 = vrot.slane %v3637, 5
  %v3640 = vor.u32 %v3636, %v3639
  %v3641 = vrot.slane %v3640, 4
  %v3643 = vshll.u32 %v118, 16
  %v3645 = vrot.slane %v3643, 5
  %v3646 = vsel %vm341, %v3641, %v3645
  %v3647 = vshrl.u32 %v118, 16
  %v3649 = vrot.slane %v3647, 4
  %v3650 = vor.u32 %v3649, %v3645
  %v3651 = vrot.slane %v3650, 4
  %v3653 = vshll.u32 %v119, 16
  %v3655 = vrot.slane %v3653, 5
  %v3656 = vsel %vm341, %v3651, %v3655
  %v3658 = vshrl.u32 %v171, 16
  %v3660 = vrot.slane %v3658, 4
  %v3661 = vshll.u32 %v171, 16
  %v3663 = vrot.slane %v3661, 5
  %v3664 = vor.u32 %v3660, %v3663
  %v3665 = vrot.slane %v3664, 4
  %v3667 = vshll.u32 %v172, 16
  %v3669 = vrot.slane %v3667, 5
  %v3670 = vsel %vm341, %v3665, %v3669
  %v3671 = vshrl.u32 %v172, 16
  %v3673 = vrot.slane %v3671, 4
  %v3674 = vor.u32 %v3673, %v3669
  %v3675 = vrot.slane %v3674, 4
  %v3677 = vshll.u32 %v173, 16
  %v3679 = vrot.slane %v3677, 5
  %v3680 = vsel %vm341, %v3675, %v3679
  %v3682 = vshrl.u32 %v225, 16
  %v3684 = vrot.slane %v3682, 4
  %v3685 = vshll.u32 %v225, 16
  %v3687 = vrot.slane %v3685, 5
  %v3688 = vor.u32 %v3684, %v3687
  %v3689 = vrot.slane %v3688, 4
  %v3691 = vshll.u32 %v226, 16
  %v3693 = vrot.slane %v3691, 5
  %v3694 = vsel %vm341, %v3689, %v3693
  %v3695 = vshrl.u32 %v226, 16
  %v3697 = vrot.slane %v3695, 4
  %v3698 = vor.u32 %v3697, %v3693
  %v3699 = vrot.slane %v3698, 4
  %v3701 = vshll.u32 %v227, 16
  %v3703 = vrot.slane %v3701, 5
  %v3704 = vsel %vm341, %v3699, %v3703
  %v3706 = vshrl.u32 %v279, 16
  %v3708 = vrot.slane %v3706, 4
  %v3709 = vshll.u32 %v279, 16
  %v3711 = vrot.slane %v3709, 5
  %v3712 = vor.u32 %v3708, %v3711
  %v3713 = vrot.slane %v3712, 4
  %v3715 = vshll.u32 %v280, 16
  %v3717 = vrot.slane %v3715, 5
  %v3718 = vsel %vm341, %v3713, %v3717
  %v3719 = vshrl.u32 %v280, 16
  %v3721 = vrot.slane %v3719, 4
  %v3722 = vor.u32 %v3721, %v3717
  %v3723 = vrot.slane %v3722, 4
  %v3725 = vshll.u32 %v281, 16
  %v3727 = vrot.slane %v3725, 5
  %v3728 = vsel %vm341, %v3723, %v3727
  %v3730 = vshrl.u32 %v333, 16
  %v3732 = vrot.slane %v3730, 4
  %v3733 = vshll.u32 %v333, 16
  %v3735 = vrot.slane %v3733, 5
  %v3736 = vor.u32 %v3732, %v3735
  %v3737 = vrot.slane %v3736, 4
  %v3739 = vshll.u32 %v334, 16
  %v3741 = vrot.slane %v3739, 5
  %v3742 = vsel %vm341, %v3737, %v3741
  %v3743 = vshrl.u32 %v334, 16
  %v3745 = vrot.slane %v3743, 4
  %v3746 = vor.u32 %v3745, %v3741
  %v3747 = vrot.slane %v3746, 4
  %v3749 = vshll.u32 %v335, 16
  %v3751 = vrot.slane %v3749, 5
  %v3752 = vsel %vm341, %v3747, %v3751
  %v3771 = vrot.slane %v63, 5
  %v3772 = vrot.slane %v3771, 4
  %v3773 = vrot.slane %v64, 5
  %v3774 = vsel %vm2936, %v3772, %v3773
  %v3775 = vrot.slane %v3773, 4
  %v3776 = vrot.slane %v65, 5
  %v3777 = vsel %vm2936, %v3775, %v3776
  %v3778 = vrot.slane %v117, 5
  %v3779 = vrot.slane %v3778, 4
  %v3780 = vrot.slane %v118, 5
  %v3781 = vsel %vm2936, %v3779, %v3780
  %v3782 = vrot.slane %v3780, 4
  %v3783 = vrot.slane %v119, 5
  %v3784 = vsel %vm2936, %v3782, %v3783
  %v3785 = vrot.slane %v171, 5
  %v3786 = vrot.slane %v3785, 4
  %v3787 = vrot.slane %v172, 5
  %v3788 = vsel %vm2936, %v3786, %v3787
  %v3789 = vrot.slane %v3787, 4
  %v3790 = vrot.slane %v173, 5
  %v3791 = vsel %vm2936, %v3789, %v3790
  %v3792 = vrot.slane %v225, 5
  %v3793 = vrot.slane %v3792, 4
  %v3794 = vrot.slane %v226, 5
  %v3795 = vsel %vm2936, %v3793, %v3794
  %v3796 = vrot.slane %v3794, 4
  %v3797 = vrot.slane %v227, 5
  %v3798 = vsel %vm2936, %v3796, %v3797
  %v3799 = vrot.slane %v279, 5
  %v3800 = vrot.slane %v3799, 4
  %v3801 = vrot.slane %v280, 5
  %v3802 = vsel %vm2936, %v3800, %v3801
  %v3803 = vrot.slane %v3801, 4
  %v3804 = vrot.slane %v281, 5
  %v3805 = vsel %vm2936, %v3803, %v3804
  %v3806 = vrot.slane %v333, 5
  %v3807 = vrot.slane %v3806, 4
  %v3808 = vrot.slane %v334, 5
  %v3809 = vsel %vm2936, %v3807, %v3808
  %v3810 = vrot.slane %v3808, 4
  %v3811 = vrot.slane %v335, 5
  %v3812 = vsel %vm2936, %v3810, %v3811
  %v3814 = vshrl.u32 %v66, 16
  %v3816 = vrot.slane %v3814, 4
  %v3817 = vshll.u32 %v66, 16
  %v3819 = vrot.slane %v3817, 5
  %v3820 = vor.u32 %v3816, %v3819
  %v3821 = vrot.slane %v3820, 4
  %v3823 = vshll.u32 %v67, 16
  %v3825 = vrot.slane %v3823, 5
  %v3826 = vsel %vm341, %v3821, %v3825
  %v3827 = vshrl.u32 %v67, 16
  %v3829 = vrot.slane %v3827, 4
  %v3830 = vor.u32 %v3829, %v3825
  %v3831 = vrot.slane %v3830, 4
  %v3833 = vshll.u32 %v68, 16
  %v3835 = vrot.slane %v3833, 5
  %v3836 = vsel %vm341, %v3831, %v3835
  %v3838 = vshrl.u32 %v120, 16
  %v3840 = vrot.slane %v3838, 4
  %v3841 = vshll.u32 %v120, 16
  %v3843 = vrot.slane %v3841, 5
  %v3844 = vor.u32 %v3840, %v3843
  %v3845 = vrot.slane %v3844, 4
  %v3847 = vshll.u32 %v121, 16
  %v3849 = vrot.slane %v3847, 5
  %v3850 = vsel %vm341, %v3845, %v3849
  %v3851 = vshrl.u32 %v121, 16
  %v3853 = vrot.slane %v3851, 4
  %v3854 = vor.u32 %v3853, %v3849
  %v3855 = vrot.slane %v3854, 4
  %v3857 = vshll.u32 %v122, 16
  %v3859 = vrot.slane %v3857, 5
  %v3860 = vsel %vm341, %v3855, %v3859
  %v3862 = vshrl.u32 %v174, 16
  %v3864 = vrot.slane %v3862, 4
  %v3865 = vshll.u32 %v174, 16
  %v3867 = vrot.slane %v3865, 5
  %v3868 = vor.u32 %v3864, %v3867
  %v3869 = vrot.slane %v3868, 4
  %v3871 = vshll.u32 %v175, 16
  %v3873 = vrot.slane %v3871, 5
  %v3874 = vsel %vm341, %v3869, %v3873
  %v3875 = vshrl.u32 %v175, 16
  %v3877 = vrot.slane %v3875, 4
  %v3878 = vor.u32 %v3877, %v3873
  %v3879 = vrot.slane %v3878, 4
  %v3881 = vshll.u32 %v176, 16
  %v3883 = vrot.slane %v3881, 5
  %v3884 = vsel %vm341, %v3879, %v3883
  %v3886 = vshrl.u32 %v228, 16
  %v3888 = vrot.slane %v3886, 4
  %v3889 = vshll.u32 %v228, 16
  %v3891 = vrot.slane %v3889, 5
  %v3892 = vor.u32 %v3888, %v3891
  %v3893 = vrot.slane %v3892, 4
  %v3895 = vshll.u32 %v229, 16
  %v3897 = vrot.slane %v3895, 5
  %v3898 = vsel %vm341, %v3893, %v3897
  %v3899 = vshrl.u32 %v229, 16
  %v3901 = vrot.slane %v3899, 4
  %v3902 = vor.u32 %v3901, %v3897
  %v3903 = vrot.slane %v3902, 4
  %v3905 = vshll.u32 %v230, 16
  %v3907 = vrot.slane %v3905, 5
  %v3908 = vsel %vm341, %v3903, %v3907
  %v3910 = vshrl.u32 %v282, 16
  %v3912 = vrot.slane %v3910, 4
  %v3913 = vshll.u32 %v282, 16
  %v3915 = vrot.slane %v3913, 5
  %v3916 = vor.u32 %v3912, %v3915
  %v3917 = vrot.slane %v3916, 4
  %v3919 = vshll.u32 %v283, 16
  %v3921 = vrot.slane %v3919, 5
  %v3922 = vsel %vm341, %v3917, %v3921
  %v3923 = vshrl.u32 %v283, 16
  %v3925 = vrot.slane %v3923, 4
  %v3926 = vor.u32 %v3925, %v3921
  %v3927 = vrot.slane %v3926, 4
  %v3929 = vshll.u32 %v284, 16
  %v3931 = vrot.slane %v3929, 5
  %v3932 = vsel %vm341, %v3927, %v3931
  %v3934 = vshrl.u32 %v336, 16
  %v3936 = vrot.slane %v3934, 4
  %v3937 = vshll.u32 %v336, 16
  %v3939 = vrot.slane %v3937, 5
  %v3940 = vor.u32 %v3936, %v3939
  %v3941 = vrot.slane %v3940, 4
  %v3943 = vshll.u32 %v337, 16
  %v3945 = vrot.slane %v3943, 5
  %v3946 = vsel %vm341, %v3941, %v3945
  %v3947 = vshrl.u32 %v337, 16
  %v3949 = vrot.slane %v3947, 4
  %v3950 = vor.u32 %v3949, %v3945
  %v3951 = vrot.slane %v3950, 4
  %v3953 = vshll.u32 %v338, 16
  %v3955 = vrot.slane %v3953, 5
  %v3956 = vsel %vm341, %v3951, %v3955
  %v3975 = vrot.slane %v66, 5
  %v3976 = vrot.slane %v3975, 4
  %v3977 = vrot.slane %v67, 5
  %v3978 = vsel %vm2936, %v3976, %v3977
  %v3979 = vrot.slane %v3977, 4
  %v3980 = vrot.slane %v68, 5
  %v3981 = vsel %vm2936, %v3979, %v3980
  %v3982 = vrot.slane %v120, 5
  %v3983 = vrot.slane %v3982, 4
  %v3984 = vrot.slane %v121, 5
  %v3985 = vsel %vm2936, %v3983, %v3984
  %v3986 = vrot.slane %v3984, 4
  %v3987 = vrot.slane %v122, 5
  %v3988 = vsel %vm2936, %v3986, %v3987
  %v3989 = vrot.slane %v174, 5
  %v3990 = vrot.slane %v3989, 4
  %v3991 = vrot.slane %v175, 5
  %v3992 = vsel %vm2936, %v3990, %v3991
  %v3993 = vrot.slane %v3991, 4
  %v3994 = vrot.slane %v176, 5
  %v3995 = vsel %vm2936, %v3993, %v3994
  %v3996 = vrot.slane %v228, 5
  %v3997 = vrot.slane %v3996, 4
  %v3998 = vrot.slane %v229, 5
  %v3999 = vsel %vm2936, %v3997, %v3998
  %v4000 = vrot.slane %v3998, 4
  %v4001 = vrot.slane %v230, 5
  %v4002 = vsel %vm2936, %v4000, %v4001
  %v4003 = vrot.slane %v282, 5
  %v4004 = vrot.slane %v4003, 4
  %v4005 = vrot.slane %v283, 5
  %v4006 = vsel %vm2936, %v4004, %v4005
  %v4007 = vrot.slane %v4005, 4
  %v4008 = vrot.slane %v284, 5
  %v4009 = vsel %vm2936, %v4007, %v4008
  %v4010 = vrot.slane %v336, 5
  %v4011 = vrot.slane %v4010, 4
  %v4012 = vrot.slane %v337, 5
  %v4013 = vsel %vm2936, %v4011, %v4012
  %v4014 = vrot.slane %v4012, 4
  %v4015 = vrot.slane %v338, 5
  %v4016 = vsel %vm2936, %v4014, %v4015
  %v4017 = vunpack.c.l.b16 %v15
  %v4018 = vunpack.c.l.b16 %v16
  %v4019 = vunpack.c.l.b16 %v18
  %v4020 = vunpack.c.l.b16 %v19
  %v4021 = vunpack.c.l.b16 %v21
  %v4022 = vunpack.c.l.b16 %v22
  %v4023 = vunpack.c.l.b16 %v24
  %v4024 = vunpack.c.l.b16 %v25
  %v4025 = vunpack.c.l.b16 %v27
  %v4026 = vunpack.c.l.b16 %v28
  %v4027 = vunpack.c.l.b16 %v30
  %v4028 = vunpack.c.l.b16 %v31
  %v4029 = vunpack.c.l.b16 %v33
  %v4030 = vunpack.c.l.b16 %v34
  %v4031 = vunpack.c.l.b16 %v36
  %v4032 = vunpack.c.l.b16 %v37
  %v4033 = vunpack.c.l.b16 %v39
  %v4034 = vunpack.c.l.b16 %v40
  %v4035 = vunpack.c.l.b16 %v42
  %v4036 = vunpack.c.l.b16 %v43
  %v4037 = vunpack.c.l.b16 %v45
  %v4038 = vunpack.c.l.b16 %v46
  %v4039 = vunpack.c.l.b16 %v48
  %v4040 = vunpack.c.l.b16 %v49
  %v4041 = vunpack.c.l.b16 %v51
  %v4042 = vunpack.c.l.b16 %v52
  %v4043 = vunpack.c.l.b16 %v54
  %v4044 = vunpack.c.l.b16 %v55
  %v4045 = vunpack.c.l.b16 %v57
  %v4046 = vunpack.c.l.b16 %v58
  %v4047 = vunpack.c.l.b16 %v60
  %v4048 = vunpack.c.l.b16 %v61
  %v4049 = vunpack.c.l.b16 %v69
  %v4050 = vunpack.c.l.b16 %v70
  %v4051 = vunpack.c.l.b16 %v72
  %v4052 = vunpack.c.l.b16 %v73
  %v4053 = vunpack.c.l.b16 %v75
  %v4054 = vunpack.c.l.b16 %v76
  %v4055 = vunpack.c.l.b16 %v78
  %v4056 = vunpack.c.l.b16 %v79
  %v4057 = vunpack.c.l.b16 %v81
  %v4058 = vunpack.c.l.b16 %v82
  %v4059 = vunpack.c.l.b16 %v84
  %v4060 = vunpack.c.l.b16 %v85
  %v4061 = vunpack.c.l.b16 %v87
  %v4062 = vunpack.c.l.b16 %v88
  %v4063 = vunpack.c.l.b16 %v90
  %v4064 = vunpack.c.l.b16 %v91
  %v4065 = vunpack.c.l.b16 %v93
  %v4066 = vunpack.c.l.b16 %v94
  %v4067 = vunpack.c.l.b16 %v96
  %v4068 = vunpack.c.l.b16 %v97
  %v4069 = vunpack.c.l.b16 %v99
  %v4070 = vunpack.c.l.b16 %v100
  %v4071 = vunpack.c.l.b16 %v102
  %v4072 = vunpack.c.l.b16 %v103
  %v4073 = vunpack.c.l.b16 %v105
  %v4074 = vunpack.c.l.b16 %v106
  %v4075 = vunpack.c.l.b16 %v108
  %v4076 = vunpack.c.l.b16 %v109
  %v4077 = vunpack.c.l.b16 %v111
  %v4078 = vunpack.c.l.b16 %v112
  %v4079 = vunpack.c.l.b16 %v114
  %v4080 = vunpack.c.l.b16 %v115
  %v4081 = vunpack.c.l.b16 %v123
  %v4082 = vunpack.c.l.b16 %v124
  %v4083 = vunpack.c.l.b16 %v126
  %v4084 = vunpack.c.l.b16 %v127
  %v4085 = vunpack.c.l.b16 %v129
  %v4086 = vunpack.c.l.b16 %v130
  %v4087 = vunpack.c.l.b16 %v132
  %v4088 = vunpack.c.l.b16 %v133
  %v4089 = vunpack.c.l.b16 %v135
  %v4090 = vunpack.c.l.b16 %v136
  %v4091 = vunpack.c.l.b16 %v138
  %v4092 = vunpack.c.l.b16 %v139
  %v4093 = vunpack.c.l.b16 %v141
  %v4094 = vunpack.c.l.b16 %v142
  %v4095 = vunpack.c.l.b16 %v144
  %v4096 = vunpack.c.l.b16 %v145
  %v4097 = vunpack.c.l.b16 %v147
  %v4098 = vunpack.c.l.b16 %v148
  %v4099 = vunpack.c.l.b16 %v150
  %v4100 = vunpack.c.l.b16 %v151
  %v4101 = vunpack.c.l.b16 %v153
  %v4102 = vunpack.c.l.b16 %v154
  %v4103 = vunpack.c.l.b16 %v156
  %v4104 = vunpack.c.l.b16 %v157
  %v4105 = vunpack.c.l.b16 %v159
  %v4106 = vunpack.c.l.b16 %v160
  %v4107 = vunpack.c.l.b16 %v162
  %v4108 = vunpack.c.l.b16 %v163
  %v4109 = vunpack.c.l.b16 %v165
  %v4110 = vunpack.c.l.b16 %v166
  %v4111 = vunpack.c.l.b16 %v168
  %v4112 = vunpack.c.l.b16 %v169
  %v4113 = vunpack.c.l.b16 %v177
  %v4114 = vunpack.c.l.b16 %v178
  %v4115 = vunpack.c.l.b16 %v180
  %v4116 = vunpack.c.l.b16 %v181
  %v4117 = vunpack.c.l.b16 %v183
  %v4118 = vunpack.c.l.b16 %v184
  %v4119 = vunpack.c.l.b16 %v186
  %v4120 = vunpack.c.l.b16 %v187
  %v4121 = vunpack.c.l.b16 %v189
  %v4122 = vunpack.c.l.b16 %v190
  %v4123 = vunpack.c.l.b16 %v192
  %v4124 = vunpack.c.l.b16 %v193
  %v4125 = vunpack.c.l.b16 %v195
  %v4126 = vunpack.c.l.b16 %v196
  %v4127 = vunpack.c.l.b16 %v198
  %v4128 = vunpack.c.l.b16 %v199
  %v4129 = vunpack.c.l.b16 %v201
  %v4130 = vunpack.c.l.b16 %v202
  %v4131 = vunpack.c.l.b16 %v204
  %v4132 = vunpack.c.l.b16 %v205
  %v4133 = vunpack.c.l.b16 %v207
  %v4134 = vunpack.c.l.b16 %v208
  %v4135 = vunpack.c.l.b16 %v210
  %v4136 = vunpack.c.l.b16 %v211
  %v4137 = vunpack.c.l.b16 %v213
  %v4138 = vunpack.c.l.b16 %v214
  %v4139 = vunpack.c.l.b16 %v216
  %v4140 = vunpack.c.l.b16 %v217
  %v4141 = vunpack.c.l.b16 %v219
  %v4142 = vunpack.c.l.b16 %v220
  %v4143 = vunpack.c.l.b16 %v222
  %v4144 = vunpack.c.l.b16 %v223
  %v4145 = vunpack.c.l.b16 %v231
  %v4146 = vunpack.c.l.b16 %v232
  %v4147 = vunpack.c.l.b16 %v234
  %v4148 = vunpack.c.l.b16 %v235
  %v4149 = vunpack.c.l.b16 %v237
  %v4150 = vunpack.c.l.b16 %v238
  %v4151 = vunpack.c.l.b16 %v240
  %v4152 = vunpack.c.l.b16 %v241
  %v4153 = vunpack.c.l.b16 %v243
  %v4154 = vunpack.c.l.b16 %v244
  %v4155 = vunpack.c.l.b16 %v246
  %v4156 = vunpack.c.l.b16 %v247
  %v4157 = vunpack.c.l.b16 %v249
  %v4158 = vunpack.c.l.b16 %v250
  %v4159 = vunpack.c.l.b16 %v252
  %v4160 = vunpack.c.l.b16 %v253
  %v4161 = vunpack.c.l.b16 %v255
  %v4162 = vunpack.c.l.b16 %v256
  %v4163 = vunpack.c.l.b16 %v258
  %v4164 = vunpack.c.l.b16 %v259
  %v4165 = vunpack.c.l.b16 %v261
  %v4166 = vunpack.c.l.b16 %v262
  %v4167 = vunpack.c.l.b16 %v264
  %v4168 = vunpack.c.l.b16 %v265
  %v4169 = vunpack.c.l.b16 %v267
  %v4170 = vunpack.c.l.b16 %v268
  %v4171 = vunpack.c.l.b16 %v270
  %v4172 = vunpack.c.l.b16 %v271
  %v4173 = vunpack.c.l.b16 %v273
  %v4174 = vunpack.c.l.b16 %v274
  %v4175 = vunpack.c.l.b16 %v276
  %v4176 = vunpack.c.l.b16 %v277
  %v4177 = vunpack.c.l.b16 %v285
  %v4178 = vunpack.c.l.b16 %v286
  %v4179 = vunpack.c.l.b16 %v288
  %v4180 = vunpack.c.l.b16 %v289
  %v4181 = vunpack.c.l.b16 %v291
  %v4182 = vunpack.c.l.b16 %v292
  %v4183 = vunpack.c.l.b16 %v294
  %v4184 = vunpack.c.l.b16 %v295
  %v4185 = vunpack.c.l.b16 %v297
  %v4186 = vunpack.c.l.b16 %v298
  %v4187 = vunpack.c.l.b16 %v300
  %v4188 = vunpack.c.l.b16 %v301
  %v4189 = vunpack.c.l.b16 %v303
  %v4190 = vunpack.c.l.b16 %v304
  %v4191 = vunpack.c.l.b16 %v306
  %v4192 = vunpack.c.l.b16 %v307
  %v4193 = vunpack.c.l.b16 %v309
  %v4194 = vunpack.c.l.b16 %v310
  %v4195 = vunpack.c.l.b16 %v312
  %v4196 = vunpack.c.l.b16 %v313
  %v4197 = vunpack.c.l.b16 %v315
  %v4198 = vunpack.c.l.b16 %v316
  %v4199 = vunpack.c.l.b16 %v318
  %v4200 = vunpack.c.l.b16 %v319
  %v4201 = vunpack.c.l.b16 %v321
  %v4202 = vunpack.c.l.b16 %v322
  %v4203 = vunpack.c.l.b16 %v324
  %v4204 = vunpack.c.l.b16 %v325
  %v4205 = vunpack.c.l.b16 %v327
  %v4206 = vunpack.c.l.b16 %v328
  %v4207 = vunpack.c.l.b16 %v330
  %v4208 = vunpack.c.l.b16 %v331
  %v4209 = vpack.c.b16 %v4018, %v4017
  %v4210 = vpack.c.b16 %v4020, %v4019
  %v4211 = vpack.c.b16 %v4022, %v4021
  %v4212 = vpack.c.b16 %v4024, %v4023
  %v4213 = vpack.c.b16 %v4026, %v4025
  %v4214 = vpack.c.b16 %v4028, %v4027
  %v4215 = vpack.c.b16 %v4030, %v4029
  %v4216 = vpack.c.b16 %v4032, %v4031
  %v4217 = vpack.c.b16 %v4034, %v4033
  %v4218 = vpack.c.b16 %v4036, %v4035
  %v4219 = vpack.c.b16 %v4038, %v4037
  %v4220 = vpack.c.b16 %v4040, %v4039
  %v4221 = vpack.c.b16 %v4042, %v4041
  %v4222 = vpack.c.b16 %v4044, %v4043
  %v4223 = vpack.c.b16 %v4046, %v4045
  %v4224 = vpack.c.b16 %v4048, %v4047
  %v4225 = vpack.c.b16 %v4050, %v4049
  %v4226 = vpack.c.b16 %v4052, %v4051
  %v4227 = vpack.c.b16 %v4054, %v4053
  %v4228 = vpack.c.b16 %v4056, %v4055
  %v4229 = vpack.c.b16 %v4058, %v4057
  %v4230 = vpack.c.b16 %v4060, %v4059
  %v4231 = vpack.c.b16 %v4062, %v4061
  %v4232 = vpack.c.b16 %v4064, %v4063
  %v4233 = vpack.c.b16 %v4066, %v4065
  %v4234 = vpack.c.b16 %v4068, %v4067
  %v4235 = vpack.c.b16 %v4070, %v4069
  %v4236 = vpack.c.b16 %v4072, %v4071
  %v4237 = vpack.c.b16 %v4074, %v4073
  %v4238 = vpack.c.b16 %v4076, %v4075
  %v4239 = vpack.c.b16 %v4078, %v4077
  %v4240 = vpack.c.b16 %v4080, %v4079
  %v4241 = vpack.c.b16 %v4082, %v4081
  %v4242 = vpack.c.b16 %v4084, %v4083
  %v4243 = vpack.c.b16 %v4086, %v4085
  %v4244 = vpack.c.b16 %v4088, %v4087
  %v4245 = vpack.c.b16 %v4090, %v4089
  %v4246 = vpack.c.b16 %v4092, %v4091
  %v4247 = vpack.c.b16 %v4094, %v4093
  %v4248 = vpack.c.b16 %v4096, %v4095
  %v4249 = vpack.c.b16 %v4098, %v4097
  %v4250 = vpack.c.b16 %v4100, %v4099
  %v4251 = vpack.c.b16 %v4102, %v4101
  %v4252 = vpack.c.b16 %v4104, %v4103
  %v4253 = vpack.c.b16 %v4106, %v4105
  %v4254 = vpack.c.b16 %v4108, %v4107
  %v4255 = vpack.c.b16 %v4110, %v4109
  %v4256 = vpack.c.b16 %v4112, %v4111
  %v4257 = vpack.c.b16 %v4114, %v4113
  %v4258 = vpack.c.b16 %v4116, %v4115
  %v4259 = vpack.c.b16 %v4118, %v4117
  %v4260 = vpack.c.b16 %v4120, %v4119
  %v4261 = vpack.c.b16 %v4122, %v4121
  %v4262 = vpack.c.b16 %v4124, %v4123
  %v4263 = vpack.c.b16 %v4126, %v4125
  %v4264 = vpack.c.b16 %v4128, %v4127
  %v4265 = vpack.c.b16 %v4130, %v4129
  %v4266 = vpack.c.b16 %v4132, %v4131
  %v4267 = vpack.c.b16 %v4134, %v4133
  %v4268 = vpack.c.b16 %v4136, %v4135
  %v4269 = vpack.c.b16 %v4138, %v4137
  %v4270 = vpack.c.b16 %v4140, %v4139
  %v4271 = vpack.c.b16 %v4142, %v4141
  %v4272 = vpack.c.b16 %v4144, %v4143
  %v4273 = vpack.c.b16 %v4146, %v4145
  %v4274 = vpack.c.b16 %v4148, %v4147
  %v4275 = vpack.c.b16 %v4150, %v4149
  %v4276 = vpack.c.b16 %v4152, %v4151
  %v4277 = vpack.c.b16 %v4154, %v4153
  %v4278 = vpack.c.b16 %v4156, %v4155
  %v4279 = vpack.c.b16 %v4158, %v4157
  %v4280 = vpack.c.b16 %v4160, %v4159
  %v4281 = vpack.c.b16 %v4162, %v4161
  %v4282 = vpack.c.b16 %v4164, %v4163
  %v4283 = vpack.c.b16 %v4166, %v4165
  %v4284 = vpack.c.b16 %v4168, %v4167
  %v4285 = vpack.c.b16 %v4170, %v4169
  %v4286 = vpack.c.b16 %v4172, %v4171
  %v4287 = vpack.c.b16 %v4174, %v4173
  %v4288 = vpack.c.b16 %v4176, %v4175
  %v4289 = vpack.c.b16 %v4178, %v4177
  %v4290 = vpack.c.b16 %v4180, %v4179
  %v4291 = vpack.c.b16 %v4182, %v4181
  %v4292 = vpack.c.b16 %v4184, %v4183
  %v4293 = vpack.c.b16 %v4186, %v4185
  %v4294 = vpack.c.b16 %v4188, %v4187
  %v4295 = vpack.c.b16 %v4190, %v4189
  %v4296 = vpack.c.b16 %v4192, %v4191
  %v4297 = vpack.c.b16 %v4194, %v4193
  %v4298 = vpack.c.b16 %v4196, %v4195
  %v4299 = vpack.c.b16 %v4198, %v4197
  %v4300 = vpack.c.b16 %v4200, %v4199
  %v4301 = vpack.c.b16 %v4202, %v4201
  %v4302 = vpack.c.b16 %v4204, %v4203
  %v4303 = vpack.c.b16 %v4206, %v4205
  %v4304 = vpack.c.b16 %v4208, %v4207
  %v4305 = vunpack.c.l.b16 %v355
  %v4306 = vunpack.c.l.b16 %v365
  %v4307 = vunpack.c.l.b16 %v379
  %v4308 = vunpack.c.l.b16 %v389
  %v4309 = vunpack.c.l.b16 %v403
  %v4310 = vunpack.c.l.b16 %v413
  %v4311 = vunpack.c.l.b16 %v427
  %v4312 = vunpack.c.l.b16 %v437
  %v4313 = vunpack.c.l.b16 %v451
  %v4314 = vunpack.c.l.b16 %v461
  %v4315 = vunpack.c.l.b16 %v475
  %v4316 = vunpack.c.l.b16 %v485
  %v4317 = vunpack.c.l.b16 %v499
  %v4318 = vunpack.c.l.b16 %v509
  %v4319 = vunpack.c.l.b16 %v523
  %v4320 = vunpack.c.l.b16 %v533
  %v4321 = vunpack.c.l.b16 %v547
  %v4322 = vunpack.c.l.b16 %v557
  %v4323 = vunpack.c.l.b16 %v571
  %v4324 = vunpack.c.l.b16 %v581
  %v4325 = vunpack.c.l.b16 %v595
  %v4326 = vunpack.c.l.b16 %v605
  %v4327 = vunpack.c.l.b16 %v619
  %v4328 = vunpack.c.l.b16 %v629
  %v4329 = vunpack.c.l.b16 %v643
  %v4330 = vunpack.c.l.b16 %v653
  %v4331 = vunpack.c.l.b16 %v667
  %v4332 = vunpack.c.l.b16 %v677
  %v4333 = vunpack.c.l.b16 %v691
  %v4334 = vunpack.c.l.b16 %v701
  %v4335 = vunpack.c.l.b16 %v715
  %v4336 = vunpack.c.l.b16 %v725
  %v4337 = vunpack.c.l.b16 %v739
  %v4338 = vunpack.c.l.b16 %v749
  %v4339 = vunpack.c.l.b16 %v763
  %v4340 = vunpack.c.l.b16 %v773
  %v4341 = vunpack.c.l.b16 %v787
  %v4342 = vunpack.c.l.b16 %v797
  %v4343 = vunpack.c.l.b16 %v811
  %v4344 = vunpack.c.l.b16 %v821
  %v4345 = vunpack.c.l.b16 %v835
  %v4346 = vunpack.c.l.b16 %v845
  %v4347 = vunpack.c.l.b16 %v859
  %v4348 = vunpack.c.l.b16 %v869
  %v4349 = vunpack.c.l.b16 %v883
  %v4350 = vunpack.c.l.b16 %v893
  %v4351 = vunpack.c.l.b16 %v907
  %v4352 = vunpack.c.l.b16 %v917
  %v4353 = vunpack.c.l.b16 %v931
  %v4354 = vunpack.c.l.b16 %v941
  %v4355 = vunpack.c.l.b16 %v955
  %v4356 = vunpack.c.l.b16 %v965
  %v4357 = vunpack.c.l.b16 %v979
  %v4358 = vunpack.c.l.b16 %v989
  %v4359 = vunpack.c.l.b16 %v1003
  %v4360 = vunpack.c.l.b16 %v1013
  %v4361 = vunpack.c.l.b16 %v1027
  %v4362 = vunpack.c.l.b16 %v1037
  %v4363 = vunpack.c.l.b16 %v1051
  %v4364 = vunpack.c.l.b16 %v1061
  %v4365 = vunpack.c.l.b16 %v1075
  %v4366 = vunpack.c.l.b16 %v1085
  %v4367 = vunpack.c.l.b16 %v1099
  %v4368 = vunpack.c.l.b16 %v1109
  %v4369 = vunpack.c.l.b16 %v1123
  %v4370 = vunpack.c.l.b16 %v1133
  %v4371 = vunpack.c.l.b16 %v1147
  %v4372 = vunpack.c.l.b16 %v1157
  %v4373 = vunpack.c.l.b16 %v1171
  %v4374 = vunpack.c.l.b16 %v1181
  %v4375 = vunpack.c.l.b16 %v1195
  %v4376 = vunpack.c.l.b16 %v1205
  %v4377 = vunpack.c.l.b16 %v1219
  %v4378 = vunpack.c.l.b16 %v1229
  %v4379 = vunpack.c.l.b16 %v1243
  %v4380 = vunpack.c.l.b16 %v1253
  %v4381 = vunpack.c.l.b16 %v1267
  %v4382 = vunpack.c.l.b16 %v1277
  %v4383 = vunpack.c.l.b16 %v1291
  %v4384 = vunpack.c.l.b16 %v1301
  %v4385 = vunpack.c.l.b16 %v1315
  %v4386 = vunpack.c.l.b16 %v1325
  %v4387 = vunpack.c.l.b16 %v1339
  %v4388 = vunpack.c.l.b16 %v1349
  %v4389 = vunpack.c.l.b16 %v1363
  %v4390 = vunpack.c.l.b16 %v1373
  %v4391 = vunpack.c.l.b16 %v1387
  %v4392 = vunpack.c.l.b16 %v1397
  %v4393 = vunpack.c.l.b16 %v1411
  %v4394 = vunpack.c.l.b16 %v1421
  %v4395 = vunpack.c.l.b16 %v1435
  %v4396 = vunpack.c.l.b16 %v1445
  %v4397 = vunpack.c.l.b16 %v1459
  %v4398 = vunpack.c.l.b16 %v1469
  %v4399 = vunpack.c.l.b16 %v1483
  %v4400 = vunpack.c.l.b16 %v1493
  %v4401 = vunpack.c.l.b16 %v1507
  %v4402 = vunpack.c.l.b16 %v1517
  %v4403 = vunpack.c.l.b16 %v1531
  %v4404 = vunpack.c.l.b16 %v1541
  %v4405 = vunpack.c.l.b16 %v1555
  %v4406 = vunpack.c.l.b16 %v1565
  %v4407 = vunpack.c.l.b16 %v1579
  %v4408 = vunpack.c.l.b16 %v1589
  %v4409 = vunpack.c.l.b16 %v1603
  %v4410 = vunpack.c.l.b16 %v1613
  %v4411 = vunpack.c.l.b16 %v1627
  %v4412 = vunpack.c.l.b16 %v1637
  %v4413 = vunpack.c.l.b16 %v1651
  %v4414 = vunpack.c.l.b16 %v1661
  %v4415 = vunpack.c.l.b16 %v1675
  %v4416 = vunpack.c.l.b16 %v1685
  %v4417 = vunpack.c.l.b16 %v1699
  %v4418 = vunpack.c.l.b16 %v1709
  %v4419 = vunpack.c.l.b16 %v1723
  %v4420 = vunpack.c.l.b16 %v1733
  %v4421 = vunpack.c.l.b16 %v1747
  %v4422 = vunpack.c.l.b16 %v1757
  %v4423 = vunpack.c.l.b16 %v1771
  %v4424 = vunpack.c.l.b16 %v1781
  %v4425 = vunpack.c.l.b16 %v1795
  %v4426 = vunpack.c.l.b16 %v1805
  %v4427 = vunpack.c.l.b16 %v1819
  %v4428 = vunpack.c.l.b16 %v1829
  %v4429 = vunpack.c.l.b16 %v1843
  %v4430 = vunpack.c.l.b16 %v1853
  %v4431 = vunpack.c.l.b16 %v1867
  %v4432 = vunpack.c.l.b16 %v1877
  %v4433 = vunpack.c.l.b16 %v1891
  %v4434 = vunpack.c.l.b16 %v1901
  %v4435 = vunpack.c.l.b16 %v1915
  %v4436 = vunpack.c.l.b16 %v1925
  %v4437 = vunpack.c.l.b16 %v1939
  %v4438 = vunpack.c.l.b16 %v1949
  %v4439 = vunpack.c.l.b16 %v1963
  %v4440 = vunpack.c.l.b16 %v1973
  %v4441 = vunpack.c.l.b16 %v1987
  %v4442 = vunpack.c.l.b16 %v1997
  %v4443 = vunpack.c.l.b16 %v2011
  %v4444 = vunpack.c.l.b16 %v2021
  %v4445 = vunpack.c.l.b16 %v2035
  %v4446 = vunpack.c.l.b16 %v2045
  %v4447 = vunpack.c.l.b16 %v2059
  %v4448 = vunpack.c.l.b16 %v2069
  %v4449 = vunpack.c.l.b16 %v2083
  %v4450 = vunpack.c.l.b16 %v2093
  %v4451 = vunpack.c.l.b16 %v2107
  %v4452 = vunpack.c.l.b16 %v2117
  %v4453 = vunpack.c.l.b16 %v2131
  %v4454 = vunpack.c.l.b16 %v2141
  %v4455 = vunpack.c.l.b16 %v2155
  %v4456 = vunpack.c.l.b16 %v2165
  %v4457 = vunpack.c.l.b16 %v2179
  %v4458 = vunpack.c.l.b16 %v2189
  %v4459 = vunpack.c.l.b16 %v2203
  %v4460 = vunpack.c.l.b16 %v2213
  %v4461 = vunpack.c.l.b16 %v2227
  %v4462 = vunpack.c.l.b16 %v2237
  %v4463 = vunpack.c.l.b16 %v2251
  %v4464 = vunpack.c.l.b16 %v2261
  %v4465 = vunpack.c.l.b16 %v2275
  %v4466 = vunpack.c.l.b16 %v2285
  %v4467 = vunpack.c.l.b16 %v2299
  %v4468 = vunpack.c.l.b16 %v2309
  %v4469 = vunpack.c.l.b16 %v2323
  %v4470 = vunpack.c.l.b16 %v2333
  %v4471 = vunpack.c.l.b16 %v2347
  %v4472 = vunpack.c.l.b16 %v2357
  %v4473 = vunpack.c.l.b16 %v2371
  %v4474 = vunpack.c.l.b16 %v2381
  %v4475 = vunpack.c.l.b16 %v2395
  %v4476 = vunpack.c.l.b16 %v2405
  %v4477 = vunpack.c.l.b16 %v2419
  %v4478 = vunpack.c.l.b16 %v2429
  %v4479 = vunpack.c.l.b16 %v2443
  %v4480 = vunpack.c.l.b16 %v2453
  %v4481 = vunpack.c.l.b16 %v2467
  %v4482 = vunpack.c.l.b16 %v2477
  %v4483 = vunpack.c.l.b16 %v2491
  %v4484 = vunpack.c.l.b16 %v2501
  %v4485 = vunpack.c.l.b16 %v2515
  %v4486 = vunpack.c.l.b16 %v2525
  %v4487 = vunpack.c.l.b16 %v2539
  %v4488 = vunpack.c.l.b16 %v2549
  %v4489 = vunpack.c.l.b16 %v2563
  %v4490 = vunpack.c.l.b16 %v2573
  %v4491 = vunpack.c.l.b16 %v2587
  %v4492 = vunpack.c.l.b16 %v2597
  %v4493 = vunpack.c.l.b16 %v2611
  %v4494 = vunpack.c.l.b16 %v2621
  %v4495 = vunpack.c.l.b16 %v2635
  %v4496 = vunpack.c.l.b16 %v2645
  %v4497 = vpack.c.b16 %v4306, %v4305
  %v4498 = vpack.c.b16 %v4308, %v4307
  %v4499 = vpack.c.b16 %v4310, %v4309
  %v4500 = vpack.c.b16 %v4312, %v4311
  %v4501 = vpack.c.b16 %v4314, %v4313
  %v4502 = vpack.c.b16 %v4316, %v4315
  %v4503 = vpack.c.b16 %v4318, %v4317
  %v4504 = vpack.c.b16 %v4320, %v4319
  %v4505 = vpack.c.b16 %v4322, %v4321
  %v4506 = vpack.c.b16 %v4324, %v4323
  %v4507 = vpack.c.b16 %v4326, %v4325
  %v4508 = vpack.c.b16 %v4328, %v4327
  %v4509 = vpack.c.b16 %v4330, %v4329
  %v4510 = vpack.c.b16 %v4332, %v4331
  %v4511 = vpack.c.b16 %v4334, %v4333
  %v4512 = vpack.c.b16 %v4336, %v4335
  %v4513 = vpack.c.b16 %v4338, %v4337
  %v4514 = vpack.c.b16 %v4340, %v4339
  %v4515 = vpack.c.b16 %v4342, %v4341
  %v4516 = vpack.c.b16 %v4344, %v4343
  %v4517 = vpack.c.b16 %v4346, %v4345
  %v4518 = vpack.c.b16 %v4348, %v4347
  %v4519 = vpack.c.b16 %v4350, %v4349
  %v4520 = vpack.c.b16 %v4352, %v4351
  %v4521 = vpack.c.b16 %v4354, %v4353
  %v4522 = vpack.c.b16 %v4356, %v4355
  %v4523 = vpack.c.b16 %v4358, %v4357
  %v4524 = vpack.c.b16 %v4360, %v4359
  %v4525 = vpack.c.b16 %v4362, %v4361
  %v4526 = vpack.c.b16 %v4364, %v4363
  %v4527 = vpack.c.b16 %v4366, %v4365
  %v4528 = vpack.c.b16 %v4368, %v4367
  %v4529 = vpack.c.b16 %v4370, %v4369
  %v4530 = vpack.c.b16 %v4372, %v4371
  %v4531 = vpack.c.b16 %v4374, %v4373
  %v4532 = vpack.c.b16 %v4376, %v4375
  %v4533 = vpack.c.b16 %v4378, %v4377
  %v4534 = vpack.c.b16 %v4380, %v4379
  %v4535 = vpack.c.b16 %v4382, %v4381
  %v4536 = vpack.c.b16 %v4384, %v4383
  %v4537 = vpack.c.b16 %v4386, %v4385
  %v4538 = vpack.c.b16 %v4388, %v4387
  %v4539 = vpack.c.b16 %v4390, %v4389
  %v4540 = vpack.c.b16 %v4392, %v4391
  %v4541 = vpack.c.b16 %v4394, %v4393
  %v4542 = vpack.c.b16 %v4396, %v4395
  %v4543 = vpack.c.b16 %v4398, %v4397
  %v4544 = vpack.c.b16 %v4400, %v4399
  %v4545 = vpack.c.b16 %v4402, %v4401
  %v4546 = vpack.c.b16 %v4404, %v4403
  %v4547 = vpack.c.b16 %v4406, %v4405
  %v4548 = vpack.c.b16 %v4408, %v4407
  %v4549 = vpack.c.b16 %v4410, %v4409
  %v4550 = vpack.c.b16 %v4412, %v4411
  %v4551 = vpack.c.b16 %v4414, %v4413
  %v4552 = vpack.c.b16 %v4416, %v4415
  %v4553 = vpack.c.b16 %v4418, %v4417
  %v4554 = vpack.c.b16 %v4420, %v4419
  %v4555 = vpack.c.b16 %v4422, %v4421
  %v4556 = vpack.c.b16 %v4424, %v4423
  %v4557 = vpack.c.b16 %v4426, %v4425
  %v4558 = vpack.c.b16 %v4428, %v4427
  %v4559 = vpack.c.b16 %v4430, %v4429
  %v4560 = vpack.c.b16 %v4432, %v4431
  %v4561 = vpack.c.b16 %v4434, %v4433
  %v4562 = vpack.c.b16 %v4436, %v4435
  %v4563 = vpack.c.b16 %v4438, %v4437
  %v4564 = vpack.c.b16 %v4440, %v4439
  %v4565 = vpack.c.b16 %v4442, %v4441
  %v4566 = vpack.c.b16 %v4444, %v4443
  %v4567 = vpack.c.b16 %v4446, %v4445
  %v4568 = vpack.c.b16 %v4448, %v4447
  %v4569 = vpack.c.b16 %v4450, %v4449
  %v4570 = vpack.c.b16 %v4452, %v4451
  %v4571 = vpack.c.b16 %v4454, %v4453
  %v4572 = vpack.c.b16 %v4456, %v4455
  %v4573 = vpack.c.b16 %v4458, %v4457
  %v4574 = vpack.c.b16 %v4460, %v4459
  %v4575 = vpack.c.b16 %v4462, %v4461
  %v4576 = vpack.c.b16 %v4464, %v4463
  %v4577 = vpack.c.b16 %v4466, %v4465
  %v4578 = vpack.c.b16 %v4468, %v4467
  %v4579 = vpack.c.b16 %v4470, %v4469
  %v4580 = vpack.c.b16 %v4472, %v4471
  %v4581 = vpack.c.b16 %v4474, %v4473
  %v4582 = vpack.c.b16 %v4476, %v4475
  %v4583 = vpack.c.b16 %v4478, %v4477
  %v4584 = vpack.c.b16 %v4480, %v4479
  %v4585 = vpack.c.b16 %v4482, %v4481
  %v4586 = vpack.c.b16 %v4484, %v4483
  %v4587 = vpack.c.b16 %v4486, %v4485
  %v4588 = vpack.c.b16 %v4488, %v4487
  %v4589 = vpack.c.b16 %v4490, %v4489
  %v4590 = vpack.c.b16 %v4492, %v4491
  %v4591 = vpack.c.b16 %v4494, %v4493
  %v4592 = vpack.c.b16 %v4496, %v4495
  %4593 = vrot.lane.b32.xlu0 %v4497, 4
  %v4594 = vpop.permute.xlu0 %4593
  %4595 = vrot.lane.b32.xlu0 %v4498, 4
  %v4596 = vpop.permute.xlu0 %4595
  %4597 = vrot.lane.b32.xlu0 %v4499, 4
  %v4598 = vpop.permute.xlu0 %4597
  %4599 = vrot.lane.b32.xlu0 %v4500, 4
  %v4600 = vpop.permute.xlu0 %4599
  %4601 = vrot.lane.b32.xlu0 %v4501, 4
  %v4602 = vpop.permute.xlu0 %4601
  %4603 = vrot.lane.b32.xlu0 %v4502, 4
  %v4604 = vpop.permute.xlu0 %4603
  %4605 = vrot.lane.b32.xlu0 %v4503, 4
  %v4606 = vpop.permute.xlu0 %4605
  %4607 = vrot.lane.b32.xlu0 %v4504, 4
  %v4608 = vpop.permute.xlu0 %4607
  %4609 = vrot.lane.b32.xlu0 %v4505, 4
  %v4610 = vpop.permute.xlu0 %4609
  %4611 = vrot.lane.b32.xlu0 %v4506, 4
  %v4612 = vpop.permute.xlu0 %4611
  %4613 = vrot.lane.b32.xlu0 %v4507, 4
  %v4614 = vpop.permute.xlu0 %4613
  %4615 = vrot.lane.b32.xlu0 %v4508, 4
  %v4616 = vpop.permute.xlu0 %4615
  %4617 = vrot.lane.b32.xlu0 %v4509, 4
  %v4618 = vpop.permute.xlu0 %4617
  %4619 = vrot.lane.b32.xlu0 %v4510, 4
  %v4620 = vpop.permute.xlu0 %4619
  %4621 = vrot.lane.b32.xlu0 %v4511, 4
  %v4622 = vpop.permute.xlu0 %4621
  %4623 = vrot.lane.b32.xlu0 %v4512, 4
  %v4624 = vpop.permute.xlu0 %4623
  %4625 = vrot.lane.b32.xlu0 %v4513, 4
  %v4626 = vpop.permute.xlu0 %4625
  %4627 = vrot.lane.b32.xlu0 %v4514, 4
  %v4628 = vpop.permute.xlu0 %4627
  %4629 = vrot.lane.b32.xlu0 %v4515, 4
  %v4630 = vpop.permute.xlu0 %4629
  %4631 = vrot.lane.b32.xlu0 %v4516, 4
  %v4632 = vpop.permute.xlu0 %4631
  %4633 = vrot.lane.b32.xlu0 %v4517, 4
  %v4634 = vpop.permute.xlu0 %4633
  %4635 = vrot.lane.b32.xlu0 %v4518, 4
  %v4636 = vpop.permute.xlu0 %4635
  %4637 = vrot.lane.b32.xlu0 %v4519, 4
  %v4638 = vpop.permute.xlu0 %4637
  %4639 = vrot.lane.b32.xlu0 %v4520, 4
  %v4640 = vpop.permute.xlu0 %4639
  %4641 = vrot.lane.b32.xlu0 %v4521, 4
  %v4642 = vpop.permute.xlu0 %4641
  %4643 = vrot.lane.b32.xlu0 %v4522, 4
  %v4644 = vpop.permute.xlu0 %4643
  %4645 = vrot.lane.b32.xlu0 %v4523, 4
  %v4646 = vpop.permute.xlu0 %4645
  %4647 = vrot.lane.b32.xlu0 %v4524, 4
  %v4648 = vpop.permute.xlu0 %4647
  %4649 = vrot.lane.b32.xlu0 %v4525, 4
  %v4650 = vpop.permute.xlu0 %4649
  %4651 = vrot.lane.b32.xlu0 %v4526, 4
  %v4652 = vpop.permute.xlu0 %4651
  %4653 = vrot.lane.b32.xlu0 %v4527, 4
  %v4654 = vpop.permute.xlu0 %4653
  %4655 = vrot.lane.b32.xlu0 %v4528, 4
  %v4656 = vpop.permute.xlu0 %4655
  %4657 = vrot.lane.b32.xlu0 %v4529, 4
  %v4658 = vpop.permute.xlu0 %4657
  %4659 = vrot.lane.b32.xlu0 %v4530, 4
  %v4660 = vpop.permute.xlu0 %4659
  %4661 = vrot.lane.b32.xlu0 %v4531, 4
  %v4662 = vpop.permute.xlu0 %4661
  %4663 = vrot.lane.b32.xlu0 %v4532, 4
  %v4664 = vpop.permute.xlu0 %4663
  %4665 = vrot.lane.b32.xlu0 %v4533, 4
  %v4666 = vpop.permute.xlu0 %4665
  %4667 = vrot.lane.b32.xlu0 %v4534, 4
  %v4668 = vpop.permute.xlu0 %4667
  %4669 = vrot.lane.b32.xlu0 %v4535, 4
  %v4670 = vpop.permute.xlu0 %4669
  %4671 = vrot.lane.b32.xlu0 %v4536, 4
  %v4672 = vpop.permute.xlu0 %4671
  %4673 = vrot.lane.b32.xlu0 %v4537, 4
  %v4674 = vpop.permute.xlu0 %4673
  %4675 = vrot.lane.b32.xlu0 %v4538, 4
  %v4676 = vpop.permute.xlu0 %4675
  %4677 = vrot.lane.b32.xlu0 %v4539, 4
  %v4678 = vpop.permute.xlu0 %4677
  %4679 = vrot.lane.b32.xlu0 %v4540, 4
  %v4680 = vpop.permute.xlu0 %4679
  %4681 = vrot.lane.b32.xlu0 %v4541, 4
  %v4682 = vpop.permute.xlu0 %4681
  %4683 = vrot.lane.b32.xlu0 %v4542, 4
  %v4684 = vpop.permute.xlu0 %4683
  %4685 = vrot.lane.b32.xlu0 %v4543, 4
  %v4686 = vpop.permute.xlu0 %4685
  %4687 = vrot.lane.b32.xlu0 %v4544, 4
  %v4688 = vpop.permute.xlu0 %4687
  %4689 = vrot.lane.b32.xlu0 %v4545, 4
  %v4690 = vpop.permute.xlu0 %4689
  %4691 = vrot.lane.b32.xlu0 %v4546, 4
  %v4692 = vpop.permute.xlu0 %4691
  %4693 = vrot.lane.b32.xlu0 %v4547, 4
  %v4694 = vpop.permute.xlu0 %4693
  %4695 = vrot.lane.b32.xlu0 %v4548, 4
  %v4696 = vpop.permute.xlu0 %4695
  %4697 = vrot.lane.b32.xlu0 %v4549, 4
  %v4698 = vpop.permute.xlu0 %4697
  %4699 = vrot.lane.b32.xlu0 %v4550, 4
  %v4700 = vpop.permute.xlu0 %4699
  %4701 = vrot.lane.b32.xlu0 %v4551, 4
  %v4702 = vpop.permute.xlu0 %4701
  %4703 = vrot.lane.b32.xlu0 %v4552, 4
  %v4704 = vpop.permute.xlu0 %4703
  %4705 = vrot.lane.b32.xlu0 %v4553, 4
  %v4706 = vpop.permute.xlu0 %4705
  %4707 = vrot.lane.b32.xlu0 %v4554, 4
  %v4708 = vpop.permute.xlu0 %4707
  %4709 = vrot.lane.b32.xlu0 %v4555, 4
  %v4710 = vpop.permute.xlu0 %4709
  %4711 = vrot.lane.b32.xlu0 %v4556, 4
  %v4712 = vpop.permute.xlu0 %4711
  %4713 = vrot.lane.b32.xlu0 %v4557, 4
  %v4714 = vpop.permute.xlu0 %4713
  %4715 = vrot.lane.b32.xlu0 %v4558, 4
  %v4716 = vpop.permute.xlu0 %4715
  %4717 = vrot.lane.b32.xlu0 %v4559, 4
  %v4718 = vpop.permute.xlu0 %4717
  %4719 = vrot.lane.b32.xlu0 %v4560, 4
  %v4720 = vpop.permute.xlu0 %4719
  %4721 = vrot.lane.b32.xlu0 %v4561, 4
  %v4722 = vpop.permute.xlu0 %4721
  %4723 = vrot.lane.b32.xlu0 %v4562, 4
  %v4724 = vpop.permute.xlu0 %4723
  %4725 = vrot.lane.b32.xlu0 %v4563, 4
  %v4726 = vpop.permute.xlu0 %4725
  %4727 = vrot.lane.b32.xlu0 %v4564, 4
  %v4728 = vpop.permute.xlu0 %4727
  %4729 = vrot.lane.b32.xlu0 %v4565, 4
  %v4730 = vpop.permute.xlu0 %4729
  %4731 = vrot.lane.b32.xlu0 %v4566, 4
  %v4732 = vpop.permute.xlu0 %4731
  %4733 = vrot.lane.b32.xlu0 %v4567, 4
  %v4734 = vpop.permute.xlu0 %4733
  %4735 = vrot.lane.b32.xlu0 %v4568, 4
  %v4736 = vpop.permute.xlu0 %4735
  %4737 = vrot.lane.b32.xlu0 %v4569, 4
  %v4738 = vpop.permute.xlu0 %4737
  %4739 = vrot.lane.b32.xlu0 %v4570, 4
  %v4740 = vpop.permute.xlu0 %4739
  %4741 = vrot.lane.b32.xlu0 %v4571, 4
  %v4742 = vpop.permute.xlu0 %4741
  %4743 = vrot.lane.b32.xlu0 %v4572, 4
  %v4744 = vpop.permute.xlu0 %4743
  %4745 = vrot.lane.b32.xlu0 %v4573, 4
  %v4746 = vpop.permute.xlu0 %4745
  %4747 = vrot.lane.b32.xlu0 %v4574, 4
  %v4748 = vpop.permute.xlu0 %4747
  %4749 = vrot.lane.b32.xlu0 %v4575, 4
  %v4750 = vpop.permute.xlu0 %4749
  %4751 = vrot.lane.b32.xlu0 %v4576, 4
  %v4752 = vpop.permute.xlu0 %4751
  %4753 = vrot.lane.b32.xlu0 %v4577, 4
  %v4754 = vpop.permute.xlu0 %4753
  %4755 = vrot.lane.b32.xlu0 %v4578, 4
  %v4756 = vpop.permute.xlu0 %4755
  %4757 = vrot.lane.b32.xlu0 %v4579, 4
  %v4758 = vpop.permute.xlu0 %4757
  %4759 = vrot.lane.b32.xlu0 %v4580, 4
  %v4760 = vpop.permute.xlu0 %4759
  %4761 = vrot.lane.b32.xlu0 %v4581, 4
  %v4762 = vpop.permute.xlu0 %4761
  %4763 = vrot.lane.b32.xlu0 %v4582, 4
  %v4764 = vpop.permute.xlu0 %4763
  %4765 = vrot.lane.b32.xlu0 %v4583, 4
  %v4766 = vpop.permute.xlu0 %4765
  %4767 = vrot.lane.b32.xlu0 %v4584, 4
  %v4768 = vpop.permute.xlu0 %4767
  %4769 = vrot.lane.b32.xlu0 %v4585, 4
  %v4770 = vpop.permute.xlu0 %4769
  %4771 = vrot.lane.b32.xlu0 %v4586, 4
  %v4772 = vpop.permute.xlu0 %4771
  %4773 = vrot.lane.b32.xlu0 %v4587, 4
  %v4774 = vpop.permute.xlu0 %4773
  %4775 = vrot.lane.b32.xlu0 %v4588, 4
  %v4776 = vpop.permute.xlu0 %4775
  %4777 = vrot.lane.b32.xlu0 %v4589, 4
  %v4778 = vpop.permute.xlu0 %4777
  %4779 = vrot.lane.b32.xlu0 %v4590, 4
  %v4780 = vpop.permute.xlu0 %4779
  %4781 = vrot.lane.b32.xlu0 %v4591, 4
  %v4782 = vpop.permute.xlu0 %4781
  %4783 = vrot.lane.b32.xlu0 %v4592, 4
  %v4784 = vpop.permute.xlu0 %4783
  %v4785 = vunpack.c.l.b16 %v2940
  %v4786 = vunpack.c.l.b16 %v2943
  %v4787 = vunpack.c.l.b16 %v2947
  %v4788 = vunpack.c.l.b16 %v2950
  %v4789 = vunpack.c.l.b16 %v2954
  %v4790 = vunpack.c.l.b16 %v2957
  %v4791 = vunpack.c.l.b16 %v2961
  %v4792 = vunpack.c.l.b16 %v2964
  %v4793 = vunpack.c.l.b16 %v2968
  %v4794 = vunpack.c.l.b16 %v2971
  %v4795 = vunpack.c.l.b16 %v2975
  %v4796 = vunpack.c.l.b16 %v2978
  %v4797 = vunpack.c.l.b16 %v2982
  %v4798 = vunpack.c.l.b16 %v2985
  %v4799 = vunpack.c.l.b16 %v2989
  %v4800 = vunpack.c.l.b16 %v2992
  %v4801 = vunpack.c.l.b16 %v2996
  %v4802 = vunpack.c.l.b16 %v2999
  %v4803 = vunpack.c.l.b16 %v3003
  %v4804 = vunpack.c.l.b16 %v3006
  %v4805 = vunpack.c.l.b16 %v3010
  %v4806 = vunpack.c.l.b16 %v3013
  %v4807 = vunpack.c.l.b16 %v3017
  %v4808 = vunpack.c.l.b16 %v3020
  %v4809 = vunpack.c.l.b16 %v3024
  %v4810 = vunpack.c.l.b16 %v3027
  %v4811 = vunpack.c.l.b16 %v3031
  %v4812 = vunpack.c.l.b16 %v3034
  %v4813 = vunpack.c.l.b16 %v3038
  %v4814 = vunpack.c.l.b16 %v3041
  %v4815 = vunpack.c.l.b16 %v3045
  %v4816 = vunpack.c.l.b16 %v3048
  %v4817 = vunpack.c.l.b16 %v3052
  %v4818 = vunpack.c.l.b16 %v3055
  %v4819 = vunpack.c.l.b16 %v3059
  %v4820 = vunpack.c.l.b16 %v3062
  %v4821 = vunpack.c.l.b16 %v3066
  %v4822 = vunpack.c.l.b16 %v3069
  %v4823 = vunpack.c.l.b16 %v3073
  %v4824 = vunpack.c.l.b16 %v3076
  %v4825 = vunpack.c.l.b16 %v3080
  %v4826 = vunpack.c.l.b16 %v3083
  %v4827 = vunpack.c.l.b16 %v3087
  %v4828 = vunpack.c.l.b16 %v3090
  %v4829 = vunpack.c.l.b16 %v3094
  %v4830 = vunpack.c.l.b16 %v3097
  %v4831 = vunpack.c.l.b16 %v3101
  %v4832 = vunpack.c.l.b16 %v3104
  %v4833 = vunpack.c.l.b16 %v3108
  %v4834 = vunpack.c.l.b16 %v3111
  %v4835 = vunpack.c.l.b16 %v3115
  %v4836 = vunpack.c.l.b16 %v3118
  %v4837 = vunpack.c.l.b16 %v3122
  %v4838 = vunpack.c.l.b16 %v3125
  %v4839 = vunpack.c.l.b16 %v3129
  %v4840 = vunpack.c.l.b16 %v3132
  %v4841 = vunpack.c.l.b16 %v3136
  %v4842 = vunpack.c.l.b16 %v3139
  %v4843 = vunpack.c.l.b16 %v3143
  %v4844 = vunpack.c.l.b16 %v3146
  %v4845 = vunpack.c.l.b16 %v3150
  %v4846 = vunpack.c.l.b16 %v3153
  %v4847 = vunpack.c.l.b16 %v3157
  %v4848 = vunpack.c.l.b16 %v3160
  %v4849 = vunpack.c.l.b16 %v3164
  %v4850 = vunpack.c.l.b16 %v3167
  %v4851 = vunpack.c.l.b16 %v3171
  %v4852 = vunpack.c.l.b16 %v3174
  %v4853 = vunpack.c.l.b16 %v3178
  %v4854 = vunpack.c.l.b16 %v3181
  %v4855 = vunpack.c.l.b16 %v3185
  %v4856 = vunpack.c.l.b16 %v3188
  %v4857 = vunpack.c.l.b16 %v3192
  %v4858 = vunpack.c.l.b16 %v3195
  %v4859 = vunpack.c.l.b16 %v3199
  %v4860 = vunpack.c.l.b16 %v3202
  %v4861 = vunpack.c.l.b16 %v3206
  %v4862 = vunpack.c.l.b16 %v3209
  %v4863 = vunpack.c.l.b16 %v3213
  %v4864 = vunpack.c.l.b16 %v3216
  %v4865 = vunpack.c.l.b16 %v3220
  %v4866 = vunpack.c.l.b16 %v3223
  %v4867 = vunpack.c.l.b16 %v3227
  %v4868 = vunpack.c.l.b16 %v3230
  %v4869 = vunpack.c.l.b16 %v3234
  %v4870 = vunpack.c.l.b16 %v3237
  %v4871 = vunpack.c.l.b16 %v3241
  %v4872 = vunpack.c.l.b16 %v3244
  %v4873 = vunpack.c.l.b16 %v3248
  %v4874 = vunpack.c.l.b16 %v3251
  %v4875 = vunpack.c.l.b16 %v3255
  %v4876 = vunpack.c.l.b16 %v3258
  %v4877 = vunpack.c.l.b16 %v3262
  %v4878 = vunpack.c.l.b16 %v3265
  %v4879 = vunpack.c.l.b16 %v3269
  %v4880 = vunpack.c.l.b16 %v3272
  %v4881 = vunpack.c.l.b16 %v3276
  %v4882 = vunpack.c.l.b16 %v3279
  %v4883 = vunpack.c.l.b16 %v3283
  %v4884 = vunpack.c.l.b16 %v3286
  %v4885 = vunpack.c.l.b16 %v3290
  %v4886 = vunpack.c.l.b16 %v3293
  %v4887 = vunpack.c.l.b16 %v3297
  %v4888 = vunpack.c.l.b16 %v3300
  %v4889 = vunpack.c.l.b16 %v3304
  %v4890 = vunpack.c.l.b16 %v3307
  %v4891 = vunpack.c.l.b16 %v3311
  %v4892 = vunpack.c.l.b16 %v3314
  %v4893 = vunpack.c.l.b16 %v3318
  %v4894 = vunpack.c.l.b16 %v3321
  %v4895 = vunpack.c.l.b16 %v3325
  %v4896 = vunpack.c.l.b16 %v3328
  %v4897 = vunpack.c.l.b16 %v3332
  %v4898 = vunpack.c.l.b16 %v3335
  %v4899 = vunpack.c.l.b16 %v3339
  %v4900 = vunpack.c.l.b16 %v3342
  %v4901 = vunpack.c.l.b16 %v3346
  %v4902 = vunpack.c.l.b16 %v3349
  %v4903 = vunpack.c.l.b16 %v3353
  %v4904 = vunpack.c.l.b16 %v3356
  %v4905 = vunpack.c.l.b16 %v3360
  %v4906 = vunpack.c.l.b16 %v3363
  %v4907 = vunpack.c.l.b16 %v3367
  %v4908 = vunpack.c.l.b16 %v3370
  %v4909 = vunpack.c.l.b16 %v3374
  %v4910 = vunpack.c.l.b16 %v3377
  %v4911 = vunpack.c.l.b16 %v3381
  %v4912 = vunpack.c.l.b16 %v3384
  %v4913 = vunpack.c.l.b16 %v3388
  %v4914 = vunpack.c.l.b16 %v3391
  %v4915 = vunpack.c.l.b16 %v3395
  %v4916 = vunpack.c.l.b16 %v3398
  %v4917 = vunpack.c.l.b16 %v3402
  %v4918 = vunpack.c.l.b16 %v3405
  %v4919 = vunpack.c.l.b16 %v3409
  %v4920 = vunpack.c.l.b16 %v3412
  %v4921 = vunpack.c.l.b16 %v3416
  %v4922 = vunpack.c.l.b16 %v3419
  %v4923 = vunpack.c.l.b16 %v3423
  %v4924 = vunpack.c.l.b16 %v3426
  %v4925 = vunpack.c.l.b16 %v3430
  %v4926 = vunpack.c.l.b16 %v3433
  %v4927 = vunpack.c.l.b16 %v3437
  %v4928 = vunpack.c.l.b16 %v3440
  %v4929 = vunpack.c.l.b16 %v3444
  %v4930 = vunpack.c.l.b16 %v3447
  %v4931 = vunpack.c.l.b16 %v3451
  %v4932 = vunpack.c.l.b16 %v3454
  %v4933 = vunpack.c.l.b16 %v3458
  %v4934 = vunpack.c.l.b16 %v3461
  %v4935 = vunpack.c.l.b16 %v3465
  %v4936 = vunpack.c.l.b16 %v3468
  %v4937 = vunpack.c.l.b16 %v3472
  %v4938 = vunpack.c.l.b16 %v3475
  %v4939 = vunpack.c.l.b16 %v3479
  %v4940 = vunpack.c.l.b16 %v3482
  %v4941 = vunpack.c.l.b16 %v3486
  %v4942 = vunpack.c.l.b16 %v3489
  %v4943 = vunpack.c.l.b16 %v3493
  %v4944 = vunpack.c.l.b16 %v3496
  %v4945 = vunpack.c.l.b16 %v3500
  %v4946 = vunpack.c.l.b16 %v3503
  %v4947 = vunpack.c.l.b16 %v3507
  %v4948 = vunpack.c.l.b16 %v3510
  %v4949 = vunpack.c.l.b16 %v3514
  %v4950 = vunpack.c.l.b16 %v3517
  %v4951 = vunpack.c.l.b16 %v3521
  %v4952 = vunpack.c.l.b16 %v3524
  %v4953 = vunpack.c.l.b16 %v3528
  %v4954 = vunpack.c.l.b16 %v3531
  %v4955 = vunpack.c.l.b16 %v3535
  %v4956 = vunpack.c.l.b16 %v3538
  %v4957 = vunpack.c.l.b16 %v3542
  %v4958 = vunpack.c.l.b16 %v3545
  %v4959 = vunpack.c.l.b16 %v3549
  %v4960 = vunpack.c.l.b16 %v3552
  %v4961 = vunpack.c.l.b16 %v3556
  %v4962 = vunpack.c.l.b16 %v3559
  %v4963 = vunpack.c.l.b16 %v3563
  %v4964 = vunpack.c.l.b16 %v3566
  %v4965 = vunpack.c.l.b16 %v3570
  %v4966 = vunpack.c.l.b16 %v3573
  %v4967 = vunpack.c.l.b16 %v3577
  %v4968 = vunpack.c.l.b16 %v3580
  %v4969 = vunpack.c.l.b16 %v3584
  %v4970 = vunpack.c.l.b16 %v3587
  %v4971 = vunpack.c.l.b16 %v3591
  %v4972 = vunpack.c.l.b16 %v3594
  %v4973 = vunpack.c.l.b16 %v3598
  %v4974 = vunpack.c.l.b16 %v3601
  %v4975 = vunpack.c.l.b16 %v3605
  %v4976 = vunpack.c.l.b16 %v3608
  %v4977 = vpack.c.b16 %v4786, %v4785
  %v4978 = vpack.c.b16 %v4788, %v4787
  %v4979 = vpack.c.b16 %v4790, %v4789
  %v4980 = vpack.c.b16 %v4792, %v4791
  %v4981 = vpack.c.b16 %v4794, %v4793
  %v4982 = vpack.c.b16 %v4796, %v4795
  %v4983 = vpack.c.b16 %v4798, %v4797
  %v4984 = vpack.c.b16 %v4800, %v4799
  %v4985 = vpack.c.b16 %v4802, %v4801
  %v4986 = vpack.c.b16 %v4804, %v4803
  %v4987 = vpack.c.b16 %v4806, %v4805
  %v4988 = vpack.c.b16 %v4808, %v4807
  %v4989 = vpack.c.b16 %v4810, %v4809
  %v4990 = vpack.c.b16 %v4812, %v4811
  %v4991 = vpack.c.b16 %v4814, %v4813
  %v4992 = vpack.c.b16 %v4816, %v4815
  %v4993 = vpack.c.b16 %v4818, %v4817
  %v4994 = vpack.c.b16 %v4820, %v4819
  %v4995 = vpack.c.b16 %v4822, %v4821
  %v4996 = vpack.c.b16 %v4824, %v4823
  %v4997 = vpack.c.b16 %v4826, %v4825
  %v4998 = vpack.c.b16 %v4828, %v4827
  %v4999 = vpack.c.b16 %v4830, %v4829
  %v5000 = vpack.c.b16 %v4832, %v4831
  %v5001 = vpack.c.b16 %v4834, %v4833
  %v5002 = vpack.c.b16 %v4836, %v4835
  %v5003 = vpack.c.b16 %v4838, %v4837
  %v5004 = vpack.c.b16 %v4840, %v4839
  %v5005 = vpack.c.b16 %v4842, %v4841
  %v5006 = vpack.c.b16 %v4844, %v4843
  %v5007 = vpack.c.b16 %v4846, %v4845
  %v5008 = vpack.c.b16 %v4848, %v4847
  %v5009 = vpack.c.b16 %v4850, %v4849
  %v5010 = vpack.c.b16 %v4852, %v4851
  %v5011 = vpack.c.b16 %v4854, %v4853
  %v5012 = vpack.c.b16 %v4856, %v4855
  %v5013 = vpack.c.b16 %v4858, %v4857
  %v5014 = vpack.c.b16 %v4860, %v4859
  %v5015 = vpack.c.b16 %v4862, %v4861
  %v5016 = vpack.c.b16 %v4864, %v4863
  %v5017 = vpack.c.b16 %v4866, %v4865
  %v5018 = vpack.c.b16 %v4868, %v4867
  %v5019 = vpack.c.b16 %v4870, %v4869
  %v5020 = vpack.c.b16 %v4872, %v4871
  %v5021 = vpack.c.b16 %v4874, %v4873
  %v5022 = vpack.c.b16 %v4876, %v4875
  %v5023 = vpack.c.b16 %v4878, %v4877
  %v5024 = vpack.c.b16 %v4880, %v4879
  %v5025 = vpack.c.b16 %v4882, %v4881
  %v5026 = vpack.c.b16 %v4884, %v4883
  %v5027 = vpack.c.b16 %v4886, %v4885
  %v5028 = vpack.c.b16 %v4888, %v4887
  %v5029 = vpack.c.b16 %v4890, %v4889
  %v5030 = vpack.c.b16 %v4892, %v4891
  %v5031 = vpack.c.b16 %v4894, %v4893
  %v5032 = vpack.c.b16 %v4896, %v4895
  %v5033 = vpack.c.b16 %v4898, %v4897
  %v5034 = vpack.c.b16 %v4900, %v4899
  %v5035 = vpack.c.b16 %v4902, %v4901
  %v5036 = vpack.c.b16 %v4904, %v4903
  %v5037 = vpack.c.b16 %v4906, %v4905
  %v5038 = vpack.c.b16 %v4908, %v4907
  %v5039 = vpack.c.b16 %v4910, %v4909
  %v5040 = vpack.c.b16 %v4912, %v4911
  %v5041 = vpack.c.b16 %v4914, %v4913
  %v5042 = vpack.c.b16 %v4916, %v4915
  %v5043 = vpack.c.b16 %v4918, %v4917
  %v5044 = vpack.c.b16 %v4920, %v4919
  %v5045 = vpack.c.b16 %v4922, %v4921
  %v5046 = vpack.c.b16 %v4924, %v4923
  %v5047 = vpack.c.b16 %v4926, %v4925
  %v5048 = vpack.c.b16 %v4928, %v4927
  %v5049 = vpack.c.b16 %v4930, %v4929
  %v5050 = vpack.c.b16 %v4932, %v4931
  %v5051 = vpack.c.b16 %v4934, %v4933
  %v5052 = vpack.c.b16 %v4936, %v4935
  %v5053 = vpack.c.b16 %v4938, %v4937
  %v5054 = vpack.c.b16 %v4940, %v4939
  %v5055 = vpack.c.b16 %v4942, %v4941
  %v5056 = vpack.c.b16 %v4944, %v4943
  %v5057 = vpack.c.b16 %v4946, %v4945
  %v5058 = vpack.c.b16 %v4948, %v4947
  %v5059 = vpack.c.b16 %v4950, %v4949
  %v5060 = vpack.c.b16 %v4952, %v4951
  %v5061 = vpack.c.b16 %v4954, %v4953
  %v5062 = vpack.c.b16 %v4956, %v4955
  %v5063 = vpack.c.b16 %v4958, %v4957
  %v5064 = vpack.c.b16 %v4960, %v4959
  %v5065 = vpack.c.b16 %v4962, %v4961
  %v5066 = vpack.c.b16 %v4964, %v4963
  %v5067 = vpack.c.b16 %v4966, %v4965
  %v5068 = vpack.c.b16 %v4968, %v4967
  %v5069 = vpack.c.b16 %v4970, %v4969
  %v5070 = vpack.c.b16 %v4972, %v4971
  %v5071 = vpack.c.b16 %v4974, %v4973
  %v5072 = vpack.c.b16 %v4976, %v4975
  %5073 = vrot.lane.b32.xlu0 %v4977, 8
  %v5074 = vpop.permute.xlu0 %5073
  %5075 = vrot.lane.b32.xlu0 %v4978, 8
  %v5076 = vpop.permute.xlu0 %5075
  %5077 = vrot.lane.b32.xlu0 %v4979, 8
  %v5078 = vpop.permute.xlu0 %5077
  %5079 = vrot.lane.b32.xlu0 %v4980, 8
  %v5080 = vpop.permute.xlu0 %5079
  %5081 = vrot.lane.b32.xlu0 %v4981, 8
  %v5082 = vpop.permute.xlu0 %5081
  %5083 = vrot.lane.b32.xlu0 %v4982, 8
  %v5084 = vpop.permute.xlu0 %5083
  %5085 = vrot.lane.b32.xlu0 %v4983, 8
  %v5086 = vpop.permute.xlu0 %5085
  %5087 = vrot.lane.b32.xlu0 %v4984, 8
  %v5088 = vpop.permute.xlu0 %5087
  %5089 = vrot.lane.b32.xlu0 %v4985, 8
  %v5090 = vpop.permute.xlu0 %5089
  %5091 = vrot.lane.b32.xlu0 %v4986, 8
  %v5092 = vpop.permute.xlu0 %5091
  %5093 = vrot.lane.b32.xlu0 %v4987, 8
  %v5094 = vpop.permute.xlu0 %5093
  %5095 = vrot.lane.b32.xlu0 %v4988, 8
  %v5096 = vpop.permute.xlu0 %5095
  %5097 = vrot.lane.b32.xlu0 %v4989, 8
  %v5098 = vpop.permute.xlu0 %5097
  %5099 = vrot.lane.b32.xlu0 %v4990, 8
  %v5100 = vpop.permute.xlu0 %5099
  %5101 = vrot.lane.b32.xlu0 %v4991, 8
  %v5102 = vpop.permute.xlu0 %5101
  %5103 = vrot.lane.b32.xlu0 %v4992, 8
  %v5104 = vpop.permute.xlu0 %5103
  %5105 = vrot.lane.b32.xlu0 %v4993, 8
  %v5106 = vpop.permute.xlu0 %5105
  %5107 = vrot.lane.b32.xlu0 %v4994, 8
  %v5108 = vpop.permute.xlu0 %5107
  %5109 = vrot.lane.b32.xlu0 %v4995, 8
  %v5110 = vpop.permute.xlu0 %5109
  %5111 = vrot.lane.b32.xlu0 %v4996, 8
  %v5112 = vpop.permute.xlu0 %5111
  %5113 = vrot.lane.b32.xlu0 %v4997, 8
  %v5114 = vpop.permute.xlu0 %5113
  %5115 = vrot.lane.b32.xlu0 %v4998, 8
  %v5116 = vpop.permute.xlu0 %5115
  %5117 = vrot.lane.b32.xlu0 %v4999, 8
  %v5118 = vpop.permute.xlu0 %5117
  %5119 = vrot.lane.b32.xlu0 %v5000, 8
  %v5120 = vpop.permute.xlu0 %5119
  %5121 = vrot.lane.b32.xlu0 %v5001, 8
  %v5122 = vpop.permute.xlu0 %5121
  %5123 = vrot.lane.b32.xlu0 %v5002, 8
  %v5124 = vpop.permute.xlu0 %5123
  %5125 = vrot.lane.b32.xlu0 %v5003, 8
  %v5126 = vpop.permute.xlu0 %5125
  %5127 = vrot.lane.b32.xlu0 %v5004, 8
  %v5128 = vpop.permute.xlu0 %5127
  %5129 = vrot.lane.b32.xlu0 %v5005, 8
  %v5130 = vpop.permute.xlu0 %5129
  %5131 = vrot.lane.b32.xlu0 %v5006, 8
  %v5132 = vpop.permute.xlu0 %5131
  %5133 = vrot.lane.b32.xlu0 %v5007, 8
  %v5134 = vpop.permute.xlu0 %5133
  %5135 = vrot.lane.b32.xlu0 %v5008, 8
  %v5136 = vpop.permute.xlu0 %5135
  %5137 = vrot.lane.b32.xlu0 %v5009, 8
  %v5138 = vpop.permute.xlu0 %5137
  %5139 = vrot.lane.b32.xlu0 %v5010, 8
  %v5140 = vpop.permute.xlu0 %5139
  %5141 = vrot.lane.b32.xlu0 %v5011, 8
  %v5142 = vpop.permute.xlu0 %5141
  %5143 = vrot.lane.b32.xlu0 %v5012, 8
  %v5144 = vpop.permute.xlu0 %5143
  %5145 = vrot.lane.b32.xlu0 %v5013, 8
  %v5146 = vpop.permute.xlu0 %5145
  %5147 = vrot.lane.b32.xlu0 %v5014, 8
  %v5148 = vpop.permute.xlu0 %5147
  %5149 = vrot.lane.b32.xlu0 %v5015, 8
  %v5150 = vpop.permute.xlu0 %5149
  %5151 = vrot.lane.b32.xlu0 %v5016, 8
  %v5152 = vpop.permute.xlu0 %5151
  %5153 = vrot.lane.b32.xlu0 %v5017, 8
  %v5154 = vpop.permute.xlu0 %5153
  %5155 = vrot.lane.b32.xlu0 %v5018, 8
  %v5156 = vpop.permute.xlu0 %5155
  %5157 = vrot.lane.b32.xlu0 %v5019, 8
  %v5158 = vpop.permute.xlu0 %5157
  %5159 = vrot.lane.b32.xlu0 %v5020, 8
  %v5160 = vpop.permute.xlu0 %5159
  %5161 = vrot.lane.b32.xlu0 %v5021, 8
  %v5162 = vpop.permute.xlu0 %5161
  %5163 = vrot.lane.b32.xlu0 %v5022, 8
  %v5164 = vpop.permute.xlu0 %5163
  %5165 = vrot.lane.b32.xlu0 %v5023, 8
  %v5166 = vpop.permute.xlu0 %5165
  %5167 = vrot.lane.b32.xlu0 %v5024, 8
  %v5168 = vpop.permute.xlu0 %5167
  %5169 = vrot.lane.b32.xlu0 %v5025, 8
  %v5170 = vpop.permute.xlu0 %5169
  %5171 = vrot.lane.b32.xlu0 %v5026, 8
  %v5172 = vpop.permute.xlu0 %5171
  %5173 = vrot.lane.b32.xlu0 %v5027, 8
  %v5174 = vpop.permute.xlu0 %5173
  %5175 = vrot.lane.b32.xlu0 %v5028, 8
  %v5176 = vpop.permute.xlu0 %5175
  %5177 = vrot.lane.b32.xlu0 %v5029, 8
  %v5178 = vpop.permute.xlu0 %5177
  %5179 = vrot.lane.b32.xlu0 %v5030, 8
  %v5180 = vpop.permute.xlu0 %5179
  %5181 = vrot.lane.b32.xlu0 %v5031, 8
  %v5182 = vpop.permute.xlu0 %5181
  %5183 = vrot.lane.b32.xlu0 %v5032, 8
  %v5184 = vpop.permute.xlu0 %5183
  %5185 = vrot.lane.b32.xlu0 %v5033, 8
  %v5186 = vpop.permute.xlu0 %5185
  %5187 = vrot.lane.b32.xlu0 %v5034, 8
  %v5188 = vpop.permute.xlu0 %5187
  %5189 = vrot.lane.b32.xlu0 %v5035, 8
  %v5190 = vpop.permute.xlu0 %5189
  %5191 = vrot.lane.b32.xlu0 %v5036, 8
  %v5192 = vpop.permute.xlu0 %5191
  %5193 = vrot.lane.b32.xlu0 %v5037, 8
  %v5194 = vpop.permute.xlu0 %5193
  %5195 = vrot.lane.b32.xlu0 %v5038, 8
  %v5196 = vpop.permute.xlu0 %5195
  %5197 = vrot.lane.b32.xlu0 %v5039, 8
  %v5198 = vpop.permute.xlu0 %5197
  %5199 = vrot.lane.b32.xlu0 %v5040, 8
  %v5200 = vpop.permute.xlu0 %5199
  %5201 = vrot.lane.b32.xlu0 %v5041, 8
  %v5202 = vpop.permute.xlu0 %5201
  %5203 = vrot.lane.b32.xlu0 %v5042, 8
  %v5204 = vpop.permute.xlu0 %5203
  %5205 = vrot.lane.b32.xlu0 %v5043, 8
  %v5206 = vpop.permute.xlu0 %5205
  %5207 = vrot.lane.b32.xlu0 %v5044, 8
  %v5208 = vpop.permute.xlu0 %5207
  %5209 = vrot.lane.b32.xlu0 %v5045, 8
  %v5210 = vpop.permute.xlu0 %5209
  %5211 = vrot.lane.b32.xlu0 %v5046, 8
  %v5212 = vpop.permute.xlu0 %5211
  %5213 = vrot.lane.b32.xlu0 %v5047, 8
  %v5214 = vpop.permute.xlu0 %5213
  %5215 = vrot.lane.b32.xlu0 %v5048, 8
  %v5216 = vpop.permute.xlu0 %5215
  %5217 = vrot.lane.b32.xlu0 %v5049, 8
  %v5218 = vpop.permute.xlu0 %5217
  %5219 = vrot.lane.b32.xlu0 %v5050, 8
  %v5220 = vpop.permute.xlu0 %5219
  %5221 = vrot.lane.b32.xlu0 %v5051, 8
  %v5222 = vpop.permute.xlu0 %5221
  %5223 = vrot.lane.b32.xlu0 %v5052, 8
  %v5224 = vpop.permute.xlu0 %5223
  %5225 = vrot.lane.b32.xlu0 %v5053, 8
  %v5226 = vpop.permute.xlu0 %5225
  %5227 = vrot.lane.b32.xlu0 %v5054, 8
  %v5228 = vpop.permute.xlu0 %5227
  %5229 = vrot.lane.b32.xlu0 %v5055, 8
  %v5230 = vpop.permute.xlu0 %5229
  %5231 = vrot.lane.b32.xlu0 %v5056, 8
  %v5232 = vpop.permute.xlu0 %5231
  %5233 = vrot.lane.b32.xlu0 %v5057, 8
  %v5234 = vpop.permute.xlu0 %5233
  %5235 = vrot.lane.b32.xlu0 %v5058, 8
  %v5236 = vpop.permute.xlu0 %5235
  %5237 = vrot.lane.b32.xlu0 %v5059, 8
  %v5238 = vpop.permute.xlu0 %5237
  %5239 = vrot.lane.b32.xlu0 %v5060, 8
  %v5240 = vpop.permute.xlu0 %5239
  %5241 = vrot.lane.b32.xlu0 %v5061, 8
  %v5242 = vpop.permute.xlu0 %5241
  %5243 = vrot.lane.b32.xlu0 %v5062, 8
  %v5244 = vpop.permute.xlu0 %5243
  %5245 = vrot.lane.b32.xlu0 %v5063, 8
  %v5246 = vpop.permute.xlu0 %5245
  %5247 = vrot.lane.b32.xlu0 %v5064, 8
  %v5248 = vpop.permute.xlu0 %5247
  %5249 = vrot.lane.b32.xlu0 %v5065, 8
  %v5250 = vpop.permute.xlu0 %5249
  %5251 = vrot.lane.b32.xlu0 %v5066, 8
  %v5252 = vpop.permute.xlu0 %5251
  %5253 = vrot.lane.b32.xlu0 %v5067, 8
  %v5254 = vpop.permute.xlu0 %5253
  %5255 = vrot.lane.b32.xlu0 %v5068, 8
  %v5256 = vpop.permute.xlu0 %5255
  %5257 = vrot.lane.b32.xlu0 %v5069, 8
  %v5258 = vpop.permute.xlu0 %5257
  %5259 = vrot.lane.b32.xlu0 %v5070, 8
  %v5260 = vpop.permute.xlu0 %5259
  %5261 = vrot.lane.b32.xlu0 %v5071, 8
  %v5262 = vpop.permute.xlu0 %5261
  %5263 = vrot.lane.b32.xlu0 %v5072, 8
  %v5264 = vpop.permute.xlu0 %5263
  %v5265 = vunpack.c.l.b16 %v63
  %v5266 = vunpack.c.l.b16 %v64
  %v5267 = vunpack.c.l.b16 %v117
  %v5268 = vunpack.c.l.b16 %v118
  %v5269 = vunpack.c.l.b16 %v171
  %v5270 = vunpack.c.l.b16 %v172
  %v5271 = vunpack.c.l.b16 %v225
  %v5272 = vunpack.c.l.b16 %v226
  %v5273 = vunpack.c.l.b16 %v279
  %v5274 = vunpack.c.l.b16 %v280
  %v5275 = vunpack.c.l.b16 %v333
  %v5276 = vunpack.c.l.b16 %v334
  %v5277 = vpack.c.b16 %v5266, %v5265
  %v5278 = vpack.c.b16 %v5268, %v5267
  %v5279 = vpack.c.b16 %v5270, %v5269
  %v5280 = vpack.c.b16 %v5272, %v5271
  %v5281 = vpack.c.b16 %v5274, %v5273
  %v5282 = vpack.c.b16 %v5276, %v5275
  %5283 = vrot.lane.b32.xlu0 %v4210, 12
  %v5284 = vpop.permute.xlu0 %5283
  %5285 = vrot.lane.b32.xlu0 %v4211, 12
  %v5286 = vpop.permute.xlu0 %5285
  %5287 = vrot.lane.b32.xlu0 %v4212, 12
  %v5288 = vpop.permute.xlu0 %5287
  %5289 = vrot.lane.b32.xlu0 %v4213, 12
  %v5290 = vpop.permute.xlu0 %5289
  %5291 = vrot.lane.b32.xlu0 %v4214, 12
  %v5292 = vpop.permute.xlu0 %5291
  %5293 = vrot.lane.b32.xlu0 %v4215, 12
  %v5294 = vpop.permute.xlu0 %5293
  %5295 = vrot.lane.b32.xlu0 %v4216, 12
  %v5296 = vpop.permute.xlu0 %5295
  %5297 = vrot.lane.b32.xlu0 %v4217, 12
  %v5298 = vpop.permute.xlu0 %5297
  %5299 = vrot.lane.b32.xlu0 %v4218, 12
  %v5300 = vpop.permute.xlu0 %5299
  %5301 = vrot.lane.b32.xlu0 %v4219, 12
  %v5302 = vpop.permute.xlu0 %5301
  %5303 = vrot.lane.b32.xlu0 %v4220, 12
  %v5304 = vpop.permute.xlu0 %5303
  %5305 = vrot.lane.b32.xlu0 %v4221, 12
  %v5306 = vpop.permute.xlu0 %5305
  %5307 = vrot.lane.b32.xlu0 %v4222, 12
  %v5308 = vpop.permute.xlu0 %5307
  %5309 = vrot.lane.b32.xlu0 %v4223, 12
  %v5310 = vpop.permute.xlu0 %5309
  %5311 = vrot.lane.b32.xlu0 %v4224, 12
  %v5312 = vpop.permute.xlu0 %5311
  %5313 = vrot.lane.b32.xlu0 %v5277, 12
  %v5314 = vpop.permute.xlu0 %5313
  %5315 = vrot.lane.b32.xlu0 %v4226, 12
  %v5316 = vpop.permute.xlu0 %5315
  %5317 = vrot.lane.b32.xlu0 %v4227, 12
  %v5318 = vpop.permute.xlu0 %5317
  %5319 = vrot.lane.b32.xlu0 %v4228, 12
  %v5320 = vpop.permute.xlu0 %5319
  %5321 = vrot.lane.b32.xlu0 %v4229, 12
  %v5322 = vpop.permute.xlu0 %5321
  %5323 = vrot.lane.b32.xlu0 %v4230, 12
  %v5324 = vpop.permute.xlu0 %5323
  %5325 = vrot.lane.b32.xlu0 %v4231, 12
  %v5326 = vpop.permute.xlu0 %5325
  %5327 = vrot.lane.b32.xlu0 %v4232, 12
  %v5328 = vpop.permute.xlu0 %5327
  %5329 = vrot.lane.b32.xlu0 %v4233, 12
  %v5330 = vpop.permute.xlu0 %5329
  %5331 = vrot.lane.b32.xlu0 %v4234, 12
  %v5332 = vpop.permute.xlu0 %5331
  %5333 = vrot.lane.b32.xlu0 %v4235, 12
  %v5334 = vpop.permute.xlu0 %5333
  %5335 = vrot.lane.b32.xlu0 %v4236, 12
  %v5336 = vpop.permute.xlu0 %5335
  %5337 = vrot.lane.b32.xlu0 %v4237, 12
  %v5338 = vpop.permute.xlu0 %5337
  %5339 = vrot.lane.b32.xlu0 %v4238, 12
  %v5340 = vpop.permute.xlu0 %5339
  %5341 = vrot.lane.b32.xlu0 %v4239, 12
  %v5342 = vpop.permute.xlu0 %5341
  %5343 = vrot.lane.b32.xlu0 %v4240, 12
  %v5344 = vpop.permute.xlu0 %5343
  %5345 = vrot.lane.b32.xlu0 %v5278, 12
  %v5346 = vpop.permute.xlu0 %5345
  %5347 = vrot.lane.b32.xlu0 %v4242, 12
  %v5348 = vpop.permute.xlu0 %5347
  %5349 = vrot.lane.b32.xlu0 %v4243, 12
  %v5350 = vpop.permute.xlu0 %5349
  %5351 = vrot.lane.b32.xlu0 %v4244, 12
  %v5352 = vpop.permute.xlu0 %5351
  %5353 = vrot.lane.b32.xlu0 %v4245, 12
  %v5354 = vpop.permute.xlu0 %5353
  %5355 = vrot.lane.b32.xlu0 %v4246, 12
  %v5356 = vpop.permute.xlu0 %5355
  %5357 = vrot.lane.b32.xlu0 %v4247, 12
  %v5358 = vpop.permute.xlu0 %5357
  %5359 = vrot.lane.b32.xlu0 %v4248, 12
  %v5360 = vpop.permute.xlu0 %5359
  %5361 = vrot.lane.b32.xlu0 %v4249, 12
  %v5362 = vpop.permute.xlu0 %5361
  %5363 = vrot.lane.b32.xlu0 %v4250, 12
  %v5364 = vpop.permute.xlu0 %5363
  %5365 = vrot.lane.b32.xlu0 %v4251, 12
  %v5366 = vpop.permute.xlu0 %5365
  %5367 = vrot.lane.b32.xlu0 %v4252, 12
  %v5368 = vpop.permute.xlu0 %5367
  %5369 = vrot.lane.b32.xlu0 %v4253, 12
  %v5370 = vpop.permute.xlu0 %5369
  %5371 = vrot.lane.b32.xlu0 %v4254, 12
  %v5372 = vpop.permute.xlu0 %5371
  %5373 = vrot.lane.b32.xlu0 %v4255, 12
  %v5374 = vpop.permute.xlu0 %5373
  %5375 = vrot.lane.b32.xlu0 %v4256, 12
  %v5376 = vpop.permute.xlu0 %5375
  %5377 = vrot.lane.b32.xlu0 %v5279, 12
  %v5378 = vpop.permute.xlu0 %5377
  %5379 = vrot.lane.b32.xlu0 %v4258, 12
  %v5380 = vpop.permute.xlu0 %5379
  %5381 = vrot.lane.b32.xlu0 %v4259, 12
  %v5382 = vpop.permute.xlu0 %5381
  %5383 = vrot.lane.b32.xlu0 %v4260, 12
  %v5384 = vpop.permute.xlu0 %5383
  %5385 = vrot.lane.b32.xlu0 %v4261, 12
  %v5386 = vpop.permute.xlu0 %5385
  %5387 = vrot.lane.b32.xlu0 %v4262, 12
  %v5388 = vpop.permute.xlu0 %5387
  %5389 = vrot.lane.b32.xlu0 %v4263, 12
  %v5390 = vpop.permute.xlu0 %5389
  %5391 = vrot.lane.b32.xlu0 %v4264, 12
  %v5392 = vpop.permute.xlu0 %5391
  %5393 = vrot.lane.b32.xlu0 %v4265, 12
  %v5394 = vpop.permute.xlu0 %5393
  %5395 = vrot.lane.b32.xlu0 %v4266, 12
  %v5396 = vpop.permute.xlu0 %5395
  %5397 = vrot.lane.b32.xlu0 %v4267, 12
  %v5398 = vpop.permute.xlu0 %5397
  %5399 = vrot.lane.b32.xlu0 %v4268, 12
  %v5400 = vpop.permute.xlu0 %5399
  %5401 = vrot.lane.b32.xlu0 %v4269, 12
  %v5402 = vpop.permute.xlu0 %5401
  %5403 = vrot.lane.b32.xlu0 %v4270, 12
  %v5404 = vpop.permute.xlu0 %5403
  %5405 = vrot.lane.b32.xlu0 %v4271, 12
  %v5406 = vpop.permute.xlu0 %5405
  %5407 = vrot.lane.b32.xlu0 %v4272, 12
  %v5408 = vpop.permute.xlu0 %5407
  %5409 = vrot.lane.b32.xlu0 %v5280, 12
  %v5410 = vpop.permute.xlu0 %5409
  %5411 = vrot.lane.b32.xlu0 %v4274, 12
  %v5412 = vpop.permute.xlu0 %5411
  %5413 = vrot.lane.b32.xlu0 %v4275, 12
  %v5414 = vpop.permute.xlu0 %5413
  %5415 = vrot.lane.b32.xlu0 %v4276, 12
  %v5416 = vpop.permute.xlu0 %5415
  %5417 = vrot.lane.b32.xlu0 %v4277, 12
  %v5418 = vpop.permute.xlu0 %5417
  %5419 = vrot.lane.b32.xlu0 %v4278, 12
  %v5420 = vpop.permute.xlu0 %5419
  %5421 = vrot.lane.b32.xlu0 %v4279, 12
  %v5422 = vpop.permute.xlu0 %5421
  %5423 = vrot.lane.b32.xlu0 %v4280, 12
  %v5424 = vpop.permute.xlu0 %5423
  %5425 = vrot.lane.b32.xlu0 %v4281, 12
  %v5426 = vpop.permute.xlu0 %5425
  %5427 = vrot.lane.b32.xlu0 %v4282, 12
  %v5428 = vpop.permute.xlu0 %5427
  %5429 = vrot.lane.b32.xlu0 %v4283, 12
  %v5430 = vpop.permute.xlu0 %5429
  %5431 = vrot.lane.b32.xlu0 %v4284, 12
  %v5432 = vpop.permute.xlu0 %5431
  %5433 = vrot.lane.b32.xlu0 %v4285, 12
  %v5434 = vpop.permute.xlu0 %5433
  %5435 = vrot.lane.b32.xlu0 %v4286, 12
  %v5436 = vpop.permute.xlu0 %5435
  %5437 = vrot.lane.b32.xlu0 %v4287, 12
  %v5438 = vpop.permute.xlu0 %5437
  %5439 = vrot.lane.b32.xlu0 %v4288, 12
  %v5440 = vpop.permute.xlu0 %5439
  %5441 = vrot.lane.b32.xlu0 %v5281, 12
  %v5442 = vpop.permute.xlu0 %5441
  %5443 = vrot.lane.b32.xlu0 %v4290, 12
  %v5444 = vpop.permute.xlu0 %5443
  %5445 = vrot.lane.b32.xlu0 %v4291, 12
  %v5446 = vpop.permute.xlu0 %5445
  %5447 = vrot.lane.b32.xlu0 %v4292, 12
  %v5448 = vpop.permute.xlu0 %5447
  %5449 = vrot.lane.b32.xlu0 %v4293, 12
  %v5450 = vpop.permute.xlu0 %5449
  %5451 = vrot.lane.b32.xlu0 %v4294, 12
  %v5452 = vpop.permute.xlu0 %5451
  %5453 = vrot.lane.b32.xlu0 %v4295, 12
  %v5454 = vpop.permute.xlu0 %5453
  %5455 = vrot.lane.b32.xlu0 %v4296, 12
  %v5456 = vpop.permute.xlu0 %5455
  %5457 = vrot.lane.b32.xlu0 %v4297, 12
  %v5458 = vpop.permute.xlu0 %5457
  %5459 = vrot.lane.b32.xlu0 %v4298, 12
  %v5460 = vpop.permute.xlu0 %5459
  %5461 = vrot.lane.b32.xlu0 %v4299, 12
  %v5462 = vpop.permute.xlu0 %5461
  %5463 = vrot.lane.b32.xlu0 %v4300, 12
  %v5464 = vpop.permute.xlu0 %5463
  %5465 = vrot.lane.b32.xlu0 %v4301, 12
  %v5466 = vpop.permute.xlu0 %5465
  %5467 = vrot.lane.b32.xlu0 %v4302, 12
  %v5468 = vpop.permute.xlu0 %5467
  %5469 = vrot.lane.b32.xlu0 %v4303, 12
  %v5470 = vpop.permute.xlu0 %5469
  %5471 = vrot.lane.b32.xlu0 %v4304, 12
  %v5472 = vpop.permute.xlu0 %5471
  %5473 = vrot.lane.b32.xlu0 %v5282, 12
  %v5474 = vpop.permute.xlu0 %5473
  %v5475 = vunpack.c.l.b16 %v3622
  %v5476 = vunpack.c.l.b16 %v3632
  %v5477 = vunpack.c.l.b16 %v3646
  %v5478 = vunpack.c.l.b16 %v3656
  %v5479 = vunpack.c.l.b16 %v3670
  %v5480 = vunpack.c.l.b16 %v3680
  %v5481 = vunpack.c.l.b16 %v3694
  %v5482 = vunpack.c.l.b16 %v3704
  %v5483 = vunpack.c.l.b16 %v3718
  %v5484 = vunpack.c.l.b16 %v3728
  %v5485 = vunpack.c.l.b16 %v3742
  %v5486 = vunpack.c.l.b16 %v3752
  %v5487 = vpack.c.b16 %v5476, %v5475
  %v5488 = vpack.c.b16 %v5478, %v5477
  %v5489 = vpack.c.b16 %v5480, %v5479
  %v5490 = vpack.c.b16 %v5482, %v5481
  %v5491 = vpack.c.b16 %v5484, %v5483
  %v5492 = vpack.c.b16 %v5486, %v5485
  %5493 = vrot.lane.b32.xlu0 %v4498, 16
  %v5494 = vpop.permute.xlu0 %5493
  %5495 = vrot.lane.b32.xlu0 %v4499, 16
  %v5496 = vpop.permute.xlu0 %5495
  %5497 = vrot.lane.b32.xlu0 %v4500, 16
  %v5498 = vpop.permute.xlu0 %5497
  %5499 = vrot.lane.b32.xlu0 %v4501, 16
  %v5500 = vpop.permute.xlu0 %5499
  %5501 = vrot.lane.b32.xlu0 %v4502, 16
  %v5502 = vpop.permute.xlu0 %5501
  %5503 = vrot.lane.b32.xlu0 %v4503, 16
  %v5504 = vpop.permute.xlu0 %5503
  %5505 = vrot.lane.b32.xlu0 %v4504, 16
  %v5506 = vpop.permute.xlu0 %5505
  %5507 = vrot.lane.b32.xlu0 %v4505, 16
  %v5508 = vpop.permute.xlu0 %5507
  %5509 = vrot.lane.b32.xlu0 %v4506, 16
  %v5510 = vpop.permute.xlu0 %5509
  %5511 = vrot.lane.b32.xlu0 %v4507, 16
  %v5512 = vpop.permute.xlu0 %5511
  %5513 = vrot.lane.b32.xlu0 %v4508, 16
  %v5514 = vpop.permute.xlu0 %5513
  %5515 = vrot.lane.b32.xlu0 %v4509, 16
  %v5516 = vpop.permute.xlu0 %5515
  %5517 = vrot.lane.b32.xlu0 %v4510, 16
  %v5518 = vpop.permute.xlu0 %5517
  %5519 = vrot.lane.b32.xlu0 %v4511, 16
  %v5520 = vpop.permute.xlu0 %5519
  %5521 = vrot.lane.b32.xlu0 %v4512, 16
  %v5522 = vpop.permute.xlu0 %5521
  %5523 = vrot.lane.b32.xlu0 %v5487, 16
  %v5524 = vpop.permute.xlu0 %5523
  %5525 = vrot.lane.b32.xlu0 %v4514, 16
  %v5526 = vpop.permute.xlu0 %5525
  %5527 = vrot.lane.b32.xlu0 %v4515, 16
  %v5528 = vpop.permute.xlu0 %5527
  %5529 = vrot.lane.b32.xlu0 %v4516, 16
  %v5530 = vpop.permute.xlu0 %5529
  %5531 = vrot.lane.b32.xlu0 %v4517, 16
  %v5532 = vpop.permute.xlu0 %5531
  %5533 = vrot.lane.b32.xlu0 %v4518, 16
  %v5534 = vpop.permute.xlu0 %5533
  %5535 = vrot.lane.b32.xlu0 %v4519, 16
  %v5536 = vpop.permute.xlu0 %5535
  %5537 = vrot.lane.b32.xlu0 %v4520, 16
  %v5538 = vpop.permute.xlu0 %5537
  %5539 = vrot.lane.b32.xlu0 %v4521, 16
  %v5540 = vpop.permute.xlu0 %5539
  %5541 = vrot.lane.b32.xlu0 %v4522, 16
  %v5542 = vpop.permute.xlu0 %5541
  %5543 = vrot.lane.b32.xlu0 %v4523, 16
  %v5544 = vpop.permute.xlu0 %5543
  %5545 = vrot.lane.b32.xlu0 %v4524, 16
  %v5546 = vpop.permute.xlu0 %5545
  %5547 = vrot.lane.b32.xlu0 %v4525, 16
  %v5548 = vpop.permute.xlu0 %5547
  %5549 = vrot.lane.b32.xlu0 %v4526, 16
  %v5550 = vpop.permute.xlu0 %5549
  %5551 = vrot.lane.b32.xlu0 %v4527, 16
  %v5552 = vpop.permute.xlu0 %5551
  %5553 = vrot.lane.b32.xlu0 %v4528, 16
  %v5554 = vpop.permute.xlu0 %5553
  %5555 = vrot.lane.b32.xlu0 %v5488, 16
  %v5556 = vpop.permute.xlu0 %5555
  %5557 = vrot.lane.b32.xlu0 %v4530, 16
  %v5558 = vpop.permute.xlu0 %5557
  %5559 = vrot.lane.b32.xlu0 %v4531, 16
  %v5560 = vpop.permute.xlu0 %5559
  %5561 = vrot.lane.b32.xlu0 %v4532, 16
  %v5562 = vpop.permute.xlu0 %5561
  %5563 = vrot.lane.b32.xlu0 %v4533, 16
  %v5564 = vpop.permute.xlu0 %5563
  %5565 = vrot.lane.b32.xlu0 %v4534, 16
  %v5566 = vpop.permute.xlu0 %5565
  %5567 = vrot.lane.b32.xlu0 %v4535, 16
  %v5568 = vpop.permute.xlu0 %5567
  %5569 = vrot.lane.b32.xlu0 %v4536, 16
  %v5570 = vpop.permute.xlu0 %5569
  %5571 = vrot.lane.b32.xlu0 %v4537, 16
  %v5572 = vpop.permute.xlu0 %5571
  %5573 = vrot.lane.b32.xlu0 %v4538, 16
  %v5574 = vpop.permute.xlu0 %5573
  %5575 = vrot.lane.b32.xlu0 %v4539, 16
  %v5576 = vpop.permute.xlu0 %5575
  %5577 = vrot.lane.b32.xlu0 %v4540, 16
  %v5578 = vpop.permute.xlu0 %5577
  %5579 = vrot.lane.b32.xlu0 %v4541, 16
  %v5580 = vpop.permute.xlu0 %5579
  %5581 = vrot.lane.b32.xlu0 %v4542, 16
  %v5582 = vpop.permute.xlu0 %5581
  %5583 = vrot.lane.b32.xlu0 %v4543, 16
  %v5584 = vpop.permute.xlu0 %5583
  %5585 = vrot.lane.b32.xlu0 %v4544, 16
  %v5586 = vpop.permute.xlu0 %5585
  %5587 = vrot.lane.b32.xlu0 %v5489, 16
  %v5588 = vpop.permute.xlu0 %5587
  %5589 = vrot.lane.b32.xlu0 %v4546, 16
  %v5590 = vpop.permute.xlu0 %5589
  %5591 = vrot.lane.b32.xlu0 %v4547, 16
  %v5592 = vpop.permute.xlu0 %5591
  %5593 = vrot.lane.b32.xlu0 %v4548, 16
  %v5594 = vpop.permute.xlu0 %5593
  %5595 = vrot.lane.b32.xlu0 %v4549, 16
  %v5596 = vpop.permute.xlu0 %5595
  %5597 = vrot.lane.b32.xlu0 %v4550, 16
  %v5598 = vpop.permute.xlu0 %5597
  %5599 = vrot.lane.b32.xlu0 %v4551, 16
  %v5600 = vpop.permute.xlu0 %5599
  %5601 = vrot.lane.b32.xlu0 %v4552, 16
  %v5602 = vpop.permute.xlu0 %5601
  %5603 = vrot.lane.b32.xlu0 %v4553, 16
  %v5604 = vpop.permute.xlu0 %5603
  %5605 = vrot.lane.b32.xlu0 %v4554, 16
  %v5606 = vpop.permute.xlu0 %5605
  %5607 = vrot.lane.b32.xlu0 %v4555, 16
  %v5608 = vpop.permute.xlu0 %5607
  %5609 = vrot.lane.b32.xlu0 %v4556, 16
  %v5610 = vpop.permute.xlu0 %5609
  %5611 = vrot.lane.b32.xlu0 %v4557, 16
  %v5612 = vpop.permute.xlu0 %5611
  %5613 = vrot.lane.b32.xlu0 %v4558, 16
  %v5614 = vpop.permute.xlu0 %5613
  %5615 = vrot.lane.b32.xlu0 %v4559, 16
  %v5616 = vpop.permute.xlu0 %5615
  %5617 = vrot.lane.b32.xlu0 %v4560, 16
  %v5618 = vpop.permute.xlu0 %5617
  %5619 = vrot.lane.b32.xlu0 %v5490, 16
  %v5620 = vpop.permute.xlu0 %5619
  %5621 = vrot.lane.b32.xlu0 %v4562, 16
  %v5622 = vpop.permute.xlu0 %5621
  %5623 = vrot.lane.b32.xlu0 %v4563, 16
  %v5624 = vpop.permute.xlu0 %5623
  %5625 = vrot.lane.b32.xlu0 %v4564, 16
  %v5626 = vpop.permute.xlu0 %5625
  %5627 = vrot.lane.b32.xlu0 %v4565, 16
  %v5628 = vpop.permute.xlu0 %5627
  %5629 = vrot.lane.b32.xlu0 %v4566, 16
  %v5630 = vpop.permute.xlu0 %5629
  %5631 = vrot.lane.b32.xlu0 %v4567, 16
  %v5632 = vpop.permute.xlu0 %5631
  %5633 = vrot.lane.b32.xlu0 %v4568, 16
  %v5634 = vpop.permute.xlu0 %5633
  %5635 = vrot.lane.b32.xlu0 %v4569, 16
  %v5636 = vpop.permute.xlu0 %5635
  %5637 = vrot.lane.b32.xlu0 %v4570, 16
  %v5638 = vpop.permute.xlu0 %5637
  %5639 = vrot.lane.b32.xlu0 %v4571, 16
  %v5640 = vpop.permute.xlu0 %5639
  %5641 = vrot.lane.b32.xlu0 %v4572, 16
  %v5642 = vpop.permute.xlu0 %5641
  %5643 = vrot.lane.b32.xlu0 %v4573, 16
  %v5644 = vpop.permute.xlu0 %5643
  %5645 = vrot.lane.b32.xlu0 %v4574, 16
  %v5646 = vpop.permute.xlu0 %5645
  %5647 = vrot.lane.b32.xlu0 %v4575, 16
  %v5648 = vpop.permute.xlu0 %5647
  %5649 = vrot.lane.b32.xlu0 %v4576, 16
  %v5650 = vpop.permute.xlu0 %5649
  %5651 = vrot.lane.b32.xlu0 %v5491, 16
  %v5652 = vpop.permute.xlu0 %5651
  %5653 = vrot.lane.b32.xlu0 %v4578, 16
  %v5654 = vpop.permute.xlu0 %5653
  %5655 = vrot.lane.b32.xlu0 %v4579, 16
  %v5656 = vpop.permute.xlu0 %5655
  %5657 = vrot.lane.b32.xlu0 %v4580, 16
  %v5658 = vpop.permute.xlu0 %5657
  %5659 = vrot.lane.b32.xlu0 %v4581, 16
  %v5660 = vpop.permute.xlu0 %5659
  %5661 = vrot.lane.b32.xlu0 %v4582, 16
  %v5662 = vpop.permute.xlu0 %5661
  %5663 = vrot.lane.b32.xlu0 %v4583, 16
  %v5664 = vpop.permute.xlu0 %5663
  %5665 = vrot.lane.b32.xlu0 %v4584, 16
  %v5666 = vpop.permute.xlu0 %5665
  %5667 = vrot.lane.b32.xlu0 %v4585, 16
  %v5668 = vpop.permute.xlu0 %5667
  %5669 = vrot.lane.b32.xlu0 %v4586, 16
  %v5670 = vpop.permute.xlu0 %5669
  %5671 = vrot.lane.b32.xlu0 %v4587, 16
  %v5672 = vpop.permute.xlu0 %5671
  %5673 = vrot.lane.b32.xlu0 %v4588, 16
  %v5674 = vpop.permute.xlu0 %5673
  %5675 = vrot.lane.b32.xlu0 %v4589, 16
  %v5676 = vpop.permute.xlu0 %5675
  %5677 = vrot.lane.b32.xlu0 %v4590, 16
  %v5678 = vpop.permute.xlu0 %5677
  %5679 = vrot.lane.b32.xlu0 %v4591, 16
  %v5680 = vpop.permute.xlu0 %5679
  %5681 = vrot.lane.b32.xlu0 %v4592, 16
  %v5682 = vpop.permute.xlu0 %5681
  %5683 = vrot.lane.b32.xlu0 %v5492, 16
  %v5684 = vpop.permute.xlu0 %5683
  %v5685 = vunpack.c.l.b16 %v3774
  %v5686 = vunpack.c.l.b16 %v3777
  %v5687 = vunpack.c.l.b16 %v3781
  %v5688 = vunpack.c.l.b16 %v3784
  %v5689 = vunpack.c.l.b16 %v3788
  %v5690 = vunpack.c.l.b16 %v3791
  %v5691 = vunpack.c.l.b16 %v3795
  %v5692 = vunpack.c.l.b16 %v3798
  %v5693 = vunpack.c.l.b16 %v3802
  %v5694 = vunpack.c.l.b16 %v3805
  %v5695 = vunpack.c.l.b16 %v3809
  %v5696 = vunpack.c.l.b16 %v3812
  %v5697 = vpack.c.b16 %v5686, %v5685
  %v5698 = vpack.c.b16 %v5688, %v5687
  %v5699 = vpack.c.b16 %v5690, %v5689
  %v5700 = vpack.c.b16 %v5692, %v5691
  %v5701 = vpack.c.b16 %v5694, %v5693
  %v5702 = vpack.c.b16 %v5696, %v5695
  %5703 = vrot.lane.b32.xlu0 %v4978, 20
  %v5704 = vpop.permute.xlu0 %5703
  %5705 = vrot.lane.b32.xlu0 %v4979, 20
  %v5706 = vpop.permute.xlu0 %5705
  %5707 = vrot.lane.b32.xlu0 %v4980, 20
  %v5708 = vpop.permute.xlu0 %5707
  %5709 = vrot.lane.b32.xlu0 %v4981, 20
  %v5710 = vpop.permute.xlu0 %5709
  %5711 = vrot.lane.b32.xlu0 %v4982, 20
  %v5712 = vpop.permute.xlu0 %5711
  %5713 = vrot.lane.b32.xlu0 %v4983, 20
  %v5714 = vpop.permute.xlu0 %5713
  %5715 = vrot.lane.b32.xlu0 %v4984, 20
  %v5716 = vpop.permute.xlu0 %5715
  %5717 = vrot.lane.b32.xlu0 %v4985, 20
  %v5718 = vpop.permute.xlu0 %5717
  %5719 = vrot.lane.b32.xlu0 %v4986, 20
  %v5720 = vpop.permute.xlu0 %5719
  %5721 = vrot.lane.b32.xlu0 %v4987, 20
  %v5722 = vpop.permute.xlu0 %5721
  %5723 = vrot.lane.b32.xlu0 %v4988, 20
  %v5724 = vpop.permute.xlu0 %5723
  %5725 = vrot.lane.b32.xlu0 %v4989, 20
  %v5726 = vpop.permute.xlu0 %5725
  %5727 = vrot.lane.b32.xlu0 %v4990, 20
  %v5728 = vpop.permute.xlu0 %5727
  %5729 = vrot.lane.b32.xlu0 %v4991, 20
  %v5730 = vpop.permute.xlu0 %5729
  %5731 = vrot.lane.b32.xlu0 %v4992, 20
  %v5732 = vpop.permute.xlu0 %5731
  %5733 = vrot.lane.b32.xlu0 %v5697, 20
  %v5734 = vpop.permute.xlu0 %5733
  %5735 = vrot.lane.b32.xlu0 %v4994, 20
  %v5736 = vpop.permute.xlu0 %5735
  %5737 = vrot.lane.b32.xlu0 %v4995, 20
  %v5738 = vpop.permute.xlu0 %5737
  %5739 = vrot.lane.b32.xlu0 %v4996, 20
  %v5740 = vpop.permute.xlu0 %5739
  %5741 = vrot.lane.b32.xlu0 %v4997, 20
  %v5742 = vpop.permute.xlu0 %5741
  %5743 = vrot.lane.b32.xlu0 %v4998, 20
  %v5744 = vpop.permute.xlu0 %5743
  %5745 = vrot.lane.b32.xlu0 %v4999, 20
  %v5746 = vpop.permute.xlu0 %5745
  %5747 = vrot.lane.b32.xlu0 %v5000, 20
  %v5748 = vpop.permute.xlu0 %5747
  %5749 = vrot.lane.b32.xlu0 %v5001, 20
  %v5750 = vpop.permute.xlu0 %5749
  %5751 = vrot.lane.b32.xlu0 %v5002, 20
  %v5752 = vpop.permute.xlu0 %5751
  %5753 = vrot.lane.b32.xlu0 %v5003, 20
  %v5754 = vpop.permute.xlu0 %5753
  %5755 = vrot.lane.b32.xlu0 %v5004, 20
  %v5756 = vpop.permute.xlu0 %5755
  %5757 = vrot.lane.b32.xlu0 %v5005, 20
  %v5758 = vpop.permute.xlu0 %5757
  %5759 = vrot.lane.b32.xlu0 %v5006, 20
  %v5760 = vpop.permute.xlu0 %5759
  %5761 = vrot.lane.b32.xlu0 %v5007, 20
  %v5762 = vpop.permute.xlu0 %5761
  %5763 = vrot.lane.b32.xlu0 %v5008, 20
  %v5764 = vpop.permute.xlu0 %5763
  %5765 = vrot.lane.b32.xlu0 %v5698, 20
  %v5766 = vpop.permute.xlu0 %5765
  %5767 = vrot.lane.b32.xlu0 %v5010, 20
  %v5768 = vpop.permute.xlu0 %5767
  %5769 = vrot.lane.b32.xlu0 %v5011, 20
  %v5770 = vpop.permute.xlu0 %5769
  %5771 = vrot.lane.b32.xlu0 %v5012, 20
  %v5772 = vpop.permute.xlu0 %5771
  %5773 = vrot.lane.b32.xlu0 %v5013, 20
  %v5774 = vpop.permute.xlu0 %5773
  %5775 = vrot.lane.b32.xlu0 %v5014, 20
  %v5776 = vpop.permute.xlu0 %5775
  %5777 = vrot.lane.b32.xlu0 %v5015, 20
  %v5778 = vpop.permute.xlu0 %5777
  %5779 = vrot.lane.b32.xlu0 %v5016, 20
  %v5780 = vpop.permute.xlu0 %5779
  %5781 = vrot.lane.b32.xlu0 %v5017, 20
  %v5782 = vpop.permute.xlu0 %5781
  %5783 = vrot.lane.b32.xlu0 %v5018, 20
  %v5784 = vpop.permute.xlu0 %5783
  %5785 = vrot.lane.b32.xlu0 %v5019, 20
  %v5786 = vpop.permute.xlu0 %5785
  %5787 = vrot.lane.b32.xlu0 %v5020, 20
  %v5788 = vpop.permute.xlu0 %5787
  %5789 = vrot.lane.b32.xlu0 %v5021, 20
  %v5790 = vpop.permute.xlu0 %5789
  %5791 = vrot.lane.b32.xlu0 %v5022, 20
  %v5792 = vpop.permute.xlu0 %5791
  %5793 = vrot.lane.b32.xlu0 %v5023, 20
  %v5794 = vpop.permute.xlu0 %5793
  %5795 = vrot.lane.b32.xlu0 %v5024, 20
  %v5796 = vpop.permute.xlu0 %5795
  %5797 = vrot.lane.b32.xlu0 %v5699, 20
  %v5798 = vpop.permute.xlu0 %5797
  %5799 = vrot.lane.b32.xlu0 %v5026, 20
  %v5800 = vpop.permute.xlu0 %5799
  %5801 = vrot.lane.b32.xlu0 %v5027, 20
  %v5802 = vpop.permute.xlu0 %5801
  %5803 = vrot.lane.b32.xlu0 %v5028, 20
  %v5804 = vpop.permute.xlu0 %5803
  %5805 = vrot.lane.b32.xlu0 %v5029, 20
  %v5806 = vpop.permute.xlu0 %5805
  %5807 = vrot.lane.b32.xlu0 %v5030, 20
  %v5808 = vpop.permute.xlu0 %5807
  %5809 = vrot.lane.b32.xlu0 %v5031, 20
  %v5810 = vpop.permute.xlu0 %5809
  %5811 = vrot.lane.b32.xlu0 %v5032, 20
  %v5812 = vpop.permute.xlu0 %5811
  %5813 = vrot.lane.b32.xlu0 %v5033, 20
  %v5814 = vpop.permute.xlu0 %5813
  %5815 = vrot.lane.b32.xlu0 %v5034, 20
  %v5816 = vpop.permute.xlu0 %5815
  %5817 = vrot.lane.b32.xlu0 %v5035, 20
  %v5818 = vpop.permute.xlu0 %5817
  %5819 = vrot.lane.b32.xlu0 %v5036, 20
  %v5820 = vpop.permute.xlu0 %5819
  %5821 = vrot.lane.b32.xlu0 %v5037, 20
  %v5822 = vpop.permute.xlu0 %5821
  %5823 = vrot.lane.b32.xlu0 %v5038, 20
  %v5824 = vpop.permute.xlu0 %5823
  %5825 = vrot.lane.b32.xlu0 %v5039, 20
  %v5826 = vpop.permute.xlu0 %5825
  %5827 = vrot.lane.b32.xlu0 %v5040, 20
  %v5828 = vpop.permute.xlu0 %5827
  %5829 = vrot.lane.b32.xlu0 %v5700, 20
  %v5830 = vpop.permute.xlu0 %5829
  %5831 = vrot.lane.b32.xlu0 %v5042, 20
  %v5832 = vpop.permute.xlu0 %5831
  %5833 = vrot.lane.b32.xlu0 %v5043, 20
  %v5834 = vpop.permute.xlu0 %5833
  %5835 = vrot.lane.b32.xlu0 %v5044, 20
  %v5836 = vpop.permute.xlu0 %5835
  %5837 = vrot.lane.b32.xlu0 %v5045, 20
  %v5838 = vpop.permute.xlu0 %5837
  %5839 = vrot.lane.b32.xlu0 %v5046, 20
  %v5840 = vpop.permute.xlu0 %5839
  %5841 = vrot.lane.b32.xlu0 %v5047, 20
  %v5842 = vpop.permute.xlu0 %5841
  %5843 = vrot.lane.b32.xlu0 %v5048, 20
  %v5844 = vpop.permute.xlu0 %5843
  %5845 = vrot.lane.b32.xlu0 %v5049, 20
  %v5846 = vpop.permute.xlu0 %5845
  %5847 = vrot.lane.b32.xlu0 %v5050, 20
  %v5848 = vpop.permute.xlu0 %5847
  %5849 = vrot.lane.b32.xlu0 %v5051, 20
  %v5850 = vpop.permute.xlu0 %5849
  %5851 = vrot.lane.b32.xlu0 %v5052, 20
  %v5852 = vpop.permute.xlu0 %5851
  %5853 = vrot.lane.b32.xlu0 %v5053, 20
  %v5854 = vpop.permute.xlu0 %5853
  %5855 = vrot.lane.b32.xlu0 %v5054, 20
  %v5856 = vpop.permute.xlu0 %5855
  %5857 = vrot.lane.b32.xlu0 %v5055, 20
  %v5858 = vpop.permute.xlu0 %5857
  %5859 = vrot.lane.b32.xlu0 %v5056, 20
  %v5860 = vpop.permute.xlu0 %5859
  %5861 = vrot.lane.b32.xlu0 %v5701, 20
  %v5862 = vpop.permute.xlu0 %5861
  %5863 = vrot.lane.b32.xlu0 %v5058, 20
  %v5864 = vpop.permute.xlu0 %5863
  %5865 = vrot.lane.b32.xlu0 %v5059, 20
  %v5866 = vpop.permute.xlu0 %5865
  %5867 = vrot.lane.b32.xlu0 %v5060, 20
  %v5868 = vpop.permute.xlu0 %5867
  %5869 = vrot.lane.b32.xlu0 %v5061, 20
  %v5870 = vpop.permute.xlu0 %5869
  %5871 = vrot.lane.b32.xlu0 %v5062, 20
  %v5872 = vpop.permute.xlu0 %5871
  %5873 = vrot.lane.b32.xlu0 %v5063, 20
  %v5874 = vpop.permute.xlu0 %5873
  %5875 = vrot.lane.b32.xlu0 %v5064, 20
  %v5876 = vpop.permute.xlu0 %5875
  %5877 = vrot.lane.b32.xlu0 %v5065, 20
  %v5878 = vpop.permute.xlu0 %5877
  %5879 = vrot.lane.b32.xlu0 %v5066, 20
  %v5880 = vpop.permute.xlu0 %5879
  %5881 = vrot.lane.b32.xlu0 %v5067, 20
  %v5882 = vpop.permute.xlu0 %5881
  %5883 = vrot.lane.b32.xlu0 %v5068, 20
  %v5884 = vpop.permute.xlu0 %5883
  %5885 = vrot.lane.b32.xlu0 %v5069, 20
  %v5886 = vpop.permute.xlu0 %5885
  %5887 = vrot.lane.b32.xlu0 %v5070, 20
  %v5888 = vpop.permute.xlu0 %5887
  %5889 = vrot.lane.b32.xlu0 %v5071, 20
  %v5890 = vpop.permute.xlu0 %5889
  %5891 = vrot.lane.b32.xlu0 %v5072, 20
  %v5892 = vpop.permute.xlu0 %5891
  %5893 = vrot.lane.b32.xlu0 %v5702, 20
  %v5894 = vpop.permute.xlu0 %5893
  %v5895 = vunpack.c.l.b16 %v66
  %v5896 = vunpack.c.l.b16 %v67
  %v5897 = vunpack.c.l.b16 %v120
  %v5898 = vunpack.c.l.b16 %v121
  %v5899 = vunpack.c.l.b16 %v174
  %v5900 = vunpack.c.l.b16 %v175
  %v5901 = vunpack.c.l.b16 %v228
  %v5902 = vunpack.c.l.b16 %v229
  %v5903 = vunpack.c.l.b16 %v282
  %v5904 = vunpack.c.l.b16 %v283
  %v5905 = vunpack.c.l.b16 %v336
  %v5906 = vunpack.c.l.b16 %v337
  %v5907 = vpack.c.b16 %v5896, %v5895
  %v5908 = vpack.c.b16 %v5898, %v5897
  %v5909 = vpack.c.b16 %v5900, %v5899
  %v5910 = vpack.c.b16 %v5902, %v5901
  %v5911 = vpack.c.b16 %v5904, %v5903
  %v5912 = vpack.c.b16 %v5906, %v5905
  %5913 = vrot.lane.b32.xlu0 %v4211, 24
  %v5914 = vpop.permute.xlu0 %5913
  %5915 = vrot.lane.b32.xlu0 %v4212, 24
  %v5916 = vpop.permute.xlu0 %5915
  %5917 = vrot.lane.b32.xlu0 %v4213, 24
  %v5918 = vpop.permute.xlu0 %5917
  %5919 = vrot.lane.b32.xlu0 %v4214, 24
  %v5920 = vpop.permute.xlu0 %5919
  %5921 = vrot.lane.b32.xlu0 %v4215, 24
  %v5922 = vpop.permute.xlu0 %5921
  %5923 = vrot.lane.b32.xlu0 %v4216, 24
  %v5924 = vpop.permute.xlu0 %5923
  %5925 = vrot.lane.b32.xlu0 %v4217, 24
  %v5926 = vpop.permute.xlu0 %5925
  %5927 = vrot.lane.b32.xlu0 %v4218, 24
  %v5928 = vpop.permute.xlu0 %5927
  %5929 = vrot.lane.b32.xlu0 %v4219, 24
  %v5930 = vpop.permute.xlu0 %5929
  %5931 = vrot.lane.b32.xlu0 %v4220, 24
  %v5932 = vpop.permute.xlu0 %5931
  %5933 = vrot.lane.b32.xlu0 %v4221, 24
  %v5934 = vpop.permute.xlu0 %5933
  %5935 = vrot.lane.b32.xlu0 %v4222, 24
  %v5936 = vpop.permute.xlu0 %5935
  %5937 = vrot.lane.b32.xlu0 %v4223, 24
  %v5938 = vpop.permute.xlu0 %5937
  %5939 = vrot.lane.b32.xlu0 %v4224, 24
  %v5940 = vpop.permute.xlu0 %5939
  %5941 = vrot.lane.b32.xlu0 %v5277, 24
  %v5942 = vpop.permute.xlu0 %5941
  %5943 = vrot.lane.b32.xlu0 %v5907, 24
  %v5944 = vpop.permute.xlu0 %5943
  %5945 = vrot.lane.b32.xlu0 %v4227, 24
  %v5946 = vpop.permute.xlu0 %5945
  %5947 = vrot.lane.b32.xlu0 %v4228, 24
  %v5948 = vpop.permute.xlu0 %5947
  %5949 = vrot.lane.b32.xlu0 %v4229, 24
  %v5950 = vpop.permute.xlu0 %5949
  %5951 = vrot.lane.b32.xlu0 %v4230, 24
  %v5952 = vpop.permute.xlu0 %5951
  %5953 = vrot.lane.b32.xlu0 %v4231, 24
  %v5954 = vpop.permute.xlu0 %5953
  %5955 = vrot.lane.b32.xlu0 %v4232, 24
  %v5956 = vpop.permute.xlu0 %5955
  %5957 = vrot.lane.b32.xlu0 %v4233, 24
  %v5958 = vpop.permute.xlu0 %5957
  %5959 = vrot.lane.b32.xlu0 %v4234, 24
  %v5960 = vpop.permute.xlu0 %5959
  %5961 = vrot.lane.b32.xlu0 %v4235, 24
  %v5962 = vpop.permute.xlu0 %5961
  %5963 = vrot.lane.b32.xlu0 %v4236, 24
  %v5964 = vpop.permute.xlu0 %5963
  %5965 = vrot.lane.b32.xlu0 %v4237, 24
  %v5966 = vpop.permute.xlu0 %5965
  %5967 = vrot.lane.b32.xlu0 %v4238, 24
  %v5968 = vpop.permute.xlu0 %5967
  %5969 = vrot.lane.b32.xlu0 %v4239, 24
  %v5970 = vpop.permute.xlu0 %5969
  %5971 = vrot.lane.b32.xlu0 %v4240, 24
  %v5972 = vpop.permute.xlu0 %5971
  %5973 = vrot.lane.b32.xlu0 %v5278, 24
  %v5974 = vpop.permute.xlu0 %5973
  %5975 = vrot.lane.b32.xlu0 %v5908, 24
  %v5976 = vpop.permute.xlu0 %5975
  %5977 = vrot.lane.b32.xlu0 %v4243, 24
  %v5978 = vpop.permute.xlu0 %5977
  %5979 = vrot.lane.b32.xlu0 %v4244, 24
  %v5980 = vpop.permute.xlu0 %5979
  %5981 = vrot.lane.b32.xlu0 %v4245, 24
  %v5982 = vpop.permute.xlu0 %5981
  %5983 = vrot.lane.b32.xlu0 %v4246, 24
  %v5984 = vpop.permute.xlu0 %5983
  %5985 = vrot.lane.b32.xlu0 %v4247, 24
  %v5986 = vpop.permute.xlu0 %5985
  %5987 = vrot.lane.b32.xlu0 %v4248, 24
  %v5988 = vpop.permute.xlu0 %5987
  %5989 = vrot.lane.b32.xlu0 %v4249, 24
  %v5990 = vpop.permute.xlu0 %5989
  %5991 = vrot.lane.b32.xlu0 %v4250, 24
  %v5992 = vpop.permute.xlu0 %5991
  %5993 = vrot.lane.b32.xlu0 %v4251, 24
  %v5994 = vpop.permute.xlu0 %5993
  %5995 = vrot.lane.b32.xlu0 %v4252, 24
  %v5996 = vpop.permute.xlu0 %5995
  %5997 = vrot.lane.b32.xlu0 %v4253, 24
  %v5998 = vpop.permute.xlu0 %5997
  %5999 = vrot.lane.b32.xlu0 %v4254, 24
  %v6000 = vpop.permute.xlu0 %5999
  %6001 = vrot.lane.b32.xlu0 %v4255, 24
  %v6002 = vpop.permute.xlu0 %6001
  %6003 = vrot.lane.b32.xlu0 %v4256, 24
  %v6004 = vpop.permute.xlu0 %6003
  %6005 = vrot.lane.b32.xlu0 %v5279, 24
  %v6006 = vpop.permute.xlu0 %6005
  %6007 = vrot.lane.b32.xlu0 %v5909, 24
  %v6008 = vpop.permute.xlu0 %6007
  %6009 = vrot.lane.b32.xlu0 %v4259, 24
  %v6010 = vpop.permute.xlu0 %6009
  %6011 = vrot.lane.b32.xlu0 %v4260, 24
  %v6012 = vpop.permute.xlu0 %6011
  %6013 = vrot.lane.b32.xlu0 %v4261, 24
  %v6014 = vpop.permute.xlu0 %6013
  %6015 = vrot.lane.b32.xlu0 %v4262, 24
  %v6016 = vpop.permute.xlu0 %6015
  %6017 = vrot.lane.b32.xlu0 %v4263, 24
  %v6018 = vpop.permute.xlu0 %6017
  %6019 = vrot.lane.b32.xlu0 %v4264, 24
  %v6020 = vpop.permute.xlu0 %6019
  %6021 = vrot.lane.b32.xlu0 %v4265, 24
  %v6022 = vpop.permute.xlu0 %6021
  %6023 = vrot.lane.b32.xlu0 %v4266, 24
  %v6024 = vpop.permute.xlu0 %6023
  %6025 = vrot.lane.b32.xlu0 %v4267, 24
  %v6026 = vpop.permute.xlu0 %6025
  %6027 = vrot.lane.b32.xlu0 %v4268, 24
  %v6028 = vpop.permute.xlu0 %6027
  %6029 = vrot.lane.b32.xlu0 %v4269, 24
  %v6030 = vpop.permute.xlu0 %6029
  %6031 = vrot.lane.b32.xlu0 %v4270, 24
  %v6032 = vpop.permute.xlu0 %6031
  %6033 = vrot.lane.b32.xlu0 %v4271, 24
  %v6034 = vpop.permute.xlu0 %6033
  %6035 = vrot.lane.b32.xlu0 %v4272, 24
  %v6036 = vpop.permute.xlu0 %6035
  %6037 = vrot.lane.b32.xlu0 %v5280, 24
  %v6038 = vpop.permute.xlu0 %6037
  %6039 = vrot.lane.b32.xlu0 %v5910, 24
  %v6040 = vpop.permute.xlu0 %6039
  %6041 = vrot.lane.b32.xlu0 %v4275, 24
  %v6042 = vpop.permute.xlu0 %6041
  %6043 = vrot.lane.b32.xlu0 %v4276, 24
  %v6044 = vpop.permute.xlu0 %6043
  %6045 = vrot.lane.b32.xlu0 %v4277, 24
  %v6046 = vpop.permute.xlu0 %6045
  %6047 = vrot.lane.b32.xlu0 %v4278, 24
  %v6048 = vpop.permute.xlu0 %6047
  %6049 = vrot.lane.b32.xlu0 %v4279, 24
  %v6050 = vpop.permute.xlu0 %6049
  %6051 = vrot.lane.b32.xlu0 %v4280, 24
  %v6052 = vpop.permute.xlu0 %6051
  %6053 = vrot.lane.b32.xlu0 %v4281, 24
  %v6054 = vpop.permute.xlu0 %6053
  %6055 = vrot.lane.b32.xlu0 %v4282, 24
  %v6056 = vpop.permute.xlu0 %6055
  %6057 = vrot.lane.b32.xlu0 %v4283, 24
  %v6058 = vpop.permute.xlu0 %6057
  %6059 = vrot.lane.b32.xlu0 %v4284, 24
  %v6060 = vpop.permute.xlu0 %6059
  %6061 = vrot.lane.b32.xlu0 %v4285, 24
  %v6062 = vpop.permute.xlu0 %6061
  %6063 = vrot.lane.b32.xlu0 %v4286, 24
  %v6064 = vpop.permute.xlu0 %6063
  %6065 = vrot.lane.b32.xlu0 %v4287, 24
  %v6066 = vpop.permute.xlu0 %6065
  %6067 = vrot.lane.b32.xlu0 %v4288, 24
  %v6068 = vpop.permute.xlu0 %6067
  %6069 = vrot.lane.b32.xlu0 %v5281, 24
  %v6070 = vpop.permute.xlu0 %6069
  %6071 = vrot.lane.b32.xlu0 %v5911, 24
  %v6072 = vpop.permute.xlu0 %6071
  %6073 = vrot.lane.b32.xlu0 %v4291, 24
  %v6074 = vpop.permute.xlu0 %6073
  %6075 = vrot.lane.b32.xlu0 %v4292, 24
  %v6076 = vpop.permute.xlu0 %6075
  %6077 = vrot.lane.b32.xlu0 %v4293, 24
  %v6078 = vpop.permute.xlu0 %6077
  %6079 = vrot.lane.b32.xlu0 %v4294, 24
  %v6080 = vpop.permute.xlu0 %6079
  %6081 = vrot.lane.b32.xlu0 %v4295, 24
  %v6082 = vpop.permute.xlu0 %6081
  %6083 = vrot.lane.b32.xlu0 %v4296, 24
  %v6084 = vpop.permute.xlu0 %6083
  %6085 = vrot.lane.b32.xlu0 %v4297, 24
  %v6086 = vpop.permute.xlu0 %6085
  %6087 = vrot.lane.b32.xlu0 %v4298, 24
  %v6088 = vpop.permute.xlu0 %6087
  %6089 = vrot.lane.b32.xlu0 %v4299, 24
  %v6090 = vpop.permute.xlu0 %6089
  %6091 = vrot.lane.b32.xlu0 %v4300, 24
  %v6092 = vpop.permute.xlu0 %6091
  %6093 = vrot.lane.b32.xlu0 %v4301, 24
  %v6094 = vpop.permute.xlu0 %6093
  %6095 = vrot.lane.b32.xlu0 %v4302, 24
  %v6096 = vpop.permute.xlu0 %6095
  %6097 = vrot.lane.b32.xlu0 %v4303, 24
  %v6098 = vpop.permute.xlu0 %6097
  %6099 = vrot.lane.b32.xlu0 %v4304, 24
  %v6100 = vpop.permute.xlu0 %6099
  %6101 = vrot.lane.b32.xlu0 %v5282, 24
  %v6102 = vpop.permute.xlu0 %6101
  %6103 = vrot.lane.b32.xlu0 %v5912, 24
  %v6104 = vpop.permute.xlu0 %6103
  %v6105 = vunpack.c.l.b16 %v3826
  %v6106 = vunpack.c.l.b16 %v3836
  %v6107 = vunpack.c.l.b16 %v3850
  %v6108 = vunpack.c.l.b16 %v3860
  %v6109 = vunpack.c.l.b16 %v3874
  %v6110 = vunpack.c.l.b16 %v3884
  %v6111 = vunpack.c.l.b16 %v3898
  %v6112 = vunpack.c.l.b16 %v3908
  %v6113 = vunpack.c.l.b16 %v3922
  %v6114 = vunpack.c.l.b16 %v3932
  %v6115 = vunpack.c.l.b16 %v3946
  %v6116 = vunpack.c.l.b16 %v3956
  %v6117 = vpack.c.b16 %v6106, %v6105
  %v6118 = vpack.c.b16 %v6108, %v6107
  %v6119 = vpack.c.b16 %v6110, %v6109
  %v6120 = vpack.c.b16 %v6112, %v6111
  %v6121 = vpack.c.b16 %v6114, %v6113
  %v6122 = vpack.c.b16 %v6116, %v6115
  %6123 = vrot.lane.b32.xlu0 %v4499, 28
  %v6124 = vpop.permute.xlu0 %6123
  %6125 = vrot.lane.b32.xlu0 %v4500, 28
  %v6126 = vpop.permute.xlu0 %6125
  %6127 = vrot.lane.b32.xlu0 %v4501, 28
  %v6128 = vpop.permute.xlu0 %6127
  %6129 = vrot.lane.b32.xlu0 %v4502, 28
  %v6130 = vpop.permute.xlu0 %6129
  %6131 = vrot.lane.b32.xlu0 %v4503, 28
  %v6132 = vpop.permute.xlu0 %6131
  %6133 = vrot.lane.b32.xlu0 %v4504, 28
  %v6134 = vpop.permute.xlu0 %6133
  %6135 = vrot.lane.b32.xlu0 %v4505, 28
  %v6136 = vpop.permute.xlu0 %6135
  %6137 = vrot.lane.b32.xlu0 %v4506, 28
  %v6138 = vpop.permute.xlu0 %6137
  %6139 = vrot.lane.b32.xlu0 %v4507, 28
  %v6140 = vpop.permute.xlu0 %6139
  %6141 = vrot.lane.b32.xlu0 %v4508, 28
  %v6142 = vpop.permute.xlu0 %6141
  %6143 = vrot.lane.b32.xlu0 %v4509, 28
  %v6144 = vpop.permute.xlu0 %6143
  %6145 = vrot.lane.b32.xlu0 %v4510, 28
  %v6146 = vpop.permute.xlu0 %6145
  %6147 = vrot.lane.b32.xlu0 %v4511, 28
  %v6148 = vpop.permute.xlu0 %6147
  %6149 = vrot.lane.b32.xlu0 %v4512, 28
  %v6150 = vpop.permute.xlu0 %6149
  %6151 = vrot.lane.b32.xlu0 %v5487, 28
  %v6152 = vpop.permute.xlu0 %6151
  %6153 = vrot.lane.b32.xlu0 %v6117, 28
  %v6154 = vpop.permute.xlu0 %6153
  %6155 = vrot.lane.b32.xlu0 %v4515, 28
  %v6156 = vpop.permute.xlu0 %6155
  %6157 = vrot.lane.b32.xlu0 %v4516, 28
  %v6158 = vpop.permute.xlu0 %6157
  %6159 = vrot.lane.b32.xlu0 %v4517, 28
  %v6160 = vpop.permute.xlu0 %6159
  %6161 = vrot.lane.b32.xlu0 %v4518, 28
  %v6162 = vpop.permute.xlu0 %6161
  %6163 = vrot.lane.b32.xlu0 %v4519, 28
  %v6164 = vpop.permute.xlu0 %6163
  %6165 = vrot.lane.b32.xlu0 %v4520, 28
  %v6166 = vpop.permute.xlu0 %6165
  %6167 = vrot.lane.b32.xlu0 %v4521, 28
  %v6168 = vpop.permute.xlu0 %6167
  %6169 = vrot.lane.b32.xlu0 %v4522, 28
  %v6170 = vpop.permute.xlu0 %6169
  %6171 = vrot.lane.b32.xlu0 %v4523, 28
  %v6172 = vpop.permute.xlu0 %6171
  %6173 = vrot.lane.b32.xlu0 %v4524, 28
  %v6174 = vpop.permute.xlu0 %6173
  %6175 = vrot.lane.b32.xlu0 %v4525, 28
  %v6176 = vpop.permute.xlu0 %6175
  %6177 = vrot.lane.b32.xlu0 %v4526, 28
  %v6178 = vpop.permute.xlu0 %6177
  %6179 = vrot.lane.b32.xlu0 %v4527, 28
  %v6180 = vpop.permute.xlu0 %6179
  %6181 = vrot.lane.b32.xlu0 %v4528, 28
  %v6182 = vpop.permute.xlu0 %6181
  %6183 = vrot.lane.b32.xlu0 %v5488, 28
  %v6184 = vpop.permute.xlu0 %6183
  %6185 = vrot.lane.b32.xlu0 %v6118, 28
  %v6186 = vpop.permute.xlu0 %6185
  %6187 = vrot.lane.b32.xlu0 %v4531, 28
  %v6188 = vpop.permute.xlu0 %6187
  %6189 = vrot.lane.b32.xlu0 %v4532, 28
  %v6190 = vpop.permute.xlu0 %6189
  %6191 = vrot.lane.b32.xlu0 %v4533, 28
  %v6192 = vpop.permute.xlu0 %6191
  %6193 = vrot.lane.b32.xlu0 %v4534, 28
  %v6194 = vpop.permute.xlu0 %6193
  %6195 = vrot.lane.b32.xlu0 %v4535, 28
  %v6196 = vpop.permute.xlu0 %6195
  %6197 = vrot.lane.b32.xlu0 %v4536, 28
  %v6198 = vpop.permute.xlu0 %6197
  %6199 = vrot.lane.b32.xlu0 %v4537, 28
  %v6200 = vpop.permute.xlu0 %6199
  %6201 = vrot.lane.b32.xlu0 %v4538, 28
  %v6202 = vpop.permute.xlu0 %6201
  %6203 = vrot.lane.b32.xlu0 %v4539, 28
  %v6204 = vpop.permute.xlu0 %6203
  %6205 = vrot.lane.b32.xlu0 %v4540, 28
  %v6206 = vpop.permute.xlu0 %6205
  %6207 = vrot.lane.b32.xlu0 %v4541, 28
  %v6208 = vpop.permute.xlu0 %6207
  %6209 = vrot.lane.b32.xlu0 %v4542, 28
  %v6210 = vpop.permute.xlu0 %6209
  %6211 = vrot.lane.b32.xlu0 %v4543, 28
  %v6212 = vpop.permute.xlu0 %6211
  %6213 = vrot.lane.b32.xlu0 %v4544, 28
  %v6214 = vpop.permute.xlu0 %6213
  %6215 = vrot.lane.b32.xlu0 %v5489, 28
  %v6216 = vpop.permute.xlu0 %6215
  %6217 = vrot.lane.b32.xlu0 %v6119, 28
  %v6218 = vpop.permute.xlu0 %6217
  %6219 = vrot.lane.b32.xlu0 %v4547, 28
  %v6220 = vpop.permute.xlu0 %6219
  %6221 = vrot.lane.b32.xlu0 %v4548, 28
  %v6222 = vpop.permute.xlu0 %6221
  %6223 = vrot.lane.b32.xlu0 %v4549, 28
  %v6224 = vpop.permute.xlu0 %6223
  %6225 = vrot.lane.b32.xlu0 %v4550, 28
  %v6226 = vpop.permute.xlu0 %6225
  %6227 = vrot.lane.b32.xlu0 %v4551, 28
  %v6228 = vpop.permute.xlu0 %6227
  %6229 = vrot.lane.b32.xlu0 %v4552, 28
  %v6230 = vpop.permute.xlu0 %6229
  %6231 = vrot.lane.b32.xlu0 %v4553, 28
  %v6232 = vpop.permute.xlu0 %6231
  %6233 = vrot.lane.b32.xlu0 %v4554, 28
  %v6234 = vpop.permute.xlu0 %6233
  %6235 = vrot.lane.b32.xlu0 %v4555, 28
  %v6236 = vpop.permute.xlu0 %6235
  %6237 = vrot.lane.b32.xlu0 %v4556, 28
  %v6238 = vpop.permute.xlu0 %6237
  %6239 = vrot.lane.b32.xlu0 %v4557, 28
  %v6240 = vpop.permute.xlu0 %6239
  %6241 = vrot.lane.b32.xlu0 %v4558, 28
  %v6242 = vpop.permute.xlu0 %6241
  %6243 = vrot.lane.b32.xlu0 %v4559, 28
  %v6244 = vpop.permute.xlu0 %6243
  %6245 = vrot.lane.b32.xlu0 %v4560, 28
  %v6246 = vpop.permute.xlu0 %6245
  %6247 = vrot.lane.b32.xlu0 %v5490, 28
  %v6248 = vpop.permute.xlu0 %6247
  %6249 = vrot.lane.b32.xlu0 %v6120, 28
  %v6250 = vpop.permute.xlu0 %6249
  %6251 = vrot.lane.b32.xlu0 %v4563, 28
  %v6252 = vpop.permute.xlu0 %6251
  %6253 = vrot.lane.b32.xlu0 %v4564, 28
  %v6254 = vpop.permute.xlu0 %6253
  %6255 = vrot.lane.b32.xlu0 %v4565, 28
  %v6256 = vpop.permute.xlu0 %6255
  %6257 = vrot.lane.b32.xlu0 %v4566, 28
  %v6258 = vpop.permute.xlu0 %6257
  %6259 = vrot.lane.b32.xlu0 %v4567, 28
  %v6260 = vpop.permute.xlu0 %6259
  %6261 = vrot.lane.b32.xlu0 %v4568, 28
  %v6262 = vpop.permute.xlu0 %6261
  %6263 = vrot.lane.b32.xlu0 %v4569, 28
  %v6264 = vpop.permute.xlu0 %6263
  %6265 = vrot.lane.b32.xlu0 %v4570, 28
  %v6266 = vpop.permute.xlu0 %6265
  %6267 = vrot.lane.b32.xlu0 %v4571, 28
  %v6268 = vpop.permute.xlu0 %6267
  %6269 = vrot.lane.b32.xlu0 %v4572, 28
  %v6270 = vpop.permute.xlu0 %6269
  %6271 = vrot.lane.b32.xlu0 %v4573, 28
  %v6272 = vpop.permute.xlu0 %6271
  %6273 = vrot.lane.b32.xlu0 %v4574, 28
  %v6274 = vpop.permute.xlu0 %6273
  %6275 = vrot.lane.b32.xlu0 %v4575, 28
  %v6276 = vpop.permute.xlu0 %6275
  %6277 = vrot.lane.b32.xlu0 %v4576, 28
  %v6278 = vpop.permute.xlu0 %6277
  %6279 = vrot.lane.b32.xlu0 %v5491, 28
  %v6280 = vpop.permute.xlu0 %6279
  %6281 = vrot.lane.b32.xlu0 %v6121, 28
  %v6282 = vpop.permute.xlu0 %6281
  %6283 = vrot.lane.b32.xlu0 %v4579, 28
  %v6284 = vpop.permute.xlu0 %6283
  %6285 = vrot.lane.b32.xlu0 %v4580, 28
  %v6286 = vpop.permute.xlu0 %6285
  %6287 = vrot.lane.b32.xlu0 %v4581, 28
  %v6288 = vpop.permute.xlu0 %6287
  %6289 = vrot.lane.b32.xlu0 %v4582, 28
  %v6290 = vpop.permute.xlu0 %6289
  %6291 = vrot.lane.b32.xlu0 %v4583, 28
  %v6292 = vpop.permute.xlu0 %6291
  %6293 = vrot.lane.b32.xlu0 %v4584, 28
  %v6294 = vpop.permute.xlu0 %6293
  %6295 = vrot.lane.b32.xlu0 %v4585, 28
  %v6296 = vpop.permute.xlu0 %6295
  %6297 = vrot.lane.b32.xlu0 %v4586, 28
  %v6298 = vpop.permute.xlu0 %6297
  %6299 = vrot.lane.b32.xlu0 %v4587, 28
  %v6300 = vpop.permute.xlu0 %6299
  %6301 = vrot.lane.b32.xlu0 %v4588, 28
  %v6302 = vpop.permute.xlu0 %6301
  %6303 = vrot.lane.b32.xlu0 %v4589, 28
  %v6304 = vpop.permute.xlu0 %6303
  %6305 = vrot.lane.b32.xlu0 %v4590, 28
  %v6306 = vpop.permute.xlu0 %6305
  %6307 = vrot.lane.b32.xlu0 %v4591, 28
  %v6308 = vpop.permute.xlu0 %6307
  %6309 = vrot.lane.b32.xlu0 %v4592, 28
  %v6310 = vpop.permute.xlu0 %6309
  %6311 = vrot.lane.b32.xlu0 %v5492, 28
  %v6312 = vpop.permute.xlu0 %6311
  %6313 = vrot.lane.b32.xlu0 %v6122, 28
  %v6314 = vpop.permute.xlu0 %6313
  %v6315 = vunpack.c.l.b16 %v3978
  %v6316 = vunpack.c.l.b16 %v3981
  %v6317 = vunpack.c.l.b16 %v3985
  %v6318 = vunpack.c.l.b16 %v3988
  %v6319 = vunpack.c.l.b16 %v3992
  %v6320 = vunpack.c.l.b16 %v3995
  %v6321 = vunpack.c.l.b16 %v3999
  %v6322 = vunpack.c.l.b16 %v4002
  %v6323 = vunpack.c.l.b16 %v4006
  %v6324 = vunpack.c.l.b16 %v4009
  %v6325 = vunpack.c.l.b16 %v4013
  %v6326 = vunpack.c.l.b16 %v4016
  %v6327 = vpack.c.b16 %v6316, %v6315
  %v6328 = vpack.c.b16 %v6318, %v6317
  %v6329 = vpack.c.b16 %v6320, %v6319
  %v6330 = vpack.c.b16 %v6322, %v6321
  %v6331 = vpack.c.b16 %v6324, %v6323
  %v6332 = vpack.c.b16 %v6326, %v6325
  %6333 = vrot.lane.b32.xlu0 %v4979, 32
  %v6334 = vpop.permute.xlu0 %6333
  %6335 = vrot.lane.b32.xlu0 %v4980, 32
  %v6336 = vpop.permute.xlu0 %6335
  %6337 = vrot.lane.b32.xlu0 %v4981, 32
  %v6338 = vpop.permute.xlu0 %6337
  %6339 = vrot.lane.b32.xlu0 %v4982, 32
  %v6340 = vpop.permute.xlu0 %6339
  %6341 = vrot.lane.b32.xlu0 %v4983, 32
  %v6342 = vpop.permute.xlu0 %6341
  %6343 = vrot.lane.b32.xlu0 %v4984, 32
  %v6344 = vpop.permute.xlu0 %6343
  %6345 = vrot.lane.b32.xlu0 %v4985, 32
  %v6346 = vpop.permute.xlu0 %6345
  %6347 = vrot.lane.b32.xlu0 %v4986, 32
  %v6348 = vpop.permute.xlu0 %6347
  %6349 = vrot.lane.b32.xlu0 %v4987, 32
  %v6350 = vpop.permute.xlu0 %6349
  %6351 = vrot.lane.b32.xlu0 %v4988, 32
  %v6352 = vpop.permute.xlu0 %6351
  %6353 = vrot.lane.b32.xlu0 %v4989, 32
  %v6354 = vpop.permute.xlu0 %6353
  %6355 = vrot.lane.b32.xlu0 %v4990, 32
  %v6356 = vpop.permute.xlu0 %6355
  %6357 = vrot.lane.b32.xlu0 %v4991, 32
  %v6358 = vpop.permute.xlu0 %6357
  %6359 = vrot.lane.b32.xlu0 %v4992, 32
  %v6360 = vpop.permute.xlu0 %6359
  %6361 = vrot.lane.b32.xlu0 %v5697, 32
  %v6362 = vpop.permute.xlu0 %6361
  %6363 = vrot.lane.b32.xlu0 %v6327, 32
  %v6364 = vpop.permute.xlu0 %6363
  %6365 = vrot.lane.b32.xlu0 %v4995, 32
  %v6366 = vpop.permute.xlu0 %6365
  %6367 = vrot.lane.b32.xlu0 %v4996, 32
  %v6368 = vpop.permute.xlu0 %6367
  %6369 = vrot.lane.b32.xlu0 %v4997, 32
  %v6370 = vpop.permute.xlu0 %6369
  %6371 = vrot.lane.b32.xlu0 %v4998, 32
  %v6372 = vpop.permute.xlu0 %6371
  %6373 = vrot.lane.b32.xlu0 %v4999, 32
  %v6374 = vpop.permute.xlu0 %6373
  %6375 = vrot.lane.b32.xlu0 %v5000, 32
  %v6376 = vpop.permute.xlu0 %6375
  %6377 = vrot.lane.b32.xlu0 %v5001, 32
  %v6378 = vpop.permute.xlu0 %6377
  %6379 = vrot.lane.b32.xlu0 %v5002, 32
  %v6380 = vpop.permute.xlu0 %6379
  %6381 = vrot.lane.b32.xlu0 %v5003, 32
  %v6382 = vpop.permute.xlu0 %6381
  %6383 = vrot.lane.b32.xlu0 %v5004, 32
  %v6384 = vpop.permute.xlu0 %6383
  %6385 = vrot.lane.b32.xlu0 %v5005, 32
  %v6386 = vpop.permute.xlu0 %6385
  %6387 = vrot.lane.b32.xlu0 %v5006, 32
  %v6388 = vpop.permute.xlu0 %6387
  %6389 = vrot.lane.b32.xlu0 %v5007, 32
  %v6390 = vpop.permute.xlu0 %6389
  %6391 = vrot.lane.b32.xlu0 %v5008, 32
  %v6392 = vpop.permute.xlu0 %6391
  %6393 = vrot.lane.b32.xlu0 %v5698, 32
  %v6394 = vpop.permute.xlu0 %6393
  %6395 = vrot.lane.b32.xlu0 %v6328, 32
  %v6396 = vpop.permute.xlu0 %6395
  %6397 = vrot.lane.b32.xlu0 %v5011, 32
  %v6398 = vpop.permute.xlu0 %6397
  %6399 = vrot.lane.b32.xlu0 %v5012, 32
  %v6400 = vpop.permute.xlu0 %6399
  %6401 = vrot.lane.b32.xlu0 %v5013, 32
  %v6402 = vpop.permute.xlu0 %6401
  %6403 = vrot.lane.b32.xlu0 %v5014, 32
  %v6404 = vpop.permute.xlu0 %6403
  %6405 = vrot.lane.b32.xlu0 %v5015, 32
  %v6406 = vpop.permute.xlu0 %6405
  %6407 = vrot.lane.b32.xlu0 %v5016, 32
  %v6408 = vpop.permute.xlu0 %6407
  %6409 = vrot.lane.b32.xlu0 %v5017, 32
  %v6410 = vpop.permute.xlu0 %6409
  %6411 = vrot.lane.b32.xlu0 %v5018, 32
  %v6412 = vpop.permute.xlu0 %6411
  %6413 = vrot.lane.b32.xlu0 %v5019, 32
  %v6414 = vpop.permute.xlu0 %6413
  %6415 = vrot.lane.b32.xlu0 %v5020, 32
  %v6416 = vpop.permute.xlu0 %6415
  %6417 = vrot.lane.b32.xlu0 %v5021, 32
  %v6418 = vpop.permute.xlu0 %6417
  %6419 = vrot.lane.b32.xlu0 %v5022, 32
  %v6420 = vpop.permute.xlu0 %6419
  %6421 = vrot.lane.b32.xlu0 %v5023, 32
  %v6422 = vpop.permute.xlu0 %6421
  %6423 = vrot.lane.b32.xlu0 %v5024, 32
  %v6424 = vpop.permute.xlu0 %6423
  %6425 = vrot.lane.b32.xlu0 %v5699, 32
  %v6426 = vpop.permute.xlu0 %6425
  %6427 = vrot.lane.b32.xlu0 %v6329, 32
  %v6428 = vpop.permute.xlu0 %6427
  %6429 = vrot.lane.b32.xlu0 %v5027, 32
  %v6430 = vpop.permute.xlu0 %6429
  %6431 = vrot.lane.b32.xlu0 %v5028, 32
  %v6432 = vpop.permute.xlu0 %6431
  %6433 = vrot.lane.b32.xlu0 %v5029, 32
  %v6434 = vpop.permute.xlu0 %6433
  %6435 = vrot.lane.b32.xlu0 %v5030, 32
  %v6436 = vpop.permute.xlu0 %6435
  %6437 = vrot.lane.b32.xlu0 %v5031, 32
  %v6438 = vpop.permute.xlu0 %6437
  %6439 = vrot.lane.b32.xlu0 %v5032, 32
  %v6440 = vpop.permute.xlu0 %6439
  %6441 = vrot.lane.b32.xlu0 %v5033, 32
  %v6442 = vpop.permute.xlu0 %6441
  %6443 = vrot.lane.b32.xlu0 %v5034, 32
  %v6444 = vpop.permute.xlu0 %6443
  %6445 = vrot.lane.b32.xlu0 %v5035, 32
  %v6446 = vpop.permute.xlu0 %6445
  %6447 = vrot.lane.b32.xlu0 %v5036, 32
  %v6448 = vpop.permute.xlu0 %6447
  %6449 = vrot.lane.b32.xlu0 %v5037, 32
  %v6450 = vpop.permute.xlu0 %6449
  %6451 = vrot.lane.b32.xlu0 %v5038, 32
  %v6452 = vpop.permute.xlu0 %6451
  %6453 = vrot.lane.b32.xlu0 %v5039, 32
  %v6454 = vpop.permute.xlu0 %6453
  %6455 = vrot.lane.b32.xlu0 %v5040, 32
  %v6456 = vpop.permute.xlu0 %6455
  %6457 = vrot.lane.b32.xlu0 %v5700, 32
  %v6458 = vpop.permute.xlu0 %6457
  %6459 = vrot.lane.b32.xlu0 %v6330, 32
  %v6460 = vpop.permute.xlu0 %6459
  %6461 = vrot.lane.b32.xlu0 %v5043, 32
  %v6462 = vpop.permute.xlu0 %6461
  %6463 = vrot.lane.b32.xlu0 %v5044, 32
  %v6464 = vpop.permute.xlu0 %6463
  %6465 = vrot.lane.b32.xlu0 %v5045, 32
  %v6466 = vpop.permute.xlu0 %6465
  %6467 = vrot.lane.b32.xlu0 %v5046, 32
  %v6468 = vpop.permute.xlu0 %6467
  %6469 = vrot.lane.b32.xlu0 %v5047, 32
  %v6470 = vpop.permute.xlu0 %6469
  %6471 = vrot.lane.b32.xlu0 %v5048, 32
  %v6472 = vpop.permute.xlu0 %6471
  %6473 = vrot.lane.b32.xlu0 %v5049, 32
  %v6474 = vpop.permute.xlu0 %6473
  %6475 = vrot.lane.b32.xlu0 %v5050, 32
  %v6476 = vpop.permute.xlu0 %6475
  %6477 = vrot.lane.b32.xlu0 %v5051, 32
  %v6478 = vpop.permute.xlu0 %6477
  %6479 = vrot.lane.b32.xlu0 %v5052, 32
  %v6480 = vpop.permute.xlu0 %6479
  %6481 = vrot.lane.b32.xlu0 %v5053, 32
  %v6482 = vpop.permute.xlu0 %6481
  %6483 = vrot.lane.b32.xlu0 %v5054, 32
  %v6484 = vpop.permute.xlu0 %6483
  %6485 = vrot.lane.b32.xlu0 %v5055, 32
  %v6486 = vpop.permute.xlu0 %6485
  %6487 = vrot.lane.b32.xlu0 %v5056, 32
  %v6488 = vpop.permute.xlu0 %6487
  %6489 = vrot.lane.b32.xlu0 %v5701, 32
  %v6490 = vpop.permute.xlu0 %6489
  %6491 = vrot.lane.b32.xlu0 %v6331, 32
  %v6492 = vpop.permute.xlu0 %6491
  %6493 = vrot.lane.b32.xlu0 %v5059, 32
  %v6494 = vpop.permute.xlu0 %6493
  %6495 = vrot.lane.b32.xlu0 %v5060, 32
  %v6496 = vpop.permute.xlu0 %6495
  %6497 = vrot.lane.b32.xlu0 %v5061, 32
  %v6498 = vpop.permute.xlu0 %6497
  %6499 = vrot.lane.b32.xlu0 %v5062, 32
  %v6500 = vpop.permute.xlu0 %6499
  %6501 = vrot.lane.b32.xlu0 %v5063, 32
  %v6502 = vpop.permute.xlu0 %6501
  %6503 = vrot.lane.b32.xlu0 %v5064, 32
  %v6504 = vpop.permute.xlu0 %6503
  %6505 = vrot.lane.b32.xlu0 %v5065, 32
  %v6506 = vpop.permute.xlu0 %6505
  %6507 = vrot.lane.b32.xlu0 %v5066, 32
  %v6508 = vpop.permute.xlu0 %6507
  %6509 = vrot.lane.b32.xlu0 %v5067, 32
  %v6510 = vpop.permute.xlu0 %6509
  %6511 = vrot.lane.b32.xlu0 %v5068, 32
  %v6512 = vpop.permute.xlu0 %6511
  %6513 = vrot.lane.b32.xlu0 %v5069, 32
  %v6514 = vpop.permute.xlu0 %6513
  %6515 = vrot.lane.b32.xlu0 %v5070, 32
  %v6516 = vpop.permute.xlu0 %6515
  %6517 = vrot.lane.b32.xlu0 %v5071, 32
  %v6518 = vpop.permute.xlu0 %6517
  %6519 = vrot.lane.b32.xlu0 %v5072, 32
  %v6520 = vpop.permute.xlu0 %6519
  %6521 = vrot.lane.b32.xlu0 %v5702, 32
  %v6522 = vpop.permute.xlu0 %6521
  %6523 = vrot.lane.b32.xlu0 %v6332, 32
  %v6524 = vpop.permute.xlu0 %6523
  %vm6525 = vcmask 31744
  %v6528 = vsel %vm6525, %v4209, %v4594
  %v6531 = vsel %vm6525, %v4210, %v4596
  %v6534 = vsel %vm6525, %v4211, %v4598
  %v6537 = vsel %vm6525, %v4212, %v4600
  %v6540 = vsel %vm6525, %v4213, %v4602
  %v6543 = vsel %vm6525, %v4214, %v4604
  %v6546 = vsel %vm6525, %v4215, %v4606
  %v6549 = vsel %vm6525, %v4216, %v4608
  %v6552 = vsel %vm6525, %v4217, %v4610
  %v6555 = vsel %vm6525, %v4218, %v4612
  %v6558 = vsel %vm6525, %v4219, %v4614
  %v6561 = vsel %vm6525, %v4220, %v4616
  %v6564 = vsel %vm6525, %v4221, %v4618
  %v6567 = vsel %vm6525, %v4222, %v4620
  %v6570 = vsel %vm6525, %v4223, %v4622
  %v6573 = vsel %vm6525, %v4224, %v4624
  %v6576 = vsel %vm6525, %v4225, %v4626
  %v6579 = vsel %vm6525, %v4226, %v4628
  %v6582 = vsel %vm6525, %v4227, %v4630
  %v6585 = vsel %vm6525, %v4228, %v4632
  %v6588 = vsel %vm6525, %v4229, %v4634
  %v6591 = vsel %vm6525, %v4230, %v4636
  %v6594 = vsel %vm6525, %v4231, %v4638
  %v6597 = vsel %vm6525, %v4232, %v4640
  %v6600 = vsel %vm6525, %v4233, %v4642
  %v6603 = vsel %vm6525, %v4234, %v4644
  %v6606 = vsel %vm6525, %v4235, %v4646
  %v6609 = vsel %vm6525, %v4236, %v4648
  %v6612 = vsel %vm6525, %v4237, %v4650
  %v6615 = vsel %vm6525, %v4238, %v4652
  %v6618 = vsel %vm6525, %v4239, %v4654
  %v6621 = vsel %vm6525, %v4240, %v4656
  %v6624 = vsel %vm6525, %v4241, %v4658
  %v6627 = vsel %vm6525, %v4242, %v4660
  %v6630 = vsel %vm6525, %v4243, %v4662
  %v6633 = vsel %vm6525, %v4244, %v4664
  %v6636 = vsel %vm6525, %v4245, %v4666
  %v6639 = vsel %vm6525, %v4246, %v4668
  %v6642 = vsel %vm6525, %v4247, %v4670
  %v6645 = vsel %vm6525, %v4248, %v4672
  %v6648 = vsel %vm6525, %v4249, %v4674
  %v6651 = vsel %vm6525, %v4250, %v4676
  %v6654 = vsel %vm6525, %v4251, %v4678
  %v6657 = vsel %vm6525, %v4252, %v4680
  %v6660 = vsel %vm6525, %v4253, %v4682
  %v6663 = vsel %vm6525, %v4254, %v4684
  %v6666 = vsel %vm6525, %v4255, %v4686
  %v6669 = vsel %vm6525, %v4256, %v4688
  %v6672 = vsel %vm6525, %v4257, %v4690
  %v6675 = vsel %vm6525, %v4258, %v4692
  %v6678 = vsel %vm6525, %v4259, %v4694
  %v6681 = vsel %vm6525, %v4260, %v4696
  %v6684 = vsel %vm6525, %v4261, %v4698
  %v6687 = vsel %vm6525, %v4262, %v4700
  %v6690 = vsel %vm6525, %v4263, %v4702
  %v6693 = vsel %vm6525, %v4264, %v4704
  %v6696 = vsel %vm6525, %v4265, %v4706
  %v6699 = vsel %vm6525, %v4266, %v4708
  %v6702 = vsel %vm6525, %v4267, %v4710
  %v6705 = vsel %vm6525, %v4268, %v4712
  %v6708 = vsel %vm6525, %v4269, %v4714
  %v6711 = vsel %vm6525, %v4270, %v4716
  %v6714 = vsel %vm6525, %v4271, %v4718
  %v6717 = vsel %vm6525, %v4272, %v4720
  %v6720 = vsel %vm6525, %v4273, %v4722
  %v6723 = vsel %vm6525, %v4274, %v4724
  %v6726 = vsel %vm6525, %v4275, %v4726
  %v6729 = vsel %vm6525, %v4276, %v4728
  %v6732 = vsel %vm6525, %v4277, %v4730
  %v6735 = vsel %vm6525, %v4278, %v4732
  %v6738 = vsel %vm6525, %v4279, %v4734
  %v6741 = vsel %vm6525, %v4280, %v4736
  %v6744 = vsel %vm6525, %v4281, %v4738
  %v6747 = vsel %vm6525, %v4282, %v4740
  %v6750 = vsel %vm6525, %v4283, %v4742
  %v6753 = vsel %vm6525, %v4284, %v4744
  %v6756 = vsel %vm6525, %v4285, %v4746
  %v6759 = vsel %vm6525, %v4286, %v4748
  %v6762 = vsel %vm6525, %v4287, %v4750
  %v6765 = vsel %vm6525, %v4288, %v4752
  %v6768 = vsel %vm6525, %v4289, %v4754
  %v6771 = vsel %vm6525, %v4290, %v4756
  %v6774 = vsel %vm6525, %v4291, %v4758
  %v6777 = vsel %vm6525, %v4292, %v4760
  %v6780 = vsel %vm6525, %v4293, %v4762
  %v6783 = vsel %vm6525, %v4294, %v4764
  %v6786 = vsel %vm6525, %v4295, %v4766
  %v6789 = vsel %vm6525, %v4296, %v4768
  %v6792 = vsel %vm6525, %v4297, %v4770
  %v6795 = vsel %vm6525, %v4298, %v4772
  %v6798 = vsel %vm6525, %v4299, %v4774
  %v6801 = vsel %vm6525, %v4300, %v4776
  %v6804 = vsel %vm6525, %v4301, %v4778
  %v6807 = vsel %vm6525, %v4302, %v4780
  %v6810 = vsel %vm6525, %v4303, %v4782
  %v6813 = vsel %vm6525, %v4304, %v4784
  %vm6814 = vcmask 64512
  %v6816 = vsel %vm6814, %v6528, %v5074
  %v6818 = vsel %vm6814, %v6531, %v5076
  %v6820 = vsel %vm6814, %v6534, %v5078
  %v6822 = vsel %vm6814, %v6537, %v5080
  %v6824 = vsel %vm6814, %v6540, %v5082
  %v6826 = vsel %vm6814, %v6543, %v5084
  %v6828 = vsel %vm6814, %v6546, %v5086
  %v6830 = vsel %vm6814, %v6549, %v5088
  %v6832 = vsel %vm6814, %v6552, %v5090
  %v6834 = vsel %vm6814, %v6555, %v5092
  %v6836 = vsel %vm6814, %v6558, %v5094
  %v6838 = vsel %vm6814, %v6561, %v5096
  %v6840 = vsel %vm6814, %v6564, %v5098
  %v6842 = vsel %vm6814, %v6567, %v5100
  %v6844 = vsel %vm6814, %v6570, %v5102
  %v6846 = vsel %vm6814, %v6573, %v5104
  %v6848 = vsel %vm6814, %v6576, %v5106
  %v6850 = vsel %vm6814, %v6579, %v5108
  %v6852 = vsel %vm6814, %v6582, %v5110
  %v6854 = vsel %vm6814, %v6585, %v5112
  %v6856 = vsel %vm6814, %v6588, %v5114
  %v6858 = vsel %vm6814, %v6591, %v5116
  %v6860 = vsel %vm6814, %v6594, %v5118
  %v6862 = vsel %vm6814, %v6597, %v5120
  %v6864 = vsel %vm6814, %v6600, %v5122
  %v6866 = vsel %vm6814, %v6603, %v5124
  %v6868 = vsel %vm6814, %v6606, %v5126
  %v6870 = vsel %vm6814, %v6609, %v5128
  %v6872 = vsel %vm6814, %v6612, %v5130
  %v6874 = vsel %vm6814, %v6615, %v5132
  %v6876 = vsel %vm6814, %v6618, %v5134
  %v6878 = vsel %vm6814, %v6621, %v5136
  %v6880 = vsel %vm6814, %v6624, %v5138
  %v6882 = vsel %vm6814, %v6627, %v5140
  %v6884 = vsel %vm6814, %v6630, %v5142
  %v6886 = vsel %vm6814, %v6633, %v5144
  %v6888 = vsel %vm6814, %v6636, %v5146
  %v6890 = vsel %vm6814, %v6639, %v5148
  %v6892 = vsel %vm6814, %v6642, %v5150
  %v6894 = vsel %vm6814, %v6645, %v5152
  %v6896 = vsel %vm6814, %v6648, %v5154
  %v6898 = vsel %vm6814, %v6651, %v5156
  %v6900 = vsel %vm6814, %v6654, %v5158
  %v6902 = vsel %vm6814, %v6657, %v5160
  %v6904 = vsel %vm6814, %v6660, %v5162
  %v6906 = vsel %vm6814, %v6663, %v5164
  %v6908 = vsel %vm6814, %v6666, %v5166
  %v6910 = vsel %vm6814, %v6669, %v5168
  %v6912 = vsel %vm6814, %v6672, %v5170
  %v6914 = vsel %vm6814, %v6675, %v5172
  %v6916 = vsel %vm6814, %v6678, %v5174
  %v6918 = vsel %vm6814, %v6681, %v5176
  %v6920 = vsel %vm6814, %v6684, %v5178
  %v6922 = vsel %vm6814, %v6687, %v5180
  %v6924 = vsel %vm6814, %v6690, %v5182
  %v6926 = vsel %vm6814, %v6693, %v5184
  %v6928 = vsel %vm6814, %v6696, %v5186
  %v6930 = vsel %vm6814, %v6699, %v5188
  %v6932 = vsel %vm6814, %v6702, %v5190
  %v6934 = vsel %vm6814, %v6705, %v5192
  %v6936 = vsel %vm6814, %v6708, %v5194
  %v6938 = vsel %vm6814, %v6711, %v5196
  %v6940 = vsel %vm6814, %v6714, %v5198
  %v6942 = vsel %vm6814, %v6717, %v5200
  %v6944 = vsel %vm6814, %v6720, %v5202
  %v6946 = vsel %vm6814, %v6723, %v5204
  %v6948 = vsel %vm6814, %v6726, %v5206
  %v6950 = vsel %vm6814, %v6729, %v5208
  %v6952 = vsel %vm6814, %v6732, %v5210
  %v6954 = vsel %vm6814, %v6735, %v5212
  %v6956 = vsel %vm6814, %v6738, %v5214
  %v6958 = vsel %vm6814, %v6741, %v5216
  %v6960 = vsel %vm6814, %v6744, %v5218
  %v6962 = vsel %vm6814, %v6747, %v5220
  %v6964 = vsel %vm6814, %v6750, %v5222
  %v6966 = vsel %vm6814, %v6753, %v5224
  %v6968 = vsel %vm6814, %v6756, %v5226
  %v6970 = vsel %vm6814, %v6759, %v5228
  %v6972 = vsel %vm6814, %v6762, %v5230
  %v6974 = vsel %vm6814, %v6765, %v5232
  %v6976 = vsel %vm6814, %v6768, %v5234
  %v6978 = vsel %vm6814, %v6771, %v5236
  %v6980 = vsel %vm6814, %v6774, %v5238
  %v6982 = vsel %vm6814, %v6777, %v5240
  %v6984 = vsel %vm6814, %v6780, %v5242
  %v6986 = vsel %vm6814, %v6783, %v5244
  %v6988 = vsel %vm6814, %v6786, %v5246
  %v6990 = vsel %vm6814, %v6789, %v5248
  %v6992 = vsel %vm6814, %v6792, %v5250
  %v6994 = vsel %vm6814, %v6795, %v5252
  %v6996 = vsel %vm6814, %v6798, %v5254
  %v6998 = vsel %vm6814, %v6801, %v5256
  %v7000 = vsel %vm6814, %v6804, %v5258
  %v7002 = vsel %vm6814, %v6807, %v5260
  %v7004 = vsel %vm6814, %v6810, %v5262
  %v7006 = vsel %vm6814, %v6813, %v5264
  %vm7007 = vcmask 97280
  %v7009 = vsel %vm7007, %v6816, %v5284
  %v7011 = vsel %vm7007, %v6818, %v5286
  %v7013 = vsel %vm7007, %v6820, %v5288
  %v7015 = vsel %vm7007, %v6822, %v5290
  %v7017 = vsel %vm7007, %v6824, %v5292
  %v7019 = vsel %vm7007, %v6826, %v5294
  %v7021 = vsel %vm7007, %v6828, %v5296
  %v7023 = vsel %vm7007, %v6830, %v5298
  %v7025 = vsel %vm7007, %v6832, %v5300
  %v7027 = vsel %vm7007, %v6834, %v5302
  %v7029 = vsel %vm7007, %v6836, %v5304
  %v7031 = vsel %vm7007, %v6838, %v5306
  %v7033 = vsel %vm7007, %v6840, %v5308
  %v7035 = vsel %vm7007, %v6842, %v5310
  %v7037 = vsel %vm7007, %v6844, %v5312
  %v7039 = vsel %vm7007, %v6846, %v5314
  %v7041 = vsel %vm7007, %v6848, %v5316
  %v7043 = vsel %vm7007, %v6850, %v5318
  %v7045 = vsel %vm7007, %v6852, %v5320
  %v7047 = vsel %vm7007, %v6854, %v5322
  %v7049 = vsel %vm7007, %v6856, %v5324
  %v7051 = vsel %vm7007, %v6858, %v5326
  %v7053 = vsel %vm7007, %v6860, %v5328
  %v7055 = vsel %vm7007, %v6862, %v5330
  %v7057 = vsel %vm7007, %v6864, %v5332
  %v7059 = vsel %vm7007, %v6866, %v5334
  %v7061 = vsel %vm7007, %v6868, %v5336
  %v7063 = vsel %vm7007, %v6870, %v5338
  %v7065 = vsel %vm7007, %v6872, %v5340
  %v7067 = vsel %vm7007, %v6874, %v5342
  %v7069 = vsel %vm7007, %v6876, %v5344
  %v7071 = vsel %vm7007, %v6878, %v5346
  %v7073 = vsel %vm7007, %v6880, %v5348
  %v7075 = vsel %vm7007, %v6882, %v5350
  %v7077 = vsel %vm7007, %v6884, %v5352
  %v7079 = vsel %vm7007, %v6886, %v5354
  %v7081 = vsel %vm7007, %v6888, %v5356
  %v7083 = vsel %vm7007, %v6890, %v5358
  %v7085 = vsel %vm7007, %v6892, %v5360
  %v7087 = vsel %vm7007, %v6894, %v5362
  %v7089 = vsel %vm7007, %v6896, %v5364
  %v7091 = vsel %vm7007, %v6898, %v5366
  %v7093 = vsel %vm7007, %v6900, %v5368
  %v7095 = vsel %vm7007, %v6902, %v5370
  %v7097 = vsel %vm7007, %v6904, %v5372
  %v7099 = vsel %vm7007, %v6906, %v5374
  %v7101 = vsel %vm7007, %v6908, %v5376
  %v7103 = vsel %vm7007, %v6910, %v5378
  %v7105 = vsel %vm7007, %v6912, %v5380
  %v7107 = vsel %vm7007, %v6914, %v5382
  %v7109 = vsel %vm7007, %v6916, %v5384
  %v7111 = vsel %vm7007, %v6918, %v5386
  %v7113 = vsel %vm7007, %v6920, %v5388
  %v7115 = vsel %vm7007, %v6922, %v5390
  %v7117 = vsel %vm7007, %v6924, %v5392
  %v7119 = vsel %vm7007, %v6926, %v5394
  %v7121 = vsel %vm7007, %v6928, %v5396
  %v7123 = vsel %vm7007, %v6930, %v5398
  %v7125 = vsel %vm7007, %v6932, %v5400
  %v7127 = vsel %vm7007, %v6934, %v5402
  %v7129 = vsel %vm7007, %v6936, %v5404
  %v7131 = vsel %vm7007, %v6938, %v5406
  %v7133 = vsel %vm7007, %v6940, %v5408
  %v7135 = vsel %vm7007, %v6942, %v5410
  %v7137 = vsel %vm7007, %v6944, %v5412
  %v7139 = vsel %vm7007, %v6946, %v5414
  %v7141 = vsel %vm7007, %v6948, %v5416
  %v7143 = vsel %vm7007, %v6950, %v5418
  %v7145 = vsel %vm7007, %v6952, %v5420
  %v7147 = vsel %vm7007, %v6954, %v5422
  %v7149 = vsel %vm7007, %v6956, %v5424
  %v7151 = vsel %vm7007, %v6958, %v5426
  %v7153 = vsel %vm7007, %v6960, %v5428
  %v7155 = vsel %vm7007, %v6962, %v5430
  %v7157 = vsel %vm7007, %v6964, %v5432
  %v7159 = vsel %vm7007, %v6966, %v5434
  %v7161 = vsel %vm7007, %v6968, %v5436
  %v7163 = vsel %vm7007, %v6970, %v5438
  %v7165 = vsel %vm7007, %v6972, %v5440
  %v7167 = vsel %vm7007, %v6974, %v5442
  %v7169 = vsel %vm7007, %v6976, %v5444
  %v7171 = vsel %vm7007, %v6978, %v5446
  %v7173 = vsel %vm7007, %v6980, %v5448
  %v7175 = vsel %vm7007, %v6982, %v5450
  %v7177 = vsel %vm7007, %v6984, %v5452
  %v7179 = vsel %vm7007, %v6986, %v5454
  %v7181 = vsel %vm7007, %v6988, %v5456
  %v7183 = vsel %vm7007, %v6990, %v5458
  %v7185 = vsel %vm7007, %v6992, %v5460
  %v7187 = vsel %vm7007, %v6994, %v5462
  %v7189 = vsel %vm7007, %v6996, %v5464
  %v7191 = vsel %vm7007, %v6998, %v5466
  %v7193 = vsel %vm7007, %v7000, %v5468
  %v7195 = vsel %vm7007, %v7002, %v5470
  %v7197 = vsel %vm7007, %v7004, %v5472
  %v7199 = vsel %vm7007, %v7006, %v5474
  %vm7200 = vcmask 130048
  %v7202 = vsel %vm7200, %v7009, %v5494
  %v7204 = vsel %vm7200, %v7011, %v5496
  %v7206 = vsel %vm7200, %v7013, %v5498
  %v7208 = vsel %vm7200, %v7015, %v5500
  %v7210 = vsel %vm7200, %v7017, %v5502
  %v7212 = vsel %vm7200, %v7019, %v5504
  %v7214 = vsel %vm7200, %v7021, %v5506
  %v7216 = vsel %vm7200, %v7023, %v5508
  %v7218 = vsel %vm7200, %v7025, %v5510
  %v7220 = vsel %vm7200, %v7027, %v5512
  %v7222 = vsel %vm7200, %v7029, %v5514
  %v7224 = vsel %vm7200, %v7031, %v5516
  %v7226 = vsel %vm7200, %v7033, %v5518
  %v7228 = vsel %vm7200, %v7035, %v5520
  %v7230 = vsel %vm7200, %v7037, %v5522
  %v7232 = vsel %vm7200, %v7039, %v5524
  %v7234 = vsel %vm7200, %v7041, %v5526
  %v7236 = vsel %vm7200, %v7043, %v5528
  %v7238 = vsel %vm7200, %v7045, %v5530
  %v7240 = vsel %vm7200, %v7047, %v5532
  %v7242 = vsel %vm7200, %v7049, %v5534
  %v7244 = vsel %vm7200, %v7051, %v5536
  %v7246 = vsel %vm7200, %v7053, %v5538
  %v7248 = vsel %vm7200, %v7055, %v5540
  %v7250 = vsel %vm7200, %v7057, %v5542
  %v7252 = vsel %vm7200, %v7059, %v5544
  %v7254 = vsel %vm7200, %v7061, %v5546
  %v7256 = vsel %vm7200, %v7063, %v5548
  %v7258 = vsel %vm7200, %v7065, %v5550
  %v7260 = vsel %vm7200, %v7067, %v5552
  %v7262 = vsel %vm7200, %v7069, %v5554
  %v7264 = vsel %vm7200, %v7071, %v5556
  %v7266 = vsel %vm7200, %v7073, %v5558
  %v7268 = vsel %vm7200, %v7075, %v5560
  %v7270 = vsel %vm7200, %v7077, %v5562
  %v7272 = vsel %vm7200, %v7079, %v5564
  %v7274 = vsel %vm7200, %v7081, %v5566
  %v7276 = vsel %vm7200, %v7083, %v5568
  %v7278 = vsel %vm7200, %v7085, %v5570
  %v7280 = vsel %vm7200, %v7087, %v5572
  %v7282 = vsel %vm7200, %v7089, %v5574
  %v7284 = vsel %vm7200, %v7091, %v5576
  %v7286 = vsel %vm7200, %v7093, %v5578
  %v7288 = vsel %vm7200, %v7095, %v5580
  %v7290 = vsel %vm7200, %v7097, %v5582
  %v7292 = vsel %vm7200, %v7099, %v5584
  %v7294 = vsel %vm7200, %v7101, %v5586
  %v7296 = vsel %vm7200, %v7103, %v5588
  %v7298 = vsel %vm7200, %v7105, %v5590
  %v7300 = vsel %vm7200, %v7107, %v5592
  %v7302 = vsel %vm7200, %v7109, %v5594
  %v7304 = vsel %vm7200, %v7111, %v5596
  %v7306 = vsel %vm7200, %v7113, %v5598
  %v7308 = vsel %vm7200, %v7115, %v5600
  %v7310 = vsel %vm7200, %v7117, %v5602
  %v7312 = vsel %vm7200, %v7119, %v5604
  %v7314 = vsel %vm7200, %v7121, %v5606
  %v7316 = vsel %vm7200, %v7123, %v5608
  %v7318 = vsel %vm7200, %v7125, %v5610
  %v7320 = vsel %vm7200, %v7127, %v5612
  %v7322 = vsel %vm7200, %v7129, %v5614
  %v7324 = vsel %vm7200, %v7131, %v5616
  %v7326 = vsel %vm7200, %v7133, %v5618
  %v7328 = vsel %vm7200, %v7135, %v5620
  %v7330 = vsel %vm7200, %v7137, %v5622
  %v7332 = vsel %vm7200, %v7139, %v5624
  %v7334 = vsel %vm7200, %v7141, %v5626
  %v7336 = vsel %vm7200, %v7143, %v5628
  %v7338 = vsel %vm7200, %v7145, %v5630
  %v7340 = vsel %vm7200, %v7147, %v5632
  %v7342 = vsel %vm7200, %v7149, %v5634
  %v7344 = vsel %vm7200, %v7151, %v5636
  %v7346 = vsel %vm7200, %v7153, %v5638
  %v7348 = vsel %vm7200, %v7155, %v5640
  %v7350 = vsel %vm7200, %v7157, %v5642
  %v7352 = vsel %vm7200, %v7159, %v5644
  %v7354 = vsel %vm7200, %v7161, %v5646
  %v7356 = vsel %vm7200, %v7163, %v5648
  %v7358 = vsel %vm7200, %v7165, %v5650
  %v7360 = vsel %vm7200, %v7167, %v5652
  %v7362 = vsel %vm7200, %v7169, %v5654
  %v7364 = vsel %vm7200, %v7171, %v5656
  %v7366 = vsel %vm7200, %v7173, %v5658
  %v7368 = vsel %vm7200, %v7175, %v5660
  %v7370 = vsel %vm7200, %v7177, %v5662
  %v7372 = vsel %vm7200, %v7179, %v5664
  %v7374 = vsel %vm7200, %v7181, %v5666
  %v7376 = vsel %vm7200, %v7183, %v5668
  %v7378 = vsel %vm7200, %v7185, %v5670
  %v7380 = vsel %vm7200, %v7187, %v5672
  %v7382 = vsel %vm7200, %v7189, %v5674
  %v7384 = vsel %vm7200, %v7191, %v5676
  %v7386 = vsel %vm7200, %v7193, %v5678
  %v7388 = vsel %vm7200, %v7195, %v5680
  %v7390 = vsel %vm7200, %v7197, %v5682
  %v7392 = vsel %vm7200, %v7199, %v5684
  %vm7393 = vcmask 162816
  %v7395 = vsel %vm7393, %v7202, %v5704
  %v7397 = vsel %vm7393, %v7204, %v5706
  %v7399 = vsel %vm7393, %v7206, %v5708
  %v7401 = vsel %vm7393, %v7208, %v5710
  %v7403 = vsel %vm7393, %v7210, %v5712
  %v7405 = vsel %vm7393, %v7212, %v5714
  %v7407 = vsel %vm7393, %v7214, %v5716
  %v7409 = vsel %vm7393, %v7216, %v5718
  %v7411 = vsel %vm7393, %v7218, %v5720
  %v7413 = vsel %vm7393, %v7220, %v5722
  %v7415 = vsel %vm7393, %v7222, %v5724
  %v7417 = vsel %vm7393, %v7224, %v5726
  %v7419 = vsel %vm7393, %v7226, %v5728
  %v7421 = vsel %vm7393, %v7228, %v5730
  %v7423 = vsel %vm7393, %v7230, %v5732
  %v7425 = vsel %vm7393, %v7232, %v5734
  %v7427 = vsel %vm7393, %v7234, %v5736
  %v7429 = vsel %vm7393, %v7236, %v5738
  %v7431 = vsel %vm7393, %v7238, %v5740
  %v7433 = vsel %vm7393, %v7240, %v5742
  %v7435 = vsel %vm7393, %v7242, %v5744
  %v7437 = vsel %vm7393, %v7244, %v5746
  %v7439 = vsel %vm7393, %v7246, %v5748
  %v7441 = vsel %vm7393, %v7248, %v5750
  %v7443 = vsel %vm7393, %v7250, %v5752
  %v7445 = vsel %vm7393, %v7252, %v5754
  %v7447 = vsel %vm7393, %v7254, %v5756
  %v7449 = vsel %vm7393, %v7256, %v5758
  %v7451 = vsel %vm7393, %v7258, %v5760
  %v7453 = vsel %vm7393, %v7260, %v5762
  %v7455 = vsel %vm7393, %v7262, %v5764
  %v7457 = vsel %vm7393, %v7264, %v5766
  %v7459 = vsel %vm7393, %v7266, %v5768
  %v7461 = vsel %vm7393, %v7268, %v5770
  %v7463 = vsel %vm7393, %v7270, %v5772
  %v7465 = vsel %vm7393, %v7272, %v5774
  %v7467 = vsel %vm7393, %v7274, %v5776
  %v7469 = vsel %vm7393, %v7276, %v5778
  %v7471 = vsel %vm7393, %v7278, %v5780
  %v7473 = vsel %vm7393, %v7280, %v5782
  %v7475 = vsel %vm7393, %v7282, %v5784
  %v7477 = vsel %vm7393, %v7284, %v5786
  %v7479 = vsel %vm7393, %v7286, %v5788
  %v7481 = vsel %vm7393, %v7288, %v5790
  %v7483 = vsel %vm7393, %v7290, %v5792
  %v7485 = vsel %vm7393, %v7292, %v5794
  %v7487 = vsel %vm7393, %v7294, %v5796
  %v7489 = vsel %vm7393, %v7296, %v5798
  %v7491 = vsel %vm7393, %v7298, %v5800
  %v7493 = vsel %vm7393, %v7300, %v5802
  %v7495 = vsel %vm7393, %v7302, %v5804
  %v7497 = vsel %vm7393, %v7304, %v5806
  %v7499 = vsel %vm7393, %v7306, %v5808
  %v7501 = vsel %vm7393, %v7308, %v5810
  %v7503 = vsel %vm7393, %v7310, %v5812
  %v7505 = vsel %vm7393, %v7312, %v5814
  %v7507 = vsel %vm7393, %v7314, %v5816
  %v7509 = vsel %vm7393, %v7316, %v5818
  %v7511 = vsel %vm7393, %v7318, %v5820
  %v7513 = vsel %vm7393, %v7320, %v5822
  %v7515 = vsel %vm7393, %v7322, %v5824
  %v7517 = vsel %vm7393, %v7324, %v5826
  %v7519 = vsel %vm7393, %v7326, %v5828
  %v7521 = vsel %vm7393, %v7328, %v5830
  %v7523 = vsel %vm7393, %v7330, %v5832
  %v7525 = vsel %vm7393, %v7332, %v5834
  %v7527 = vsel %vm7393, %v7334, %v5836
  %v7529 = vsel %vm7393, %v7336, %v5838
  %v7531 = vsel %vm7393, %v7338, %v5840
  %v7533 = vsel %vm7393, %v7340, %v5842
  %v7535 = vsel %vm7393, %v7342, %v5844
  %v7537 = vsel %vm7393, %v7344, %v5846
  %v7539 = vsel %vm7393, %v7346, %v5848
  %v7541 = vsel %vm7393, %v7348, %v5850
  %v7543 = vsel %vm7393, %v7350, %v5852
  %v7545 = vsel %vm7393, %v7352, %v5854
  %v7547 = vsel %vm7393, %v7354, %v5856
  %v7549 = vsel %vm7393, %v7356, %v5858
  %v7551 = vsel %vm7393, %v7358, %v5860
  %v7553 = vsel %vm7393, %v7360, %v5862
  %v7555 = vsel %vm7393, %v7362, %v5864
  %v7557 = vsel %vm7393, %v7364, %v5866
  %v7559 = vsel %vm7393, %v7366, %v5868
  %v7561 = vsel %vm7393, %v7368, %v5870
  %v7563 = vsel %vm7393, %v7370, %v5872
  %v7565 = vsel %vm7393, %v7372, %v5874
  %v7567 = vsel %vm7393, %v7374, %v5876
  %v7569 = vsel %vm7393, %v7376, %v5878
  %v7571 = vsel %vm7393, %v7378, %v5880
  %v7573 = vsel %vm7393, %v7380, %v5882
  %v7575 = vsel %vm7393, %v7382, %v5884
  %v7577 = vsel %vm7393, %v7384, %v5886
  %v7579 = vsel %vm7393, %v7386, %v5888
  %v7581 = vsel %vm7393, %v7388, %v5890
  %v7583 = vsel %vm7393, %v7390, %v5892
  %v7585 = vsel %vm7393, %v7392, %v5894
  %vm7586 = vcmask 195584
  %v7588 = vsel %vm7586, %v7395, %v5914
  %v7590 = vsel %vm7586, %v7397, %v5916
  %v7592 = vsel %vm7586, %v7399, %v5918
  %v7594 = vsel %vm7586, %v7401, %v5920
  %v7596 = vsel %vm7586, %v7403, %v5922
  %v7598 = vsel %vm7586, %v7405, %v5924
  %v7600 = vsel %vm7586, %v7407, %v5926
  %v7602 = vsel %vm7586, %v7409, %v5928
  %v7604 = vsel %vm7586, %v7411, %v5930
  %v7606 = vsel %vm7586, %v7413, %v5932
  %v7608 = vsel %vm7586, %v7415, %v5934
  %v7610 = vsel %vm7586, %v7417, %v5936
  %v7612 = vsel %vm7586, %v7419, %v5938
  %v7614 = vsel %vm7586, %v7421, %v5940
  %v7616 = vsel %vm7586, %v7423, %v5942
  %v7618 = vsel %vm7586, %v7425, %v5944
  %v7620 = vsel %vm7586, %v7427, %v5946
  %v7622 = vsel %vm7586, %v7429, %v5948
  %v7624 = vsel %vm7586, %v7431, %v5950
  %v7626 = vsel %vm7586, %v7433, %v5952
  %v7628 = vsel %vm7586, %v7435, %v5954
  %v7630 = vsel %vm7586, %v7437, %v5956
  %v7632 = vsel %vm7586, %v7439, %v5958
  %v7634 = vsel %vm7586, %v7441, %v5960
  %v7636 = vsel %vm7586, %v7443, %v5962
  %v7638 = vsel %vm7586, %v7445, %v5964
  %v7640 = vsel %vm7586, %v7447, %v5966
  %v7642 = vsel %vm7586, %v7449, %v5968
  %v7644 = vsel %vm7586, %v7451, %v5970
  %v7646 = vsel %vm7586, %v7453, %v5972
  %v7648 = vsel %vm7586, %v7455, %v5974
  %v7650 = vsel %vm7586, %v7457, %v5976
  %v7652 = vsel %vm7586, %v7459, %v5978
  %v7654 = vsel %vm7586, %v7461, %v5980
  %v7656 = vsel %vm7586, %v7463, %v5982
  %v7658 = vsel %vm7586, %v7465, %v5984
  %v7660 = vsel %vm7586, %v7467, %v5986
  %v7662 = vsel %vm7586, %v7469, %v5988
  %v7664 = vsel %vm7586, %v7471, %v5990
  %v7666 = vsel %vm7586, %v7473, %v5992
  %v7668 = vsel %vm7586, %v7475, %v5994
  %v7670 = vsel %vm7586, %v7477, %v5996
  %v7672 = vsel %vm7586, %v7479, %v5998
  %v7674 = vsel %vm7586, %v7481, %v6000
  %v7676 = vsel %vm7586, %v7483, %v6002
  %v7678 = vsel %vm7586, %v7485, %v6004
  %v7680 = vsel %vm7586, %v7487, %v6006
  %v7682 = vsel %vm7586, %v7489, %v6008
  %v7684 = vsel %vm7586, %v7491, %v6010
  %v7686 = vsel %vm7586, %v7493, %v6012
  %v7688 = vsel %vm7586, %v7495, %v6014
  %v7690 = vsel %vm7586, %v7497, %v6016
  %v7692 = vsel %vm7586, %v7499, %v6018
  %v7694 = vsel %vm7586, %v7501, %v6020
  %v7696 = vsel %vm7586, %v7503, %v6022
  %v7698 = vsel %vm7586, %v7505, %v6024
  %v7700 = vsel %vm7586, %v7507, %v6026
  %v7702 = vsel %vm7586, %v7509, %v6028
  %v7704 = vsel %vm7586, %v7511, %v6030
  %v7706 = vsel %vm7586, %v7513, %v6032
  %v7708 = vsel %vm7586, %v7515, %v6034
  %v7710 = vsel %vm7586, %v7517, %v6036
  %v7712 = vsel %vm7586, %v7519, %v6038
  %v7714 = vsel %vm7586, %v7521, %v6040
  %v7716 = vsel %vm7586, %v7523, %v6042
  %v7718 = vsel %vm7586, %v7525, %v6044
  %v7720 = vsel %vm7586, %v7527, %v6046
  %v7722 = vsel %vm7586, %v7529, %v6048
  %v7724 = vsel %vm7586, %v7531, %v6050
  %v7726 = vsel %vm7586, %v7533, %v6052
  %v7728 = vsel %vm7586, %v7535, %v6054
  %v7730 = vsel %vm7586, %v7537, %v6056
  %v7732 = vsel %vm7586, %v7539, %v6058
  %v7734 = vsel %vm7586, %v7541, %v6060
  %v7736 = vsel %vm7586, %v7543, %v6062
  %v7738 = vsel %vm7586, %v7545, %v6064
  %v7740 = vsel %vm7586, %v7547, %v6066
  %v7742 = vsel %vm7586, %v7549, %v6068
  %v7744 = vsel %vm7586, %v7551, %v6070
  %v7746 = vsel %vm7586, %v7553, %v6072
  %v7748 = vsel %vm7586, %v7555, %v6074
  %v7750 = vsel %vm7586, %v7557, %v6076
  %v7752 = vsel %vm7586, %v7559, %v6078
  %v7754 = vsel %vm7586, %v7561, %v6080
  %v7756 = vsel %vm7586, %v7563, %v6082
  %v7758 = vsel %vm7586, %v7565, %v6084
  %v7760 = vsel %vm7586, %v7567, %v6086
  %v7762 = vsel %vm7586, %v7569, %v6088
  %v7764 = vsel %vm7586, %v7571, %v6090
  %v7766 = vsel %vm7586, %v7573, %v6092
  %v7768 = vsel %vm7586, %v7575, %v6094
  %v7770 = vsel %vm7586, %v7577, %v6096
  %v7772 = vsel %vm7586, %v7579, %v6098
  %v7774 = vsel %vm7586, %v7581, %v6100
  %v7776 = vsel %vm7586, %v7583, %v6102
  %v7778 = vsel %vm7586, %v7585, %v6104
  %vm7779 = vcmask 228352
  %v7781 = vsel %vm7779, %v7588, %v6124
  %v7783 = vsel %vm7779, %v7590, %v6126
  %v7785 = vsel %vm7779, %v7592, %v6128
  %v7787 = vsel %vm7779, %v7594, %v6130
  %v7789 = vsel %vm7779, %v7596, %v6132
  %v7791 = vsel %vm7779, %v7598, %v6134
  %v7793 = vsel %vm7779, %v7600, %v6136
  %v7795 = vsel %vm7779, %v7602, %v6138
  %v7797 = vsel %vm7779, %v7604, %v6140
  %v7799 = vsel %vm7779, %v7606, %v6142
  %v7801 = vsel %vm7779, %v7608, %v6144
  %v7803 = vsel %vm7779, %v7610, %v6146
  %v7805 = vsel %vm7779, %v7612, %v6148
  %v7807 = vsel %vm7779, %v7614, %v6150
  %v7809 = vsel %vm7779, %v7616, %v6152
  %v7811 = vsel %vm7779, %v7618, %v6154
  %v7813 = vsel %vm7779, %v7620, %v6156
  %v7815 = vsel %vm7779, %v7622, %v6158
  %v7817 = vsel %vm7779, %v7624, %v6160
  %v7819 = vsel %vm7779, %v7626, %v6162
  %v7821 = vsel %vm7779, %v7628, %v6164
  %v7823 = vsel %vm7779, %v7630, %v6166
  %v7825 = vsel %vm7779, %v7632, %v6168
  %v7827 = vsel %vm7779, %v7634, %v6170
  %v7829 = vsel %vm7779, %v7636, %v6172
  %v7831 = vsel %vm7779, %v7638, %v6174
  %v7833 = vsel %vm7779, %v7640, %v6176
  %v7835 = vsel %vm7779, %v7642, %v6178
  %v7837 = vsel %vm7779, %v7644, %v6180
  %v7839 = vsel %vm7779, %v7646, %v6182
  %v7841 = vsel %vm7779, %v7648, %v6184
  %v7843 = vsel %vm7779, %v7650, %v6186
  %v7845 = vsel %vm7779, %v7652, %v6188
  %v7847 = vsel %vm7779, %v7654, %v6190
  %v7849 = vsel %vm7779, %v7656, %v6192
  %v7851 = vsel %vm7779, %v7658, %v6194
  %v7853 = vsel %vm7779, %v7660, %v6196
  %v7855 = vsel %vm7779, %v7662, %v6198
  %v7857 = vsel %vm7779, %v7664, %v6200
  %v7859 = vsel %vm7779, %v7666, %v6202
  %v7861 = vsel %vm7779, %v7668, %v6204
  %v7863 = vsel %vm7779, %v7670, %v6206
  %v7865 = vsel %vm7779, %v7672, %v6208
  %v7867 = vsel %vm7779, %v7674, %v6210
  %v7869 = vsel %vm7779, %v7676, %v6212
  %v7871 = vsel %vm7779, %v7678, %v6214
  %v7873 = vsel %vm7779, %v7680, %v6216
  %v7875 = vsel %vm7779, %v7682, %v6218
  %v7877 = vsel %vm7779, %v7684, %v6220
  %v7879 = vsel %vm7779, %v7686, %v6222
  %v7881 = vsel %vm7779, %v7688, %v6224
  %v7883 = vsel %vm7779, %v7690, %v6226
  %v7885 = vsel %vm7779, %v7692, %v6228
  %v7887 = vsel %vm7779, %v7694, %v6230
  %v7889 = vsel %vm7779, %v7696, %v6232
  %v7891 = vsel %vm7779, %v7698, %v6234
  %v7893 = vsel %vm7779, %v7700, %v6236
  %v7895 = vsel %vm7779, %v7702, %v6238
  %v7897 = vsel %vm7779, %v7704, %v6240
  %v7899 = vsel %vm7779, %v7706, %v6242
  %v7901 = vsel %vm7779, %v7708, %v6244
  %v7903 = vsel %vm7779, %v7710, %v6246
  %v7905 = vsel %vm7779, %v7712, %v6248
  %v7907 = vsel %vm7779, %v7714, %v6250
  %v7909 = vsel %vm7779, %v7716, %v6252
  %v7911 = vsel %vm7779, %v7718, %v6254
  %v7913 = vsel %vm7779, %v7720, %v6256
  %v7915 = vsel %vm7779, %v7722, %v6258
  %v7917 = vsel %vm7779, %v7724, %v6260
  %v7919 = vsel %vm7779, %v7726, %v6262
  %v7921 = vsel %vm7779, %v7728, %v6264
  %v7923 = vsel %vm7779, %v7730, %v6266
  %v7925 = vsel %vm7779, %v7732, %v6268
  %v7927 = vsel %vm7779, %v7734, %v6270
  %v7929 = vsel %vm7779, %v7736, %v6272
  %v7931 = vsel %vm7779, %v7738, %v6274
  %v7933 = vsel %vm7779, %v7740, %v6276
  %v7935 = vsel %vm7779, %v7742, %v6278
  %v7937 = vsel %vm7779, %v7744, %v6280
  %v7939 = vsel %vm7779, %v7746, %v6282
  %v7941 = vsel %vm7779, %v7748, %v6284
  %v7943 = vsel %vm7779, %v7750, %v6286
  %v7945 = vsel %vm7779, %v7752, %v6288
  %v7947 = vsel %vm7779, %v7754, %v6290
  %v7949 = vsel %vm7779, %v7756, %v6292
  %v7951 = vsel %vm7779, %v7758, %v6294
  %v7953 = vsel %vm7779, %v7760, %v6296
  %v7955 = vsel %vm7779, %v7762, %v6298
  %v7957 = vsel %vm7779, %v7764, %v6300
  %v7959 = vsel %vm7779, %v7766, %v6302
  %v7961 = vsel %vm7779, %v7768, %v6304
  %v7963 = vsel %vm7779, %v7770, %v6306
  %v7965 = vsel %vm7779, %v7772, %v6308
  %v7967 = vsel %vm7779, %v7774, %v6310
  %v7969 = vsel %vm7779, %v7776, %v6312
  %v7971 = vsel %vm7779, %v7778, %v6314
  %vm7972 = vcmask 261120
  %v7974 = vsel %vm7972, %v7781, %v6334
  %v7976 = vsel %vm7972, %v7783, %v6336
  %v7978 = vsel %vm7972, %v7785, %v6338
  %v7980 = vsel %vm7972, %v7787, %v6340
  %v7982 = vsel %vm7972, %v7789, %v6342
  %v7984 = vsel %vm7972, %v7791, %v6344
  %v7986 = vsel %vm7972, %v7793, %v6346
  %v7988 = vsel %vm7972, %v7795, %v6348
  %v7990 = vsel %vm7972, %v7797, %v6350
  %v7992 = vsel %vm7972, %v7799, %v6352
  %v7994 = vsel %vm7972, %v7801, %v6354
  %v7996 = vsel %vm7972, %v7803, %v6356
  %v7998 = vsel %vm7972, %v7805, %v6358
  %v8000 = vsel %vm7972, %v7807, %v6360
  %v8002 = vsel %vm7972, %v7809, %v6362
  %v8004 = vsel %vm7972, %v7811, %v6364
  %v8006 = vsel %vm7972, %v7813, %v6366
  %v8008 = vsel %vm7972, %v7815, %v6368
  %v8010 = vsel %vm7972, %v7817, %v6370
  %v8012 = vsel %vm7972, %v7819, %v6372
  %v8014 = vsel %vm7972, %v7821, %v6374
  %v8016 = vsel %vm7972, %v7823, %v6376
  %v8018 = vsel %vm7972, %v7825, %v6378
  %v8020 = vsel %vm7972, %v7827, %v6380
  %v8022 = vsel %vm7972, %v7829, %v6382
  %v8024 = vsel %vm7972, %v7831, %v6384
  %v8026 = vsel %vm7972, %v7833, %v6386
  %v8028 = vsel %vm7972, %v7835, %v6388
  %v8030 = vsel %vm7972, %v7837, %v6390
  %v8032 = vsel %vm7972, %v7839, %v6392
  %v8034 = vsel %vm7972, %v7841, %v6394
  %v8036 = vsel %vm7972, %v7843, %v6396
  %v8038 = vsel %vm7972, %v7845, %v6398
  %v8040 = vsel %vm7972, %v7847, %v6400
  %v8042 = vsel %vm7972, %v7849, %v6402
  %v8044 = vsel %vm7972, %v7851, %v6404
  %v8046 = vsel %vm7972, %v7853, %v6406
  %v8048 = vsel %vm7972, %v7855, %v6408
  %v8050 = vsel %vm7972, %v7857, %v6410
  %v8052 = vsel %vm7972, %v7859, %v6412
  %v8054 = vsel %vm7972, %v7861, %v6414
  %v8056 = vsel %vm7972, %v7863, %v6416
  %v8058 = vsel %vm7972, %v7865, %v6418
  %v8060 = vsel %vm7972, %v7867, %v6420
  %v8062 = vsel %vm7972, %v7869, %v6422
  %v8064 = vsel %vm7972, %v7871, %v6424
  %v8066 = vsel %vm7972, %v7873, %v6426
  %v8068 = vsel %vm7972, %v7875, %v6428
  %v8070 = vsel %vm7972, %v7877, %v6430
  %v8072 = vsel %vm7972, %v7879, %v6432
  %v8074 = vsel %vm7972, %v7881, %v6434
  %v8076 = vsel %vm7972, %v7883, %v6436
  %v8078 = vsel %vm7972, %v7885, %v6438
  %v8080 = vsel %vm7972, %v7887, %v6440
  %v8082 = vsel %vm7972, %v7889, %v6442
  %v8084 = vsel %vm7972, %v7891, %v6444
  %v8086 = vsel %vm7972, %v7893, %v6446
  %v8088 = vsel %vm7972, %v7895, %v6448
  %v8090 = vsel %vm7972, %v7897, %v6450
  %v8092 = vsel %vm7972, %v7899, %v6452
  %v8094 = vsel %vm7972, %v7901, %v6454
  %v8096 = vsel %vm7972, %v7903, %v6456
  %v8098 = vsel %vm7972, %v7905, %v6458
  %v8100 = vsel %vm7972, %v7907, %v6460
  %v8102 = vsel %vm7972, %v7909, %v6462
  %v8104 = vsel %vm7972, %v7911, %v6464
  %v8106 = vsel %vm7972, %v7913, %v6466
  %v8108 = vsel %vm7972, %v7915, %v6468
  %v8110 = vsel %vm7972, %v7917, %v6470
  %v8112 = vsel %vm7972, %v7919, %v6472
  %v8114 = vsel %vm7972, %v7921, %v6474
  %v8116 = vsel %vm7972, %v7923, %v6476
  %v8118 = vsel %vm7972, %v7925, %v6478
  %v8120 = vsel %vm7972, %v7927, %v6480
  %v8122 = vsel %vm7972, %v7929, %v6482
  %v8124 = vsel %vm7972, %v7931, %v6484
  %v8126 = vsel %vm7972, %v7933, %v6486
  %v8128 = vsel %vm7972, %v7935, %v6488
  %v8130 = vsel %vm7972, %v7937, %v6490
  %v8132 = vsel %vm7972, %v7939, %v6492
  %v8134 = vsel %vm7972, %v7941, %v6494
  %v8136 = vsel %vm7972, %v7943, %v6496
  %v8138 = vsel %vm7972, %v7945, %v6498
  %v8140 = vsel %vm7972, %v7947, %v6500
  %v8142 = vsel %vm7972, %v7949, %v6502
  %v8144 = vsel %vm7972, %v7951, %v6504
  %v8146 = vsel %vm7972, %v7953, %v6506
  %v8148 = vsel %vm7972, %v7955, %v6508
  %v8150 = vsel %vm7972, %v7957, %v6510
  %v8152 = vsel %vm7972, %v7959, %v6512
  %v8154 = vsel %vm7972, %v7961, %v6514
  %v8156 = vsel %vm7972, %v7963, %v6516
  %v8158 = vsel %vm7972, %v7965, %v6518
  %v8160 = vsel %vm7972, %v7967, %v6520
  %v8162 = vsel %vm7972, %v7969, %v6522
  %v8164 = vsel %vm7972, %v7971, %v6524
  %v8165 = vld [vmem:[%s1] sm:$0xf]
  %v8166 = vld [vmem:[%s1 + $0x4] sm:$0xf]
  %v8167 = vld [vmem:[%s1 + $0x8] sm:$0xf]
  %v8168 = vld [vmem:[%s1 + $0xc] sm:$0xf]
  %v8169 = vld [vmem:[%s1 + $0x10] sm:$0x3]
  %v8170 = vld [vmem:[%s2] sm:$0x1]
  %v8172 = vlaneseq
  %v8173 = vshrl.u32 %v8172, 7
  %v8174 = vsub.s32 0, %v8173
  %v8175 = vrot.slane %v8170, %v8174
  %v8182 = vunpack.c.l.b16 %v8165
  %v8183 = vunpack.c.l.b16 %v8166
  %v8184 = vunpack.c.l.b16 %v8167
  %v8185 = vunpack.c.l.b16 %v8168
  %v8186 = vunpack.c.l.b16 %v8169
  %v8187 = vpack.c.b16 %v8183, %v8182
  %v8188 = vpack.c.b16 %v8185, %v8184
  %v8189 = vpack.c.b16 %v8186, %v8186
  %vm8192 = vcmask 293888
  %v8193 = vsel %vm8192, %v7974, 0
  %v8195 = vsel %vm8192, %v7976, 0
  %v8197 = vsel %vm8192, %v7978, 0
  %v8199 = vsel %vm8192, %v7980, 0
  %v8201 = vsel %vm8192, %v7982, 0
  %v8203 = vsel %vm8192, %v7984, 0
  %v8205 = vsel %vm8192, %v7986, 0
  %v8207 = vsel %vm8192, %v7988, 0
  %v8209 = vsel %vm8192, %v7990, 0
  %v8211 = vsel %vm8192, %v7992, 0
  %v8213 = vsel %vm8192, %v7994, 0
  %v8215 = vsel %vm8192, %v7996, 0
  %v8217 = vsel %vm8192, %v7998, 0
  %v8219 = vsel %vm8192, %v8000, 0
  %v8221 = vsel %vm8192, %v8002, 0
  %v8223 = vsel %vm8192, %v8004, 0
  %v8225 = vsel %vm8192, %v8006, 0
  %v8227 = vsel %vm8192, %v8008, 0
  %v8229 = vsel %vm8192, %v8010, 0
  %v8231 = vsel %vm8192, %v8012, 0
  %v8233 = vsel %vm8192, %v8014, 0
  %v8235 = vsel %vm8192, %v8016, 0
  %v8237 = vsel %vm8192, %v8018, 0
  %v8239 = vsel %vm8192, %v8020, 0
  %v8241 = vsel %vm8192, %v8022, 0
  %v8243 = vsel %vm8192, %v8024, 0
  %v8245 = vsel %vm8192, %v8026, 0
  %v8247 = vsel %vm8192, %v8028, 0
  %v8249 = vsel %vm8192, %v8030, 0
  %v8251 = vsel %vm8192, %v8032, 0
  %v8253 = vsel %vm8192, %v8034, 0
  %v8255 = vsel %vm8192, %v8036, 0
  %v8257 = vsel %vm8192, %v8038, 0
  %v8259 = vsel %vm8192, %v8040, 0
  %v8261 = vsel %vm8192, %v8042, 0
  %v8263 = vsel %vm8192, %v8044, 0
  %v8265 = vsel %vm8192, %v8046, 0
  %v8267 = vsel %vm8192, %v8048, 0
  %v8269 = vsel %vm8192, %v8050, 0
  %v8271 = vsel %vm8192, %v8052, 0
  %v8273 = vsel %vm8192, %v8054, 0
  %v8275 = vsel %vm8192, %v8056, 0
  %v8277 = vsel %vm8192, %v8058, 0
  %v8279 = vsel %vm8192, %v8060, 0
  %v8281 = vsel %vm8192, %v8062, 0
  %v8283 = vsel %vm8192, %v8064, 0
  %v8285 = vsel %vm8192, %v8066, 0
  %v8287 = vsel %vm8192, %v8068, 0
  %v8289 = vsel %vm8192, %v8070, 0
  %v8291 = vsel %vm8192, %v8072, 0
  %v8293 = vsel %vm8192, %v8074, 0
  %v8295 = vsel %vm8192, %v8076, 0
  %v8297 = vsel %vm8192, %v8078, 0
  %v8299 = vsel %vm8192, %v8080, 0
  %v8301 = vsel %vm8192, %v8082, 0
  %v8303 = vsel %vm8192, %v8084, 0
  %v8305 = vsel %vm8192, %v8086, 0
  %v8307 = vsel %vm8192, %v8088, 0
  %v8309 = vsel %vm8192, %v8090, 0
  %v8311 = vsel %vm8192, %v8092, 0
  %v8313 = vsel %vm8192, %v8094, 0
  %v8315 = vsel %vm8192, %v8096, 0
  %v8317 = vsel %vm8192, %v8098, 0
  %v8319 = vsel %vm8192, %v8100, 0
  %v8321 = vsel %vm8192, %v8102, 0
  %v8323 = vsel %vm8192, %v8104, 0
  %v8325 = vsel %vm8192, %v8106, 0
  %v8327 = vsel %vm8192, %v8108, 0
  %v8329 = vsel %vm8192, %v8110, 0
  %v8331 = vsel %vm8192, %v8112, 0
  %v8333 = vsel %vm8192, %v8114, 0
  %v8335 = vsel %vm8192, %v8116, 0
  %v8337 = vsel %vm8192, %v8118, 0
  %v8339 = vsel %vm8192, %v8120, 0
  %v8341 = vsel %vm8192, %v8122, 0
  %v8343 = vsel %vm8192, %v8124, 0
  %v8345 = vsel %vm8192, %v8126, 0
  %v8347 = vsel %vm8192, %v8128, 0
  %v8349 = vsel %vm8192, %v8130, 0
  %v8351 = vsel %vm8192, %v8132, 0
  %v8353 = vsel %vm8192, %v8134, 0
  %v8355 = vsel %vm8192, %v8136, 0
  %v8357 = vsel %vm8192, %v8138, 0
  %v8359 = vsel %vm8192, %v8140, 0
  %v8361 = vsel %vm8192, %v8142, 0
  %v8363 = vsel %vm8192, %v8144, 0
  %v8365 = vsel %vm8192, %v8146, 0
  %v8367 = vsel %vm8192, %v8148, 0
  %v8369 = vsel %vm8192, %v8150, 0
  %v8371 = vsel %vm8192, %v8152, 0
  %v8373 = vsel %vm8192, %v8154, 0
  %v8375 = vsel %vm8192, %v8156, 0
  %v8377 = vsel %vm8192, %v8158, 0
  %v8379 = vsel %vm8192, %v8160, 0
  %v8381 = vsel %vm8192, %v8162, 0
  %v8383 = vsel %vm8192, %v8164, 0
  %vm8385 = vcmask 1041408
  %v8387 = vsel %vm8385, %v8189, 0
  %8389 = vmatprep.subr.bf16.mxu0 0
  %8390 = vmatpush1.bf16.msra.mxu0 0
  %8391 = vmatprep.subr.bf16.mxu0 0
  %8392 = vmatpush1.bf16.msra.mxu0 0
  %8393 = vmatprep.subr.bf16.mxu0 0
  %8394 = vmatpush1.bf16.msra.mxu0 0
  %8395 = vmatprep.subr.bf16.mxu0 0
  %8396 = vmatpush1.bf16.msra.mxu0 0
  %8397 = vmatprep.subr.bf16.mxu0 0
  %8398 = vmatpush1.bf16.msra.mxu0 0
  %8399 = vmatprep.subr.bf16.mxu0 0
  %8400 = vmatpush1.bf16.msra.mxu0 %v8387
  %8401 = vmatprep.subr.bf16.mxu0 0
  %8402 = vmatpush1.bf16.msra.mxu0 %v8188
  %8403 = vmatprep.subr.bf16.mxu0 0
  %8404 = vmatpush1.bf16.msra.mxu0 %v8187
  %8405 = vmatprep.subr.bf16.mxu0 0
  %8406 = vmatpush2.bf16.msra.mxu0 0
  %8407 = vmatprep.subr.bf16.mxu0 0
  %8408 = vmatpush2.bf16.msra.mxu0 0
  %8409 = vmatprep.subr.bf16.mxu0 0
  %8410 = vmatpush2.bf16.msra.mxu0 0
  %8411 = vmatprep.subr.bf16.mxu0 0
  %8412 = vmatpush2.bf16.msra.mxu0 0
  %8413 = vmatprep.subr.bf16.mxu0 0
  %8414 = vmatpush2.bf16.msra.mxu0 0
  %8415 = vmatprep.subr.bf16.mxu0 0
  %8416 = vmatpush2.bf16.msra.mxu0 0
  %8417 = vmatprep.subr.bf16.mxu0 0
  %8418 = vmatpush2.bf16.msra.mxu0 0
  %8419 = vmatprep.subr.bf16.mxu0 0
  %8420 = vmatpush2.bf16.msra.mxu0 0
  %8421 = vmatprep.mubr.bf16.mxu0 0
  %8422 = vmatmul.mubr.bf16.gmra.mxu0 %v8193
  %v8423 = vpop.f32.mrf.mxu0
  %v8424 = vadd.f32 %v8175, %v8423
  %v8425 = vpop.f32.mrf.mxu0
  %v8426 = vpop.f32.mrf.mxu0
  %v8427 = vadd.f32 %v8175, %v8426
  %v8428 = vpop.f32.mrf.mxu0
  %8429 = vmatprep.mubr.bf16.mxu0 0
  %8430 = vmatmul.mubr.bf16.gmra.mxu0 %v8195
  %v8431 = vpop.f32.mrf.mxu0
  %v8432 = vadd.f32 %v8175, %v8431
  %v8433 = vpop.f32.mrf.mxu0
  %v8434 = vpop.f32.mrf.mxu0
  %v8435 = vadd.f32 %v8175, %v8434
  %v8436 = vpop.f32.mrf.mxu0
  %8437 = vmatprep.mubr.bf16.mxu0 0
  %8438 = vmatmul.mubr.bf16.gmra.mxu0 %v8197
  %v8439 = vpop.f32.mrf.mxu0
  %v8440 = vadd.f32 %v8175, %v8439
  %v8441 = vpop.f32.mrf.mxu0
  %v8442 = vpop.f32.mrf.mxu0
  %v8443 = vadd.f32 %v8175, %v8442
  %v8444 = vpop.f32.mrf.mxu0
  %8445 = vmatprep.mubr.bf16.mxu0 0
  %8446 = vmatmul.mubr.bf16.gmra.mxu0 %v8199
  %v8447 = vpop.f32.mrf.mxu0
  %v8448 = vadd.f32 %v8175, %v8447
  %v8449 = vpop.f32.mrf.mxu0
  %v8450 = vpop.f32.mrf.mxu0
  %v8451 = vadd.f32 %v8175, %v8450
  %v8452 = vpop.f32.mrf.mxu0
  %8453 = vmatprep.mubr.bf16.mxu0 0
  %8454 = vmatmul.mubr.bf16.gmra.mxu0 %v8201
  %v8455 = vpop.f32.mrf.mxu0
  %v8456 = vadd.f32 %v8175, %v8455
  %v8457 = vpop.f32.mrf.mxu0
  %v8458 = vpop.f32.mrf.mxu0
  %v8459 = vadd.f32 %v8175, %v8458
  %v8460 = vpop.f32.mrf.mxu0
  %8461 = vmatprep.mubr.bf16.mxu0 0
  %8462 = vmatmul.mubr.bf16.gmra.mxu0 %v8203
  %v8463 = vpop.f32.mrf.mxu0
  %v8464 = vadd.f32 %v8175, %v8463
  %v8465 = vpop.f32.mrf.mxu0
  %v8466 = vpop.f32.mrf.mxu0
  %v8467 = vadd.f32 %v8175, %v8466
  %v8468 = vpop.f32.mrf.mxu0
  %8469 = vmatprep.mubr.bf16.mxu0 0
  %8470 = vmatmul.mubr.bf16.gmra.mxu0 %v8205
  %v8471 = vpop.f32.mrf.mxu0
  %v8472 = vadd.f32 %v8175, %v8471
  %v8473 = vpop.f32.mrf.mxu0
  %v8474 = vpop.f32.mrf.mxu0
  %v8475 = vadd.f32 %v8175, %v8474
  %v8476 = vpop.f32.mrf.mxu0
  %8477 = vmatprep.mubr.bf16.mxu0 0
  %8478 = vmatmul.mubr.bf16.gmra.mxu0 %v8207
  %v8479 = vpop.f32.mrf.mxu0
  %v8480 = vadd.f32 %v8175, %v8479
  %v8481 = vpop.f32.mrf.mxu0
  %v8482 = vpop.f32.mrf.mxu0
  %v8483 = vadd.f32 %v8175, %v8482
  %v8484 = vpop.f32.mrf.mxu0
  %8485 = vmatprep.mubr.bf16.mxu0 0
  %8486 = vmatmul.mubr.bf16.gmra.mxu0 %v8209
  %v8487 = vpop.f32.mrf.mxu0
  %v8488 = vadd.f32 %v8175, %v8487
  %v8489 = vpop.f32.mrf.mxu0
  %v8490 = vpop.f32.mrf.mxu0
  %v8491 = vadd.f32 %v8175, %v8490
  %v8492 = vpop.f32.mrf.mxu0
  %8493 = vmatprep.mubr.bf16.mxu0 0
  %8494 = vmatmul.mubr.bf16.gmra.mxu0 %v8211
  %v8495 = vpop.f32.mrf.mxu0
  %v8496 = vadd.f32 %v8175, %v8495
  %v8497 = vpop.f32.mrf.mxu0
  %v8498 = vpop.f32.mrf.mxu0
  %v8499 = vadd.f32 %v8175, %v8498
  %v8500 = vpop.f32.mrf.mxu0
  %8501 = vmatprep.mubr.bf16.mxu0 0
  %8502 = vmatmul.mubr.bf16.gmra.mxu0 %v8213
  %v8503 = vpop.f32.mrf.mxu0
  %v8504 = vadd.f32 %v8175, %v8503
  %v8505 = vpop.f32.mrf.mxu0
  %v8506 = vpop.f32.mrf.mxu0
  %v8507 = vadd.f32 %v8175, %v8506
  %v8508 = vpop.f32.mrf.mxu0
  %8509 = vmatprep.mubr.bf16.mxu0 0
  %8510 = vmatmul.mubr.bf16.gmra.mxu0 %v8215
  %v8511 = vpop.f32.mrf.mxu0
  %v8512 = vadd.f32 %v8175, %v8511
  %v8513 = vpop.f32.mrf.mxu0
  %v8514 = vpop.f32.mrf.mxu0
  %v8515 = vadd.f32 %v8175, %v8514
  %v8516 = vpop.f32.mrf.mxu0
  %8517 = vmatprep.mubr.bf16.mxu0 0
  %8518 = vmatmul.mubr.bf16.gmra.mxu0 %v8217
  %v8519 = vpop.f32.mrf.mxu0
  %v8520 = vadd.f32 %v8175, %v8519
  %v8521 = vpop.f32.mrf.mxu0
  %v8522 = vpop.f32.mrf.mxu0
  %v8523 = vadd.f32 %v8175, %v8522
  %v8524 = vpop.f32.mrf.mxu0
  %8525 = vmatprep.mubr.bf16.mxu0 0
  %8526 = vmatmul.mubr.bf16.gmra.mxu0 %v8219
  %v8527 = vpop.f32.mrf.mxu0
  %v8528 = vadd.f32 %v8175, %v8527
  %v8529 = vpop.f32.mrf.mxu0
  %v8530 = vpop.f32.mrf.mxu0
  %v8531 = vadd.f32 %v8175, %v8530
  %v8532 = vpop.f32.mrf.mxu0
  %8533 = vmatprep.mubr.bf16.mxu0 0
  %8534 = vmatmul.mubr.bf16.gmra.mxu0 %v8221
  %v8535 = vpop.f32.mrf.mxu0
  %v8536 = vadd.f32 %v8175, %v8535
  %v8537 = vpop.f32.mrf.mxu0
  %v8538 = vpop.f32.mrf.mxu0
  %v8539 = vadd.f32 %v8175, %v8538
  %v8540 = vpop.f32.mrf.mxu0
  %8541 = vmatprep.mubr.bf16.mxu0 0
  %8542 = vmatmul.mubr.bf16.gmra.mxu0 %v8223
  %v8543 = vpop.f32.mrf.mxu0
  %v8544 = vadd.f32 %v8175, %v8543
  %v8545 = vpop.f32.mrf.mxu0
  %v8546 = vpop.f32.mrf.mxu0
  %v8547 = vadd.f32 %v8175, %v8546
  %v8548 = vpop.f32.mrf.mxu0
  %8549 = vmatprep.mubr.bf16.mxu0 0
  %8550 = vmatmul.mubr.bf16.gmra.mxu0 %v8225
  %v8551 = vpop.f32.mrf.mxu0
  %v8552 = vadd.f32 %v8175, %v8551
  %v8553 = vpop.f32.mrf.mxu0
  %v8554 = vpop.f32.mrf.mxu0
  %v8555 = vadd.f32 %v8175, %v8554
  %v8556 = vpop.f32.mrf.mxu0
  %8557 = vmatprep.mubr.bf16.mxu0 0
  %8558 = vmatmul.mubr.bf16.gmra.mxu0 %v8227
  %v8559 = vpop.f32.mrf.mxu0
  %v8560 = vadd.f32 %v8175, %v8559
  %v8561 = vpop.f32.mrf.mxu0
  %v8562 = vpop.f32.mrf.mxu0
  %v8563 = vadd.f32 %v8175, %v8562
  %v8564 = vpop.f32.mrf.mxu0
  %8565 = vmatprep.mubr.bf16.mxu0 0
  %8566 = vmatmul.mubr.bf16.gmra.mxu0 %v8229
  %v8567 = vpop.f32.mrf.mxu0
  %v8568 = vadd.f32 %v8175, %v8567
  %v8569 = vpop.f32.mrf.mxu0
  %v8570 = vpop.f32.mrf.mxu0
  %v8571 = vadd.f32 %v8175, %v8570
  %v8572 = vpop.f32.mrf.mxu0
  %8573 = vmatprep.mubr.bf16.mxu0 0
  %8574 = vmatmul.mubr.bf16.gmra.mxu0 %v8231
  %v8575 = vpop.f32.mrf.mxu0
  %v8576 = vadd.f32 %v8175, %v8575
  %v8577 = vpop.f32.mrf.mxu0
  %v8578 = vpop.f32.mrf.mxu0
  %v8579 = vadd.f32 %v8175, %v8578
  %v8580 = vpop.f32.mrf.mxu0
  %8581 = vmatprep.mubr.bf16.mxu0 0
  %8582 = vmatmul.mubr.bf16.gmra.mxu0 %v8233
  %v8583 = vpop.f32.mrf.mxu0
  %v8584 = vadd.f32 %v8175, %v8583
  %v8585 = vpop.f32.mrf.mxu0
  %v8586 = vpop.f32.mrf.mxu0
  %v8587 = vadd.f32 %v8175, %v8586
  %v8588 = vpop.f32.mrf.mxu0
  %8589 = vmatprep.mubr.bf16.mxu0 0
  %8590 = vmatmul.mubr.bf16.gmra.mxu0 %v8235
  %v8591 = vpop.f32.mrf.mxu0
  %v8592 = vadd.f32 %v8175, %v8591
  %v8593 = vpop.f32.mrf.mxu0
  %v8594 = vpop.f32.mrf.mxu0
  %v8595 = vadd.f32 %v8175, %v8594
  %v8596 = vpop.f32.mrf.mxu0
  %8597 = vmatprep.mubr.bf16.mxu0 0
  %8598 = vmatmul.mubr.bf16.gmra.mxu0 %v8237
  %v8599 = vpop.f32.mrf.mxu0
  %v8600 = vadd.f32 %v8175, %v8599
  %v8601 = vpop.f32.mrf.mxu0
  %v8602 = vpop.f32.mrf.mxu0
  %v8603 = vadd.f32 %v8175, %v8602
  %v8604 = vpop.f32.mrf.mxu0
  %8605 = vmatprep.mubr.bf16.mxu0 0
  %8606 = vmatmul.mubr.bf16.gmra.mxu0 %v8239
  %v8607 = vpop.f32.mrf.mxu0
  %v8608 = vadd.f32 %v8175, %v8607
  %v8609 = vpop.f32.mrf.mxu0
  %v8610 = vpop.f32.mrf.mxu0
  %v8611 = vadd.f32 %v8175, %v8610
  %v8612 = vpop.f32.mrf.mxu0
  %8613 = vmatprep.mubr.bf16.mxu0 0
  %8614 = vmatmul.mubr.bf16.gmra.mxu0 %v8241
  %v8615 = vpop.f32.mrf.mxu0
  %v8616 = vadd.f32 %v8175, %v8615
  %v8617 = vpop.f32.mrf.mxu0
  %v8618 = vpop.f32.mrf.mxu0
  %v8619 = vadd.f32 %v8175, %v8618
  %v8620 = vpop.f32.mrf.mxu0
  %8621 = vmatprep.mubr.bf16.mxu0 0
  %8622 = vmatmul.mubr.bf16.gmra.mxu0 %v8243
  %v8623 = vpop.f32.mrf.mxu0
  %v8624 = vadd.f32 %v8175, %v8623
  %v8625 = vpop.f32.mrf.mxu0
  %v8626 = vpop.f32.mrf.mxu0
  %v8627 = vadd.f32 %v8175, %v8626
  %v8628 = vpop.f32.mrf.mxu0
  %8629 = vmatprep.mubr.bf16.mxu0 0
  %8630 = vmatmul.mubr.bf16.gmra.mxu0 %v8245
  %v8631 = vpop.f32.mrf.mxu0
  %v8632 = vadd.f32 %v8175, %v8631
  %v8633 = vpop.f32.mrf.mxu0
  %v8634 = vpop.f32.mrf.mxu0
  %v8635 = vadd.f32 %v8175, %v8634
  %v8636 = vpop.f32.mrf.mxu0
  %8637 = vmatprep.mubr.bf16.mxu0 0
  %8638 = vmatmul.mubr.bf16.gmra.mxu0 %v8247
  %v8639 = vpop.f32.mrf.mxu0
  %v8640 = vadd.f32 %v8175, %v8639
  %v8641 = vpop.f32.mrf.mxu0
  %v8642 = vpop.f32.mrf.mxu0
  %v8643 = vadd.f32 %v8175, %v8642
  %v8644 = vpop.f32.mrf.mxu0
  %8645 = vmatprep.mubr.bf16.mxu0 0
  %8646 = vmatmul.mubr.bf16.gmra.mxu0 %v8249
  %v8647 = vpop.f32.mrf.mxu0
  %v8648 = vadd.f32 %v8175, %v8647
  %v8649 = vpop.f32.mrf.mxu0
  %v8650 = vpop.f32.mrf.mxu0
  %v8651 = vadd.f32 %v8175, %v8650
  %v8652 = vpop.f32.mrf.mxu0
  %8653 = vmatprep.mubr.bf16.mxu0 0
  %8654 = vmatmul.mubr.bf16.gmra.mxu0 %v8251
  %v8655 = vpop.f32.mrf.mxu0
  %v8656 = vadd.f32 %v8175, %v8655
  %v8657 = vpop.f32.mrf.mxu0
  %v8658 = vpop.f32.mrf.mxu0
  %v8659 = vadd.f32 %v8175, %v8658
  %v8660 = vpop.f32.mrf.mxu0
  %8661 = vmatprep.mubr.bf16.mxu0 0
  %8662 = vmatmul.mubr.bf16.gmra.mxu0 %v8253
  %v8663 = vpop.f32.mrf.mxu0
  %v8664 = vadd.f32 %v8175, %v8663
  %v8665 = vpop.f32.mrf.mxu0
  %v8666 = vpop.f32.mrf.mxu0
  %v8667 = vadd.f32 %v8175, %v8666
  %v8668 = vpop.f32.mrf.mxu0
  %8669 = vmatprep.mubr.bf16.mxu0 0
  %8670 = vmatmul.mubr.bf16.gmra.mxu0 %v8255
  %v8671 = vpop.f32.mrf.mxu0
  %v8672 = vadd.f32 %v8175, %v8671
  %v8673 = vpop.f32.mrf.mxu0
  %v8674 = vpop.f32.mrf.mxu0
  %v8675 = vadd.f32 %v8175, %v8674
  %v8676 = vpop.f32.mrf.mxu0
  %8677 = vmatprep.mubr.bf16.mxu0 0
  %8678 = vmatmul.mubr.bf16.gmra.mxu0 %v8257
  %v8679 = vpop.f32.mrf.mxu0
  %v8680 = vadd.f32 %v8175, %v8679
  %v8681 = vpop.f32.mrf.mxu0
  %v8682 = vpop.f32.mrf.mxu0
  %v8683 = vadd.f32 %v8175, %v8682
  %v8684 = vpop.f32.mrf.mxu0
  %8685 = vmatprep.mubr.bf16.mxu0 0
  %8686 = vmatmul.mubr.bf16.gmra.mxu0 %v8259
  %v8687 = vpop.f32.mrf.mxu0
  %v8688 = vadd.f32 %v8175, %v8687
  %v8689 = vpop.f32.mrf.mxu0
  %v8690 = vpop.f32.mrf.mxu0
  %v8691 = vadd.f32 %v8175, %v8690
  %v8692 = vpop.f32.mrf.mxu0
  %8693 = vmatprep.mubr.bf16.mxu0 0
  %8694 = vmatmul.mubr.bf16.gmra.mxu0 %v8261
  %v8695 = vpop.f32.mrf.mxu0
  %v8696 = vadd.f32 %v8175, %v8695
  %v8697 = vpop.f32.mrf.mxu0
  %v8698 = vpop.f32.mrf.mxu0
  %v8699 = vadd.f32 %v8175, %v8698
  %v8700 = vpop.f32.mrf.mxu0
  %8701 = vmatprep.mubr.bf16.mxu0 0
  %8702 = vmatmul.mubr.bf16.gmra.mxu0 %v8263
  %v8703 = vpop.f32.mrf.mxu0
  %v8704 = vadd.f32 %v8175, %v8703
  %v8705 = vpop.f32.mrf.mxu0
  %v8706 = vpop.f32.mrf.mxu0
  %v8707 = vadd.f32 %v8175, %v8706
  %v8708 = vpop.f32.mrf.mxu0
  %8709 = vmatprep.mubr.bf16.mxu0 0
  %8710 = vmatmul.mubr.bf16.gmra.mxu0 %v8265
  %v8711 = vpop.f32.mrf.mxu0
  %v8712 = vadd.f32 %v8175, %v8711
  %v8713 = vpop.f32.mrf.mxu0
  %v8714 = vpop.f32.mrf.mxu0
  %v8715 = vadd.f32 %v8175, %v8714
  %v8716 = vpop.f32.mrf.mxu0
  %8717 = vmatprep.mubr.bf16.mxu0 0
  %8718 = vmatmul.mubr.bf16.gmra.mxu0 %v8267
  %v8719 = vpop.f32.mrf.mxu0
  %v8720 = vadd.f32 %v8175, %v8719
  %v8721 = vpop.f32.mrf.mxu0
  %v8722 = vpop.f32.mrf.mxu0
  %v8723 = vadd.f32 %v8175, %v8722
  %v8724 = vpop.f32.mrf.mxu0
  %8725 = vmatprep.mubr.bf16.mxu0 0
  %8726 = vmatmul.mubr.bf16.gmra.mxu0 %v8269
  %v8727 = vpop.f32.mrf.mxu0
  %v8728 = vadd.f32 %v8175, %v8727
  %v8729 = vpop.f32.mrf.mxu0
  %v8730 = vpop.f32.mrf.mxu0
  %v8731 = vadd.f32 %v8175, %v8730
  %v8732 = vpop.f32.mrf.mxu0
  %8733 = vmatprep.mubr.bf16.mxu0 0
  %8734 = vmatmul.mubr.bf16.gmra.mxu0 %v8271
  %v8735 = vpop.f32.mrf.mxu0
  %v8736 = vadd.f32 %v8175, %v8735
  %v8737 = vpop.f32.mrf.mxu0
  %v8738 = vpop.f32.mrf.mxu0
  %v8739 = vadd.f32 %v8175, %v8738
  %v8740 = vpop.f32.mrf.mxu0
  %8741 = vmatprep.mubr.bf16.mxu0 0
  %8742 = vmatmul.mubr.bf16.gmra.mxu0 %v8273
  %v8743 = vpop.f32.mrf.mxu0
  %v8744 = vadd.f32 %v8175, %v8743
  %v8745 = vpop.f32.mrf.mxu0
  %v8746 = vpop.f32.mrf.mxu0
  %v8747 = vadd.f32 %v8175, %v8746
  %v8748 = vpop.f32.mrf.mxu0
  %8749 = vmatprep.mubr.bf16.mxu0 0
  %8750 = vmatmul.mubr.bf16.gmra.mxu0 %v8275
  %v8751 = vpop.f32.mrf.mxu0
  %v8752 = vadd.f32 %v8175, %v8751
  %v8753 = vpop.f32.mrf.mxu0
  %v8754 = vpop.f32.mrf.mxu0
  %v8755 = vadd.f32 %v8175, %v8754
  %v8756 = vpop.f32.mrf.mxu0
  %8757 = vmatprep.mubr.bf16.mxu0 0
  %8758 = vmatmul.mubr.bf16.gmra.mxu0 %v8277
  %v8759 = vpop.f32.mrf.mxu0
  %v8760 = vadd.f32 %v8175, %v8759
  %v8761 = vpop.f32.mrf.mxu0
  %v8762 = vpop.f32.mrf.mxu0
  %v8763 = vadd.f32 %v8175, %v8762
  %v8764 = vpop.f32.mrf.mxu0
  %8765 = vmatprep.mubr.bf16.mxu0 0
  %8766 = vmatmul.mubr.bf16.gmra.mxu0 %v8279
  %v8767 = vpop.f32.mrf.mxu0
  %v8768 = vadd.f32 %v8175, %v8767
  %v8769 = vpop.f32.mrf.mxu0
  %v8770 = vpop.f32.mrf.mxu0
  %v8771 = vadd.f32 %v8175, %v8770
  %v8772 = vpop.f32.mrf.mxu0
  %8773 = vmatprep.mubr.bf16.mxu0 0
  %8774 = vmatmul.mubr.bf16.gmra.mxu0 %v8281
  %v8775 = vpop.f32.mrf.mxu0
  %v8776 = vadd.f32 %v8175, %v8775
  %v8777 = vpop.f32.mrf.mxu0
  %v8778 = vpop.f32.mrf.mxu0
  %v8779 = vadd.f32 %v8175, %v8778
  %v8780 = vpop.f32.mrf.mxu0
  %8781 = vmatprep.mubr.bf16.mxu0 0
  %8782 = vmatmul.mubr.bf16.gmra.mxu0 %v8283
  %v8783 = vpop.f32.mrf.mxu0
  %v8784 = vadd.f32 %v8175, %v8783
  %v8785 = vpop.f32.mrf.mxu0
  %v8786 = vpop.f32.mrf.mxu0
  %v8787 = vadd.f32 %v8175, %v8786
  %v8788 = vpop.f32.mrf.mxu0
  %8789 = vmatprep.mubr.bf16.mxu0 0
  %8790 = vmatmul.mubr.bf16.gmra.mxu0 %v8285
  %v8791 = vpop.f32.mrf.mxu0
  %v8792 = vadd.f32 %v8175, %v8791
  %v8793 = vpop.f32.mrf.mxu0
  %v8794 = vpop.f32.mrf.mxu0
  %v8795 = vadd.f32 %v8175, %v8794
  %v8796 = vpop.f32.mrf.mxu0
  %8797 = vmatprep.mubr.bf16.mxu0 0
  %8798 = vmatmul.mubr.bf16.gmra.mxu0 %v8287
  %v8799 = vpop.f32.mrf.mxu0
  %v8800 = vadd.f32 %v8175, %v8799
  %v8801 = vpop.f32.mrf.mxu0
  %v8802 = vpop.f32.mrf.mxu0
  %v8803 = vadd.f32 %v8175, %v8802
  %v8804 = vpop.f32.mrf.mxu0
  %8805 = vmatprep.mubr.bf16.mxu0 0
  %8806 = vmatmul.mubr.bf16.gmra.mxu0 %v8289
  %v8807 = vpop.f32.mrf.mxu0
  %v8808 = vadd.f32 %v8175, %v8807
  %v8809 = vpop.f32.mrf.mxu0
  %v8810 = vpop.f32.mrf.mxu0
  %v8811 = vadd.f32 %v8175, %v8810
  %v8812 = vpop.f32.mrf.mxu0
  %8813 = vmatprep.mubr.bf16.mxu0 0
  %8814 = vmatmul.mubr.bf16.gmra.mxu0 %v8291
  %v8815 = vpop.f32.mrf.mxu0
  %v8816 = vadd.f32 %v8175, %v8815
  %v8817 = vpop.f32.mrf.mxu0
  %v8818 = vpop.f32.mrf.mxu0
  %v8819 = vadd.f32 %v8175, %v8818
  %v8820 = vpop.f32.mrf.mxu0
  %8821 = vmatprep.mubr.bf16.mxu0 0
  %8822 = vmatmul.mubr.bf16.gmra.mxu0 %v8293
  %v8823 = vpop.f32.mrf.mxu0
  %v8824 = vadd.f32 %v8175, %v8823
  %v8825 = vpop.f32.mrf.mxu0
  %v8826 = vpop.f32.mrf.mxu0
  %v8827 = vadd.f32 %v8175, %v8826
  %v8828 = vpop.f32.mrf.mxu0
  %8829 = vmatprep.mubr.bf16.mxu0 0
  %8830 = vmatmul.mubr.bf16.gmra.mxu0 %v8295
  %v8831 = vpop.f32.mrf.mxu0
  %v8832 = vadd.f32 %v8175, %v8831
  %v8833 = vpop.f32.mrf.mxu0
  %v8834 = vpop.f32.mrf.mxu0
  %v8835 = vadd.f32 %v8175, %v8834
  %v8836 = vpop.f32.mrf.mxu0
  %8837 = vmatprep.mubr.bf16.mxu0 0
  %8838 = vmatmul.mubr.bf16.gmra.mxu0 %v8297
  %v8839 = vpop.f32.mrf.mxu0
  %v8840 = vadd.f32 %v8175, %v8839
  %v8841 = vpop.f32.mrf.mxu0
  %v8842 = vpop.f32.mrf.mxu0
  %v8843 = vadd.f32 %v8175, %v8842
  %v8844 = vpop.f32.mrf.mxu0
  %8845 = vmatprep.mubr.bf16.mxu0 0
  %8846 = vmatmul.mubr.bf16.gmra.mxu0 %v8299
  %v8847 = vpop.f32.mrf.mxu0
  %v8848 = vadd.f32 %v8175, %v8847
  %v8849 = vpop.f32.mrf.mxu0
  %v8850 = vpop.f32.mrf.mxu0
  %v8851 = vadd.f32 %v8175, %v8850
  %v8852 = vpop.f32.mrf.mxu0
  %8853 = vmatprep.mubr.bf16.mxu0 0
  %8854 = vmatmul.mubr.bf16.gmra.mxu0 %v8301
  %v8855 = vpop.f32.mrf.mxu0
  %v8856 = vadd.f32 %v8175, %v8855
  %v8857 = vpop.f32.mrf.mxu0
  %v8858 = vpop.f32.mrf.mxu0
  %v8859 = vadd.f32 %v8175, %v8858
  %v8860 = vpop.f32.mrf.mxu0
  %8861 = vmatprep.mubr.bf16.mxu0 0
  %8862 = vmatmul.mubr.bf16.gmra.mxu0 %v8303
  %v8863 = vpop.f32.mrf.mxu0
  %v8864 = vadd.f32 %v8175, %v8863
  %v8865 = vpop.f32.mrf.mxu0
  %v8866 = vpop.f32.mrf.mxu0
  %v8867 = vadd.f32 %v8175, %v8866
  %v8868 = vpop.f32.mrf.mxu0
  %8869 = vmatprep.mubr.bf16.mxu0 0
  %8870 = vmatmul.mubr.bf16.gmra.mxu0 %v8305
  %v8871 = vpop.f32.mrf.mxu0
  %v8872 = vadd.f32 %v8175, %v8871
  %v8873 = vpop.f32.mrf.mxu0
  %v8874 = vpop.f32.mrf.mxu0
  %v8875 = vadd.f32 %v8175, %v8874
  %v8876 = vpop.f32.mrf.mxu0
  %8877 = vmatprep.mubr.bf16.mxu0 0
  %8878 = vmatmul.mubr.bf16.gmra.mxu0 %v8307
  %v8879 = vpop.f32.mrf.mxu0
  %v8880 = vadd.f32 %v8175, %v8879
  %v8881 = vpop.f32.mrf.mxu0
  %v8882 = vpop.f32.mrf.mxu0
  %v8883 = vadd.f32 %v8175, %v8882
  %v8884 = vpop.f32.mrf.mxu0
  %8885 = vmatprep.mubr.bf16.mxu0 0
  %8886 = vmatmul.mubr.bf16.gmra.mxu0 %v8309
  %v8887 = vpop.f32.mrf.mxu0
  %v8888 = vadd.f32 %v8175, %v8887
  %v8889 = vpop.f32.mrf.mxu0
  %v8890 = vpop.f32.mrf.mxu0
  %v8891 = vadd.f32 %v8175, %v8890
  %v8892 = vpop.f32.mrf.mxu0
  %8893 = vmatprep.mubr.bf16.mxu0 0
  %8894 = vmatmul.mubr.bf16.gmra.mxu0 %v8311
  %v8895 = vpop.f32.mrf.mxu0
  %v8896 = vadd.f32 %v8175, %v8895
  %v8897 = vpop.f32.mrf.mxu0
  %v8898 = vpop.f32.mrf.mxu0
  %v8899 = vadd.f32 %v8175, %v8898
  %v8900 = vpop.f32.mrf.mxu0
  %8901 = vmatprep.mubr.bf16.mxu0 0
  %8902 = vmatmul.mubr.bf16.gmra.mxu0 %v8313
  %v8903 = vpop.f32.mrf.mxu0
  %v8904 = vadd.f32 %v8175, %v8903
  %v8905 = vpop.f32.mrf.mxu0
  %v8906 = vpop.f32.mrf.mxu0
  %v8907 = vadd.f32 %v8175, %v8906
  %v8908 = vpop.f32.mrf.mxu0
  %8909 = vmatprep.mubr.bf16.mxu0 0
  %8910 = vmatmul.mubr.bf16.gmra.mxu0 %v8315
  %v8911 = vpop.f32.mrf.mxu0
  %v8912 = vadd.f32 %v8175, %v8911
  %v8913 = vpop.f32.mrf.mxu0
  %v8914 = vpop.f32.mrf.mxu0
  %v8915 = vadd.f32 %v8175, %v8914
  %v8916 = vpop.f32.mrf.mxu0
  %8917 = vmatprep.mubr.bf16.mxu0 0
  %8918 = vmatmul.mubr.bf16.gmra.mxu0 %v8317
  %v8919 = vpop.f32.mrf.mxu0
  %v8920 = vadd.f32 %v8175, %v8919
  %v8921 = vpop.f32.mrf.mxu0
  %v8922 = vpop.f32.mrf.mxu0
  %v8923 = vadd.f32 %v8175, %v8922
  %v8924 = vpop.f32.mrf.mxu0
  %8925 = vmatprep.mubr.bf16.mxu0 0
  %8926 = vmatmul.mubr.bf16.gmra.mxu0 %v8319
  %v8927 = vpop.f32.mrf.mxu0
  %v8928 = vadd.f32 %v8175, %v8927
  %v8929 = vpop.f32.mrf.mxu0
  %v8930 = vpop.f32.mrf.mxu0
  %v8931 = vadd.f32 %v8175, %v8930
  %v8932 = vpop.f32.mrf.mxu0
  %8933 = vmatprep.mubr.bf16.mxu0 0
  %8934 = vmatmul.mubr.bf16.gmra.mxu0 %v8321
  %v8935 = vpop.f32.mrf.mxu0
  %v8936 = vadd.f32 %v8175, %v8935
  %v8937 = vpop.f32.mrf.mxu0
  %v8938 = vpop.f32.mrf.mxu0
  %v8939 = vadd.f32 %v8175, %v8938
  %v8940 = vpop.f32.mrf.mxu0
  %8941 = vmatprep.mubr.bf16.mxu0 0
  %8942 = vmatmul.mubr.bf16.gmra.mxu0 %v8323
  %v8943 = vpop.f32.mrf.mxu0
  %v8944 = vadd.f32 %v8175, %v8943
  %v8945 = vpop.f32.mrf.mxu0
  %v8946 = vpop.f32.mrf.mxu0
  %v8947 = vadd.f32 %v8175, %v8946
  %v8948 = vpop.f32.mrf.mxu0
  %8949 = vmatprep.mubr.bf16.mxu0 0
  %8950 = vmatmul.mubr.bf16.gmra.mxu0 %v8325
  %v8951 = vpop.f32.mrf.mxu0
  %v8952 = vadd.f32 %v8175, %v8951
  %v8953 = vpop.f32.mrf.mxu0
  %v8954 = vpop.f32.mrf.mxu0
  %v8955 = vadd.f32 %v8175, %v8954
  %v8956 = vpop.f32.mrf.mxu0
  %8957 = vmatprep.mubr.bf16.mxu0 0
  %8958 = vmatmul.mubr.bf16.gmra.mxu0 %v8327
  %v8959 = vpop.f32.mrf.mxu0
  %v8960 = vadd.f32 %v8175, %v8959
  %v8961 = vpop.f32.mrf.mxu0
  %v8962 = vpop.f32.mrf.mxu0
  %v8963 = vadd.f32 %v8175, %v8962
  %v8964 = vpop.f32.mrf.mxu0
  %8965 = vmatprep.mubr.bf16.mxu0 0
  %8966 = vmatmul.mubr.bf16.gmra.mxu0 %v8329
  %v8967 = vpop.f32.mrf.mxu0
  %v8968 = vadd.f32 %v8175, %v8967
  %v8969 = vpop.f32.mrf.mxu0
  %v8970 = vpop.f32.mrf.mxu0
  %v8971 = vadd.f32 %v8175, %v8970
  %v8972 = vpop.f32.mrf.mxu0
  %8973 = vmatprep.mubr.bf16.mxu0 0
  %8974 = vmatmul.mubr.bf16.gmra.mxu0 %v8331
  %v8975 = vpop.f32.mrf.mxu0
  %v8976 = vadd.f32 %v8175, %v8975
  %v8977 = vpop.f32.mrf.mxu0
  %v8978 = vpop.f32.mrf.mxu0
  %v8979 = vadd.f32 %v8175, %v8978
  %v8980 = vpop.f32.mrf.mxu0
  %8981 = vmatprep.mubr.bf16.mxu0 0
  %8982 = vmatmul.mubr.bf16.gmra.mxu0 %v8333
  %v8983 = vpop.f32.mrf.mxu0
  %v8984 = vadd.f32 %v8175, %v8983
  %v8985 = vpop.f32.mrf.mxu0
  %v8986 = vpop.f32.mrf.mxu0
  %v8987 = vadd.f32 %v8175, %v8986
  %v8988 = vpop.f32.mrf.mxu0
  %8989 = vmatprep.mubr.bf16.mxu0 0
  %8990 = vmatmul.mubr.bf16.gmra.mxu0 %v8335
  %v8991 = vpop.f32.mrf.mxu0
  %v8992 = vadd.f32 %v8175, %v8991
  %v8993 = vpop.f32.mrf.mxu0
  %v8994 = vpop.f32.mrf.mxu0
  %v8995 = vadd.f32 %v8175, %v8994
  %v8996 = vpop.f32.mrf.mxu0
  %8997 = vmatprep.mubr.bf16.mxu0 0
  %8998 = vmatmul.mubr.bf16.gmra.mxu0 %v8337
  %v8999 = vpop.f32.mrf.mxu0
  %v9000 = vadd.f32 %v8175, %v8999
  %v9001 = vpop.f32.mrf.mxu0
  %v9002 = vpop.f32.mrf.mxu0
  %v9003 = vadd.f32 %v8175, %v9002
  %v9004 = vpop.f32.mrf.mxu0
  %9005 = vmatprep.mubr.bf16.mxu0 0
  %9006 = vmatmul.mubr.bf16.gmra.mxu0 %v8339
  %v9007 = vpop.f32.mrf.mxu0
  %v9008 = vadd.f32 %v8175, %v9007
  %v9009 = vpop.f32.mrf.mxu0
  %v9010 = vpop.f32.mrf.mxu0
  %v9011 = vadd.f32 %v8175, %v9010
  %v9012 = vpop.f32.mrf.mxu0
  %9013 = vmatprep.mubr.bf16.mxu0 0
  %9014 = vmatmul.mubr.bf16.gmra.mxu0 %v8341
  %v9015 = vpop.f32.mrf.mxu0
  %v9016 = vadd.f32 %v8175, %v9015
  %v9017 = vpop.f32.mrf.mxu0
  %v9018 = vpop.f32.mrf.mxu0
  %v9019 = vadd.f32 %v8175, %v9018
  %v9020 = vpop.f32.mrf.mxu0
  %9021 = vmatprep.mubr.bf16.mxu0 0
  %9022 = vmatmul.mubr.bf16.gmra.mxu0 %v8343
  %v9023 = vpop.f32.mrf.mxu0
  %v9024 = vadd.f32 %v8175, %v9023
  %v9025 = vpop.f32.mrf.mxu0
  %v9026 = vpop.f32.mrf.mxu0
  %v9027 = vadd.f32 %v8175, %v9026
  %v9028 = vpop.f32.mrf.mxu0
  %9029 = vmatprep.mubr.bf16.mxu0 0
  %9030 = vmatmul.mubr.bf16.gmra.mxu0 %v8345
  %v9031 = vpop.f32.mrf.mxu0
  %v9032 = vadd.f32 %v8175, %v9031
  %v9033 = vpop.f32.mrf.mxu0
  %v9034 = vpop.f32.mrf.mxu0
  %v9035 = vadd.f32 %v8175, %v9034
  %v9036 = vpop.f32.mrf.mxu0
  %9037 = vmatprep.mubr.bf16.mxu0 0
  %9038 = vmatmul.mubr.bf16.gmra.mxu0 %v8347
  %v9039 = vpop.f32.mrf.mxu0
  %v9040 = vadd.f32 %v8175, %v9039
  %v9041 = vpop.f32.mrf.mxu0
  %v9042 = vpop.f32.mrf.mxu0
  %v9043 = vadd.f32 %v8175, %v9042
  %v9044 = vpop.f32.mrf.mxu0
  %9045 = vmatprep.mubr.bf16.mxu0 0
  %9046 = vmatmul.mubr.bf16.gmra.mxu0 %v8349
  %v9047 = vpop.f32.mrf.mxu0
  %v9048 = vadd.f32 %v8175, %v9047
  %v9049 = vpop.f32.mrf.mxu0
  %v9050 = vpop.f32.mrf.mxu0
  %v9051 = vadd.f32 %v8175, %v9050
  %v9052 = vpop.f32.mrf.mxu0
  %9053 = vmatprep.mubr.bf16.mxu0 0
  %9054 = vmatmul.mubr.bf16.gmra.mxu0 %v8351
  %v9055 = vpop.f32.mrf.mxu0
  %v9056 = vadd.f32 %v8175, %v9055
  %v9057 = vpop.f32.mrf.mxu0
  %v9058 = vpop.f32.mrf.mxu0
  %v9059 = vadd.f32 %v8175, %v9058
  %v9060 = vpop.f32.mrf.mxu0
  %9061 = vmatprep.mubr.bf16.mxu0 0
  %9062 = vmatmul.mubr.bf16.gmra.mxu0 %v8353
  %v9063 = vpop.f32.mrf.mxu0
  %v9064 = vadd.f32 %v8175, %v9063
  %v9065 = vpop.f32.mrf.mxu0
  %v9066 = vpop.f32.mrf.mxu0
  %v9067 = vadd.f32 %v8175, %v9066
  %v9068 = vpop.f32.mrf.mxu0
  %9069 = vmatprep.mubr.bf16.mxu0 0
  %9070 = vmatmul.mubr.bf16.gmra.mxu0 %v8355
  %v9071 = vpop.f32.mrf.mxu0
  %v9072 = vadd.f32 %v8175, %v9071
  %v9073 = vpop.f32.mrf.mxu0
  %v9074 = vpop.f32.mrf.mxu0
  %v9075 = vadd.f32 %v8175, %v9074
  %v9076 = vpop.f32.mrf.mxu0
  %9077 = vmatprep.mubr.bf16.mxu0 0
  %9078 = vmatmul.mubr.bf16.gmra.mxu0 %v8357
  %v9079 = vpop.f32.mrf.mxu0
  %v9080 = vadd.f32 %v8175, %v9079
  %v9081 = vpop.f32.mrf.mxu0
  %v9082 = vpop.f32.mrf.mxu0
  %v9083 = vadd.f32 %v8175, %v9082
  %v9084 = vpop.f32.mrf.mxu0
  %9085 = vmatprep.mubr.bf16.mxu0 0
  %9086 = vmatmul.mubr.bf16.gmra.mxu0 %v8359
  %v9087 = vpop.f32.mrf.mxu0
  %v9088 = vadd.f32 %v8175, %v9087
  %v9089 = vpop.f32.mrf.mxu0
  %v9090 = vpop.f32.mrf.mxu0
  %v9091 = vadd.f32 %v8175, %v9090
  %v9092 = vpop.f32.mrf.mxu0
  %9093 = vmatprep.mubr.bf16.mxu0 0
  %9094 = vmatmul.mubr.bf16.gmra.mxu0 %v8361
  %v9095 = vpop.f32.mrf.mxu0
  %v9096 = vadd.f32 %v8175, %v9095
  %v9097 = vpop.f32.mrf.mxu0
  %v9098 = vpop.f32.mrf.mxu0
  %v9099 = vadd.f32 %v8175, %v9098
  %v9100 = vpop.f32.mrf.mxu0
  %9101 = vmatprep.mubr.bf16.mxu0 0
  %9102 = vmatmul.mubr.bf16.gmra.mxu0 %v8363
  %v9103 = vpop.f32.mrf.mxu0
  %v9104 = vadd.f32 %v8175, %v9103
  %v9105 = vpop.f32.mrf.mxu0
  %v9106 = vpop.f32.mrf.mxu0
  %v9107 = vadd.f32 %v8175, %v9106
  %v9108 = vpop.f32.mrf.mxu0
  %9109 = vmatprep.mubr.bf16.mxu0 0
  %9110 = vmatmul.mubr.bf16.gmra.mxu0 %v8365
  %v9111 = vpop.f32.mrf.mxu0
  %v9112 = vadd.f32 %v8175, %v9111
  %v9113 = vpop.f32.mrf.mxu0
  %v9114 = vpop.f32.mrf.mxu0
  %v9115 = vadd.f32 %v8175, %v9114
  %v9116 = vpop.f32.mrf.mxu0
  %9117 = vmatprep.mubr.bf16.mxu0 0
  %9118 = vmatmul.mubr.bf16.gmra.mxu0 %v8367
  %v9119 = vpop.f32.mrf.mxu0
  %v9120 = vadd.f32 %v8175, %v9119
  %v9121 = vpop.f32.mrf.mxu0
  %v9122 = vpop.f32.mrf.mxu0
  %v9123 = vadd.f32 %v8175, %v9122
  %v9124 = vpop.f32.mrf.mxu0
  %9125 = vmatprep.mubr.bf16.mxu0 0
  %9126 = vmatmul.mubr.bf16.gmra.mxu0 %v8369
  %v9127 = vpop.f32.mrf.mxu0
  %v9128 = vadd.f32 %v8175, %v9127
  %v9129 = vpop.f32.mrf.mxu0
  %v9130 = vpop.f32.mrf.mxu0
  %v9131 = vadd.f32 %v8175, %v9130
  %v9132 = vpop.f32.mrf.mxu0
  %9133 = vmatprep.mubr.bf16.mxu0 0
  %9134 = vmatmul.mubr.bf16.gmra.mxu0 %v8371
  %v9135 = vpop.f32.mrf.mxu0
  %v9136 = vadd.f32 %v8175, %v9135
  %v9137 = vpop.f32.mrf.mxu0
  %v9138 = vpop.f32.mrf.mxu0
  %v9139 = vadd.f32 %v8175, %v9138
  %v9140 = vpop.f32.mrf.mxu0
  %9141 = vmatprep.mubr.bf16.mxu0 0
  %9142 = vmatmul.mubr.bf16.gmra.mxu0 %v8373
  %v9143 = vpop.f32.mrf.mxu0
  %v9144 = vadd.f32 %v8175, %v9143
  %v9145 = vpop.f32.mrf.mxu0
  %v9146 = vpop.f32.mrf.mxu0
  %v9147 = vadd.f32 %v8175, %v9146
  %v9148 = vpop.f32.mrf.mxu0
  %9149 = vmatprep.mubr.bf16.mxu0 0
  %9150 = vmatmul.mubr.bf16.gmra.mxu0 %v8375
  %v9151 = vpop.f32.mrf.mxu0
  %v9152 = vadd.f32 %v8175, %v9151
  %v9153 = vpop.f32.mrf.mxu0
  %v9154 = vpop.f32.mrf.mxu0
  %v9155 = vadd.f32 %v8175, %v9154
  %v9156 = vpop.f32.mrf.mxu0
  %9157 = vmatprep.mubr.bf16.mxu0 0
  %9158 = vmatmul.mubr.bf16.gmra.mxu0 %v8377
  %v9159 = vpop.f32.mrf.mxu0
  %v9160 = vadd.f32 %v8175, %v9159
  %v9161 = vpop.f32.mrf.mxu0
  %v9162 = vpop.f32.mrf.mxu0
  %v9163 = vadd.f32 %v8175, %v9162
  %v9164 = vpop.f32.mrf.mxu0
  %9165 = vmatprep.mubr.bf16.mxu0 0
  %9166 = vmatmul.mubr.bf16.gmra.mxu0 %v8379
  %v9167 = vpop.f32.mrf.mxu0
  %v9168 = vadd.f32 %v8175, %v9167
  %v9169 = vpop.f32.mrf.mxu0
  %v9170 = vpop.f32.mrf.mxu0
  %v9171 = vadd.f32 %v8175, %v9170
  %v9172 = vpop.f32.mrf.mxu0
  %9173 = vmatprep.mubr.bf16.mxu0 0
  %9174 = vmatmul.mubr.bf16.gmra.mxu0 %v8381
  %v9175 = vpop.f32.mrf.mxu0
  %v9176 = vadd.f32 %v8175, %v9175
  %v9177 = vpop.f32.mrf.mxu0
  %v9178 = vpop.f32.mrf.mxu0
  %v9179 = vadd.f32 %v8175, %v9178
  %v9180 = vpop.f32.mrf.mxu0
  %9181 = vmatprep.mubr.bf16.mxu0 0
  %9182 = vmatmul.mubr.bf16.gmra.mxu0 %v8383
  %v9183 = vpop.f32.mrf.mxu0
  %v9184 = vadd.f32 %v8175, %v9183
  %v9185 = vpop.f32.mrf.mxu0
  %v9186 = vpop.f32.mrf.mxu0
  %v9187 = vadd.f32 %v8175, %v9186
  %v9188 = vpop.f32.mrf.mxu0
  %9189 = vdwg.mxu0
  %9190 = vst.msk [vmem:[%s3] sm:$0xff] %vm6814, %v8424
  %9191 = vst.msk [vmem:[%s3 + $0x8] sm:$0xff] %vm6814, %v8427
  %9192 = vst.msk [vmem:[%s3 + $0x10] sm:$0xff] %vm6814, %v8432
  %9193 = vst.msk [vmem:[%s3 + $0x18] sm:$0xff] %vm6814, %v8435
  %9194 = vst.msk [vmem:[%s3 + $0x20] sm:$0xff] %vm6814, %v8440
  %9195 = vst.msk [vmem:[%s3 + $0x28] sm:$0xff] %vm6814, %v8443
  %9196 = vst.msk [vmem:[%s3 + $0x30] sm:$0xff] %vm6814, %v8448
  %9197 = vst.msk [vmem:[%s3 + $0x38] sm:$0xff] %vm6814, %v8451
  %9198 = vst.msk [vmem:[%s3 + $0x40] sm:$0xff] %vm6814, %v8456
  %9199 = vst.msk [vmem:[%s3 + $0x48] sm:$0xff] %vm6814, %v8459
  %9200 = vst.msk [vmem:[%s3 + $0x50] sm:$0xff] %vm6814, %v8464
  %9201 = vst.msk [vmem:[%s3 + $0x58] sm:$0xff] %vm6814, %v8467
  %9202 = vst.msk [vmem:[%s3 + $0x60] sm:$0xff] %vm6814, %v8472
  %9203 = vst.msk [vmem:[%s3 + $0x68] sm:$0xff] %vm6814, %v8475
  %9204 = vst.msk [vmem:[%s3 + $0x70] sm:$0xff] %vm6814, %v8480
  %9205 = vst.msk [vmem:[%s3 + $0x78] sm:$0xff] %vm6814, %v8483
  %9206 = vst.msk [vmem:[%s3 + $0x80] sm:$0xff] %vm6814, %v8488
  %9207 = vst.msk [vmem:[%s3 + $0x88] sm:$0xff] %vm6814, %v8491
  %9208 = vst.msk [vmem:[%s3 + $0x90] sm:$0xff] %vm6814, %v8496
  %9209 = vst.msk [vmem:[%s3 + $0x98] sm:$0xff] %vm6814, %v8499
  %9210 = vst.msk [vmem:[%s3 + $0xa0] sm:$0xff] %vm6814, %v8504
  %9211 = vst.msk [vmem:[%s3 + $0xa8] sm:$0xff] %vm6814, %v8507
  %9212 = vst.msk [vmem:[%s3 + $0xb0] sm:$0xff] %vm6814, %v8512
  %9213 = vst.msk [vmem:[%s3 + $0xb8] sm:$0xff] %vm6814, %v8515
  %9214 = vst.msk [vmem:[%s3 + $0xc0] sm:$0xff] %vm6814, %v8520
  %9215 = vst.msk [vmem:[%s3 + $0xc8] sm:$0xff] %vm6814, %v8523
  %9216 = vst.msk [vmem:[%s3 + $0xd0] sm:$0xff] %vm6814, %v8528
  %9217 = vst.msk [vmem:[%s3 + $0xd8] sm:$0xff] %vm6814, %v8531
  %9218 = vst.msk [vmem:[%s3 + $0xe0] sm:$0xff] %vm6814, %v8536
  %9219 = vst.msk [vmem:[%s3 + $0xe8] sm:$0xff] %vm6814, %v8539
  %9220 = vst.msk [vmem:[%s3 + $0xf0] sm:$0xff] %vm6814, %v8544
  %9221 = vst.msk [vmem:[%s3 + $0xf8] sm:$0xff] %vm6814, %v8547
  %9222 = vst.msk [vmem:[%s3 + $0x100] sm:$0xff] %vm6814, %v8552
  %9223 = vst.msk [vmem:[%s3 + $0x108] sm:$0xff] %vm6814, %v8555
  %9224 = vst.msk [vmem:[%s3 + $0x110] sm:$0xff] %vm6814, %v8560
  %9225 = vst.msk [vmem:[%s3 + $0x118] sm:$0xff] %vm6814, %v8563
  %9226 = vst.msk [vmem:[%s3 + $0x120] sm:$0xff] %vm6814, %v8568
  %9227 = vst.msk [vmem:[%s3 + $0x128] sm:$0xff] %vm6814, %v8571
  %9228 = vst.msk [vmem:[%s3 + $0x130] sm:$0xff] %vm6814, %v8576
  %9229 = vst.msk [vmem:[%s3 + $0x138] sm:$0xff] %vm6814, %v8579
  %9230 = vst.msk [vmem:[%s3 + $0x140] sm:$0xff] %vm6814, %v8584
  %9231 = vst.msk [vmem:[%s3 + $0x148] sm:$0xff] %vm6814, %v8587
  %9232 = vst.msk [vmem:[%s3 + $0x150] sm:$0xff] %vm6814, %v8592
  %9233 = vst.msk [vmem:[%s3 + $0x158] sm:$0xff] %vm6814, %v8595
  %9234 = vst.msk [vmem:[%s3 + $0x160] sm:$0xff] %vm6814, %v8600
  %9235 = vst.msk [vmem:[%s3 + $0x168] sm:$0xff] %vm6814, %v8603
  %9236 = vst.msk [vmem:[%s3 + $0x170] sm:$0xff] %vm6814, %v8608
  %9237 = vst.msk [vmem:[%s3 + $0x178] sm:$0xff] %vm6814, %v8611
  %9238 = vst.msk [vmem:[%s3 + $0x180] sm:$0xff] %vm6814, %v8616
  %9239 = vst.msk [vmem:[%s3 + $0x188] sm:$0xff] %vm6814, %v8619
  %9240 = vst.msk [vmem:[%s3 + $0x190] sm:$0xff] %vm6814, %v8624
  %9241 = vst.msk [vmem:[%s3 + $0x198] sm:$0xff] %vm6814, %v8627
  %9242 = vst.msk [vmem:[%s3 + $0x1a0] sm:$0xff] %vm6814, %v8632
  %9243 = vst.msk [vmem:[%s3 + $0x1a8] sm:$0xff] %vm6814, %v8635
  %9244 = vst.msk [vmem:[%s3 + $0x1b0] sm:$0xff] %vm6814, %v8640
  %9245 = vst.msk [vmem:[%s3 + $0x1b8] sm:$0xff] %vm6814, %v8643
  %9246 = vst.msk [vmem:[%s3 + $0x1c0] sm:$0xff] %vm6814, %v8648
  %9247 = vst.msk [vmem:[%s3 + $0x1c8] sm:$0xff] %vm6814, %v8651
  %9248 = vst.msk [vmem:[%s3 + $0x1d0] sm:$0xff] %vm6814, %v8656
  %9249 = vst.msk [vmem:[%s3 + $0x1d8] sm:$0xff] %vm6814, %v8659
  %9250 = vst.msk [vmem:[%s3 + $0x1e0] sm:$0xff] %vm6814, %v8664
  %9251 = vst.msk [vmem:[%s3 + $0x1e8] sm:$0xff] %vm6814, %v8667
  %9252 = vst.msk [vmem:[%s3 + $0x1f0] sm:$0xff] %vm6814, %v8672
  %9253 = vst.msk [vmem:[%s3 + $0x1f8] sm:$0xff] %vm6814, %v8675
  %9254 = vst.msk [vmem:[%s3 + $0x200] sm:$0xff] %vm6814, %v8680
  %9255 = vst.msk [vmem:[%s3 + $0x208] sm:$0xff] %vm6814, %v8683
  %9256 = vst.msk [vmem:[%s3 + $0x210] sm:$0xff] %vm6814, %v8688
  %9257 = vst.msk [vmem:[%s3 + $0x218] sm:$0xff] %vm6814, %v8691
  %9258 = vst.msk [vmem:[%s3 + $0x220] sm:$0xff] %vm6814, %v8696
  %9259 = vst.msk [vmem:[%s3 + $0x228] sm:$0xff] %vm6814, %v8699
  %9260 = vst.msk [vmem:[%s3 + $0x230] sm:$0xff] %vm6814, %v8704
  %9261 = vst.msk [vmem:[%s3 + $0x238] sm:$0xff] %vm6814, %v8707
  %9262 = vst.msk [vmem:[%s3 + $0x240] sm:$0xff] %vm6814, %v8712
  %9263 = vst.msk [vmem:[%s3 + $0x248] sm:$0xff] %vm6814, %v8715
  %9264 = vst.msk [vmem:[%s3 + $0x250] sm:$0xff] %vm6814, %v8720
  %9265 = vst.msk [vmem:[%s3 + $0x258] sm:$0xff] %vm6814, %v8723
  %9266 = vst.msk [vmem:[%s3 + $0x260] sm:$0xff] %vm6814, %v8728
  %9267 = vst.msk [vmem:[%s3 + $0x268] sm:$0xff] %vm6814, %v8731
  %9268 = vst.msk [vmem:[%s3 + $0x270] sm:$0xff] %vm6814, %v8736
  %9269 = vst.msk [vmem:[%s3 + $0x278] sm:$0xff] %vm6814, %v8739
  %9270 = vst.msk [vmem:[%s3 + $0x280] sm:$0xff] %vm6814, %v8744
  %9271 = vst.msk [vmem:[%s3 + $0x288] sm:$0xff] %vm6814, %v8747
  %9272 = vst.msk [vmem:[%s3 + $0x290] sm:$0xff] %vm6814, %v8752
  %9273 = vst.msk [vmem:[%s3 + $0x298] sm:$0xff] %vm6814, %v8755
  %9274 = vst.msk [vmem:[%s3 + $0x2a0] sm:$0xff] %vm6814, %v8760
  %9275 = vst.msk [vmem:[%s3 + $0x2a8] sm:$0xff] %vm6814, %v8763
  %9276 = vst.msk [vmem:[%s3 + $0x2b0] sm:$0xff] %vm6814, %v8768
  %9277 = vst.msk [vmem:[%s3 + $0x2b8] sm:$0xff] %vm6814, %v8771
  %9278 = vst.msk [vmem:[%s3 + $0x2c0] sm:$0xff] %vm6814, %v8776
  %9279 = vst.msk [vmem:[%s3 + $0x2c8] sm:$0xff] %vm6814, %v8779
  %9280 = vst.msk [vmem:[%s3 + $0x2d0] sm:$0xff] %vm6814, %v8784
  %9281 = vst.msk [vmem:[%s3 + $0x2d8] sm:$0xff] %vm6814, %v8787
  %9282 = vst.msk [vmem:[%s3 + $0x2e0] sm:$0xff] %vm6814, %v8792
  %9283 = vst.msk [vmem:[%s3 + $0x2e8] sm:$0xff] %vm6814, %v8795
  %9284 = vst.msk [vmem:[%s3 + $0x2f0] sm:$0xff] %vm6814, %v8800
  %9285 = vst.msk [vmem:[%s3 + $0x2f8] sm:$0xff] %vm6814, %v8803
  %9286 = vst.msk [vmem:[%s3 + $0x300] sm:$0xff] %vm6814, %v8808
  %9287 = vst.msk [vmem:[%s3 + $0x308] sm:$0xff] %vm6814, %v8811
  %9288 = vst.msk [vmem:[%s3 + $0x310] sm:$0xff] %vm6814, %v8816
  %9289 = vst.msk [vmem:[%s3 + $0x318] sm:$0xff] %vm6814, %v8819
  %9290 = vst.msk [vmem:[%s3 + $0x320] sm:$0xff] %vm6814, %v8824
  %9291 = vst.msk [vmem:[%s3 + $0x328] sm:$0xff] %vm6814, %v8827
  %9292 = vst.msk [vmem:[%s3 + $0x330] sm:$0xff] %vm6814, %v8832
  %9293 = vst.msk [vmem:[%s3 + $0x338] sm:$0xff] %vm6814, %v8835
  %9294 = vst.msk [vmem:[%s3 + $0x340] sm:$0xff] %vm6814, %v8840
  %9295 = vst.msk [vmem:[%s3 + $0x348] sm:$0xff] %vm6814, %v8843
  %9296 = vst.msk [vmem:[%s3 + $0x350] sm:$0xff] %vm6814, %v8848
  %9297 = vst.msk [vmem:[%s3 + $0x358] sm:$0xff] %vm6814, %v8851
  %9298 = vst.msk [vmem:[%s3 + $0x360] sm:$0xff] %vm6814, %v8856
  %9299 = vst.msk [vmem:[%s3 + $0x368] sm:$0xff] %vm6814, %v8859
  %9300 = vst.msk [vmem:[%s3 + $0x370] sm:$0xff] %vm6814, %v8864
  %9301 = vst.msk [vmem:[%s3 + $0x378] sm:$0xff] %vm6814, %v8867
  %9302 = vst.msk [vmem:[%s3 + $0x380] sm:$0xff] %vm6814, %v8872
  %9303 = vst.msk [vmem:[%s3 + $0x388] sm:$0xff] %vm6814, %v8875
  %9304 = vst.msk [vmem:[%s3 + $0x390] sm:$0xff] %vm6814, %v8880
  %9305 = vst.msk [vmem:[%s3 + $0x398] sm:$0xff] %vm6814, %v8883
  %9306 = vst.msk [vmem:[%s3 + $0x3a0] sm:$0xff] %vm6814, %v8888
  %9307 = vst.msk [vmem:[%s3 + $0x3a8] sm:$0xff] %vm6814, %v8891
  %9308 = vst.msk [vmem:[%s3 + $0x3b0] sm:$0xff] %vm6814, %v8896
  %9309 = vst.msk [vmem:[%s3 + $0x3b8] sm:$0xff] %vm6814, %v8899
  %9310 = vst.msk [vmem:[%s3 + $0x3c0] sm:$0xff] %vm6814, %v8904
  %9311 = vst.msk [vmem:[%s3 + $0x3c8] sm:$0xff] %vm6814, %v8907
  %9312 = vst.msk [vmem:[%s3 + $0x3d0] sm:$0xff] %vm6814, %v8912
  %9313 = vst.msk [vmem:[%s3 + $0x3d8] sm:$0xff] %vm6814, %v8915
  %9314 = vst.msk [vmem:[%s3 + $0x3e0] sm:$0xff] %vm6814, %v8920
  %9315 = vst.msk [vmem:[%s3 + $0x3e8] sm:$0xff] %vm6814, %v8923
  %9316 = vst.msk [vmem:[%s3 + $0x3f0] sm:$0xff] %vm6814, %v8928
  %9317 = vst.msk [vmem:[%s3 + $0x3f8] sm:$0xff] %vm6814, %v8931
  %9318 = vst.msk [vmem:[%s3 + $0x400] sm:$0xff] %vm6814, %v8936
  %9319 = vst.msk [vmem:[%s3 + $0x408] sm:$0xff] %vm6814, %v8939
  %9320 = vst.msk [vmem:[%s3 + $0x410] sm:$0xff] %vm6814, %v8944
  %9321 = vst.msk [vmem:[%s3 + $0x418] sm:$0xff] %vm6814, %v8947
  %9322 = vst.msk [vmem:[%s3 + $0x420] sm:$0xff] %vm6814, %v8952
  %9323 = vst.msk [vmem:[%s3 + $0x428] sm:$0xff] %vm6814, %v8955
  %9324 = vst.msk [vmem:[%s3 + $0x430] sm:$0xff] %vm6814, %v8960
  %9325 = vst.msk [vmem:[%s3 + $0x438] sm:$0xff] %vm6814, %v8963
  %9326 = vst.msk [vmem:[%s3 + $0x440] sm:$0xff] %vm6814, %v8968
  %9327 = vst.msk [vmem:[%s3 + $0x448] sm:$0xff] %vm6814, %v8971
  %9328 = vst.msk [vmem:[%s3 + $0x450] sm:$0xff] %vm6814, %v8976
  %9329 = vst.msk [vmem:[%s3 + $0x458] sm:$0xff] %vm6814, %v8979
  %9330 = vst.msk [vmem:[%s3 + $0x460] sm:$0xff] %vm6814, %v8984
  %9331 = vst.msk [vmem:[%s3 + $0x468] sm:$0xff] %vm6814, %v8987
  %9332 = vst.msk [vmem:[%s3 + $0x470] sm:$0xff] %vm6814, %v8992
  %9333 = vst.msk [vmem:[%s3 + $0x478] sm:$0xff] %vm6814, %v8995
  %9334 = vst.msk [vmem:[%s3 + $0x480] sm:$0xff] %vm6814, %v9000
  %9335 = vst.msk [vmem:[%s3 + $0x488] sm:$0xff] %vm6814, %v9003
  %9336 = vst.msk [vmem:[%s3 + $0x490] sm:$0xff] %vm6814, %v9008
  %9337 = vst.msk [vmem:[%s3 + $0x498] sm:$0xff] %vm6814, %v9011
  %9338 = vst.msk [vmem:[%s3 + $0x4a0] sm:$0xff] %vm6814, %v9016
  %9339 = vst.msk [vmem:[%s3 + $0x4a8] sm:$0xff] %vm6814, %v9019
  %9340 = vst.msk [vmem:[%s3 + $0x4b0] sm:$0xff] %vm6814, %v9024
  %9341 = vst.msk [vmem:[%s3 + $0x4b8] sm:$0xff] %vm6814, %v9027
  %9342 = vst.msk [vmem:[%s3 + $0x4c0] sm:$0xff] %vm6814, %v9032
  %9343 = vst.msk [vmem:[%s3 + $0x4c8] sm:$0xff] %vm6814, %v9035
  %9344 = vst.msk [vmem:[%s3 + $0x4d0] sm:$0xff] %vm6814, %v9040
  %9345 = vst.msk [vmem:[%s3 + $0x4d8] sm:$0xff] %vm6814, %v9043
  %9346 = vst.msk [vmem:[%s3 + $0x4e0] sm:$0xff] %vm6814, %v9048
  %9347 = vst.msk [vmem:[%s3 + $0x4e8] sm:$0xff] %vm6814, %v9051
  %9348 = vst.msk [vmem:[%s3 + $0x4f0] sm:$0xff] %vm6814, %v9056
  %9349 = vst.msk [vmem:[%s3 + $0x4f8] sm:$0xff] %vm6814, %v9059
  %9350 = vst.msk [vmem:[%s3 + $0x500] sm:$0xff] %vm6814, %v9064
  %9351 = vst.msk [vmem:[%s3 + $0x508] sm:$0xff] %vm6814, %v9067
  %9352 = vst.msk [vmem:[%s3 + $0x510] sm:$0xff] %vm6814, %v9072
  %9353 = vst.msk [vmem:[%s3 + $0x518] sm:$0xff] %vm6814, %v9075
  %9354 = vst.msk [vmem:[%s3 + $0x520] sm:$0xff] %vm6814, %v9080
  %9355 = vst.msk [vmem:[%s3 + $0x528] sm:$0xff] %vm6814, %v9083
  %9356 = vst.msk [vmem:[%s3 + $0x530] sm:$0xff] %vm6814, %v9088
  %9357 = vst.msk [vmem:[%s3 + $0x538] sm:$0xff] %vm6814, %v9091
  %9358 = vst.msk [vmem:[%s3 + $0x540] sm:$0xff] %vm6814, %v9096
  %9359 = vst.msk [vmem:[%s3 + $0x548] sm:$0xff] %vm6814, %v9099
  %9360 = vst.msk [vmem:[%s3 + $0x550] sm:$0xff] %vm6814, %v9104
  %9361 = vst.msk [vmem:[%s3 + $0x558] sm:$0xff] %vm6814, %v9107
  %9362 = vst.msk [vmem:[%s3 + $0x560] sm:$0xff] %vm6814, %v9112
  %9363 = vst.msk [vmem:[%s3 + $0x568] sm:$0xff] %vm6814, %v9115
  %9364 = vst.msk [vmem:[%s3 + $0x570] sm:$0xff] %vm6814, %v9120
  %9365 = vst.msk [vmem:[%s3 + $0x578] sm:$0xff] %vm6814, %v9123
  %9366 = vst.msk [vmem:[%s3 + $0x580] sm:$0xff] %vm6814, %v9128
  %9367 = vst.msk [vmem:[%s3 + $0x588] sm:$0xff] %vm6814, %v9131
  %9368 = vst.msk [vmem:[%s3 + $0x590] sm:$0xff] %vm6814, %v9136
  %9369 = vst.msk [vmem:[%s3 + $0x598] sm:$0xff] %vm6814, %v9139
  %9370 = vst.msk [vmem:[%s3 + $0x5a0] sm:$0xff] %vm6814, %v9144
  %9371 = vst.msk [vmem:[%s3 + $0x5a8] sm:$0xff] %vm6814, %v9147
  %9372 = vst.msk [vmem:[%s3 + $0x5b0] sm:$0xff] %vm6814, %v9152
  %9373 = vst.msk [vmem:[%s3 + $0x5b8] sm:$0xff] %vm6814, %v9155
  %9374 = vst.msk [vmem:[%s3 + $0x5c0] sm:$0xff] %vm6814, %v9160
  %9375 = vst.msk [vmem:[%s3 + $0x5c8] sm:$0xff] %vm6814, %v9163
  %9376 = vst.msk [vmem:[%s3 + $0x5d0] sm:$0xff] %vm6814, %v9168
  %9377 = vst.msk [vmem:[%s3 + $0x5d8] sm:$0xff] %vm6814, %v9171
  %9378 = vst.msk [vmem:[%s3 + $0x5e0] sm:$0xff] %vm6814, %v9176
  %9379 = vst.msk [vmem:[%s3 + $0x5e8] sm:$0xff] %vm6814, %v9179
  %9380 = vst.msk [vmem:[%s3 + $0x5f0] sm:$0xff] %vm6814, %v9184
  %9381 = vst.msk [vmem:[%s3 + $0x5f8] sm:$0xff] %vm6814, %v9187
  // Predicated region
  $region14: #{tpu_custom_call.1} parent=0 // pred_check
    _
  $region15: #{tpu_custom_call.1} parent=0 // pred_check_branch
    %9383 = sbr.rel (0) target = $region17
  $region16: #{tpu_custom_call.1} parent=0 // pred_region
    _
  $region17: #{tpu_custom_call.1} parent=0 // pred_fallthru
    _
  // Predicated region
  $region18: #{tpu_custom_call.1} parent=0 // pred_check
    _
  $region19: #{tpu_custom_call.1} parent=0 // pred_check_branch
    %9385 = sbr.rel (0) target = $region21
  $region20: #{tpu_custom_call.1} parent=0 // pred_region
    _
  $region21: #{tpu_custom_call.1} parent=0 // pred_fallthru
    _

</llo_original>
